<compile_context>
chip_gen: v7x
topology: tpu7x:2x2x1
jax: 0.10.0
libtpu: 0.0.40
codegen_flags: <defaults>
</compile_context>

<pallas_src>
import functools

import jax
import jax.numpy as jnp
from jax import lax
from jax.experimental import pallas as pl
from jax.experimental.pallas import tpu as pltpu


# ----------------------------------------------------------------------------
# Pallas kernel: reasoning for one batch tile (edge work hoisted out of the loop).
# ----------------------------------------------------------------------------
def _reasoning_kernel(node_ref, c_ref, edge_ref, probs_ref, wsn_ref, bsn_ref,
                      vmem_ref, attn_ref, *, stack_size, max_steps,
                      num_valid_nodes):
    f32 = jnp.float32
    S, T = stack_size, max_steps

    node = node_ref[...]                      # (TB, H, Np)  f32, node axis on lanes
    c = c_ref[...]                            # (TB, H)      f32  == questions_hidden
    TB, H, Np = node.shape

    # Padded node slots (node axis padded to a lane multiple) are masked exactly below.
    node_mask = lax.broadcasted_iota(jnp.int32, (1, Np), 1) < num_valid_nodes   # (1, Np)

    # ---- loop-invariant precompute (c_i == questions_hidden at every step) ----
    # AttendKey: attention over nodes (sublane reduce over H -> lane-dense (TB, Np)).
    key_logits = jnp.sum(node * c[:, :, None], axis=1)                          # (TB, Np)
    key_logits = jnp.where(node_mask, key_logits, -1e30)
    key_attn = jax.nn.softmax(key_logits, axis=-1)                              # (TB, Np)

    # SearchNeighbors: query projection (small MXU matmul) + per-node gate.
    q_proj = jnp.tanh(
        jnp.dot(c, wsn_ref[...], preferred_element_type=f32) + bsn_ref[...])    # (TB, H)
    gate = jax.nn.sigmoid(jnp.sum(node * q_proj[:, :, None], axis=1))           # (TB, Np)

    # Hoisted edge propagation.  The stack always holds scalar multiples of key_attn, so
    # SearchNeighbors' value output at step t is alpha_t * prop with
    #   prop[b, i] = sum_j edge[b, i, j] * key_attn[b, j] * gate[b, j].
    # edge_ref stores edge^T (b, j, i) in bf16; the f32 cast is consumed once (fused into
    # the multiply, no long-lived f32 copy) and the reduce runs over the SUBLANE axis.
    xw = key_attn * gate                                                        # (TB, Np)
    prop = jnp.sum(edge_ref[...].astype(f32) * xw[:, :, None], axis=1)          # (TB, Np)

    probs = probs_ref[...]                    # (TB, T, M)  tiny, loaded once

    # Stack-pointer "push" (move-forward, clamped at S-1) as a tiny VPU broadcast+reduce
    # (keeps MXU latency off the sequential ptr -> softmax -> ptr dependency chain).
    row = lax.broadcasted_iota(jnp.int32, (S, S), 0)
    col = lax.broadcasted_iota(jnp.int32, (S, S), 1)
    shift_fw = (col == jnp.minimum(row + 1, S - 1)).astype(f32)                 # (S, S)

    # ---- scalar-sized recurrences only (stack == w[:, :, None] * key_attn,
    #                                     value_mem == beta * prop) ----
    w = jnp.zeros((TB, S), f32)
    stack_ptr = (lax.broadcasted_iota(jnp.int32, (TB, S), 1) == 0).astype(f32)  # (TB, S)
    beta = jnp.zeros((TB, 1), f32)

    # T is small & static; the loop body only carries a handful of (TB,S)/(TB,1) vregs,
    # so a Python unroll keeps full LLO scheduling visibility without vreg pressure.
    for t in range(T):
        p0 = probs[:, t, 0:1]                                                   # (TB, 1)
        p1 = probs[:, t, 1:2]                                                   # (TB, 1)
        # NOTE: the reference model has exactly two modules (attend_key, search_neighbors).

        # --- module 0: AttendKey -> push key_attn onto the stack (weight-space update)
        ptr0 = jnp.sum(stack_ptr[:, :, None] * shift_fw[None, :, :], axis=1)    # (TB, S)
        w0 = ptr0 + w * (1.0 - ptr0)                                            # (TB, S)

        # --- module 1: SearchNeighbors -> read stack top (alpha * key_attn), propagate
        alpha = jnp.sum(w * stack_ptr, axis=-1, keepdims=True)                  # (TB, 1)

        # --- cache read_from_stack(module_output) for each module (lane-dense stores)
        gamma0 = jnp.sum(w0 * ptr0, axis=-1, keepdims=True)                     # (TB, 1)
        attn_ref[t, 0, :, :] = gamma0 * key_attn
        attn_ref[t, 1, :, :] = alpha * key_attn

        # --- soft module mixing by controller probabilities
        w = p0 * w0 + p1 * w
        beta = p0 * beta + p1 * alpha
        ptr_mix = p0 * ptr0 + p1 * stack_ptr
        stack_ptr = jax.nn.softmax(ptr_mix * 10.0, axis=-1)   # sharpen_ptr (soft, temp 0.1)

    vmem_ref[...] = jax.nn.sigmoid(beta * prop)


def _round_up(x, m):
    return ((x + m - 1) // m) * m


def _choose_batch_tile(B, Np, H, T, M, budget_bytes=40 * 1024 * 1024):
    """VMEM-aware batch tile: single grid step at small B, 8-row multiples otherwise."""
    per_row = (Np * Np * (2 * 2 + 4)      # edge: 2x bf16 pipeline buffers + f32 compute temp
               + 2 * H * Np * 4           # node block (double-buffered)
               + 2 * T * M * Np * 4       # attn-cache output block
               + 2 * Np * 4)              # value_mem output block
    cap = max(1, budget_bytes // per_row)
    if B <= min(cap, 32):
        return B, B                       # one grid step, no batch padding needed
    tb = max(8, min(cap, 32, B) // 8 * 8)
    return tb, _round_up(B, tb)


def run_reasoning(node_feat, q_hidden, edge, module_probs, w_sn, b_sn,
                  *, stack_size, lane=128):
    B, N, H = node_feat.shape
    T, _, M = module_probs.shape
    assert M == 2, "reference VQA model has exactly two modules"
    f32 = jnp.float32

    Np = _round_up(max(N, lane), lane)                # lane-dense node axis
    TB, Bp = _choose_batch_tile(B, Np, H, T, M)
    num_tiles = Bp // TB

    # Node features transposed so the node axis sits on lanes everywhere.
    node_p = jnp.pad(jnp.transpose(node_feat.astype(f32), (0, 2, 1)),
                     ((0, Bp - B), (0, 0), (0, Np - N)))                 # (Bp, H, Np)
    q_p = jnp.pad(q_hidden.astype(f32), ((0, Bp - B), (0, 0)))           # (Bp, H)
    # Edge is binary adjacency -> bf16 storage is lossless and halves HBM/VMEM traffic for
    # the largest operand; transposed to (b, j, i) so the in-kernel reduce is over sublanes.
    # TODO(synk): in production, pre-pack (cast+transpose+pad) the edges once outside the
    # per-call path instead of re-doing this fused XLA copy every forward.
    edge_p = jnp.pad(jnp.transpose(edge.astype(jnp.bfloat16), (0, 2, 1)),
                     ((0, Bp - B), (0, Np - N), (0, Np - N)))            # (Bp, Np, Np)
    probs_p = jnp.pad(jnp.transpose(module_probs.astype(f32), (1, 0, 2)),
                      ((0, Bp - B), (0, 0), (0, 0)))                     # (Bp, T, M)
    # NOTE: padded batch rows see zero probabilities / uniform softmaxes; their outputs are
    # sliced off below, so this is benign.

    kernel = functools.partial(_reasoning_kernel, stack_size=stack_size,
                               max_steps=T, num_valid_nodes=N)

    value_mem, cache_attn = pl.pallas_call(
        kernel,
        out_shape=(jax.ShapeDtypeStruct((Bp, Np), f32),
                   jax.ShapeDtypeStruct((T, M, Bp, Np), f32)),
        grid=(num_tiles,),
        in_specs=[
            pl.BlockSpec((TB, H, Np), lambda i: (i, 0, 0)),       # node_feat (transposed)
            pl.BlockSpec((TB, H), lambda i: (i, 0)),              # questions_hidden
            pl.BlockSpec((TB, Np, Np), lambda i: (i, 0, 0)),      # edge^T (bf16)
            pl.BlockSpec((TB, T, M), lambda i: (i, 0, 0)),        # module_probs
            pl.BlockSpec((H, H), lambda i: (0, 0)),               # W_sn
            pl.BlockSpec((1, H), lambda i: (0, 0)),               # b_sn
        ],
        out_specs=(
            pl.BlockSpec((TB, Np), lambda i: (i, 0)),             # value_mem
            pl.BlockSpec((T, M, TB, Np), lambda i: (0, 0, i, 0)),  # cache_attn
        ),
        compiler_params=pltpu.CompilerParams(
            dimension_semantics=("parallel",) if num_tiles > 1 else ("arbitrary",),
            vmem_limit_bytes=48 * 1024 * 1024,   # > 16/32 MiB scoped defaults, < 64 MiB (v7x)
        ),
    )(node_p, q_p, edge_p, probs_p, w_sn.astype(f32), b_sn.astype(f32))

    return value_mem[:B, :N], cache_attn[:, :, :B, :N]


# ----------------------------------------------------------------------------
# Plain-JAX glue: embedding, bidirectional GRU encoder, controller.
# ----------------------------------------------------------------------------
def _gru_dir(gru, x, lens, reverse):
    # x: (L, B, D), lens: (B,)
    L, B, _ = x.shape
    hh = gru['Wh'].shape[0]
    t_idx = jnp.arange(L)
    mask = (t_idx[:, None] < lens[None, :]).astype(jnp.float32)[:, :, None]  # (L,B,1)
    xs_x, xs_m = (x[::-1], mask[::-1]) if reverse else (x, mask)

    def step(h, inp):
        xt, mt = inp
        xg = xt @ gru['Wx']
        hg = h @ gru['Wh'] + gru['b']
        z = jax.nn.sigmoid(xg[:, :hh] + hg[:, :hh])
        r = jax.nn.sigmoid(xg[:, hh:2 * hh] + hg[:, hh:2 * hh])
        n = jnp.tanh(xg[:, 2 * hh:] + r * hg[:, 2 * hh:])
        h_new = (1.0 - z) * n + z * h
        h_out = mt * h_new + (1.0 - mt) * h
        return h_out, h_out

    h0 = jnp.zeros((B, hh), jnp.float32)
    h_last, hs = lax.scan(step, h0, (xs_x, xs_m))
    if reverse:
        hs = hs[::-1]
    return hs, h_last


def encode(params, tokens, lens):
    # tokens: (B, L) int32 -> outputs (L, B, H), hidden (B, H)
    emb = jnp.tanh(params['emb'][tokens])            # (B, L, D)
    x = jnp.transpose(emb, (1, 0, 2))                # (L, B, D) seq-major
    outs_f, h_f = _gru_dir(params['gru_f'], x, lens, reverse=False)
    outs_b, h_b = _gru_dir(params['gru_b'], x, lens, reverse=True)
    outputs = jnp.concatenate([outs_f, outs_b], axis=-1)
    hidden = jnp.concatenate([h_f, h_b], axis=-1)
    return outputs, hidden


def init_params(key, num_tokens, word_dim, hidden_dim, num_module, max_steps):
    hh = hidden_dim // 2
    ks = jax.random.split(key, 8)

    def nrm(k, shape, scale):
        return (scale * jax.random.normal(k, shape)).astype(jnp.float32)

    return dict(
        emb=nrm(ks[0], (num_tokens, word_dim), 0.5),
        gru_f=dict(Wx=nrm(ks[1], (word_dim, 3 * hh), 0.2),
                   Wh=nrm(ks[2], (hh, 3 * hh), 0.2),
                   b=jnp.zeros((3 * hh,), jnp.float32)),
        gru_b=dict(Wx=nrm(ks[3], (word_dim, 3 * hh), 0.2),
                   Wh=nrm(ks[4], (hh, 3 * hh), 0.2),
                   b=jnp.zeros((3 * hh,), jnp.float32)),
        W_ctrl=nrm(ks[5], (max_steps, hidden_dim, num_module), 0.3),
        b_ctrl=jnp.zeros((max_steps, num_module), jnp.float32),
        W_sn=nrm(ks[6], (hidden_dim, hidden_dim), 0.2),
        b_sn=jnp.zeros((1, hidden_dim), jnp.float32),
    )


def vqa_forward(params, questions, questions_len, vertex_vectors, edge_matrices,
                *, hidden_dim, stack_size, text_len):
    B, _ = questions.shape
    N = vertex_vectors.shape[1]
    T = stack_size                                   # max_steps == stack_size

    # node features: encode every vertex's token sequence
    vtok = vertex_vectors.reshape(B * N, text_len)
    vlen = jnp.full((B * N,), text_len, jnp.int32)
    _, vhid = encode(params, vtok, vlen)
    node_feat = vhid.reshape(B, N, hidden_dim)

    # question encoding
    _, q_hidden = encode(params, questions, questions_len)

    # controller: per-step module probabilities
    # TODO(synk): original Controller also produces word-attention c_list/cv_list;
    # they are not needed for the returned values and are omitted.
    logits = (jnp.einsum('bh,thm->tbm', q_hidden, params['W_ctrl'])
              + params['b_ctrl'][:, None, :])
    module_probs = jax.nn.softmax(logits, axis=-1)   # (T, B, M)

    # Pallas reasoning kernel
    value_mem, attn = run_reasoning(node_feat, q_hidden, edge_matrices,
                                    module_probs, params['W_sn'], params['b_sn'],
                                    stack_size=stack_size)

    cache_module_prob = [jnp.transpose(module_probs[t]) for t in range(T)]   # each (M, B)
    cache_attn = [[attn[t, m][..., None] for m in range(attn.shape[1])]
                  for t in range(T)]                                         # each (B, N, 1)
    return value_mem, cache_module_prob, cache_attn


if __name__ == "__main__":
    num_tokens, word_dim, hidden_dim = 50, 16, 32
    stack_size, text_len = 4, 4
    B, N, q_len, M = 16, 8, 6, 2

    key = jax.random.PRNGKey(0)
    kp, kq, kv, ke = jax.random.split(key, 4)
    params = init_params(kp, num_tokens, word_dim, hidden_dim, M, stack_size)

    questions = jax.random.randint(kq, (B, q_len), 0, num_tokens, dtype=jnp.int32)
    questions_len = jnp.where(jnp.arange(B) % 2 == 0, q_len, q_len - 2).astype(jnp.int32)
    vertex_vectors = jax.random.randint(kv, (B, N, text_len), 0, num_tokens, dtype=jnp.int32)
    edge_matrices = (jax.random.uniform(ke, (B, N, N)) > 0.5).astype(jnp.float32)

    value_mem, cache_prob, cache_attn = vqa_forward(
        params, questions, questions_len, vertex_vectors, edge_matrices,
        hidden_dim=hidden_dim, stack_size=stack_size, text_len=text_len)

    jax.block_until_ready(value_mem)
    assert value_mem.shape == (B, N)
    assert len(cache_prob) == stack_size and cache_prob[0].shape == (M, B)
    assert len(cache_attn) == stack_size and cache_attn[0][0].shape == (B, N, 1)
    print("KERNEL_OK")
</pallas_src>

<mosaic_0001>
module attributes {stable_mosaic.version = 11 : i64} {
  func.func @_reasoning_kernel(%arg0: i32, %arg1: memref<16x32x128xf32, #tpu.memory_space<vmem>>, %arg2: memref<16x32xf32, #tpu.memory_space<vmem>>, %arg3: memref<16x128x128xbf16, #tpu.memory_space<vmem>>, %arg4: memref<16x4x2xf32, #tpu.memory_space<vmem>>, %arg5: memref<32x32xf32, #tpu.memory_space<vmem>>, %arg6: memref<1x32xf32, #tpu.memory_space<vmem>>, %arg7: memref<16x128xf32, #tpu.memory_space<vmem>>, %arg8: memref<4x2x16x128xf32, #tpu.memory_space<vmem>>) attributes {dimension_semantics = [#tpu.dimension_semantics<arbitrary>], iteration_bounds = array<i64: 1>, scalar_prefetch = 0 : i64, scratch_operands = 0 : i64, tpu.core_type = #tpu.core_type<tc>, window_params = [{transform_indices = @transform_0, window_bounds = array<i64: 16, 32, 128>}, {transform_indices = @transform_1, window_bounds = array<i64: 16, 32>}, {transform_indices = @transform_2, window_bounds = array<i64: 16, 128, 128>}, {transform_indices = @transform_3, window_bounds = array<i64: 16, 4, 2>}, {pipeline_mode = #tpu.pipeline_mode<synchronous>, transform_indices = @transform_4, window_bounds = array<i64: 32, 32>}, {pipeline_mode = #tpu.pipeline_mode<synchronous>, transform_indices = @transform_5, window_bounds = array<i64: 1, 32>}, {transform_indices = @transform_6, window_bounds = array<i64: 16, 128>}, {transform_indices = @transform_7, window_bounds = array<i64: 4, 2, 16, 128>}]} {
    %c0 = arith.constant 0 : index
    %c0_0 = arith.constant 0 : index
    %c0_1 = arith.constant 0 : index
    %0 = vector.load %arg1[%c0, %c0_0, %c0_1] : memref<16x32x128xf32, #tpu.memory_space<vmem>>, vector<16x32x128xf32>
    %c0_2 = arith.constant 0 : index
    %c0_3 = arith.constant 0 : index
    %1 = vector.load %arg2[%c0_2, %c0_3] : memref<16x32xf32, #tpu.memory_space<vmem>>, vector<16x32xf32>
    %2 = tpu.iota {dimensions = array<i32: 1>} : vector<1x128xi32>
    %c8_i32 = arith.constant 8 : i32
    %3 = vector.broadcast %c8_i32 : i32 to vector<1x128xi32>
    %4 = arith.cmpi slt, %2, %3 : vector<1x128xi32>
    %5 = vector.shape_cast %1 : vector<16x32xf32> to vector<16x32x1xf32>
    %6 = vector.broadcast %5 : vector<16x32x1xf32> to vector<16x32x128xf32>
    %7 = arith.mulf %0, %6 : vector<16x32x128xf32>
    %cst = arith.constant dense<0.000000e+00> : vector<16x128xf32>
    %8 = vector.multi_reduction <add>, %7, %cst [1] : vector<16x32x128xf32> to vector<16x128xf32>
    %cst_4 = arith.constant -1.000000e+30 : f32
    %9 = vector.shape_cast %4 : vector<1x128xi1> to vector<1x128xi1>
    %10 = vector.broadcast %9 : vector<1x128xi1> to vector<16x128xi1>
    %11 = vector.broadcast %cst_4 : f32 to vector<16x128xf32>
    %12 = arith.select %10, %8, %11 : vector<16x128xi1>, vector<16x128xf32>
    %cst_5 = arith.constant dense<0xFF800000> : vector<16xf32>
    %13 = vector.multi_reduction <maximumf>, %12, %cst_5 [1] : vector<16x128xf32> to vector<16xf32>
    %cst_6 = arith.constant 0xFF800000 : f32
    %14 = vector.broadcast %cst_6 : f32 to vector<16xf32>
    %15 = arith.maximumf %14, %13 : vector<16xf32>
    %16 = vector.shape_cast %15 : vector<16xf32> to vector<16x1xf32>
    %17 = vector.broadcast %16 : vector<16x1xf32> to vector<16x128xf32>
    %18 = arith.subf %12, %17 : vector<16x128xf32>
    %19 = math.exp %18 : vector<16x128xf32>
    %cst_7 = arith.constant dense<0.000000e+00> : vector<16xf32>
    %20 = vector.multi_reduction <add>, %19, %cst_7 [1] : vector<16x128xf32> to vector<16xf32>
    %21 = vector.shape_cast %20 : vector<16xf32> to vector<16x1xf32>
    %22 = vector.broadcast %21 : vector<16x1xf32> to vector<16x128xf32>
    %23 = arith.divf %19, %22 : vector<16x128xf32>
    %c0_8 = arith.constant 0 : index
    %c0_9 = arith.constant 0 : index
    %24 = vector.load %arg5[%c0_8, %c0_9] : memref<32x32xf32, #tpu.memory_space<vmem>>, vector<32x32xf32>
    %cst_10 = arith.constant dense<0.000000e+00> : vector<16x32xf32>
    %25 = tpu.matmul %1, %24, %cst_10 {dimension_numbers = #tpu.dot_dimension_numbers<[1], [0], [0], [1], [0, 0, 1, 1], [], []>} : vector<16x32xf32>, vector<32x32xf32>, vector<16x32xf32> -> vector<16x32xf32>
    %c0_11 = arith.constant 0 : index
    %c0_12 = arith.constant 0 : index
    %26 = vector.load %arg6[%c0_11, %c0_12] : memref<1x32xf32, #tpu.memory_space<vmem>>, vector<1x32xf32>
    %27 = vector.broadcast %26 : vector<1x32xf32> to vector<16x32xf32>
    %28 = arith.addf %25, %27 : vector<16x32xf32>
    %29 = math.tanh %28 : vector<16x32xf32>
    %30 = vector.shape_cast %29 : vector<16x32xf32> to vector<16x32x1xf32>
    %31 = vector.broadcast %30 : vector<16x32x1xf32> to vector<16x32x128xf32>
    %32 = arith.mulf %0, %31 : vector<16x32x128xf32>
    %cst_13 = arith.constant dense<0.000000e+00> : vector<16x128xf32>
    %33 = vector.multi_reduction <add>, %32, %cst_13 [1] : vector<16x32x128xf32> to vector<16x128xf32>
    %34 = arith.negf %33 : vector<16x128xf32>
    %35 = math.exp %34 : vector<16x128xf32>
    %cst_14 = arith.constant 1.000000e+00 : f32
    %36 = vector.broadcast %cst_14 : f32 to vector<16x128xf32>
    %37 = arith.addf %36, %35 : vector<16x128xf32>
    %38 = arith.divf %36, %37 : vector<16x128xf32>
    %39 = arith.mulf %23, %38 : vector<16x128xf32>
    %c0_15 = arith.constant 0 : index
    %c0_16 = arith.constant 0 : index
    %c0_17 = arith.constant 0 : index
    %40 = vector.load %arg3[%c0_15, %c0_16, %c0_17] : memref<16x128x128xbf16, #tpu.memory_space<vmem>>, vector<16x128x128xbf16>
    %41 = arith.extf %40 : vector<16x128x128xbf16> to vector<16x128x128xf32>
    %42 = vector.shape_cast %39 : vector<16x128xf32> to vector<16x128x1xf32>
    %43 = vector.broadcast %42 : vector<16x128x1xf32> to vector<16x128x128xf32>
    %44 = arith.mulf %41, %43 : vector<16x128x128xf32>
    %cst_18 = arith.constant dense<0.000000e+00> : vector<16x128xf32>
    %45 = vector.multi_reduction <add>, %44, %cst_18 [1] : vector<16x128x128xf32> to vector<16x128xf32>
    %c0_19 = arith.constant 0 : index
    %c0_20 = arith.constant 0 : index
    %c0_21 = arith.constant 0 : index
    %46 = vector.load %arg4[%c0_19, %c0_20, %c0_21] : memref<16x4x2xf32, #tpu.memory_space<vmem>>, vector<16x4x2xf32>
    %47 = tpu.iota {dimensions = array<i32: 0>} : vector<4x4xi32>
    %48 = tpu.iota {dimensions = array<i32: 1>} : vector<4x4xi32>
    %c1_i32 = arith.constant 1 : i32
    %49 = vector.broadcast %c1_i32 : i32 to vector<4x4xi32>
    %50 = arith.addi %47, %49 : vector<4x4xi32>
    %c3_i32 = arith.constant 3 : i32
    %51 = vector.broadcast %c3_i32 : i32 to vector<4x4xi32>
    %52 = arith.minsi %50, %51 : vector<4x4xi32>
    %53 = arith.cmpi eq, %48, %52 : vector<4x4xi32>
    %54 = arith.extui %53 : vector<4x4xi1> to vector<4x4xi32>
    %55 = arith.sitofp %54 : vector<4x4xi32> to vector<4x4xf32>
    %cst_22 = arith.constant 0.000000e+00 : f32
    %56 = vector.broadcast %cst_22 : f32 to vector<16x4xf32>
    %57 = tpu.iota {dimensions = array<i32: 1>} : vector<16x4xi32>
    %c0_i32 = arith.constant 0 : i32
    %58 = vector.broadcast %c0_i32 : i32 to vector<16x4xi32>
    %59 = arith.cmpi eq, %57, %58 : vector<16x4xi32>
    %60 = arith.extui %59 : vector<16x4xi1> to vector<16x4xi32>
    %61 = arith.sitofp %60 : vector<16x4xi32> to vector<16x4xf32>
    %cst_23 = arith.constant 0.000000e+00 : f32
    %62 = vector.broadcast %cst_23 : f32 to vector<16x1xf32>
    %63 = vector.extract_strided_slice %46 {offsets = [0, 0, 0], sizes = [16, 1, 1], strides = [1, 1, 1]} : vector<16x4x2xf32> to vector<16x1x1xf32>
    %64 = vector.shape_cast %63 : vector<16x1x1xf32> to vector<16x1xf32>
    %65 = vector.extract_strided_slice %46 {offsets = [0, 0, 1], sizes = [16, 1, 1], strides = [1, 1, 1]} : vector<16x4x2xf32> to vector<16x1x1xf32>
    %66 = vector.shape_cast %65 : vector<16x1x1xf32> to vector<16x1xf32>
    %67 = vector.shape_cast %61 : vector<16x4xf32> to vector<16x4x1xf32>
    %68 = vector.shape_cast %55 : vector<4x4xf32> to vector<1x4x4xf32>
    %69 = vector.broadcast %67 : vector<16x4x1xf32> to vector<16x4x4xf32>
    %70 = vector.broadcast %68 : vector<1x4x4xf32> to vector<16x4x4xf32>
    %71 = arith.mulf %69, %70 : vector<16x4x4xf32>
    %cst_24 = arith.constant dense<0.000000e+00> : vector<16x4xf32>
    %72 = vector.multi_reduction <add>, %71, %cst_24 [1] : vector<16x4x4xf32> to vector<16x4xf32>
    %cst_25 = arith.constant 1.000000e+00 : f32
    %73 = vector.broadcast %cst_25 : f32 to vector<16x4xf32>
    %74 = arith.subf %73, %72 : vector<16x4xf32>
    %75 = arith.mulf %56, %74 : vector<16x4xf32>
    %76 = arith.addf %72, %75 : vector<16x4xf32>
    %77 = arith.mulf %56, %61 : vector<16x4xf32>
    %cst_26 = arith.constant dense<0.000000e+00> : vector<16xf32>
    %78 = vector.multi_reduction <add>, %77, %cst_26 [1] : vector<16x4xf32> to vector<16xf32>
    %79 = vector.shape_cast %78 : vector<16xf32> to vector<16x1xf32>
    %80 = arith.mulf %76, %72 : vector<16x4xf32>
    %cst_27 = arith.constant dense<0.000000e+00> : vector<16xf32>
    %81 = vector.multi_reduction <add>, %80, %cst_27 [1] : vector<16x4xf32> to vector<16xf32>
    %82 = vector.shape_cast %81 : vector<16xf32> to vector<16x1xf32>
    %83 = vector.broadcast %82 : vector<16x1xf32> to vector<16x128xf32>
    %84 = arith.mulf %83, %23 : vector<16x128xf32>
    %c0_28 = arith.constant 0 : index
    %c0_29 = arith.constant 0 : index
    %c0_30 = arith.constant 0 : index
    %c0_31 = arith.constant 0 : index
    %85 = vector.load %arg8[%c0_28, %c0_29, %c0_30, %c0_31] : memref<4x2x16x128xf32, #tpu.memory_space<vmem>>, vector<1x1x16x128xf32>
    %86 = vector.shape_cast %85 : vector<1x1x16x128xf32> to vector<16x128xf32>
    %87 = vector.shape_cast %84 : vector<16x128xf32> to vector<1x1x16x128xf32>
    tpu.vector_store %arg8[%c0_28, %c0_29, %c0_30, %c0_31], %87 {strides = array<i32>} : memref<4x2x16x128xf32, #tpu.memory_space<vmem>>, vector<1x1x16x128xf32>,
    %88 = vector.broadcast %79 : vector<16x1xf32> to vector<16x128xf32>
    %89 = arith.mulf %88, %23 : vector<16x128xf32>
    %c0_32 = arith.constant 0 : index
    %c1 = arith.constant 1 : index
    %c0_33 = arith.constant 0 : index
    %c0_34 = arith.constant 0 : index
    %90 = vector.load %arg8[%c0_32, %c1, %c0_33, %c0_34] : memref<4x2x16x128xf32, #tpu.memory_space<vmem>>, vector<1x1x16x128xf32>
    %91 = vector.shape_cast %90 : vector<1x1x16x128xf32> to vector<16x128xf32>
    %92 = vector.shape_cast %89 : vector<16x128xf32> to vector<1x1x16x128xf32>
    tpu.vector_store %arg8[%c0_32, %c1, %c0_33, %c0_34], %92 {strides = array<i32>} : memref<4x2x16x128xf32, #tpu.memory_space<vmem>>, vector<1x1x16x128xf32>,
    %93 = vector.broadcast %64 : vector<16x1xf32> to vector<16x4xf32>
    %94 = arith.mulf %93, %76 : vector<16x4xf32>
    %95 = vector.broadcast %66 : vector<16x1xf32> to vector<16x4xf32>
    %96 = arith.mulf %95, %56 : vector<16x4xf32>
    %97 = arith.addf %94, %96 : vector<16x4xf32>
    %98 = arith.mulf %64, %62 : vector<16x1xf32>
    %99 = arith.mulf %66, %79 : vector<16x1xf32>
    %100 = arith.addf %98, %99 : vector<16x1xf32>
    %101 = vector.broadcast %64 : vector<16x1xf32> to vector<16x4xf32>
    %102 = arith.mulf %101, %72 : vector<16x4xf32>
    %103 = vector.broadcast %66 : vector<16x1xf32> to vector<16x4xf32>
    %104 = arith.mulf %103, %61 : vector<16x4xf32>
    %105 = arith.addf %102, %104 : vector<16x4xf32>
    %cst_35 = arith.constant 1.000000e+01 : f32
    %106 = vector.broadcast %cst_35 : f32 to vector<16x4xf32>
    %107 = arith.mulf %105, %106 : vector<16x4xf32>
    %cst_36 = arith.constant dense<0xFF800000> : vector<16xf32>
    %108 = vector.multi_reduction <maximumf>, %107, %cst_36 [1] : vector<16x4xf32> to vector<16xf32>
    %cst_37 = arith.constant 0xFF800000 : f32
    %109 = vector.broadcast %cst_37 : f32 to vector<16xf32>
    %110 = arith.maximumf %109, %108 : vector<16xf32>
    %111 = vector.shape_cast %110 : vector<16xf32> to vector<16x1xf32>
    %112 = vector.broadcast %111 : vector<16x1xf32> to vector<16x4xf32>
    %113 = arith.subf %107, %112 : vector<16x4xf32>
    %114 = math.exp %113 : vector<16x4xf32>
    %cst_38 = arith.constant dense<0.000000e+00> : vector<16xf32>
    %115 = vector.multi_reduction <add>, %114, %cst_38 [1] : vector<16x4xf32> to vector<16xf32>
    %116 = vector.shape_cast %115 : vector<16xf32> to vector<16x1xf32>
    %117 = vector.broadcast %116 : vector<16x1xf32> to vector<16x4xf32>
    %118 = arith.divf %114, %117 : vector<16x4xf32>
    %119 = vector.extract_strided_slice %46 {offsets = [0, 1, 0], sizes = [16, 1, 1], strides = [1, 1, 1]} : vector<16x4x2xf32> to vector<16x1x1xf32>
    %120 = vector.shape_cast %119 : vector<16x1x1xf32> to vector<16x1xf32>
    %121 = vector.extract_strided_slice %46 {offsets = [0, 1, 1], sizes = [16, 1, 1], strides = [1, 1, 1]} : vector<16x4x2xf32> to vector<16x1x1xf32>
    %122 = vector.shape_cast %121 : vector<16x1x1xf32> to vector<16x1xf32>
    %123 = vector.shape_cast %118 : vector<16x4xf32> to vector<16x4x1xf32>
    %124 = vector.shape_cast %55 : vector<4x4xf32> to vector<1x4x4xf32>
    %125 = vector.broadcast %123 : vector<16x4x1xf32> to vector<16x4x4xf32>
    %126 = vector.broadcast %124 : vector<1x4x4xf32> to vector<16x4x4xf32>
    %127 = arith.mulf %125, %126 : vector<16x4x4xf32>
    %cst_39 = arith.constant dense<0.000000e+00> : vector<16x4xf32>
    %128 = vector.multi_reduction <add>, %127, %cst_39 [1] : vector<16x4x4xf32> to vector<16x4xf32>
    %cst_40 = arith.constant 1.000000e+00 : f32
    %129 = vector.broadcast %cst_40 : f32 to vector<16x4xf32>
    %130 = arith.subf %129, %128 : vector<16x4xf32>
    %131 = arith.mulf %97, %130 : vector<16x4xf32>
    %132 = arith.addf %128, %131 : vector<16x4xf32>
    %133 = arith.mulf %97, %118 : vector<16x4xf32>
    %cst_41 = arith.constant dense<0.000000e+00> : vector<16xf32>
    %134 = vector.multi_reduction <add>, %133, %cst_41 [1] : vector<16x4xf32> to vector<16xf32>
    %135 = vector.shape_cast %134 : vector<16xf32> to vector<16x1xf32>
    %136 = arith.mulf %132, %128 : vector<16x4xf32>
    %cst_42 = arith.constant dense<0.000000e+00> : vector<16xf32>
    %137 = vector.multi_reduction <add>, %136, %cst_42 [1] : vector<16x4xf32> to vector<16xf32>
    %138 = vector.shape_cast %137 : vector<16xf32> to vector<16x1xf32>
    %139 = vector.broadcast %138 : vector<16x1xf32> to vector<16x128xf32>
    %140 = arith.mulf %139, %23 : vector<16x128xf32>
    %c1_43 = arith.constant 1 : index
    %c0_44 = arith.constant 0 : index
    %c0_45 = arith.constant 0 : index
    %c0_46 = arith.constant 0 : index
    %141 = vector.load %arg8[%c1_43, %c0_44, %c0_45, %c0_46] : memref<4x2x16x128xf32, #tpu.memory_space<vmem>>, vector<1x1x16x128xf32>
    %142 = vector.shape_cast %141 : vector<1x1x16x128xf32> to vector<16x128xf32>
    %143 = vector.shape_cast %140 : vector<16x128xf32> to vector<1x1x16x128xf32>
    tpu.vector_store %arg8[%c1_43, %c0_44, %c0_45, %c0_46], %143 {strides = array<i32>} : memref<4x2x16x128xf32, #tpu.memory_space<vmem>>, vector<1x1x16x128xf32>,
    %144 = vector.broadcast %135 : vector<16x1xf32> to vector<16x128xf32>
    %145 = arith.mulf %144, %23 : vector<16x128xf32>
    %c1_47 = arith.constant 1 : index
    %c1_48 = arith.constant 1 : index
    %c0_49 = arith.constant 0 : index
    %c0_50 = arith.constant 0 : index
    %146 = vector.load %arg8[%c1_47, %c1_48, %c0_49, %c0_50] : memref<4x2x16x128xf32, #tpu.memory_space<vmem>>, vector<1x1x16x128xf32>
    %147 = vector.shape_cast %146 : vector<1x1x16x128xf32> to vector<16x128xf32>
    %148 = vector.shape_cast %145 : vector<16x128xf32> to vector<1x1x16x128xf32>
    tpu.vector_store %arg8[%c1_47, %c1_48, %c0_49, %c0_50], %148 {strides = array<i32>} : memref<4x2x16x128xf32, #tpu.memory_space<vmem>>, vector<1x1x16x128xf32>,
    %149 = vector.broadcast %120 : vector<16x1xf32> to vector<16x4xf32>
    %150 = arith.mulf %149, %132 : vector<16x4xf32>
    %151 = vector.broadcast %122 : vector<16x1xf32> to vector<16x4xf32>
    %152 = arith.mulf %151, %97 : vector<16x4xf32>
    %153 = arith.addf %150, %152 : vector<16x4xf32>
    %154 = arith.mulf %120, %100 : vector<16x1xf32>
    %155 = arith.mulf %122, %135 : vector<16x1xf32>
    %156 = arith.addf %154, %155 : vector<16x1xf32>
    %157 = vector.broadcast %120 : vector<16x1xf32> to vector<16x4xf32>
    %158 = arith.mulf %157, %128 : vector<16x4xf32>
    %159 = vector.broadcast %122 : vector<16x1xf32> to vector<16x4xf32>
    %160 = arith.mulf %159, %118 : vector<16x4xf32>
    %161 = arith.addf %158, %160 : vector<16x4xf32>
    %cst_51 = arith.constant 1.000000e+01 : f32
    %162 = vector.broadcast %cst_51 : f32 to vector<16x4xf32>
    %163 = arith.mulf %161, %162 : vector<16x4xf32>
    %cst_52 = arith.constant dense<0xFF800000> : vector<16xf32>
    %164 = vector.multi_reduction <maximumf>, %163, %cst_52 [1] : vector<16x4xf32> to vector<16xf32>
    %cst_53 = arith.constant 0xFF800000 : f32
    %165 = vector.broadcast %cst_53 : f32 to vector<16xf32>
    %166 = arith.maximumf %165, %164 : vector<16xf32>
    %167 = vector.shape_cast %166 : vector<16xf32> to vector<16x1xf32>
    %168 = vector.broadcast %167 : vector<16x1xf32> to vector<16x4xf32>
    %169 = arith.subf %163, %168 : vector<16x4xf32>
    %170 = math.exp %169 : vector<16x4xf32>
    %cst_54 = arith.constant dense<0.000000e+00> : vector<16xf32>
    %171 = vector.multi_reduction <add>, %170, %cst_54 [1] : vector<16x4xf32> to vector<16xf32>
    %172 = vector.shape_cast %171 : vector<16xf32> to vector<16x1xf32>
    %173 = vector.broadcast %172 : vector<16x1xf32> to vector<16x4xf32>
    %174 = arith.divf %170, %173 : vector<16x4xf32>
    %175 = vector.extract_strided_slice %46 {offsets = [0, 2, 0], sizes = [16, 1, 1], strides = [1, 1, 1]} : vector<16x4x2xf32> to vector<16x1x1xf32>
    %176 = vector.shape_cast %175 : vector<16x1x1xf32> to vector<16x1xf32>
    %177 = vector.extract_strided_slice %46 {offsets = [0, 2, 1], sizes = [16, 1, 1], strides = [1, 1, 1]} : vector<16x4x2xf32> to vector<16x1x1xf32>
    %178 = vector.shape_cast %177 : vector<16x1x1xf32> to vector<16x1xf32>
    %179 = vector.shape_cast %174 : vector<16x4xf32> to vector<16x4x1xf32>
    %180 = vector.shape_cast %55 : vector<4x4xf32> to vector<1x4x4xf32>
    %181 = vector.broadcast %179 : vector<16x4x1xf32> to vector<16x4x4xf32>
    %182 = vector.broadcast %180 : vector<1x4x4xf32> to vector<16x4x4xf32>
    %183 = arith.mulf %181, %182 : vector<16x4x4xf32>
    %cst_55 = arith.constant dense<0.000000e+00> : vector<16x4xf32>
    %184 = vector.multi_reduction <add>, %183, %cst_55 [1] : vector<16x4x4xf32> to vector<16x4xf32>
    %cst_56 = arith.constant 1.000000e+00 : f32
    %185 = vector.broadcast %cst_56 : f32 to vector<16x4xf32>
    %186 = arith.subf %185, %184 : vector<16x4xf32>
    %187 = arith.mulf %153, %186 : vector<16x4xf32>
    %188 = arith.addf %184, %187 : vector<16x4xf32>
    %189 = arith.mulf %153, %174 : vector<16x4xf32>
    %cst_57 = arith.constant dense<0.000000e+00> : vector<16xf32>
    %190 = vector.multi_reduction <add>, %189, %cst_57 [1] : vector<16x4xf32> to vector<16xf32>
    %191 = vector.shape_cast %190 : vector<16xf32> to vector<16x1xf32>
    %192 = arith.mulf %188, %184 : vector<16x4xf32>
    %cst_58 = arith.constant dense<0.000000e+00> : vector<16xf32>
    %193 = vector.multi_reduction <add>, %192, %cst_58 [1] : vector<16x4xf32> to vector<16xf32>
    %194 = vector.shape_cast %193 : vector<16xf32> to vector<16x1xf32>
    %195 = vector.broadcast %194 : vector<16x1xf32> to vector<16x128xf32>
    %196 = arith.mulf %195, %23 : vector<16x128xf32>
    %c2 = arith.constant 2 : index
    %c0_59 = arith.constant 0 : index
    %c0_60 = arith.constant 0 : index
    %c0_61 = arith.constant 0 : index
    %197 = vector.load %arg8[%c2, %c0_59, %c0_60, %c0_61] : memref<4x2x16x128xf32, #tpu.memory_space<vmem>>, vector<1x1x16x128xf32>
    %198 = vector.shape_cast %197 : vector<1x1x16x128xf32> to vector<16x128xf32>
    %199 = vector.shape_cast %196 : vector<16x128xf32> to vector<1x1x16x128xf32>
    tpu.vector_store %arg8[%c2, %c0_59, %c0_60, %c0_61], %199 {strides = array<i32>} : memref<4x2x16x128xf32, #tpu.memory_space<vmem>>, vector<1x1x16x128xf32>,
    %200 = vector.broadcast %191 : vector<16x1xf32> to vector<16x128xf32>
    %201 = arith.mulf %200, %23 : vector<16x128xf32>
    %c2_62 = arith.constant 2 : index
    %c1_63 = arith.constant 1 : index
    %c0_64 = arith.constant 0 : index
    %c0_65 = arith.constant 0 : index
    %202 = vector.load %arg8[%c2_62, %c1_63, %c0_64, %c0_65] : memref<4x2x16x128xf32, #tpu.memory_space<vmem>>, vector<1x1x16x128xf32>
    %203 = vector.shape_cast %202 : vector<1x1x16x128xf32> to vector<16x128xf32>
    %204 = vector.shape_cast %201 : vector<16x128xf32> to vector<1x1x16x128xf32>
    tpu.vector_store %arg8[%c2_62, %c1_63, %c0_64, %c0_65], %204 {strides = array<i32>} : memref<4x2x16x128xf32, #tpu.memory_space<vmem>>, vector<1x1x16x128xf32>,
    %205 = vector.broadcast %176 : vector<16x1xf32> to vector<16x4xf32>
    %206 = arith.mulf %205, %188 : vector<16x4xf32>
    %207 = vector.broadcast %178 : vector<16x1xf32> to vector<16x4xf32>
    %208 = arith.mulf %207, %153 : vector<16x4xf32>
    %209 = arith.addf %206, %208 : vector<16x4xf32>
    %210 = arith.mulf %176, %156 : vector<16x1xf32>
    %211 = arith.mulf %178, %191 : vector<16x1xf32>
    %212 = arith.addf %210, %211 : vector<16x1xf32>
    %213 = vector.broadcast %176 : vector<16x1xf32> to vector<16x4xf32>
    %214 = arith.mulf %213, %184 : vector<16x4xf32>
    %215 = vector.broadcast %178 : vector<16x1xf32> to vector<16x4xf32>
    %216 = arith.mulf %215, %174 : vector<16x4xf32>
    %217 = arith.addf %214, %216 : vector<16x4xf32>
    %cst_66 = arith.constant 1.000000e+01 : f32
    %218 = vector.broadcast %cst_66 : f32 to vector<16x4xf32>
    %219 = arith.mulf %217, %218 : vector<16x4xf32>
    %cst_67 = arith.constant dense<0xFF800000> : vector<16xf32>
    %220 = vector.multi_reduction <maximumf>, %219, %cst_67 [1] : vector<16x4xf32> to vector<16xf32>
    %cst_68 = arith.constant 0xFF800000 : f32
    %221 = vector.broadcast %cst_68 : f32 to vector<16xf32>
    %222 = arith.maximumf %221, %220 : vector<16xf32>
    %223 = vector.shape_cast %222 : vector<16xf32> to vector<16x1xf32>
    %224 = vector.broadcast %223 : vector<16x1xf32> to vector<16x4xf32>
    %225 = arith.subf %219, %224 : vector<16x4xf32>
    %226 = math.exp %225 : vector<16x4xf32>
    %cst_69 = arith.constant dense<0.000000e+00> : vector<16xf32>
    %227 = vector.multi_reduction <add>, %226, %cst_69 [1] : vector<16x4xf32> to vector<16xf32>
    %228 = vector.shape_cast %227 : vector<16xf32> to vector<16x1xf32>
    %229 = vector.broadcast %228 : vector<16x1xf32> to vector<16x4xf32>
    %230 = arith.divf %226, %229 : vector<16x4xf32>
    %231 = vector.extract_strided_slice %46 {offsets = [0, 3, 0], sizes = [16, 1, 1], strides = [1, 1, 1]} : vector<16x4x2xf32> to vector<16x1x1xf32>
    %232 = vector.shape_cast %231 : vector<16x1x1xf32> to vector<16x1xf32>
    %233 = vector.extract_strided_slice %46 {offsets = [0, 3, 1], sizes = [16, 1, 1], strides = [1, 1, 1]} : vector<16x4x2xf32> to vector<16x1x1xf32>
    %234 = vector.shape_cast %233 : vector<16x1x1xf32> to vector<16x1xf32>
    %235 = vector.shape_cast %230 : vector<16x4xf32> to vector<16x4x1xf32>
    %236 = vector.shape_cast %55 : vector<4x4xf32> to vector<1x4x4xf32>
    %237 = vector.broadcast %235 : vector<16x4x1xf32> to vector<16x4x4xf32>
    %238 = vector.broadcast %236 : vector<1x4x4xf32> to vector<16x4x4xf32>
    %239 = arith.mulf %237, %238 : vector<16x4x4xf32>
    %cst_70 = arith.constant dense<0.000000e+00> : vector<16x4xf32>
    %240 = vector.multi_reduction <add>, %239, %cst_70 [1] : vector<16x4x4xf32> to vector<16x4xf32>
    %cst_71 = arith.constant 1.000000e+00 : f32
    %241 = vector.broadcast %cst_71 : f32 to vector<16x4xf32>
    %242 = arith.subf %241, %240 : vector<16x4xf32>
    %243 = arith.mulf %209, %242 : vector<16x4xf32>
    %244 = arith.addf %240, %243 : vector<16x4xf32>
    %245 = arith.mulf %209, %230 : vector<16x4xf32>
    %cst_72 = arith.constant dense<0.000000e+00> : vector<16xf32>
    %246 = vector.multi_reduction <add>, %245, %cst_72 [1] : vector<16x4xf32> to vector<16xf32>
    %247 = vector.shape_cast %246 : vector<16xf32> to vector<16x1xf32>
    %248 = arith.mulf %244, %240 : vector<16x4xf32>
    %cst_73 = arith.constant dense<0.000000e+00> : vector<16xf32>
    %249 = vector.multi_reduction <add>, %248, %cst_73 [1] : vector<16x4xf32> to vector<16xf32>
    %250 = vector.shape_cast %249 : vector<16xf32> to vector<16x1xf32>
    %251 = vector.broadcast %250 : vector<16x1xf32> to vector<16x128xf32>
    %252 = arith.mulf %251, %23 : vector<16x128xf32>
    %c3 = arith.constant 3 : index
    %c0_74 = arith.constant 0 : index
    %c0_75 = arith.constant 0 : index
    %c0_76 = arith.constant 0 : index
    %253 = vector.load %arg8[%c3, %c0_74, %c0_75, %c0_76] : memref<4x2x16x128xf32, #tpu.memory_space<vmem>>, vector<1x1x16x128xf32>
    %254 = vector.shape_cast %253 : vector<1x1x16x128xf32> to vector<16x128xf32>
    %255 = vector.shape_cast %252 : vector<16x128xf32> to vector<1x1x16x128xf32>
    tpu.vector_store %arg8[%c3, %c0_74, %c0_75, %c0_76], %255 {strides = array<i32>} : memref<4x2x16x128xf32, #tpu.memory_space<vmem>>, vector<1x1x16x128xf32>,
    %256 = vector.broadcast %247 : vector<16x1xf32> to vector<16x128xf32>
    %257 = arith.mulf %256, %23 : vector<16x128xf32>
    %c3_77 = arith.constant 3 : index
    %c1_78 = arith.constant 1 : index
    %c0_79 = arith.constant 0 : index
    %c0_80 = arith.constant 0 : index
    %258 = vector.load %arg8[%c3_77, %c1_78, %c0_79, %c0_80] : memref<4x2x16x128xf32, #tpu.memory_space<vmem>>, vector<1x1x16x128xf32>
    %259 = vector.shape_cast %258 : vector<1x1x16x128xf32> to vector<16x128xf32>
    %260 = vector.shape_cast %257 : vector<16x128xf32> to vector<1x1x16x128xf32>
    tpu.vector_store %arg8[%c3_77, %c1_78, %c0_79, %c0_80], %260 {strides = array<i32>} : memref<4x2x16x128xf32, #tpu.memory_space<vmem>>, vector<1x1x16x128xf32>,
    %261 = arith.mulf %232, %212 : vector<16x1xf32>
    %262 = arith.mulf %234, %247 : vector<16x1xf32>
    %263 = arith.addf %261, %262 : vector<16x1xf32>
    %264 = vector.broadcast %263 : vector<16x1xf32> to vector<16x128xf32>
    %265 = arith.mulf %264, %45 : vector<16x128xf32>
    %266 = arith.negf %265 : vector<16x128xf32>
    %267 = math.exp %266 : vector<16x128xf32>
    %cst_81 = arith.constant 1.000000e+00 : f32
    %268 = vector.broadcast %cst_81 : f32 to vector<16x128xf32>
    %269 = arith.addf %268, %267 : vector<16x128xf32>
    %270 = arith.divf %268, %269 : vector<16x128xf32>
    %c0_82 = arith.constant 0 : index
    %c0_83 = arith.constant 0 : index
    %271 = vector.load %arg7[%c0_82, %c0_83] : memref<16x128xf32, #tpu.memory_space<vmem>>, vector<16x128xf32>
    tpu.vector_store %arg7[%c0_82, %c0_83], %270 {strides = array<i32>} : memref<16x128xf32, #tpu.memory_space<vmem>>, vector<16x128xf32>,
    return
  }
  func.func @transform_0(%arg0: i32) -> (i32, i32, i32) {
    %c0_i32 = arith.constant 0 : i32
    %c0_i32_0 = arith.constant 0 : i32
    %c0_i32_1 = arith.constant 0 : i32
    return %arg0, %c0_i32, %c0_i32_0 : i32, i32, i32
  }
  func.func @transform_1(%arg0: i32) -> (i32, i32) {
    %c0_i32 = arith.constant 0 : i32
    %c0_i32_0 = arith.constant 0 : i32
    return %arg0, %c0_i32 : i32, i32
  }
  func.func @transform_2(%arg0: i32) -> (i32, i32, i32) {
    %c0_i32 = arith.constant 0 : i32
    %c0_i32_0 = arith.constant 0 : i32
    %c0_i32_1 = arith.constant 0 : i32
    return %arg0, %c0_i32, %c0_i32_0 : i32, i32, i32
  }
  func.func @transform_3(%arg0: i32) -> (i32, i32, i32) {
    %c0_i32 = arith.constant 0 : i32
    %c0_i32_0 = arith.constant 0 : i32
    %c0_i32_1 = arith.constant 0 : i32
    return %arg0, %c0_i32, %c0_i32_0 : i32, i32, i32
  }
  func.func @transform_4(%arg0: i32) -> (i32, i32) {
    %c0_i32 = arith.constant 0 : i32
    %c0_i32_0 = arith.constant 0 : i32
    %c0_i32_1 = arith.constant 0 : i32
    return %c0_i32, %c0_i32_0 : i32, i32
  }
  func.func @transform_5(%arg0: i32) -> (i32, i32) {
    %c0_i32 = arith.constant 0 : i32
    %c0_i32_0 = arith.constant 0 : i32
    %c0_i32_1 = arith.constant 0 : i32
    return %c0_i32, %c0_i32_0 : i32, i32
  }
  func.func @transform_6(%arg0: i32) -> (i32, i32) {
    %c0_i32 = arith.constant 0 : i32
    %c0_i32_0 = arith.constant 0 : i32
    return %arg0, %c0_i32 : i32, i32
  }
  func.func @transform_7(%arg0: i32) -> (i32, i32, i32, i32) {
    %c0_i32 = arith.constant 0 : i32
    %c0_i32_0 = arith.constant 0 : i32
    %c0_i32_1 = arith.constant 0 : i32
    %c0_i32_2 = arith.constant 0 : i32
    return %c0_i32, %c0_i32_0, %arg0, %c0_i32_1 : i32, i32, i32, i32
  }
}

</mosaic_0001>

<llo_original>
// kernel: tpu_custom_call.1
$region0: #{tpu_custom_call.1}
  #allocation0 [shape = 'u32[]', space=smem, size = 0x4, offset = 0x4, fixed_abs, tag = 'smem constant byte address 0x4 - core index']
  #allocation1 [shape = 'u32[144,128]{1,0:T(1,128)}', space=vmem, size = 0x12000, scoped, tag = 'internal scratch']
  %s0 = inlined_call_operand.hbm [shape: f32[16,32,128], index: 0, kind: input, shape index: {}]
  %s1 = inlined_call_operand.vmem [shape: f32[16,32], index: 1, kind: input, shape index: {}]
  %s2 = inlined_call_operand.hbm [shape: bf16[16,128,128], index: 2, kind: input, shape index: {}]
  %s3 = inlined_call_operand.vmem [shape: f32[16,4,2], index: 3, kind: input, shape index: {}]
  %s4 = inlined_call_operand.vmem [shape: f32[32,32], index: 4, kind: input, shape index: {}]
  %s5 = inlined_call_operand.vmem [shape: f32[1,32], index: 5, kind: input, shape index: {}]
  %s6 = inlined_call_operand.hbm [shape: f32[16,128], index: 6, kind: output, shape index: {0}]
  %s7 = inlined_call_operand.hbm [shape: f32[4,2,16,128], index: 7, kind: output, shape index: {1}]
  %8 = xla_tuple %s6, %s7
  %s9 = sld [smem:[#allocation0]]
  $region50: #{tpu_custom_call.1} parent=0
    _
  %s11 = ssub.s32 1, %s9
  %s12 = scalar_select 0, %s11, %s9
  $region1: #{tpu_custom_call.1} parent=0
    #allocation2 [shape = 'u8[262144]{0}', space=vmem, size = 0x40000, scoped, tag = 'input window, operand 0, single buffered']
    #allocation3 [shape = 's32[1]{0}', space=sflag, size = 0x4, scoped, tag = 'scoped memory for tpu_custom_call.1']
    #allocation4 [shape = 's32[1]{0}', space=sflag, size = 0x4, scoped, tag = 'scoped memory for tpu_custom_call.1']
    #allocation5 [shape = 'u8[524288]{0}', space=vmem, size = 0x80000, scoped, tag = 'input window, operand 2, single buffered']
    #allocation6 [shape = 's32[1]{0}', space=sflag, size = 0x4, scoped, tag = 'scoped memory for tpu_custom_call.1']
    #allocation7 [shape = 'u8[8192]{0}', space=vmem, size = 0x2000, scoped, tag = 'output window, operand 0, single buffered']
    #allocation8 [shape = 'u8[65536]{0}', space=vmem, size = 0x10000, scoped, tag = 'output window, operand 1, single buffered']
    #allocation9 [shape = 's32[1]{0}', space=sflag, size = 0x4, scoped, tag = 'scoped memory for tpu_custom_call.1']
    %13 = vsyncpa [#allocation3], 0
    %14 = vsyncpa [#allocation6], 0
    %15 = vsyncpa [#allocation4], 0
    %16 = vsyncpa [#allocation9], 0
    // Predicated region
    $region2: #{tpu_custom_call.1} parent=1 // pred_check
      _
    $region3: #{tpu_custom_call.1} parent=1 // pred_check_branch
      %18 = sbr.rel (0) target = $region5
    $region4: #{tpu_custom_call.1} parent=1 // pred_region
      %s20 = ssub.s32 8192, 8192
      %21 = vsyncadd [#allocation3], %s20
      %s22 = sshll.u32 [#allocation2], 4
      %s23 = int_to_ptr.vmem [resolvable:$true] %s22
      %28 = dma.hbm_to_vmem [thread:$0]  %s0, 8192, %s23, [#allocation3], 128, 128, 8
    $region5: #{tpu_custom_call.1} parent=1 // pred_fallthru
      _
    // Predicated region
    $region6: #{tpu_custom_call.1} parent=1 // pred_check
      _
    $region7: #{tpu_custom_call.1} parent=1 // pred_check_branch
      %30 = sbr.rel (0) target = $region9
    $region8: #{tpu_custom_call.1} parent=1 // pred_region
      _
    $region9: #{tpu_custom_call.1} parent=1 // pred_fallthru
      _
    // Predicated region
    $region10: #{tpu_custom_call.1} parent=1 // pred_check
      _
    $region11: #{tpu_custom_call.1} parent=1 // pred_check_branch
      %32 = sbr.rel (0) target = $region13
    $region12: #{tpu_custom_call.1} parent=1 // pred_region
      %s34 = ssub.s32 16384, 16384
      %35 = vsyncadd [#allocation6], %s34
      %s36 = sshll.u32 [#allocation5], 4
      %s37 = int_to_ptr.vmem [resolvable:$true] %s36
      %42 = dma.hbm_to_vmem [thread:$0]  %s2, 16384, %s37, [#allocation6], 64, 64, 4
    $region13: #{tpu_custom_call.1} parent=1 // pred_fallthru
      _
    // Predicated region
    $region14: #{tpu_custom_call.1} parent=1 // pred_check
      _
    $region15: #{tpu_custom_call.1} parent=1 // pred_check_branch
      %44 = sbr.rel (0) target = $region17
    $region16: #{tpu_custom_call.1} parent=1 // pred_region
      _
    $region17: #{tpu_custom_call.1} parent=1 // pred_fallthru
      _
    // Predicated region
    $region18: #{tpu_custom_call.1} parent=1 // pred_check
      _
    $region19: #{tpu_custom_call.1} parent=1 // pred_check_branch
      %46 = sbr.rel (0) target = $region21
    $region20: #{tpu_custom_call.1} parent=1 // pred_region
      _
    $region21: #{tpu_custom_call.1} parent=1 // pred_fallthru
      _
    // Predicated region
    $region22: #{tpu_custom_call.1} parent=1 // pred_check
      _
    $region23: #{tpu_custom_call.1} parent=1 // pred_check_branch
      %48 = sbr.rel (0) target = $region25
    $region24: #{tpu_custom_call.1} parent=1 // pred_region
      _
    $region25: #{tpu_custom_call.1} parent=1 // pred_fallthru
      _
    // Predicated region
    $region26: #{tpu_custom_call.1} parent=1 // pred_check
      _
    $region27: #{tpu_custom_call.1} parent=1 // pred_check_branch
      %50 = sbr.rel (0) target = $region29
    $region28: #{tpu_custom_call.1} parent=1 // pred_region
      %51 = dma.done [#allocation3], 8192
    $region29: #{tpu_custom_call.1} parent=1 // pred_fallthru
      _
    // Predicated region
    $region30: #{tpu_custom_call.1} parent=1 // pred_check
      _
    $region31: #{tpu_custom_call.1} parent=1 // pred_check_branch
      %53 = sbr.rel (0) target = $region33
    $region32: #{tpu_custom_call.1} parent=1 // pred_region
      %54 = dma.done [#allocation6], 16384
    $region33: #{tpu_custom_call.1} parent=1 // pred_fallthru
      _
    %v55 = vld [vmem:[#allocation2] sm:$0xff]
    %v56 = vld [vmem:[#allocation2 + $0x8] sm:$0xff]
    %v57 = vld [vmem:[#allocation2 + $0x10] sm:$0xff]
    %v58 = vld [vmem:[#allocation2 + $0x18] sm:$0xff]
    %v59 = vld [vmem:[#allocation2 + $0x20] sm:$0xff]
    %v60 = vld [vmem:[#allocation2 + $0x28] sm:$0xff]
    %v61 = vld [vmem:[#allocation2 + $0x30] sm:$0xff]
    %v62 = vld [vmem:[#allocation2 + $0x38] sm:$0xff]
    %v63 = vld [vmem:[#allocation2 + $0x40] sm:$0xff]
    %v64 = vld [vmem:[#allocation2 + $0x48] sm:$0xff]
    %v65 = vld [vmem:[#allocation2 + $0x50] sm:$0xff]
    %v66 = vld [vmem:[#allocation2 + $0x58] sm:$0xff]
    %v67 = vld [vmem:[#allocation2 + $0x60] sm:$0xff]
    %v68 = vld [vmem:[#allocation2 + $0x68] sm:$0xff]
    %v69 = vld [vmem:[#allocation2 + $0x70] sm:$0xff]
    %v70 = vld [vmem:[#allocation2 + $0x78] sm:$0xff]
    %v71 = vld [vmem:[#allocation2 + $0x80] sm:$0xff]
    %v72 = vld [vmem:[#allocation2 + $0x88] sm:$0xff]
    %v73 = vld [vmem:[#allocation2 + $0x90] sm:$0xff]
    %v74 = vld [vmem:[#allocation2 + $0x98] sm:$0xff]
    %v75 = vld [vmem:[#allocation2 + $0xa0] sm:$0xff]
    %v76 = vld [vmem:[#allocation2 + $0xa8] sm:$0xff]
    %v77 = vld [vmem:[#allocation2 + $0xb0] sm:$0xff]
    %v78 = vld [vmem:[#allocation2 + $0xb8] sm:$0xff]
    %v79 = vld [vmem:[#allocation2 + $0xc0] sm:$0xff]
    %v80 = vld [vmem:[#allocation2 + $0xc8] sm:$0xff]
    %v81 = vld [vmem:[#allocation2 + $0xd0] sm:$0xff]
    %v82 = vld [vmem:[#allocation2 + $0xd8] sm:$0xff]
    %v83 = vld [vmem:[#allocation2 + $0xe0] sm:$0xff]
    %v84 = vld [vmem:[#allocation2 + $0xe8] sm:$0xff]
    %v85 = vld [vmem:[#allocation2 + $0xf0] sm:$0xff]
    %v86 = vld [vmem:[#allocation2 + $0xf8] sm:$0xff]
    %v87 = vld [vmem:[#allocation2 + $0x100] sm:$0xff]
    %v88 = vld [vmem:[#allocation2 + $0x108] sm:$0xff]
    %v89 = vld [vmem:[#allocation2 + $0x110] sm:$0xff]
    %v90 = vld [vmem:[#allocation2 + $0x118] sm:$0xff]
    %v91 = vld [vmem:[#allocation2 + $0x120] sm:$0xff]
    %v92 = vld [vmem:[#allocation2 + $0x128] sm:$0xff]
    %v93 = vld [vmem:[#allocation2 + $0x130] sm:$0xff]
    %v94 = vld [vmem:[#allocation2 + $0x138] sm:$0xff]
    %v95 = vld [vmem:[#allocation2 + $0x140] sm:$0xff]
    %v96 = vld [vmem:[#allocation2 + $0x148] sm:$0xff]
    %v97 = vld [vmem:[#allocation2 + $0x150] sm:$0xff]
    %v98 = vld [vmem:[#allocation2 + $0x158] sm:$0xff]
    %v99 = vld [vmem:[#allocation2 + $0x160] sm:$0xff]
    %v100 = vld [vmem:[#allocation2 + $0x168] sm:$0xff]
    %v101 = vld [vmem:[#allocation2 + $0x170] sm:$0xff]
    %v102 = vld [vmem:[#allocation2 + $0x178] sm:$0xff]
    %v103 = vld [vmem:[#allocation2 + $0x180] sm:$0xff]
    %v104 = vld [vmem:[#allocation2 + $0x188] sm:$0xff]
    %v105 = vld [vmem:[#allocation2 + $0x190] sm:$0xff]
    %v106 = vld [vmem:[#allocation2 + $0x198] sm:$0xff]
    %v107 = vld [vmem:[#allocation2 + $0x1a0] sm:$0xff]
    %v108 = vld [vmem:[#allocation2 + $0x1a8] sm:$0xff]
    %v109 = vld [vmem:[#allocation2 + $0x1b0] sm:$0xff]
    %v110 = vld [vmem:[#allocation2 + $0x1b8] sm:$0xff]
    %v111 = vld [vmem:[#allocation2 + $0x1c0] sm:$0xff]
    %v112 = vld [vmem:[#allocation2 + $0x1c8] sm:$0xff]
    %v113 = vld [vmem:[#allocation2 + $0x1d0] sm:$0xff]
    %v114 = vld [vmem:[#allocation2 + $0x1d8] sm:$0xff]
    %v115 = vld [vmem:[#allocation2 + $0x1e0] sm:$0xff]
    %v116 = vld [vmem:[#allocation2 + $0x1e8] sm:$0xff]
    %v117 = vld [vmem:[#allocation2 + $0x1f0] sm:$0xff]
    %v118 = vld [vmem:[#allocation2 + $0x1f8] sm:$0xff]
    %v119 = vld [vmem:[%s1] sm:$0xff]
    %v120 = vld [vmem:[%s1 + $0x8] sm:$0xff]
    %v121 = vlaneseq
    %v122 = vand.u32 %v121, 127
    %vm123 = vcmp.lt.s32.totalorder %v122, 8
    %v124 = vlaneseq
    %v125 = vshrl.u32 %v124, 7
    %v126 = vsub.s32 0, %v125
    %v127 = vrot.slane %v119, %v126
    %129 = vbcast.lane.b32.xlu0 %v127, 256
    %v130 = vpop.permute.xlu0 %129
    %s132 = sor.u32 256, 8
    %133 = vbcast.lane.b32.xlu0 %v127, %s132
    %v134 = vpop.permute.xlu0 %133
    %s136 = sor.u32 256, 16
    %137 = vbcast.lane.b32.xlu0 %v127, %s136
    %v138 = vpop.permute.xlu0 %137
    %s140 = sor.u32 256, 24
    %141 = vbcast.lane.b32.xlu0 %v127, %s140
    %v142 = vpop.permute.xlu0 %141
    %v143 = vlaneseq
    %v144 = vshrl.u32 %v143, 7
    %v145 = vsub.s32 1, %v144
    %v146 = vrot.slane %v119, %v145
    %148 = vbcast.lane.b32.xlu0 %v146, 256
    %v149 = vpop.permute.xlu0 %148
    %s151 = sor.u32 256, 8
    %152 = vbcast.lane.b32.xlu0 %v146, %s151
    %v153 = vpop.permute.xlu0 %152
    %s155 = sor.u32 256, 16
    %156 = vbcast.lane.b32.xlu0 %v146, %s155
    %v157 = vpop.permute.xlu0 %156
    %s159 = sor.u32 256, 24
    %160 = vbcast.lane.b32.xlu0 %v146, %s159
    %v161 = vpop.permute.xlu0 %160
    %v162 = vlaneseq
    %v163 = vshrl.u32 %v162, 7
    %v164 = vsub.s32 2, %v163
    %v165 = vrot.slane %v119, %v164
    %167 = vbcast.lane.b32.xlu0 %v165, 256
    %v168 = vpop.permute.xlu0 %167
    %s170 = sor.u32 256, 8
    %171 = vbcast.lane.b32.xlu0 %v165, %s170
    %v172 = vpop.permute.xlu0 %171
    %s174 = sor.u32 256, 16
    %175 = vbcast.lane.b32.xlu0 %v165, %s174
    %v176 = vpop.permute.xlu0 %175
    %s178 = sor.u32 256, 24
    %179 = vbcast.lane.b32.xlu0 %v165, %s178
    %v180 = vpop.permute.xlu0 %179
    %v181 = vlaneseq
    %v182 = vshrl.u32 %v181, 7
    %v183 = vsub.s32 3, %v182
    %v184 = vrot.slane %v119, %v183
    %186 = vbcast.lane.b32.xlu0 %v184, 256
    %v187 = vpop.permute.xlu0 %186
    %s189 = sor.u32 256, 8
    %190 = vbcast.lane.b32.xlu0 %v184, %s189
    %v191 = vpop.permute.xlu0 %190
    %s193 = sor.u32 256, 16
    %194 = vbcast.lane.b32.xlu0 %v184, %s193
    %v195 = vpop.permute.xlu0 %194
    %s197 = sor.u32 256, 24
    %198 = vbcast.lane.b32.xlu0 %v184, %s197
    %v199 = vpop.permute.xlu0 %198
    %v200 = vlaneseq
    %v201 = vshrl.u32 %v200, 7
    %v202 = vsub.s32 4, %v201
    %v203 = vrot.slane %v119, %v202
    %205 = vbcast.lane.b32.xlu0 %v203, 256
    %v206 = vpop.permute.xlu0 %205
    %s208 = sor.u32 256, 8
    %209 = vbcast.lane.b32.xlu0 %v203, %s208
    %v210 = vpop.permute.xlu0 %209
    %s212 = sor.u32 256, 16
    %213 = vbcast.lane.b32.xlu0 %v203, %s212
    %v214 = vpop.permute.xlu0 %213
    %s216 = sor.u32 256, 24
    %217 = vbcast.lane.b32.xlu0 %v203, %s216
    %v218 = vpop.permute.xlu0 %217
    %v219 = vlaneseq
    %v220 = vshrl.u32 %v219, 7
    %v221 = vsub.s32 5, %v220
    %v222 = vrot.slane %v119, %v221
    %224 = vbcast.lane.b32.xlu0 %v222, 256
    %v225 = vpop.permute.xlu0 %224
    %s227 = sor.u32 256, 8
    %228 = vbcast.lane.b32.xlu0 %v222, %s227
    %v229 = vpop.permute.xlu0 %228
    %s231 = sor.u32 256, 16
    %232 = vbcast.lane.b32.xlu0 %v222, %s231
    %v233 = vpop.permute.xlu0 %232
    %s235 = sor.u32 256, 24
    %236 = vbcast.lane.b32.xlu0 %v222, %s235
    %v237 = vpop.permute.xlu0 %236
    %v238 = vlaneseq
    %v239 = vshrl.u32 %v238, 7
    %v240 = vsub.s32 6, %v239
    %v241 = vrot.slane %v119, %v240
    %243 = vbcast.lane.b32.xlu0 %v241, 256
    %v244 = vpop.permute.xlu0 %243
    %s246 = sor.u32 256, 8
    %247 = vbcast.lane.b32.xlu0 %v241, %s246
    %v248 = vpop.permute.xlu0 %247
    %s250 = sor.u32 256, 16
    %251 = vbcast.lane.b32.xlu0 %v241, %s250
    %v252 = vpop.permute.xlu0 %251
    %s254 = sor.u32 256, 24
    %255 = vbcast.lane.b32.xlu0 %v241, %s254
    %v256 = vpop.permute.xlu0 %255
    %v257 = vlaneseq
    %v258 = vshrl.u32 %v257, 7
    %v259 = vsub.s32 7, %v258
    %v260 = vrot.slane %v119, %v259
    %262 = vbcast.lane.b32.xlu0 %v260, 256
    %v263 = vpop.permute.xlu0 %262
    %s265 = sor.u32 256, 8
    %266 = vbcast.lane.b32.xlu0 %v260, %s265
    %v267 = vpop.permute.xlu0 %266
    %s269 = sor.u32 256, 16
    %270 = vbcast.lane.b32.xlu0 %v260, %s269
    %v271 = vpop.permute.xlu0 %270
    %s273 = sor.u32 256, 24
    %274 = vbcast.lane.b32.xlu0 %v260, %s273
    %v275 = vpop.permute.xlu0 %274
    %v276 = vlaneseq
    %v277 = vshrl.u32 %v276, 7
    %v278 = vsub.s32 0, %v277
    %v279 = vrot.slane %v120, %v278
    %281 = vbcast.lane.b32.xlu0 %v279, 256
    %v282 = vpop.permute.xlu0 %281
    %s284 = sor.u32 256, 8
    %285 = vbcast.lane.b32.xlu0 %v279, %s284
    %v286 = vpop.permute.xlu0 %285
    %s288 = sor.u32 256, 16
    %289 = vbcast.lane.b32.xlu0 %v279, %s288
    %v290 = vpop.permute.xlu0 %289
    %s292 = sor.u32 256, 24
    %293 = vbcast.lane.b32.xlu0 %v279, %s292
    %v294 = vpop.permute.xlu0 %293
    %v295 = vlaneseq
    %v296 = vshrl.u32 %v295, 7
    %v297 = vsub.s32 1, %v296
    %v298 = vrot.slane %v120, %v297
    %300 = vbcast.lane.b32.xlu0 %v298, 256
    %v301 = vpop.permute.xlu0 %300
    %s303 = sor.u32 256, 8
    %304 = vbcast.lane.b32.xlu0 %v298, %s303
    %v305 = vpop.permute.xlu0 %304
    %s307 = sor.u32 256, 16
    %308 = vbcast.lane.b32.xlu0 %v298, %s307
    %v309 = vpop.permute.xlu0 %308
    %s311 = sor.u32 256, 24
    %312 = vbcast.lane.b32.xlu0 %v298, %s311
    %v313 = vpop.permute.xlu0 %312
    %v314 = vlaneseq
    %v315 = vshrl.u32 %v314, 7
    %v316 = vsub.s32 2, %v315
    %v317 = vrot.slane %v120, %v316
    %319 = vbcast.lane.b32.xlu0 %v317, 256
    %v320 = vpop.permute.xlu0 %319
    %s322 = sor.u32 256, 8
    %323 = vbcast.lane.b32.xlu0 %v317, %s322
    %v324 = vpop.permute.xlu0 %323
    %s326 = sor.u32 256, 16
    %327 = vbcast.lane.b32.xlu0 %v317, %s326
    %v328 = vpop.permute.xlu0 %327
    %s330 = sor.u32 256, 24
    %331 = vbcast.lane.b32.xlu0 %v317, %s330
    %v332 = vpop.permute.xlu0 %331
    %v333 = vlaneseq
    %v334 = vshrl.u32 %v333, 7
    %v335 = vsub.s32 3, %v334
    %v336 = vrot.slane %v120, %v335
    %338 = vbcast.lane.b32.xlu0 %v336, 256
    %v339 = vpop.permute.xlu0 %338
    %s341 = sor.u32 256, 8
    %342 = vbcast.lane.b32.xlu0 %v336, %s341
    %v343 = vpop.permute.xlu0 %342
    %s345 = sor.u32 256, 16
    %346 = vbcast.lane.b32.xlu0 %v336, %s345
    %v347 = vpop.permute.xlu0 %346
    %s349 = sor.u32 256, 24
    %350 = vbcast.lane.b32.xlu0 %v336, %s349
    %v351 = vpop.permute.xlu0 %350
    %v352 = vlaneseq
    %v353 = vshrl.u32 %v352, 7
    %v354 = vsub.s32 4, %v353
    %v355 = vrot.slane %v120, %v354
    %357 = vbcast.lane.b32.xlu0 %v355, 256
    %v358 = vpop.permute.xlu0 %357
    %s360 = sor.u32 256, 8
    %361 = vbcast.lane.b32.xlu0 %v355, %s360
    %v362 = vpop.permute.xlu0 %361
    %s364 = sor.u32 256, 16
    %365 = vbcast.lane.b32.xlu0 %v355, %s364
    %v366 = vpop.permute.xlu0 %365
    %s368 = sor.u32 256, 24
    %369 = vbcast.lane.b32.xlu0 %v355, %s368
    %v370 = vpop.permute.xlu0 %369
    %v371 = vlaneseq
    %v372 = vshrl.u32 %v371, 7
    %v373 = vsub.s32 5, %v372
    %v374 = vrot.slane %v120, %v373
    %376 = vbcast.lane.b32.xlu0 %v374, 256
    %v377 = vpop.permute.xlu0 %376
    %s379 = sor.u32 256, 8
    %380 = vbcast.lane.b32.xlu0 %v374, %s379
    %v381 = vpop.permute.xlu0 %380
    %s383 = sor.u32 256, 16
    %384 = vbcast.lane.b32.xlu0 %v374, %s383
    %v385 = vpop.permute.xlu0 %384
    %s387 = sor.u32 256, 24
    %388 = vbcast.lane.b32.xlu0 %v374, %s387
    %v389 = vpop.permute.xlu0 %388
    %v390 = vlaneseq
    %v391 = vshrl.u32 %v390, 7
    %v392 = vsub.s32 6, %v391
    %v393 = vrot.slane %v120, %v392
    %395 = vbcast.lane.b32.xlu0 %v393, 256
    %v396 = vpop.permute.xlu0 %395
    %s398 = sor.u32 256, 8
    %399 = vbcast.lane.b32.xlu0 %v393, %s398
    %v400 = vpop.permute.xlu0 %399
    %s402 = sor.u32 256, 16
    %403 = vbcast.lane.b32.xlu0 %v393, %s402
    %v404 = vpop.permute.xlu0 %403
    %s406 = sor.u32 256, 24
    %407 = vbcast.lane.b32.xlu0 %v393, %s406
    %v408 = vpop.permute.xlu0 %407
    %v409 = vlaneseq
    %v410 = vshrl.u32 %v409, 7
    %v411 = vsub.s32 7, %v410
    %v412 = vrot.slane %v120, %v411
    %414 = vbcast.lane.b32.xlu0 %v412, 256
    %v415 = vpop.permute.xlu0 %414
    %s417 = sor.u32 256, 8
    %418 = vbcast.lane.b32.xlu0 %v412, %s417
    %v419 = vpop.permute.xlu0 %418
    %s421 = sor.u32 256, 16
    %422 = vbcast.lane.b32.xlu0 %v412, %s421
    %v423 = vpop.permute.xlu0 %422
    %s425 = sor.u32 256, 24
    %426 = vbcast.lane.b32.xlu0 %v412, %s425
    %v427 = vpop.permute.xlu0 %426
    %v428 = vmul.f32 %v55, %v130
    %v429 = vmul.f32 %v56, %v134
    %v430 = vmul.f32 %v57, %v138
    %v431 = vmul.f32 %v58, %v142
    %v432 = vmul.f32 %v59, %v149
    %v433 = vmul.f32 %v60, %v153
    %v434 = vmul.f32 %v61, %v157
    %v435 = vmul.f32 %v62, %v161
    %v436 = vmul.f32 %v63, %v168
    %v437 = vmul.f32 %v64, %v172
    %v438 = vmul.f32 %v65, %v176
    %v439 = vmul.f32 %v66, %v180
    %v440 = vmul.f32 %v67, %v187
    %v441 = vmul.f32 %v68, %v191
    %v442 = vmul.f32 %v69, %v195
    %v443 = vmul.f32 %v70, %v199
    %v444 = vmul.f32 %v71, %v206
    %v445 = vmul.f32 %v72, %v210
    %v446 = vmul.f32 %v73, %v214
    %v447 = vmul.f32 %v74, %v218
    %v448 = vmul.f32 %v75, %v225
    %v449 = vmul.f32 %v76, %v229
    %v450 = vmul.f32 %v77, %v233
    %v451 = vmul.f32 %v78, %v237
    %v452 = vmul.f32 %v79, %v244
    %v453 = vmul.f32 %v80, %v248
    %v454 = vmul.f32 %v81, %v252
    %v455 = vmul.f32 %v82, %v256
    %v456 = vmul.f32 %v83, %v263
    %v457 = vmul.f32 %v84, %v267
    %v458 = vmul.f32 %v85, %v271
    %v459 = vmul.f32 %v86, %v275
    %v460 = vmul.f32 %v87, %v282
    %v461 = vmul.f32 %v88, %v286
    %v462 = vmul.f32 %v89, %v290
    %v463 = vmul.f32 %v90, %v294
    %v464 = vmul.f32 %v91, %v301
    %v465 = vmul.f32 %v92, %v305
    %v466 = vmul.f32 %v93, %v309
    %v467 = vmul.f32 %v94, %v313
    %v468 = vmul.f32 %v95, %v320
    %v469 = vmul.f32 %v96, %v324
    %v470 = vmul.f32 %v97, %v328
    %v471 = vmul.f32 %v98, %v332
    %v472 = vmul.f32 %v99, %v339
    %v473 = vmul.f32 %v100, %v343
    %v474 = vmul.f32 %v101, %v347
    %v475 = vmul.f32 %v102, %v351
    %v476 = vmul.f32 %v103, %v358
    %v477 = vmul.f32 %v104, %v362
    %v478 = vmul.f32 %v105, %v366
    %v479 = vmul.f32 %v106, %v370
    %v480 = vmul.f32 %v107, %v377
    %v481 = vmul.f32 %v108, %v381
    %v482 = vmul.f32 %v109, %v385
    %v483 = vmul.f32 %v110, %v389
    %v484 = vmul.f32 %v111, %v396
    %v485 = vmul.f32 %v112, %v400
    %v486 = vmul.f32 %v113, %v404
    %v487 = vmul.f32 %v114, %v408
    %v488 = vmul.f32 %v115, %v415
    %v489 = vmul.f32 %v116, %v419
    %v490 = vmul.f32 %v117, %v423
    %v491 = vmul.f32 %v118, %v427
    %v492 = vadd.f32 %v428, %v429
    %v493 = vadd.f32 %v492, %v430
    %v494 = vadd.f32 %v493, %v431
    %v495 = vrot.slane %v494, 4
    %v496 = vadd.f32 %v494, %v495
    %v497 = vrot.slane %v496, 2
    %v498 = vadd.f32 %v496, %v497
    %v499 = vrot.slane %v498, 1
    %v500 = vadd.f32 %v498, %v499
    %v501 = vadd.f32 %v432, %v433
    %v502 = vadd.f32 %v501, %v434
    %v503 = vadd.f32 %v502, %v435
    %v504 = vrot.slane %v503, 4
    %v505 = vadd.f32 %v503, %v504
    %v506 = vrot.slane %v505, 2
    %v507 = vadd.f32 %v505, %v506
    %v508 = vrot.slane %v507, 1
    %v509 = vadd.f32 %v507, %v508
    %v510 = vadd.f32 %v436, %v437
    %v511 = vadd.f32 %v510, %v438
    %v512 = vadd.f32 %v511, %v439
    %v513 = vrot.slane %v512, 4
    %v514 = vadd.f32 %v512, %v513
    %v515 = vrot.slane %v514, 2
    %v516 = vadd.f32 %v514, %v515
    %v517 = vrot.slane %v516, 1
    %v518 = vadd.f32 %v516, %v517
    %v519 = vadd.f32 %v440, %v441
    %v520 = vadd.f32 %v519, %v442
    %v521 = vadd.f32 %v520, %v443
    %v522 = vrot.slane %v521, 4
    %v523 = vadd.f32 %v521, %v522
    %v524 = vrot.slane %v523, 2
    %v525 = vadd.f32 %v523, %v524
    %v526 = vrot.slane %v525, 1
    %v527 = vadd.f32 %v525, %v526
    %v528 = vadd.f32 %v444, %v445
    %v529 = vadd.f32 %v528, %v446
    %v530 = vadd.f32 %v529, %v447
    %v531 = vrot.slane %v530, 4
    %v532 = vadd.f32 %v530, %v531
    %v533 = vrot.slane %v532, 2
    %v534 = vadd.f32 %v532, %v533
    %v535 = vrot.slane %v534, 1
    %v536 = vadd.f32 %v534, %v535
    %v537 = vadd.f32 %v448, %v449
    %v538 = vadd.f32 %v537, %v450
    %v539 = vadd.f32 %v538, %v451
    %v540 = vrot.slane %v539, 4
    %v541 = vadd.f32 %v539, %v540
    %v542 = vrot.slane %v541, 2
    %v543 = vadd.f32 %v541, %v542
    %v544 = vrot.slane %v543, 1
    %v545 = vadd.f32 %v543, %v544
    %v546 = vadd.f32 %v452, %v453
    %v547 = vadd.f32 %v546, %v454
    %v548 = vadd.f32 %v547, %v455
    %v549 = vrot.slane %v548, 4
    %v550 = vadd.f32 %v548, %v549
    %v551 = vrot.slane %v550, 2
    %v552 = vadd.f32 %v550, %v551
    %v553 = vrot.slane %v552, 1
    %v554 = vadd.f32 %v552, %v553
    %v555 = vadd.f32 %v456, %v457
    %v556 = vadd.f32 %v555, %v458
    %v557 = vadd.f32 %v556, %v459
    %v558 = vrot.slane %v557, 4
    %v559 = vadd.f32 %v557, %v558
    %v560 = vrot.slane %v559, 2
    %v561 = vadd.f32 %v559, %v560
    %v562 = vrot.slane %v561, 1
    %v563 = vadd.f32 %v561, %v562
    %v564 = vadd.f32 %v460, %v461
    %v565 = vadd.f32 %v564, %v462
    %v566 = vadd.f32 %v565, %v463
    %v567 = vrot.slane %v566, 4
    %v568 = vadd.f32 %v566, %v567
    %v569 = vrot.slane %v568, 2
    %v570 = vadd.f32 %v568, %v569
    %v571 = vrot.slane %v570, 1
    %v572 = vadd.f32 %v570, %v571
    %v573 = vadd.f32 %v464, %v465
    %v574 = vadd.f32 %v573, %v466
    %v575 = vadd.f32 %v574, %v467
    %v576 = vrot.slane %v575, 4
    %v577 = vadd.f32 %v575, %v576
    %v578 = vrot.slane %v577, 2
    %v579 = vadd.f32 %v577, %v578
    %v580 = vrot.slane %v579, 1
    %v581 = vadd.f32 %v579, %v580
    %v582 = vadd.f32 %v468, %v469
    %v583 = vadd.f32 %v582, %v470
    %v584 = vadd.f32 %v583, %v471
    %v585 = vrot.slane %v584, 4
    %v586 = vadd.f32 %v584, %v585
    %v587 = vrot.slane %v586, 2
    %v588 = vadd.f32 %v586, %v587
    %v589 = vrot.slane %v588, 1
    %v590 = vadd.f32 %v588, %v589
    %v591 = vadd.f32 %v472, %v473
    %v592 = vadd.f32 %v591, %v474
    %v593 = vadd.f32 %v592, %v475
    %v594 = vrot.slane %v593, 4
    %v595 = vadd.f32 %v593, %v594
    %v596 = vrot.slane %v595, 2
    %v597 = vadd.f32 %v595, %v596
    %v598 = vrot.slane %v597, 1
    %v599 = vadd.f32 %v597, %v598
    %v600 = vadd.f32 %v476, %v477
    %v601 = vadd.f32 %v600, %v478
    %v602 = vadd.f32 %v601, %v479
    %v603 = vrot.slane %v602, 4
    %v604 = vadd.f32 %v602, %v603
    %v605 = vrot.slane %v604, 2
    %v606 = vadd.f32 %v604, %v605
    %v607 = vrot.slane %v606, 1
    %v608 = vadd.f32 %v606, %v607
    %v609 = vadd.f32 %v480, %v481
    %v610 = vadd.f32 %v609, %v482
    %v611 = vadd.f32 %v610, %v483
    %v612 = vrot.slane %v611, 4
    %v613 = vadd.f32 %v611, %v612
    %v614 = vrot.slane %v613, 2
    %v615 = vadd.f32 %v613, %v614
    %v616 = vrot.slane %v615, 1
    %v617 = vadd.f32 %v615, %v616
    %v618 = vadd.f32 %v484, %v485
    %v619 = vadd.f32 %v618, %v486
    %v620 = vadd.f32 %v619, %v487
    %v621 = vrot.slane %v620, 4
    %v622 = vadd.f32 %v620, %v621
    %v623 = vrot.slane %v622, 2
    %v624 = vadd.f32 %v622, %v623
    %v625 = vrot.slane %v624, 1
    %v626 = vadd.f32 %v624, %v625
    %v627 = vadd.f32 %v488, %v489
    %v628 = vadd.f32 %v627, %v490
    %v629 = vadd.f32 %v628, %v491
    %v630 = vrot.slane %v629, 4
    %v631 = vadd.f32 %v629, %v630
    %v632 = vrot.slane %v631, 2
    %v633 = vadd.f32 %v631, %v632
    %v634 = vrot.slane %v633, 1
    %v635 = vadd.f32 %v633, %v634
    %v636 = vsel %vm123, 1, 0
    %vm637 = vcmp.eq.s32.totalorder %v636, 1
    %vm654 = vcmask 1041409
    %v655 = vsel %vm654, %v509, %v500
    %vm656 = vcmask 1042434
    %v657 = vsel %vm656, %v518, %v655
    %vm658 = vcmask 1043459
    %v659 = vsel %vm658, %v527, %v657
    %vm660 = vcmask 1044484
    %v661 = vsel %vm660, %v536, %v659
    %vm662 = vcmask 1045509
    %v663 = vsel %vm662, %v545, %v661
    %vm664 = vcmask 1046534
    %v665 = vsel %vm664, %v554, %v663
    %vm666 = vcmask 1047559
    %v667 = vsel %vm666, %v563, %v665
    %v668 = vsel %vm654, %v581, %v572
    %v669 = vsel %vm656, %v590, %v668
    %v670 = vsel %vm658, %v599, %v669
    %v671 = vsel %vm660, %v608, %v670
    %v672 = vsel %vm662, %v617, %v671
    %v673 = vsel %vm664, %v626, %v672
    %v674 = vsel %vm666, %v635, %v673
    %v677 = vsel %vm637, %v667, -1e+30
    %v678 = vsel %vm637, %v674, -1e+30
    %679 = vmax.xlane.f32.xlu0 %v677
    %v680 = vpop.xlane.xlu0 %679
    %681 = vmax.xlane.f32.xlu0 %v678
    %v682 = vpop.xlane.xlu0 %681
    %v683 = vsub.f32 %v677, %v680
    %v684 = vsub.f32 %v678, %v682
    %v685 = vmul.f32 %v683, 1.442695
    %v686 = vpow.pop %v685
    %v687 = vmul.f32 %v684, 1.442695
    %v688 = vpow.pop %v687
    %689 = vadd.xlane.f32.xlu0 %v686
    %v690 = vpop.xlane.xlu0 %689
    %691 = vadd.xlane.f32.xlu0 %v688
    %v692 = vpop.xlane.xlu0 %691
    %v693 = vrcp.pop %v690
    %v694 = vmul.f32 %v686, %v693
    %v695 = vrcp.pop %v692
    %v696 = vmul.f32 %v688, %v695
    %v697 = vld [vmem:[%s4] sm:$0xff]
    %v698 = vld [vmem:[%s4 + $0x8] sm:$0xff]
    %v699 = vld [vmem:[%s4 + $0x10] sm:$0xff]
    %v700 = vld [vmem:[%s4 + $0x18] sm:$0xff]
    %v701 = vld [vmem:[%s5] sm:$0x1]
    %v703 = vlaneseq
    %v704 = vshrl.u32 %v703, 7
    %v705 = vsub.s32 0, %v704
    %v706 = vrot.slane %v701, %v705
    %vm708 = vcmask 261120
    %v710 = vsel %vm708, %v119, 0
    %v713 = vsel %vm708, %v120, 0
    %715 = vmatprep.subr.mxu0 0.0
    %716 = vmatpush1.msra.mxu0 %v697
    %717 = vmatprep.subr.mxu0 0.0
    %718 = vmatpush1.msra.mxu0 %v698
    %719 = vmatprep.subr.mxu0 0.0
    %720 = vmatpush1.msra.mxu0 %v699
    %721 = vmatprep.subr.mxu0 0.0
    %722 = vmatpush1.msra.mxu0 %v700
    %723 = vmatprep.subr.mxu0 0.0
    %724 = vmatpush1.msra.mxu0 0.0
    %725 = vmatprep.subr.mxu0 0.0
    %726 = vmatpush1.msra.mxu0 0.0
    %727 = vmatprep.subr.mxu0 0.0
    %728 = vmatpush1.msra.mxu0 0.0
    %729 = vmatprep.subr.mxu0 0.0
    %730 = vmatpush1.msra.mxu0 0.0
    %731 = vmatprep.subr.mxu0 0.0
    %732 = vmatpush1.msra.mxu0 0.0
    %733 = vmatprep.subr.mxu0 0.0
    %734 = vmatpush1.msra.mxu0 0.0
    %735 = vmatprep.subr.mxu0 0.0
    %736 = vmatpush1.msra.mxu0 0.0
    %737 = vmatprep.subr.mxu0 0.0
    %738 = vmatpush1.msra.mxu0 0.0
    %739 = vmatprep.subr.mxu0 0.0
    %740 = vmatpush1.msra.mxu0 0.0
    %741 = vmatprep.subr.mxu0 0.0
    %742 = vmatpush1.msra.mxu0 0.0
    %743 = vmatprep.subr.mxu0 0.0
    %744 = vmatpush1.msra.mxu0 0.0
    %745 = vmatprep.subr.mxu0 0.0
    %746 = vmatpush1.msra.mxu0 0.0
    %747 = vmatprep.subr.mxu0 0.0
    %748 = vmatpush1.msra.mxu0 0.0
    %749 = vmatprep.subr.mxu0 0.0
    %750 = vmatpush1.msra.mxu0 0.0
    %751 = vmatprep.subr.mxu0 0.0
    %752 = vmatpush1.msra.mxu0 0.0
    %753 = vmatprep.subr.mxu0 0.0
    %754 = vmatpush1.msra.mxu0 0.0
    %755 = vmatprep.subr.mxu0 0.0
    %756 = vmatpush1.msra.mxu0 0.0
    %757 = vmatprep.subr.mxu0 0.0
    %758 = vmatpush1.msra.mxu0 0.0
    %759 = vmatprep.subr.mxu0 0.0
    %760 = vmatpush1.msra.mxu0 0.0
    %761 = vmatprep.subr.mxu0 0.0
    %762 = vmatpush1.msra.mxu0 0.0
    %763 = vmatprep.subr.mxu0 0.0
    %764 = vmatpush1.msra.mxu0 0.0
    %765 = vmatprep.subr.mxu0 0.0
    %766 = vmatpush1.msra.mxu0 0.0
    %767 = vmatprep.subr.mxu0 0.0
    %768 = vmatpush1.msra.mxu0 0.0
    %769 = vmatprep.subr.mxu0 0.0
    %770 = vmatpush1.msra.mxu0 0.0
    %771 = vmatprep.subr.mxu0 0.0
    %772 = vmatpush1.msra.mxu0 0.0
    %773 = vmatprep.subr.mxu0 0.0
    %774 = vmatpush1.msra.mxu0 0.0
    %775 = vmatprep.subr.mxu0 0.0
    %776 = vmatpush1.msra.mxu0 0.0
    %777 = vmatprep.subr.mxu0 0.0
    %778 = vmatpush1.msra.mxu0 0.0
    %779 = vmatprep.mubr.f32.mxu0 0.0
    %780 = vmatmul.mubr.f32.gmra.mrb[0].mxu0 %v710
    %v781 = vpop.f32.mrb[0].mxu0
    %v782 = vadd.f32 %v706, %v781
    %v783 = vpop.f32.mrb[0].mxu0
    %784 = vmatprep.mubr.f32.mxu0 0.0
    %785 = vmatmul.mubr.f32.gmra.mrb[0].mxu0 %v713
    %v786 = vpop.f32.mrb[0].mxu0
    %v787 = vadd.f32 %v706, %v786
    %v788 = vpop.f32.mrb[0].mxu0
    %789 = vdwg.mxu0
    %v790 = vtanh.pop %v782
    %v791 = vtanh.pop %v787
    %v792 = vlaneseq
    %v793 = vshrl.u32 %v792, 7
    %v794 = vsub.s32 0, %v793
    %v795 = vrot.slane %v790, %v794
    %797 = vbcast.lane.b32.xlu0 %v795, 256
    %v798 = vpop.permute.xlu0 %797
    %s800 = sor.u32 256, 8
    %801 = vbcast.lane.b32.xlu0 %v795, %s800
    %v802 = vpop.permute.xlu0 %801
    %s804 = sor.u32 256, 16
    %805 = vbcast.lane.b32.xlu0 %v795, %s804
    %v806 = vpop.permute.xlu0 %805
    %s808 = sor.u32 256, 24
    %809 = vbcast.lane.b32.xlu0 %v795, %s808
    %v810 = vpop.permute.xlu0 %809
    %v811 = vlaneseq
    %v812 = vshrl.u32 %v811, 7
    %v813 = vsub.s32 1, %v812
    %v814 = vrot.slane %v790, %v813
    %816 = vbcast.lane.b32.xlu0 %v814, 256
    %v817 = vpop.permute.xlu0 %816
    %s819 = sor.u32 256, 8
    %820 = vbcast.lane.b32.xlu0 %v814, %s819
    %v821 = vpop.permute.xlu0 %820
    %s823 = sor.u32 256, 16
    %824 = vbcast.lane.b32.xlu0 %v814, %s823
    %v825 = vpop.permute.xlu0 %824
    %s827 = sor.u32 256, 24
    %828 = vbcast.lane.b32.xlu0 %v814, %s827
    %v829 = vpop.permute.xlu0 %828
    %v830 = vlaneseq
    %v831 = vshrl.u32 %v830, 7
    %v832 = vsub.s32 2, %v831
    %v833 = vrot.slane %v790, %v832
    %835 = vbcast.lane.b32.xlu0 %v833, 256
    %v836 = vpop.permute.xlu0 %835
    %s838 = sor.u32 256, 8
    %839 = vbcast.lane.b32.xlu0 %v833, %s838
    %v840 = vpop.permute.xlu0 %839
    %s842 = sor.u32 256, 16
    %843 = vbcast.lane.b32.xlu0 %v833, %s842
    %v844 = vpop.permute.xlu0 %843
    %s846 = sor.u32 256, 24
    %847 = vbcast.lane.b32.xlu0 %v833, %s846
    %v848 = vpop.permute.xlu0 %847
    %v849 = vlaneseq
    %v850 = vshrl.u32 %v849, 7
    %v851 = vsub.s32 3, %v850
    %v852 = vrot.slane %v790, %v851
    %854 = vbcast.lane.b32.xlu0 %v852, 256
    %v855 = vpop.permute.xlu0 %854
    %s857 = sor.u32 256, 8
    %858 = vbcast.lane.b32.xlu0 %v852, %s857
    %v859 = vpop.permute.xlu0 %858
    %s861 = sor.u32 256, 16
    %862 = vbcast.lane.b32.xlu0 %v852, %s861
    %v863 = vpop.permute.xlu0 %862
    %s865 = sor.u32 256, 24
    %866 = vbcast.lane.b32.xlu0 %v852, %s865
    %v867 = vpop.permute.xlu0 %866
    %v868 = vlaneseq
    %v869 = vshrl.u32 %v868, 7
    %v870 = vsub.s32 4, %v869
    %v871 = vrot.slane %v790, %v870
    %873 = vbcast.lane.b32.xlu0 %v871, 256
    %v874 = vpop.permute.xlu0 %873
    %s876 = sor.u32 256, 8
    %877 = vbcast.lane.b32.xlu0 %v871, %s876
    %v878 = vpop.permute.xlu0 %877
    %s880 = sor.u32 256, 16
    %881 = vbcast.lane.b32.xlu0 %v871, %s880
    %v882 = vpop.permute.xlu0 %881
    %s884 = sor.u32 256, 24
    %885 = vbcast.lane.b32.xlu0 %v871, %s884
    %v886 = vpop.permute.xlu0 %885
    %v887 = vlaneseq
    %v888 = vshrl.u32 %v887, 7
    %v889 = vsub.s32 5, %v888
    %v890 = vrot.slane %v790, %v889
    %892 = vbcast.lane.b32.xlu0 %v890, 256
    %v893 = vpop.permute.xlu0 %892
    %s895 = sor.u32 256, 8
    %896 = vbcast.lane.b32.xlu0 %v890, %s895
    %v897 = vpop.permute.xlu0 %896
    %s899 = sor.u32 256, 16
    %900 = vbcast.lane.b32.xlu0 %v890, %s899
    %v901 = vpop.permute.xlu0 %900
    %s903 = sor.u32 256, 24
    %904 = vbcast.lane.b32.xlu0 %v890, %s903
    %v905 = vpop.permute.xlu0 %904
    %v906 = vlaneseq
    %v907 = vshrl.u32 %v906, 7
    %v908 = vsub.s32 6, %v907
    %v909 = vrot.slane %v790, %v908
    %911 = vbcast.lane.b32.xlu0 %v909, 256
    %v912 = vpop.permute.xlu0 %911
    %s914 = sor.u32 256, 8
    %915 = vbcast.lane.b32.xlu0 %v909, %s914
    %v916 = vpop.permute.xlu0 %915
    %s918 = sor.u32 256, 16
    %919 = vbcast.lane.b32.xlu0 %v909, %s918
    %v920 = vpop.permute.xlu0 %919
    %s922 = sor.u32 256, 24
    %923 = vbcast.lane.b32.xlu0 %v909, %s922
    %v924 = vpop.permute.xlu0 %923
    %v925 = vlaneseq
    %v926 = vshrl.u32 %v925, 7
    %v927 = vsub.s32 7, %v926
    %v928 = vrot.slane %v790, %v927
    %930 = vbcast.lane.b32.xlu0 %v928, 256
    %v931 = vpop.permute.xlu0 %930
    %s933 = sor.u32 256, 8
    %934 = vbcast.lane.b32.xlu0 %v928, %s933
    %v935 = vpop.permute.xlu0 %934
    %s937 = sor.u32 256, 16
    %938 = vbcast.lane.b32.xlu0 %v928, %s937
    %v939 = vpop.permute.xlu0 %938
    %s941 = sor.u32 256, 24
    %942 = vbcast.lane.b32.xlu0 %v928, %s941
    %v943 = vpop.permute.xlu0 %942
    %v944 = vlaneseq
    %v945 = vshrl.u32 %v944, 7
    %v946 = vsub.s32 0, %v945
    %v947 = vrot.slane %v791, %v946
    %949 = vbcast.lane.b32.xlu0 %v947, 256
    %v950 = vpop.permute.xlu0 %949
    %s952 = sor.u32 256, 8
    %953 = vbcast.lane.b32.xlu0 %v947, %s952
    %v954 = vpop.permute.xlu0 %953
    %s956 = sor.u32 256, 16
    %957 = vbcast.lane.b32.xlu0 %v947, %s956
    %v958 = vpop.permute.xlu0 %957
    %s960 = sor.u32 256, 24
    %961 = vbcast.lane.b32.xlu0 %v947, %s960
    %v962 = vpop.permute.xlu0 %961
    %v963 = vlaneseq
    %v964 = vshrl.u32 %v963, 7
    %v965 = vsub.s32 1, %v964
    %v966 = vrot.slane %v791, %v965
    %968 = vbcast.lane.b32.xlu0 %v966, 256
    %v969 = vpop.permute.xlu0 %968
    %s971 = sor.u32 256, 8
    %972 = vbcast.lane.b32.xlu0 %v966, %s971
    %v973 = vpop.permute.xlu0 %972
    %s975 = sor.u32 256, 16
    %976 = vbcast.lane.b32.xlu0 %v966, %s975
    %v977 = vpop.permute.xlu0 %976
    %s979 = sor.u32 256, 24
    %980 = vbcast.lane.b32.xlu0 %v966, %s979
    %v981 = vpop.permute.xlu0 %980
    %v982 = vlaneseq
    %v983 = vshrl.u32 %v982, 7
    %v984 = vsub.s32 2, %v983
    %v985 = vrot.slane %v791, %v984
    %987 = vbcast.lane.b32.xlu0 %v985, 256
    %v988 = vpop.permute.xlu0 %987
    %s990 = sor.u32 256, 8
    %991 = vbcast.lane.b32.xlu0 %v985, %s990
    %v992 = vpop.permute.xlu0 %991
    %s994 = sor.u32 256, 16
    %995 = vbcast.lane.b32.xlu0 %v985, %s994
    %v996 = vpop.permute.xlu0 %995
    %s998 = sor.u32 256, 24
    %999 = vbcast.lane.b32.xlu0 %v985, %s998
    %v1000 = vpop.permute.xlu0 %999
    %v1001 = vlaneseq
    %v1002 = vshrl.u32 %v1001, 7
    %v1003 = vsub.s32 3, %v1002
    %v1004 = vrot.slane %v791, %v1003
    %1006 = vbcast.lane.b32.xlu0 %v1004, 256
    %v1007 = vpop.permute.xlu0 %1006
    %s1009 = sor.u32 256, 8
    %1010 = vbcast.lane.b32.xlu0 %v1004, %s1009
    %v1011 = vpop.permute.xlu0 %1010
    %s1013 = sor.u32 256, 16
    %1014 = vbcast.lane.b32.xlu0 %v1004, %s1013
    %v1015 = vpop.permute.xlu0 %1014
    %s1017 = sor.u32 256, 24
    %1018 = vbcast.lane.b32.xlu0 %v1004, %s1017
    %v1019 = vpop.permute.xlu0 %1018
    %v1020 = vlaneseq
    %v1021 = vshrl.u32 %v1020, 7
    %v1022 = vsub.s32 4, %v1021
    %v1023 = vrot.slane %v791, %v1022
    %1025 = vbcast.lane.b32.xlu0 %v1023, 256
    %v1026 = vpop.permute.xlu0 %1025
    %s1028 = sor.u32 256, 8
    %1029 = vbcast.lane.b32.xlu0 %v1023, %s1028
    %v1030 = vpop.permute.xlu0 %1029
    %s1032 = sor.u32 256, 16
    %1033 = vbcast.lane.b32.xlu0 %v1023, %s1032
    %v1034 = vpop.permute.xlu0 %1033
    %s1036 = sor.u32 256, 24
    %1037 = vbcast.lane.b32.xlu0 %v1023, %s1036
    %v1038 = vpop.permute.xlu0 %1037
    %v1039 = vlaneseq
    %v1040 = vshrl.u32 %v1039, 7
    %v1041 = vsub.s32 5, %v1040
    %v1042 = vrot.slane %v791, %v1041
    %1044 = vbcast.lane.b32.xlu0 %v1042, 256
    %v1045 = vpop.permute.xlu0 %1044
    %s1047 = sor.u32 256, 8
    %1048 = vbcast.lane.b32.xlu0 %v1042, %s1047
    %v1049 = vpop.permute.xlu0 %1048
    %s1051 = sor.u32 256, 16
    %1052 = vbcast.lane.b32.xlu0 %v1042, %s1051
    %v1053 = vpop.permute.xlu0 %1052
    %s1055 = sor.u32 256, 24
    %1056 = vbcast.lane.b32.xlu0 %v1042, %s1055
    %v1057 = vpop.permute.xlu0 %1056
    %v1058 = vlaneseq
    %v1059 = vshrl.u32 %v1058, 7
    %v1060 = vsub.s32 6, %v1059
    %v1061 = vrot.slane %v791, %v1060
    %1063 = vbcast.lane.b32.xlu0 %v1061, 256
    %v1064 = vpop.permute.xlu0 %1063
    %s1066 = sor.u32 256, 8
    %1067 = vbcast.lane.b32.xlu0 %v1061, %s1066
    %v1068 = vpop.permute.xlu0 %1067
    %s1070 = sor.u32 256, 16
    %1071 = vbcast.lane.b32.xlu0 %v1061, %s1070
    %v1072 = vpop.permute.xlu0 %1071
    %s1074 = sor.u32 256, 24
    %1075 = vbcast.lane.b32.xlu0 %v1061, %s1074
    %v1076 = vpop.permute.xlu0 %1075
    %v1077 = vlaneseq
    %v1078 = vshrl.u32 %v1077, 7
    %v1079 = vsub.s32 7, %v1078
    %v1080 = vrot.slane %v791, %v1079
    %1082 = vbcast.lane.b32.xlu0 %v1080, 256
    %v1083 = vpop.permute.xlu0 %1082
    %s1085 = sor.u32 256, 8
    %1086 = vbcast.lane.b32.xlu0 %v1080, %s1085
    %v1087 = vpop.permute.xlu0 %1086
    %s1089 = sor.u32 256, 16
    %1090 = vbcast.lane.b32.xlu0 %v1080, %s1089
    %v1091 = vpop.permute.xlu0 %1090
    %s1093 = sor.u32 256, 24
    %1094 = vbcast.lane.b32.xlu0 %v1080, %s1093
    %v1095 = vpop.permute.xlu0 %1094
    %v1096 = vmul.f32 %v55, %v798
    %v1097 = vmul.f32 %v56, %v802
    %v1098 = vmul.f32 %v57, %v806
    %v1099 = vmul.f32 %v58, %v810
    %v1100 = vmul.f32 %v59, %v817
    %v1101 = vmul.f32 %v60, %v821
    %v1102 = vmul.f32 %v61, %v825
    %v1103 = vmul.f32 %v62, %v829
    %v1104 = vmul.f32 %v63, %v836
    %v1105 = vmul.f32 %v64, %v840
    %v1106 = vmul.f32 %v65, %v844
    %v1107 = vmul.f32 %v66, %v848
    %v1108 = vmul.f32 %v67, %v855
    %v1109 = vmul.f32 %v68, %v859
    %v1110 = vmul.f32 %v69, %v863
    %v1111 = vmul.f32 %v70, %v867
    %v1112 = vmul.f32 %v71, %v874
    %v1113 = vmul.f32 %v72, %v878
    %v1114 = vmul.f32 %v73, %v882
    %v1115 = vmul.f32 %v74, %v886
    %v1116 = vmul.f32 %v75, %v893
    %v1117 = vmul.f32 %v76, %v897
    %v1118 = vmul.f32 %v77, %v901
    %v1119 = vmul.f32 %v78, %v905
    %v1120 = vmul.f32 %v79, %v912
    %v1121 = vmul.f32 %v80, %v916
    %v1122 = vmul.f32 %v81, %v920
    %v1123 = vmul.f32 %v82, %v924
    %v1124 = vmul.f32 %v83, %v931
    %v1125 = vmul.f32 %v84, %v935
    %v1126 = vmul.f32 %v85, %v939
    %v1127 = vmul.f32 %v86, %v943
    %v1128 = vmul.f32 %v87, %v950
    %v1129 = vmul.f32 %v88, %v954
    %v1130 = vmul.f32 %v89, %v958
    %v1131 = vmul.f32 %v90, %v962
    %v1132 = vmul.f32 %v91, %v969
    %v1133 = vmul.f32 %v92, %v973
    %v1134 = vmul.f32 %v93, %v977
    %v1135 = vmul.f32 %v94, %v981
    %v1136 = vmul.f32 %v95, %v988
    %v1137 = vmul.f32 %v96, %v992
    %v1138 = vmul.f32 %v97, %v996
    %v1139 = vmul.f32 %v98, %v1000
    %v1140 = vmul.f32 %v99, %v1007
    %v1141 = vmul.f32 %v100, %v1011
    %v1142 = vmul.f32 %v101, %v1015
    %v1143 = vmul.f32 %v102, %v1019
    %v1144 = vmul.f32 %v103, %v1026
    %v1145 = vmul.f32 %v104, %v1030
    %v1146 = vmul.f32 %v105, %v1034
    %v1147 = vmul.f32 %v106, %v1038
    %v1148 = vmul.f32 %v107, %v1045
    %v1149 = vmul.f32 %v108, %v1049
    %v1150 = vmul.f32 %v109, %v1053
    %v1151 = vmul.f32 %v110, %v1057
    %v1152 = vmul.f32 %v111, %v1064
    %v1153 = vmul.f32 %v112, %v1068
    %v1154 = vmul.f32 %v113, %v1072
    %v1155 = vmul.f32 %v114, %v1076
    %v1156 = vmul.f32 %v115, %v1083
    %v1157 = vmul.f32 %v116, %v1087
    %v1158 = vmul.f32 %v117, %v1091
    %v1159 = vmul.f32 %v118, %v1095
    %v1160 = vadd.f32 %v1096, %v1097
    %v1161 = vadd.f32 %v1160, %v1098
    %v1162 = vadd.f32 %v1161, %v1099
    %v1163 = vrot.slane %v1162, 4
    %v1164 = vadd.f32 %v1162, %v1163
    %v1165 = vrot.slane %v1164, 2
    %v1166 = vadd.f32 %v1164, %v1165
    %v1167 = vrot.slane %v1166, 1
    %v1168 = vadd.f32 %v1166, %v1167
    %v1169 = vadd.f32 %v1100, %v1101
    %v1170 = vadd.f32 %v1169, %v1102
    %v1171 = vadd.f32 %v1170, %v1103
    %v1172 = vrot.slane %v1171, 4
    %v1173 = vadd.f32 %v1171, %v1172
    %v1174 = vrot.slane %v1173, 2
    %v1175 = vadd.f32 %v1173, %v1174
    %v1176 = vrot.slane %v1175, 1
    %v1177 = vadd.f32 %v1175, %v1176
    %v1178 = vadd.f32 %v1104, %v1105
    %v1179 = vadd.f32 %v1178, %v1106
    %v1180 = vadd.f32 %v1179, %v1107
    %v1181 = vrot.slane %v1180, 4
    %v1182 = vadd.f32 %v1180, %v1181
    %v1183 = vrot.slane %v1182, 2
    %v1184 = vadd.f32 %v1182, %v1183
    %v1185 = vrot.slane %v1184, 1
    %v1186 = vadd.f32 %v1184, %v1185
    %v1187 = vadd.f32 %v1108, %v1109
    %v1188 = vadd.f32 %v1187, %v1110
    %v1189 = vadd.f32 %v1188, %v1111
    %v1190 = vrot.slane %v1189, 4
    %v1191 = vadd.f32 %v1189, %v1190
    %v1192 = vrot.slane %v1191, 2
    %v1193 = vadd.f32 %v1191, %v1192
    %v1194 = vrot.slane %v1193, 1
    %v1195 = vadd.f32 %v1193, %v1194
    %v1196 = vadd.f32 %v1112, %v1113
    %v1197 = vadd.f32 %v1196, %v1114
    %v1198 = vadd.f32 %v1197, %v1115
    %v1199 = vrot.slane %v1198, 4
    %v1200 = vadd.f32 %v1198, %v1199
    %v1201 = vrot.slane %v1200, 2
    %v1202 = vadd.f32 %v1200, %v1201
    %v1203 = vrot.slane %v1202, 1
    %v1204 = vadd.f32 %v1202, %v1203
    %v1205 = vadd.f32 %v1116, %v1117
    %v1206 = vadd.f32 %v1205, %v1118
    %v1207 = vadd.f32 %v1206, %v1119
    %v1208 = vrot.slane %v1207, 4
    %v1209 = vadd.f32 %v1207, %v1208
    %v1210 = vrot.slane %v1209, 2
    %v1211 = vadd.f32 %v1209, %v1210
    %v1212 = vrot.slane %v1211, 1
    %v1213 = vadd.f32 %v1211, %v1212
    %v1214 = vadd.f32 %v1120, %v1121
    %v1215 = vadd.f32 %v1214, %v1122
    %v1216 = vadd.f32 %v1215, %v1123
    %v1217 = vrot.slane %v1216, 4
    %v1218 = vadd.f32 %v1216, %v1217
    %v1219 = vrot.slane %v1218, 2
    %v1220 = vadd.f32 %v1218, %v1219
    %v1221 = vrot.slane %v1220, 1
    %v1222 = vadd.f32 %v1220, %v1221
    %v1223 = vadd.f32 %v1124, %v1125
    %v1224 = vadd.f32 %v1223, %v1126
    %v1225 = vadd.f32 %v1224, %v1127
    %v1226 = vrot.slane %v1225, 4
    %v1227 = vadd.f32 %v1225, %v1226
    %v1228 = vrot.slane %v1227, 2
    %v1229 = vadd.f32 %v1227, %v1228
    %v1230 = vrot.slane %v1229, 1
    %v1231 = vadd.f32 %v1229, %v1230
    %v1232 = vadd.f32 %v1128, %v1129
    %v1233 = vadd.f32 %v1232, %v1130
    %v1234 = vadd.f32 %v1233, %v1131
    %v1235 = vrot.slane %v1234, 4
    %v1236 = vadd.f32 %v1234, %v1235
    %v1237 = vrot.slane %v1236, 2
    %v1238 = vadd.f32 %v1236, %v1237
    %v1239 = vrot.slane %v1238, 1
    %v1240 = vadd.f32 %v1238, %v1239
    %v1241 = vadd.f32 %v1132, %v1133
    %v1242 = vadd.f32 %v1241, %v1134
    %v1243 = vadd.f32 %v1242, %v1135
    %v1244 = vrot.slane %v1243, 4
    %v1245 = vadd.f32 %v1243, %v1244
    %v1246 = vrot.slane %v1245, 2
    %v1247 = vadd.f32 %v1245, %v1246
    %v1248 = vrot.slane %v1247, 1
    %v1249 = vadd.f32 %v1247, %v1248
    %v1250 = vadd.f32 %v1136, %v1137
    %v1251 = vadd.f32 %v1250, %v1138
    %v1252 = vadd.f32 %v1251, %v1139
    %v1253 = vrot.slane %v1252, 4
    %v1254 = vadd.f32 %v1252, %v1253
    %v1255 = vrot.slane %v1254, 2
    %v1256 = vadd.f32 %v1254, %v1255
    %v1257 = vrot.slane %v1256, 1
    %v1258 = vadd.f32 %v1256, %v1257
    %v1259 = vadd.f32 %v1140, %v1141
    %v1260 = vadd.f32 %v1259, %v1142
    %v1261 = vadd.f32 %v1260, %v1143
    %v1262 = vrot.slane %v1261, 4
    %v1263 = vadd.f32 %v1261, %v1262
    %v1264 = vrot.slane %v1263, 2
    %v1265 = vadd.f32 %v1263, %v1264
    %v1266 = vrot.slane %v1265, 1
    %v1267 = vadd.f32 %v1265, %v1266
    %v1268 = vadd.f32 %v1144, %v1145
    %v1269 = vadd.f32 %v1268, %v1146
    %v1270 = vadd.f32 %v1269, %v1147
    %v1271 = vrot.slane %v1270, 4
    %v1272 = vadd.f32 %v1270, %v1271
    %v1273 = vrot.slane %v1272, 2
    %v1274 = vadd.f32 %v1272, %v1273
    %v1275 = vrot.slane %v1274, 1
    %v1276 = vadd.f32 %v1274, %v1275
    %v1277 = vadd.f32 %v1148, %v1149
    %v1278 = vadd.f32 %v1277, %v1150
    %v1279 = vadd.f32 %v1278, %v1151
    %v1280 = vrot.slane %v1279, 4
    %v1281 = vadd.f32 %v1279, %v1280
    %v1282 = vrot.slane %v1281, 2
    %v1283 = vadd.f32 %v1281, %v1282
    %v1284 = vrot.slane %v1283, 1
    %v1285 = vadd.f32 %v1283, %v1284
    %v1286 = vadd.f32 %v1152, %v1153
    %v1287 = vadd.f32 %v1286, %v1154
    %v1288 = vadd.f32 %v1287, %v1155
    %v1289 = vrot.slane %v1288, 4
    %v1290 = vadd.f32 %v1288, %v1289
    %v1291 = vrot.slane %v1290, 2
    %v1292 = vadd.f32 %v1290, %v1291
    %v1293 = vrot.slane %v1292, 1
    %v1294 = vadd.f32 %v1292, %v1293
    %v1295 = vadd.f32 %v1156, %v1157
    %v1296 = vadd.f32 %v1295, %v1158
    %v1297 = vadd.f32 %v1296, %v1159
    %v1298 = vrot.slane %v1297, 4
    %v1299 = vadd.f32 %v1297, %v1298
    %v1300 = vrot.slane %v1299, 2
    %v1301 = vadd.f32 %v1299, %v1300
    %v1302 = vrot.slane %v1301, 1
    %v1303 = vadd.f32 %v1301, %v1302
    %v1304 = vxor.u32 %v1168, 2147483648
    %v1305 = vxor.u32 %v1177, 2147483648
    %v1306 = vxor.u32 %v1186, 2147483648
    %v1307 = vxor.u32 %v1195, 2147483648
    %v1308 = vxor.u32 %v1204, 2147483648
    %v1309 = vxor.u32 %v1213, 2147483648
    %v1310 = vxor.u32 %v1222, 2147483648
    %v1311 = vxor.u32 %v1231, 2147483648
    %v1312 = vxor.u32 %v1240, 2147483648
    %v1313 = vxor.u32 %v1249, 2147483648
    %v1314 = vxor.u32 %v1258, 2147483648
    %v1315 = vxor.u32 %v1267, 2147483648
    %v1316 = vxor.u32 %v1276, 2147483648
    %v1317 = vxor.u32 %v1285, 2147483648
    %v1318 = vxor.u32 %v1294, 2147483648
    %v1319 = vxor.u32 %v1303, 2147483648
    %v1320 = vmul.f32 %v1304, 1.442695
    %v1321 = vpow.pop %v1320
    %v1322 = vmul.f32 %v1305, 1.442695
    %v1323 = vpow.pop %v1322
    %v1324 = vmul.f32 %v1306, 1.442695
    %v1325 = vpow.pop %v1324
    %v1326 = vmul.f32 %v1307, 1.442695
    %v1327 = vpow.pop %v1326
    %v1328 = vmul.f32 %v1308, 1.442695
    %v1329 = vpow.pop %v1328
    %v1330 = vmul.f32 %v1309, 1.442695
    %v1331 = vpow.pop %v1330
    %v1332 = vmul.f32 %v1310, 1.442695
    %v1333 = vpow.pop %v1332
    %v1334 = vmul.f32 %v1311, 1.442695
    %v1335 = vpow.pop %v1334
    %v1336 = vmul.f32 %v1312, 1.442695
    %v1337 = vpow.pop %v1336
    %v1338 = vmul.f32 %v1313, 1.442695
    %v1339 = vpow.pop %v1338
    %v1340 = vmul.f32 %v1314, 1.442695
    %v1341 = vpow.pop %v1340
    %v1342 = vmul.f32 %v1315, 1.442695
    %v1343 = vpow.pop %v1342
    %v1344 = vmul.f32 %v1316, 1.442695
    %v1345 = vpow.pop %v1344
    %v1346 = vmul.f32 %v1317, 1.442695
    %v1347 = vpow.pop %v1346
    %v1348 = vmul.f32 %v1318, 1.442695
    %v1349 = vpow.pop %v1348
    %v1350 = vmul.f32 %v1319, 1.442695
    %v1351 = vpow.pop %v1350
    %v1352 = vadd.f32 %v1321, 1.0
    %v1353 = vadd.f32 %v1323, 1.0
    %v1354 = vadd.f32 %v1325, 1.0
    %v1355 = vadd.f32 %v1327, 1.0
    %v1356 = vadd.f32 %v1329, 1.0
    %v1357 = vadd.f32 %v1331, 1.0
    %v1358 = vadd.f32 %v1333, 1.0
    %v1359 = vadd.f32 %v1335, 1.0
    %v1360 = vadd.f32 %v1337, 1.0
    %v1361 = vadd.f32 %v1339, 1.0
    %v1362 = vadd.f32 %v1341, 1.0
    %v1363 = vadd.f32 %v1343, 1.0
    %v1364 = vadd.f32 %v1345, 1.0
    %v1365 = vadd.f32 %v1347, 1.0
    %v1366 = vadd.f32 %v1349, 1.0
    %v1367 = vadd.f32 %v1351, 1.0
    %v1368 = vrcp.pop %v1352
    %v1369 = vmul.f32 1.0, %v1368
    %v1370 = vrcp.pop %v1353
    %v1371 = vmul.f32 1.0, %v1370
    %v1372 = vrcp.pop %v1354
    %v1373 = vmul.f32 1.0, %v1372
    %v1374 = vrcp.pop %v1355
    %v1375 = vmul.f32 1.0, %v1374
    %v1376 = vrcp.pop %v1356
    %v1377 = vmul.f32 1.0, %v1376
    %v1378 = vrcp.pop %v1357
    %v1379 = vmul.f32 1.0, %v1378
    %v1380 = vrcp.pop %v1358
    %v1381 = vmul.f32 1.0, %v1380
    %v1382 = vrcp.pop %v1359
    %v1383 = vmul.f32 1.0, %v1382
    %v1384 = vrcp.pop %v1360
    %v1385 = vmul.f32 1.0, %v1384
    %v1386 = vrcp.pop %v1361
    %v1387 = vmul.f32 1.0, %v1386
    %v1388 = vrcp.pop %v1362
    %v1389 = vmul.f32 1.0, %v1388
    %v1390 = vrcp.pop %v1363
    %v1391 = vmul.f32 1.0, %v1390
    %v1392 = vrcp.pop %v1364
    %v1393 = vmul.f32 1.0, %v1392
    %v1394 = vrcp.pop %v1365
    %v1395 = vmul.f32 1.0, %v1394
    %v1396 = vrcp.pop %v1366
    %v1397 = vmul.f32 1.0, %v1396
    %v1398 = vrcp.pop %v1367
    %v1399 = vmul.f32 1.0, %v1398
    %v1416 = vsel %vm654, %v1371, %v1369
    %v1417 = vsel %vm656, %v1373, %v1416
    %v1418 = vsel %vm658, %v1375, %v1417
    %v1419 = vsel %vm660, %v1377, %v1418
    %v1420 = vsel %vm662, %v1379, %v1419
    %v1421 = vsel %vm664, %v1381, %v1420
    %v1422 = vsel %vm666, %v1383, %v1421
    %v1423 = vsel %vm654, %v1387, %v1385
    %v1424 = vsel %vm656, %v1389, %v1423
    %v1425 = vsel %vm658, %v1391, %v1424
    %v1426 = vsel %vm660, %v1393, %v1425
    %v1427 = vsel %vm662, %v1395, %v1426
    %v1428 = vsel %vm664, %v1397, %v1427
    %v1429 = vsel %vm666, %v1399, %v1428
    %v1432 = vmul.f32 %v694, %v1422
    %v1433 = vmul.f32 %v696, %v1429
    %v1434 = vld [vmem:[#allocation5] sm:$0xf]
    %v1435 = vld [vmem:[#allocation5 + $0x4] sm:$0xf]
    %v1436 = vld [vmem:[#allocation5 + $0x8] sm:$0xf]
    %v1437 = vld [vmem:[#allocation5 + $0xc] sm:$0xf]
    %v1438 = vld [vmem:[#allocation5 + $0x10] sm:$0xf]
    %v1439 = vld [vmem:[#allocation5 + $0x14] sm:$0xf]
    %v1440 = vld [vmem:[#allocation5 + $0x18] sm:$0xf]
    %v1441 = vld [vmem:[#allocation5 + $0x1c] sm:$0xf]
    %v1442 = vld [vmem:[#allocation5 + $0x20] sm:$0xf]
    %v1443 = vld [vmem:[#allocation5 + $0x24] sm:$0xf]
    %v1444 = vld [vmem:[#allocation5 + $0x28] sm:$0xf]
    %v1445 = vld [vmem:[#allocation5 + $0x2c] sm:$0xf]
    %v1446 = vld [vmem:[#allocation5 + $0x30] sm:$0xf]
    %v1447 = vld [vmem:[#allocation5 + $0x34] sm:$0xf]
    %v1448 = vld [vmem:[#allocation5 + $0x38] sm:$0xf]
    %v1449 = vld [vmem:[#allocation5 + $0x3c] sm:$0xf]
    %v1450 = vld [vmem:[#allocation5 + $0x40] sm:$0xf]
    %v1451 = vld [vmem:[#allocation5 + $0x44] sm:$0xf]
    %v1452 = vld [vmem:[#allocation5 + $0x48] sm:$0xf]
    %v1453 = vld [vmem:[#allocation5 + $0x4c] sm:$0xf]
    %v1454 = vld [vmem:[#allocation5 + $0x50] sm:$0xf]
    %v1455 = vld [vmem:[#allocation5 + $0x54] sm:$0xf]
    %v1456 = vld [vmem:[#allocation5 + $0x58] sm:$0xf]
    %v1457 = vld [vmem:[#allocation5 + $0x5c] sm:$0xf]
    %v1458 = vld [vmem:[#allocation5 + $0x60] sm:$0xf]
    %v1459 = vld [vmem:[#allocation5 + $0x64] sm:$0xf]
    %v1460 = vld [vmem:[#allocation5 + $0x68] sm:$0xf]
    %v1461 = vld [vmem:[#allocation5 + $0x6c] sm:$0xf]
    %v1462 = vld [vmem:[#allocation5 + $0x70] sm:$0xf]
    %v1463 = vld [vmem:[#allocation5 + $0x74] sm:$0xf]
    %v1464 = vld [vmem:[#allocation5 + $0x78] sm:$0xf]
    %v1465 = vld [vmem:[#allocation5 + $0x7c] sm:$0xf]
    %v1466 = vld [vmem:[#allocation5 + $0x80] sm:$0xf]
    %v1467 = vld [vmem:[#allocation5 + $0x84] sm:$0xf]
    %v1468 = vld [vmem:[#allocation5 + $0x88] sm:$0xf]
    %v1469 = vld [vmem:[#allocation5 + $0x8c] sm:$0xf]
    %v1470 = vld [vmem:[#allocation5 + $0x90] sm:$0xf]
    %v1471 = vld [vmem:[#allocation5 + $0x94] sm:$0xf]
    %v1472 = vld [vmem:[#allocation5 + $0x98] sm:$0xf]
    %v1473 = vld [vmem:[#allocation5 + $0x9c] sm:$0xf]
    %v1474 = vld [vmem:[#allocation5 + $0xa0] sm:$0xf]
    %v1475 = vld [vmem:[#allocation5 + $0xa4] sm:$0xf]
    %v1476 = vld [vmem:[#allocation5 + $0xa8] sm:$0xf]
    %v1477 = vld [vmem:[#allocation5 + $0xac] sm:$0xf]
    %v1478 = vld [vmem:[#allocation5 + $0xb0] sm:$0xf]
    %v1479 = vld [vmem:[#allocation5 + $0xb4] sm:$0xf]
    %v1480 = vld [vmem:[#allocation5 + $0xb8] sm:$0xf]
    %v1481 = vld [vmem:[#allocation5 + $0xbc] sm:$0xf]
    %v1482 = vld [vmem:[#allocation5 + $0xc0] sm:$0xf]
    %v1483 = vld [vmem:[#allocation5 + $0xc4] sm:$0xf]
    %v1484 = vld [vmem:[#allocation5 + $0xc8] sm:$0xf]
    %v1485 = vld [vmem:[#allocation5 + $0xcc] sm:$0xf]
    %v1486 = vld [vmem:[#allocation5 + $0xd0] sm:$0xf]
    %v1487 = vld [vmem:[#allocation5 + $0xd4] sm:$0xf]
    %v1488 = vld [vmem:[#allocation5 + $0xd8] sm:$0xf]
    %v1489 = vld [vmem:[#allocation5 + $0xdc] sm:$0xf]
    %v1490 = vld [vmem:[#allocation5 + $0xe0] sm:$0xf]
    %v1491 = vld [vmem:[#allocation5 + $0xe4] sm:$0xf]
    %v1492 = vld [vmem:[#allocation5 + $0xe8] sm:$0xf]
    %v1493 = vld [vmem:[#allocation5 + $0xec] sm:$0xf]
    %v1494 = vld [vmem:[#allocation5 + $0xf0] sm:$0xf]
    %v1495 = vld [vmem:[#allocation5 + $0xf4] sm:$0xf]
    %v1496 = vld [vmem:[#allocation5 + $0xf8] sm:$0xf]
    %v1497 = vld [vmem:[#allocation5 + $0xfc] sm:$0xf]
    %v1498 = vld [vmem:[#allocation5 + $0x100] sm:$0xf]
    %v1499 = vld [vmem:[#allocation5 + $0x104] sm:$0xf]
    %v1500 = vld [vmem:[#allocation5 + $0x108] sm:$0xf]
    %v1501 = vld [vmem:[#allocation5 + $0x10c] sm:$0xf]
    %v1502 = vld [vmem:[#allocation5 + $0x110] sm:$0xf]
    %v1503 = vld [vmem:[#allocation5 + $0x114] sm:$0xf]
    %v1504 = vld [vmem:[#allocation5 + $0x118] sm:$0xf]
    %v1505 = vld [vmem:[#allocation5 + $0x11c] sm:$0xf]
    %v1506 = vld [vmem:[#allocation5 + $0x120] sm:$0xf]
    %v1507 = vld [vmem:[#allocation5 + $0x124] sm:$0xf]
    %v1508 = vld [vmem:[#allocation5 + $0x128] sm:$0xf]
    %v1509 = vld [vmem:[#allocation5 + $0x12c] sm:$0xf]
    %v1510 = vld [vmem:[#allocation5 + $0x130] sm:$0xf]
    %v1511 = vld [vmem:[#allocation5 + $0x134] sm:$0xf]
    %v1512 = vld [vmem:[#allocation5 + $0x138] sm:$0xf]
    %v1513 = vld [vmem:[#allocation5 + $0x13c] sm:$0xf]
    %v1514 = vld [vmem:[#allocation5 + $0x140] sm:$0xf]
    %v1515 = vld [vmem:[#allocation5 + $0x144] sm:$0xf]
    %v1516 = vld [vmem:[#allocation5 + $0x148] sm:$0xf]
    %v1517 = vld [vmem:[#allocation5 + $0x14c] sm:$0xf]
    %v1518 = vld [vmem:[#allocation5 + $0x150] sm:$0xf]
    %v1519 = vld [vmem:[#allocation5 + $0x154] sm:$0xf]
    %v1520 = vld [vmem:[#allocation5 + $0x158] sm:$0xf]
    %v1521 = vld [vmem:[#allocation5 + $0x15c] sm:$0xf]
    %v1522 = vld [vmem:[#allocation5 + $0x160] sm:$0xf]
    %v1523 = vld [vmem:[#allocation5 + $0x164] sm:$0xf]
    %v1524 = vld [vmem:[#allocation5 + $0x168] sm:$0xf]
    %v1525 = vld [vmem:[#allocation5 + $0x16c] sm:$0xf]
    %v1526 = vld [vmem:[#allocation5 + $0x170] sm:$0xf]
    %v1527 = vld [vmem:[#allocation5 + $0x174] sm:$0xf]
    %v1528 = vld [vmem:[#allocation5 + $0x178] sm:$0xf]
    %v1529 = vld [vmem:[#allocation5 + $0x17c] sm:$0xf]
    %v1530 = vld [vmem:[#allocation5 + $0x180] sm:$0xf]
    %v1531 = vld [vmem:[#allocation5 + $0x184] sm:$0xf]
    %v1532 = vld [vmem:[#allocation5 + $0x188] sm:$0xf]
    %v1533 = vld [vmem:[#allocation5 + $0x18c] sm:$0xf]
    %v1534 = vld [vmem:[#allocation5 + $0x190] sm:$0xf]
    %v1535 = vld [vmem:[#allocation5 + $0x194] sm:$0xf]
    %v1536 = vld [vmem:[#allocation5 + $0x198] sm:$0xf]
    %v1537 = vld [vmem:[#allocation5 + $0x19c] sm:$0xf]
    %v1538 = vld [vmem:[#allocation5 + $0x1a0] sm:$0xf]
    %v1539 = vld [vmem:[#allocation5 + $0x1a4] sm:$0xf]
    %v1540 = vld [vmem:[#allocation5 + $0x1a8] sm:$0xf]
    %v1541 = vld [vmem:[#allocation5 + $0x1ac] sm:$0xf]
    %v1542 = vld [vmem:[#allocation5 + $0x1b0] sm:$0xf]
    %v1543 = vld [vmem:[#allocation5 + $0x1b4] sm:$0xf]
    %v1544 = vld [vmem:[#allocation5 + $0x1b8] sm:$0xf]
    %v1545 = vld [vmem:[#allocation5 + $0x1bc] sm:$0xf]
    %v1546 = vld [vmem:[#allocation5 + $0x1c0] sm:$0xf]
    %v1547 = vld [vmem:[#allocation5 + $0x1c4] sm:$0xf]
    %v1548 = vld [vmem:[#allocation5 + $0x1c8] sm:$0xf]
    %v1549 = vld [vmem:[#allocation5 + $0x1cc] sm:$0xf]
    %v1550 = vld [vmem:[#allocation5 + $0x1d0] sm:$0xf]
    %v1551 = vld [vmem:[#allocation5 + $0x1d4] sm:$0xf]
    %v1552 = vld [vmem:[#allocation5 + $0x1d8] sm:$0xf]
    %v1553 = vld [vmem:[#allocation5 + $0x1dc] sm:$0xf]
    %v1554 = vld [vmem:[#allocation5 + $0x1e0] sm:$0xf]
    %v1555 = vld [vmem:[#allocation5 + $0x1e4] sm:$0xf]
    %v1556 = vld [vmem:[#allocation5 + $0x1e8] sm:$0xf]
    %v1557 = vld [vmem:[#allocation5 + $0x1ec] sm:$0xf]
    %v1558 = vld [vmem:[#allocation5 + $0x1f0] sm:$0xf]
    %v1559 = vld [vmem:[#allocation5 + $0x1f4] sm:$0xf]
    %v1560 = vld [vmem:[#allocation5 + $0x1f8] sm:$0xf]
    %v1561 = vld [vmem:[#allocation5 + $0x1fc] sm:$0xf]
    %v1562 = vld [vmem:[#allocation5 + $0x200] sm:$0xf]
    %v1563 = vld [vmem:[#allocation5 + $0x204] sm:$0xf]
    %v1564 = vld [vmem:[#allocation5 + $0x208] sm:$0xf]
    %v1565 = vld [vmem:[#allocation5 + $0x20c] sm:$0xf]
    %v1566 = vld [vmem:[#allocation5 + $0x210] sm:$0xf]
    %v1567 = vld [vmem:[#allocation5 + $0x214] sm:$0xf]
    %v1568 = vld [vmem:[#allocation5 + $0x218] sm:$0xf]
    %v1569 = vld [vmem:[#allocation5 + $0x21c] sm:$0xf]
    %v1570 = vld [vmem:[#allocation5 + $0x220] sm:$0xf]
    %v1571 = vld [vmem:[#allocation5 + $0x224] sm:$0xf]
    %v1572 = vld [vmem:[#allocation5 + $0x228] sm:$0xf]
    %v1573 = vld [vmem:[#allocation5 + $0x22c] sm:$0xf]
    %v1574 = vld [vmem:[#allocation5 + $0x230] sm:$0xf]
    %v1575 = vld [vmem:[#allocation5 + $0x234] sm:$0xf]
    %v1576 = vld [vmem:[#allocation5 + $0x238] sm:$0xf]
    %v1577 = vld [vmem:[#allocation5 + $0x23c] sm:$0xf]
    %v1578 = vld [vmem:[#allocation5 + $0x240] sm:$0xf]
    %v1579 = vld [vmem:[#allocation5 + $0x244] sm:$0xf]
    %v1580 = vld [vmem:[#allocation5 + $0x248] sm:$0xf]
    %v1581 = vld [vmem:[#allocation5 + $0x24c] sm:$0xf]
    %v1582 = vld [vmem:[#allocation5 + $0x250] sm:$0xf]
    %v1583 = vld [vmem:[#allocation5 + $0x254] sm:$0xf]
    %v1584 = vld [vmem:[#allocation5 + $0x258] sm:$0xf]
    %v1585 = vld [vmem:[#allocation5 + $0x25c] sm:$0xf]
    %v1586 = vld [vmem:[#allocation5 + $0x260] sm:$0xf]
    %v1587 = vld [vmem:[#allocation5 + $0x264] sm:$0xf]
    %v1588 = vld [vmem:[#allocation5 + $0x268] sm:$0xf]
    %v1589 = vld [vmem:[#allocation5 + $0x26c] sm:$0xf]
    %v1590 = vld [vmem:[#allocation5 + $0x270] sm:$0xf]
    %v1591 = vld [vmem:[#allocation5 + $0x274] sm:$0xf]
    %v1592 = vld [vmem:[#allocation5 + $0x278] sm:$0xf]
    %v1593 = vld [vmem:[#allocation5 + $0x27c] sm:$0xf]
    %v1594 = vld [vmem:[#allocation5 + $0x280] sm:$0xf]
    %v1595 = vld [vmem:[#allocation5 + $0x284] sm:$0xf]
    %v1596 = vld [vmem:[#allocation5 + $0x288] sm:$0xf]
    %v1597 = vld [vmem:[#allocation5 + $0x28c] sm:$0xf]
    %v1598 = vld [vmem:[#allocation5 + $0x290] sm:$0xf]
    %v1599 = vld [vmem:[#allocation5 + $0x294] sm:$0xf]
    %v1600 = vld [vmem:[#allocation5 + $0x298] sm:$0xf]
    %v1601 = vld [vmem:[#allocation5 + $0x29c] sm:$0xf]
    %v1602 = vld [vmem:[#allocation5 + $0x2a0] sm:$0xf]
    %v1603 = vld [vmem:[#allocation5 + $0x2a4] sm:$0xf]
    %v1604 = vld [vmem:[#allocation5 + $0x2a8] sm:$0xf]
    %v1605 = vld [vmem:[#allocation5 + $0x2ac] sm:$0xf]
    %v1606 = vld [vmem:[#allocation5 + $0x2b0] sm:$0xf]
    %v1607 = vld [vmem:[#allocation5 + $0x2b4] sm:$0xf]
    %v1608 = vld [vmem:[#allocation5 + $0x2b8] sm:$0xf]
    %v1609 = vld [vmem:[#allocation5 + $0x2bc] sm:$0xf]
    %v1610 = vld [vmem:[#allocation5 + $0x2c0] sm:$0xf]
    %v1611 = vld [vmem:[#allocation5 + $0x2c4] sm:$0xf]
    %v1612 = vld [vmem:[#allocation5 + $0x2c8] sm:$0xf]
    %v1613 = vld [vmem:[#allocation5 + $0x2cc] sm:$0xf]
    %v1614 = vld [vmem:[#allocation5 + $0x2d0] sm:$0xf]
    %v1615 = vld [vmem:[#allocation5 + $0x2d4] sm:$0xf]
    %v1616 = vld [vmem:[#allocation5 + $0x2d8] sm:$0xf]
    %v1617 = vld [vmem:[#allocation5 + $0x2dc] sm:$0xf]
    %v1618 = vld [vmem:[#allocation5 + $0x2e0] sm:$0xf]
    %v1619 = vld [vmem:[#allocation5 + $0x2e4] sm:$0xf]
    %v1620 = vld [vmem:[#allocation5 + $0x2e8] sm:$0xf]
    %v1621 = vld [vmem:[#allocation5 + $0x2ec] sm:$0xf]
    %v1622 = vld [vmem:[#allocation5 + $0x2f0] sm:$0xf]
    %v1623 = vld [vmem:[#allocation5 + $0x2f4] sm:$0xf]
    %v1624 = vld [vmem:[#allocation5 + $0x2f8] sm:$0xf]
    %v1625 = vld [vmem:[#allocation5 + $0x2fc] sm:$0xf]
    %v1626 = vld [vmem:[#allocation5 + $0x300] sm:$0xf]
    %v1627 = vld [vmem:[#allocation5 + $0x304] sm:$0xf]
    %v1628 = vld [vmem:[#allocation5 + $0x308] sm:$0xf]
    %v1629 = vld [vmem:[#allocation5 + $0x30c] sm:$0xf]
    %v1630 = vld [vmem:[#allocation5 + $0x310] sm:$0xf]
    %v1631 = vld [vmem:[#allocation5 + $0x314] sm:$0xf]
    %v1632 = vld [vmem:[#allocation5 + $0x318] sm:$0xf]
    %v1633 = vld [vmem:[#allocation5 + $0x31c] sm:$0xf]
    %v1634 = vld [vmem:[#allocation5 + $0x320] sm:$0xf]
    %v1635 = vld [vmem:[#allocation5 + $0x324] sm:$0xf]
    %v1636 = vld [vmem:[#allocation5 + $0x328] sm:$0xf]
    %v1637 = vld [vmem:[#allocation5 + $0x32c] sm:$0xf]
    %v1638 = vld [vmem:[#allocation5 + $0x330] sm:$0xf]
    %v1639 = vld [vmem:[#allocation5 + $0x334] sm:$0xf]
    %v1640 = vld [vmem:[#allocation5 + $0x338] sm:$0xf]
    %v1641 = vld [vmem:[#allocation5 + $0x33c] sm:$0xf]
    %v1642 = vld [vmem:[#allocation5 + $0x340] sm:$0xf]
    %v1643 = vld [vmem:[#allocation5 + $0x344] sm:$0xf]
    %v1644 = vld [vmem:[#allocation5 + $0x348] sm:$0xf]
    %v1645 = vld [vmem:[#allocation5 + $0x34c] sm:$0xf]
    %v1646 = vld [vmem:[#allocation5 + $0x350] sm:$0xf]
    %v1647 = vld [vmem:[#allocation5 + $0x354] sm:$0xf]
    %v1648 = vld [vmem:[#allocation5 + $0x358] sm:$0xf]
    %v1649 = vld [vmem:[#allocation5 + $0x35c] sm:$0xf]
    %v1650 = vld [vmem:[#allocation5 + $0x360] sm:$0xf]
    %v1651 = vld [vmem:[#allocation5 + $0x364] sm:$0xf]
    %v1652 = vld [vmem:[#allocation5 + $0x368] sm:$0xf]
    %v1653 = vld [vmem:[#allocation5 + $0x36c] sm:$0xf]
    %v1654 = vld [vmem:[#allocation5 + $0x370] sm:$0xf]
    %v1655 = vld [vmem:[#allocation5 + $0x374] sm:$0xf]
    %v1656 = vld [vmem:[#allocation5 + $0x378] sm:$0xf]
    %v1657 = vld [vmem:[#allocation5 + $0x37c] sm:$0xf]
    %v1658 = vld [vmem:[#allocation5 + $0x380] sm:$0xf]
    %v1659 = vld [vmem:[#allocation5 + $0x384] sm:$0xf]
    %v1660 = vld [vmem:[#allocation5 + $0x388] sm:$0xf]
    %v1661 = vld [vmem:[#allocation5 + $0x38c] sm:$0xf]
    %v1662 = vld [vmem:[#allocation5 + $0x390] sm:$0xf]
    %v1663 = vld [vmem:[#allocation5 + $0x394] sm:$0xf]
    %v1664 = vld [vmem:[#allocation5 + $0x398] sm:$0xf]
    %v1665 = vld [vmem:[#allocation5 + $0x39c] sm:$0xf]
    %v1666 = vld [vmem:[#allocation5 + $0x3a0] sm:$0xf]
    %v1667 = vld [vmem:[#allocation5 + $0x3a4] sm:$0xf]
    %v1668 = vld [vmem:[#allocation5 + $0x3a8] sm:$0xf]
    %v1669 = vld [vmem:[#allocation5 + $0x3ac] sm:$0xf]
    %v1670 = vld [vmem:[#allocation5 + $0x3b0] sm:$0xf]
    %v1671 = vld [vmem:[#allocation5 + $0x3b4] sm:$0xf]
    %v1672 = vld [vmem:[#allocation5 + $0x3b8] sm:$0xf]
    %v1673 = vld [vmem:[#allocation5 + $0x3bc] sm:$0xf]
    %v1674 = vld [vmem:[#allocation5 + $0x3c0] sm:$0xf]
    %v1675 = vld [vmem:[#allocation5 + $0x3c4] sm:$0xf]
    %v1676 = vld [vmem:[#allocation5 + $0x3c8] sm:$0xf]
    %v1677 = vld [vmem:[#allocation5 + $0x3cc] sm:$0xf]
    %v1678 = vld [vmem:[#allocation5 + $0x3d0] sm:$0xf]
    %v1679 = vld [vmem:[#allocation5 + $0x3d4] sm:$0xf]
    %v1680 = vld [vmem:[#allocation5 + $0x3d8] sm:$0xf]
    %v1681 = vld [vmem:[#allocation5 + $0x3dc] sm:$0xf]
    %v1682 = vld [vmem:[#allocation5 + $0x3e0] sm:$0xf]
    %v1683 = vld [vmem:[#allocation5 + $0x3e4] sm:$0xf]
    %v1684 = vld [vmem:[#allocation5 + $0x3e8] sm:$0xf]
    %v1685 = vld [vmem:[#allocation5 + $0x3ec] sm:$0xf]
    %v1686 = vld [vmem:[#allocation5 + $0x3f0] sm:$0xf]
    %v1687 = vld [vmem:[#allocation5 + $0x3f4] sm:$0xf]
    %v1688 = vld [vmem:[#allocation5 + $0x3f8] sm:$0xf]
    %v1689 = vld [vmem:[#allocation5 + $0x3fc] sm:$0xf]
    %v1690 = vunpack.c.l.bf16 %v1434
    %v1691 = vunpack.c.l.bf16 %v1435
    %v1692 = vunpack.c.l.bf16 %v1436
    %v1693 = vunpack.c.l.bf16 %v1437
    %v1694 = vunpack.c.l.bf16 %v1438
    %v1695 = vunpack.c.l.bf16 %v1439
    %v1696 = vunpack.c.l.bf16 %v1440
    %v1697 = vunpack.c.l.bf16 %v1441
    %v1698 = vunpack.c.l.bf16 %v1442
    %v1699 = vunpack.c.l.bf16 %v1443
    %v1700 = vunpack.c.l.bf16 %v1444
    %v1701 = vunpack.c.l.bf16 %v1445
    %v1702 = vunpack.c.l.bf16 %v1446
    %v1703 = vunpack.c.l.bf16 %v1447
    %v1704 = vunpack.c.l.bf16 %v1448
    %v1705 = vunpack.c.l.bf16 %v1449
    %v1706 = vunpack.c.l.bf16 %v1450
    %v1707 = vunpack.c.l.bf16 %v1451
    %v1708 = vunpack.c.l.bf16 %v1452
    %v1709 = vunpack.c.l.bf16 %v1453
    %v1710 = vunpack.c.l.bf16 %v1454
    %v1711 = vunpack.c.l.bf16 %v1455
    %v1712 = vunpack.c.l.bf16 %v1456
    %v1713 = vunpack.c.l.bf16 %v1457
    %v1714 = vunpack.c.l.bf16 %v1458
    %v1715 = vunpack.c.l.bf16 %v1459
    %v1716 = vunpack.c.l.bf16 %v1460
    %v1717 = vunpack.c.l.bf16 %v1461
    %v1718 = vunpack.c.l.bf16 %v1462
    %v1719 = vunpack.c.l.bf16 %v1463
    %v1720 = vunpack.c.l.bf16 %v1464
    %v1721 = vunpack.c.l.bf16 %v1465
    %v1722 = vunpack.c.l.bf16 %v1466
    %v1723 = vunpack.c.l.bf16 %v1467
    %v1724 = vunpack.c.l.bf16 %v1468
    %v1725 = vunpack.c.l.bf16 %v1469
    %v1726 = vunpack.c.l.bf16 %v1470
    %v1727 = vunpack.c.l.bf16 %v1471
    %v1728 = vunpack.c.l.bf16 %v1472
    %v1729 = vunpack.c.l.bf16 %v1473
    %v1730 = vunpack.c.l.bf16 %v1474
    %v1731 = vunpack.c.l.bf16 %v1475
    %v1732 = vunpack.c.l.bf16 %v1476
    %v1733 = vunpack.c.l.bf16 %v1477
    %v1734 = vunpack.c.l.bf16 %v1478
    %v1735 = vunpack.c.l.bf16 %v1479
    %v1736 = vunpack.c.l.bf16 %v1480
    %v1737 = vunpack.c.l.bf16 %v1481
    %v1738 = vunpack.c.l.bf16 %v1482
    %v1739 = vunpack.c.l.bf16 %v1483
    %v1740 = vunpack.c.l.bf16 %v1484
    %v1741 = vunpack.c.l.bf16 %v1485
    %v1742 = vunpack.c.l.bf16 %v1486
    %v1743 = vunpack.c.l.bf16 %v1487
    %v1744 = vunpack.c.l.bf16 %v1488
    %v1745 = vunpack.c.l.bf16 %v1489
    %v1746 = vunpack.c.l.bf16 %v1490
    %v1747 = vunpack.c.l.bf16 %v1491
    %v1748 = vunpack.c.l.bf16 %v1492
    %v1749 = vunpack.c.l.bf16 %v1493
    %v1750 = vunpack.c.l.bf16 %v1494
    %v1751 = vunpack.c.l.bf16 %v1495
    %v1752 = vunpack.c.l.bf16 %v1496
    %v1753 = vunpack.c.l.bf16 %v1497
    %v1754 = vunpack.c.l.bf16 %v1498
    %v1755 = vunpack.c.l.bf16 %v1499
    %v1756 = vunpack.c.l.bf16 %v1500
    %v1757 = vunpack.c.l.bf16 %v1501
    %v1758 = vunpack.c.l.bf16 %v1502
    %v1759 = vunpack.c.l.bf16 %v1503
    %v1760 = vunpack.c.l.bf16 %v1504
    %v1761 = vunpack.c.l.bf16 %v1505
    %v1762 = vunpack.c.l.bf16 %v1506
    %v1763 = vunpack.c.l.bf16 %v1507
    %v1764 = vunpack.c.l.bf16 %v1508
    %v1765 = vunpack.c.l.bf16 %v1509
    %v1766 = vunpack.c.l.bf16 %v1510
    %v1767 = vunpack.c.l.bf16 %v1511
    %v1768 = vunpack.c.l.bf16 %v1512
    %v1769 = vunpack.c.l.bf16 %v1513
    %v1770 = vunpack.c.l.bf16 %v1514
    %v1771 = vunpack.c.l.bf16 %v1515
    %v1772 = vunpack.c.l.bf16 %v1516
    %v1773 = vunpack.c.l.bf16 %v1517
    %v1774 = vunpack.c.l.bf16 %v1518
    %v1775 = vunpack.c.l.bf16 %v1519
    %v1776 = vunpack.c.l.bf16 %v1520
    %v1777 = vunpack.c.l.bf16 %v1521
    %v1778 = vunpack.c.l.bf16 %v1522
    %v1779 = vunpack.c.l.bf16 %v1523
    %v1780 = vunpack.c.l.bf16 %v1524
    %v1781 = vunpack.c.l.bf16 %v1525
    %v1782 = vunpack.c.l.bf16 %v1526
    %v1783 = vunpack.c.l.bf16 %v1527
    %v1784 = vunpack.c.l.bf16 %v1528
    %v1785 = vunpack.c.l.bf16 %v1529
    %v1786 = vunpack.c.l.bf16 %v1530
    %v1787 = vunpack.c.l.bf16 %v1531
    %v1788 = vunpack.c.l.bf16 %v1532
    %v1789 = vunpack.c.l.bf16 %v1533
    %v1790 = vunpack.c.l.bf16 %v1534
    %v1791 = vunpack.c.l.bf16 %v1535
    %v1792 = vunpack.c.l.bf16 %v1536
    %v1793 = vunpack.c.l.bf16 %v1537
    %v1794 = vunpack.c.l.bf16 %v1538
    %v1795 = vunpack.c.l.bf16 %v1539
    %v1796 = vunpack.c.l.bf16 %v1540
    %v1797 = vunpack.c.l.bf16 %v1541
    %v1798 = vunpack.c.l.bf16 %v1542
    %v1799 = vunpack.c.l.bf16 %v1543
    %v1800 = vunpack.c.l.bf16 %v1544
    %v1801 = vunpack.c.l.bf16 %v1545
    %v1802 = vunpack.c.l.bf16 %v1546
    %v1803 = vunpack.c.l.bf16 %v1547
    %v1804 = vunpack.c.l.bf16 %v1548
    %v1805 = vunpack.c.l.bf16 %v1549
    %v1806 = vunpack.c.l.bf16 %v1550
    %v1807 = vunpack.c.l.bf16 %v1551
    %v1808 = vunpack.c.l.bf16 %v1552
    %v1809 = vunpack.c.l.bf16 %v1553
    %v1810 = vunpack.c.l.bf16 %v1554
    %v1811 = vunpack.c.l.bf16 %v1555
    %v1812 = vunpack.c.l.bf16 %v1556
    %v1813 = vunpack.c.l.bf16 %v1557
    %v1814 = vunpack.c.l.bf16 %v1558
    %v1815 = vunpack.c.l.bf16 %v1559
    %v1816 = vunpack.c.l.bf16 %v1560
    %v1817 = vunpack.c.l.bf16 %v1561
    %v1818 = vunpack.c.l.bf16 %v1562
    %v1819 = vunpack.c.l.bf16 %v1563
    %v1820 = vunpack.c.l.bf16 %v1564
    %v1821 = vunpack.c.l.bf16 %v1565
    %v1822 = vunpack.c.l.bf16 %v1566
    %v1823 = vunpack.c.l.bf16 %v1567
    %v1824 = vunpack.c.l.bf16 %v1568
    %v1825 = vunpack.c.l.bf16 %v1569
    %v1826 = vunpack.c.l.bf16 %v1570
    %v1827 = vunpack.c.l.bf16 %v1571
    %v1828 = vunpack.c.l.bf16 %v1572
    %v1829 = vunpack.c.l.bf16 %v1573
    %v1830 = vunpack.c.l.bf16 %v1574
    %v1831 = vunpack.c.l.bf16 %v1575
    %v1832 = vunpack.c.l.bf16 %v1576
    %v1833 = vunpack.c.l.bf16 %v1577
    %v1834 = vunpack.c.l.bf16 %v1578
    %v1835 = vunpack.c.l.bf16 %v1579
    %v1836 = vunpack.c.l.bf16 %v1580
    %v1837 = vunpack.c.l.bf16 %v1581
    %v1838 = vunpack.c.l.bf16 %v1582
    %v1839 = vunpack.c.l.bf16 %v1583
    %v1840 = vunpack.c.l.bf16 %v1584
    %v1841 = vunpack.c.l.bf16 %v1585
    %v1842 = vunpack.c.l.bf16 %v1586
    %v1843 = vunpack.c.l.bf16 %v1587
    %v1844 = vunpack.c.l.bf16 %v1588
    %v1845 = vunpack.c.l.bf16 %v1589
    %v1846 = vunpack.c.l.bf16 %v1590
    %v1847 = vunpack.c.l.bf16 %v1591
    %v1848 = vunpack.c.l.bf16 %v1592
    %v1849 = vunpack.c.l.bf16 %v1593
    %v1850 = vunpack.c.l.bf16 %v1594
    %v1851 = vunpack.c.l.bf16 %v1595
    %v1852 = vunpack.c.l.bf16 %v1596
    %v1853 = vunpack.c.l.bf16 %v1597
    %v1854 = vunpack.c.l.bf16 %v1598
    %v1855 = vunpack.c.l.bf16 %v1599
    %v1856 = vunpack.c.l.bf16 %v1600
    %v1857 = vunpack.c.l.bf16 %v1601
    %v1858 = vunpack.c.l.bf16 %v1602
    %v1859 = vunpack.c.l.bf16 %v1603
    %v1860 = vunpack.c.l.bf16 %v1604
    %v1861 = vunpack.c.l.bf16 %v1605
    %v1862 = vunpack.c.l.bf16 %v1606
    %v1863 = vunpack.c.l.bf16 %v1607
    %v1864 = vunpack.c.l.bf16 %v1608
    %v1865 = vunpack.c.l.bf16 %v1609
    %v1866 = vunpack.c.l.bf16 %v1610
    %v1867 = vunpack.c.l.bf16 %v1611
    %v1868 = vunpack.c.l.bf16 %v1612
    %v1869 = vunpack.c.l.bf16 %v1613
    %v1870 = vunpack.c.l.bf16 %v1614
    %v1871 = vunpack.c.l.bf16 %v1615
    %v1872 = vunpack.c.l.bf16 %v1616
    %v1873 = vunpack.c.l.bf16 %v1617
    %v1874 = vunpack.c.l.bf16 %v1618
    %v1875 = vunpack.c.l.bf16 %v1619
    %v1876 = vunpack.c.l.bf16 %v1620
    %v1877 = vunpack.c.l.bf16 %v1621
    %v1878 = vunpack.c.l.bf16 %v1622
    %v1879 = vunpack.c.l.bf16 %v1623
    %v1880 = vunpack.c.l.bf16 %v1624
    %v1881 = vunpack.c.l.bf16 %v1625
    %v1882 = vunpack.c.l.bf16 %v1626
    %v1883 = vunpack.c.l.bf16 %v1627
    %v1884 = vunpack.c.l.bf16 %v1628
    %v1885 = vunpack.c.l.bf16 %v1629
    %v1886 = vunpack.c.l.bf16 %v1630
    %v1887 = vunpack.c.l.bf16 %v1631
    %v1888 = vunpack.c.l.bf16 %v1632
    %v1889 = vunpack.c.l.bf16 %v1633
    %v1890 = vunpack.c.l.bf16 %v1634
    %v1891 = vunpack.c.l.bf16 %v1635
    %v1892 = vunpack.c.l.bf16 %v1636
    %v1893 = vunpack.c.l.bf16 %v1637
    %v1894 = vunpack.c.l.bf16 %v1638
    %v1895 = vunpack.c.l.bf16 %v1639
    %v1896 = vunpack.c.l.bf16 %v1640
    %v1897 = vunpack.c.l.bf16 %v1641
    %v1898 = vunpack.c.l.bf16 %v1642
    %v1899 = vunpack.c.l.bf16 %v1643
    %v1900 = vunpack.c.l.bf16 %v1644
    %v1901 = vunpack.c.l.bf16 %v1645
    %v1902 = vunpack.c.l.bf16 %v1646
    %v1903 = vunpack.c.l.bf16 %v1647
    %v1904 = vunpack.c.l.bf16 %v1648
    %v1905 = vunpack.c.l.bf16 %v1649
    %v1906 = vunpack.c.l.bf16 %v1650
    %v1907 = vunpack.c.l.bf16 %v1651
    %v1908 = vunpack.c.l.bf16 %v1652
    %v1909 = vunpack.c.l.bf16 %v1653
    %v1910 = vunpack.c.l.bf16 %v1654
    %v1911 = vunpack.c.l.bf16 %v1655
    %v1912 = vunpack.c.l.bf16 %v1656
    %v1913 = vunpack.c.l.bf16 %v1657
    %v1914 = vunpack.c.l.bf16 %v1658
    %v1915 = vunpack.c.l.bf16 %v1659
    %v1916 = vunpack.c.l.bf16 %v1660
    %v1917 = vunpack.c.l.bf16 %v1661
    %v1918 = vunpack.c.l.bf16 %v1662
    %v1919 = vunpack.c.l.bf16 %v1663
    %v1920 = vunpack.c.l.bf16 %v1664
    %v1921 = vunpack.c.l.bf16 %v1665
    %v1922 = vunpack.c.l.bf16 %v1666
    %v1923 = vunpack.c.l.bf16 %v1667
    %v1924 = vunpack.c.l.bf16 %v1668
    %v1925 = vunpack.c.l.bf16 %v1669
    %v1926 = vunpack.c.l.bf16 %v1670
    %v1927 = vunpack.c.l.bf16 %v1671
    %v1928 = vunpack.c.l.bf16 %v1672
    %v1929 = vunpack.c.l.bf16 %v1673
    %v1930 = vunpack.c.l.bf16 %v1674
    %v1931 = vunpack.c.l.bf16 %v1675
    %v1932 = vunpack.c.l.bf16 %v1676
    %v1933 = vunpack.c.l.bf16 %v1677
    %v1934 = vunpack.c.l.bf16 %v1678
    %v1935 = vunpack.c.l.bf16 %v1679
    %v1936 = vunpack.c.l.bf16 %v1680
    %v1937 = vunpack.c.l.bf16 %v1681
    %v1938 = vunpack.c.l.bf16 %v1682
    %v1939 = vunpack.c.l.bf16 %v1683
    %v1940 = vunpack.c.l.bf16 %v1684
    %v1941 = vunpack.c.l.bf16 %v1685
    %v1942 = vunpack.c.l.bf16 %v1686
    %v1943 = vunpack.c.l.bf16 %v1687
    %v1944 = vunpack.c.l.bf16 %v1688
    %v1945 = vunpack.c.l.bf16 %v1689
    %v1946 = vlaneseq
    %v1947 = vshrl.u32 %v1946, 7
    %v1948 = vsub.s32 0, %v1947
    %v1949 = vrot.slane %v1432, %v1948
    %1951 = vbcast.lane.b32.xlu0 %v1949, 256
    %v1952 = vpop.permute.xlu0 %1951
    %s1954 = sor.u32 256, 8
    %1955 = vbcast.lane.b32.xlu0 %v1949, %s1954
    %v1956 = vpop.permute.xlu0 %1955
    %s1958 = sor.u32 256, 16
    %1959 = vbcast.lane.b32.xlu0 %v1949, %s1958
    %v1960 = vpop.permute.xlu0 %1959
    %s1962 = sor.u32 256, 24
    %1963 = vbcast.lane.b32.xlu0 %v1949, %s1962
    %v1964 = vpop.permute.xlu0 %1963
    %s1966 = sor.u32 256, 32
    %1967 = vbcast.lane.b32.xlu0 %v1949, %s1966
    %v1968 = vpop.permute.xlu0 %1967
    %s1970 = sor.u32 256, 40
    %1971 = vbcast.lane.b32.xlu0 %v1949, %s1970
    %v1972 = vpop.permute.xlu0 %1971
    %s1974 = sor.u32 256, 48
    %1975 = vbcast.lane.b32.xlu0 %v1949, %s1974
    %v1976 = vpop.permute.xlu0 %1975
    %s1978 = sor.u32 256, 56
    %1979 = vbcast.lane.b32.xlu0 %v1949, %s1978
    %v1980 = vpop.permute.xlu0 %1979
    %s1982 = sor.u32 256, 64
    %1983 = vbcast.lane.b32.xlu0 %v1949, %s1982
    %v1984 = vpop.permute.xlu0 %1983
    %s1986 = sor.u32 256, 72
    %1987 = vbcast.lane.b32.xlu0 %v1949, %s1986
    %v1988 = vpop.permute.xlu0 %1987
    %s1990 = sor.u32 256, 80
    %1991 = vbcast.lane.b32.xlu0 %v1949, %s1990
    %v1992 = vpop.permute.xlu0 %1991
    %s1994 = sor.u32 256, 88
    %1995 = vbcast.lane.b32.xlu0 %v1949, %s1994
    %v1996 = vpop.permute.xlu0 %1995
    %s1998 = sor.u32 256, 96
    %1999 = vbcast.lane.b32.xlu0 %v1949, %s1998
    %v2000 = vpop.permute.xlu0 %1999
    %s2002 = sor.u32 256, 104
    %2003 = vbcast.lane.b32.xlu0 %v1949, %s2002
    %v2004 = vpop.permute.xlu0 %2003
    %s2006 = sor.u32 256, 112
    %2007 = vbcast.lane.b32.xlu0 %v1949, %s2006
    %v2008 = vpop.permute.xlu0 %2007
    %s2010 = sor.u32 256, 120
    %2011 = vbcast.lane.b32.xlu0 %v1949, %s2010
    %v2012 = vpop.permute.xlu0 %2011
    %v2013 = vlaneseq
    %v2014 = vshrl.u32 %v2013, 7
    %v2015 = vsub.s32 1, %v2014
    %v2016 = vrot.slane %v1432, %v2015
    %2018 = vbcast.lane.b32.xlu0 %v2016, 256
    %v2019 = vpop.permute.xlu0 %2018
    %s2021 = sor.u32 256, 8
    %2022 = vbcast.lane.b32.xlu0 %v2016, %s2021
    %v2023 = vpop.permute.xlu0 %2022
    %s2025 = sor.u32 256, 16
    %2026 = vbcast.lane.b32.xlu0 %v2016, %s2025
    %v2027 = vpop.permute.xlu0 %2026
    %s2029 = sor.u32 256, 24
    %2030 = vbcast.lane.b32.xlu0 %v2016, %s2029
    %v2031 = vpop.permute.xlu0 %2030
    %s2033 = sor.u32 256, 32
    %2034 = vbcast.lane.b32.xlu0 %v2016, %s2033
    %v2035 = vpop.permute.xlu0 %2034
    %s2037 = sor.u32 256, 40
    %2038 = vbcast.lane.b32.xlu0 %v2016, %s2037
    %v2039 = vpop.permute.xlu0 %2038
    %s2041 = sor.u32 256, 48
    %2042 = vbcast.lane.b32.xlu0 %v2016, %s2041
    %v2043 = vpop.permute.xlu0 %2042
    %s2045 = sor.u32 256, 56
    %2046 = vbcast.lane.b32.xlu0 %v2016, %s2045
    %v2047 = vpop.permute.xlu0 %2046
    %s2049 = sor.u32 256, 64
    %2050 = vbcast.lane.b32.xlu0 %v2016, %s2049
    %v2051 = vpop.permute.xlu0 %2050
    %s2053 = sor.u32 256, 72
    %2054 = vbcast.lane.b32.xlu0 %v2016, %s2053
    %v2055 = vpop.permute.xlu0 %2054
    %s2057 = sor.u32 256, 80
    %2058 = vbcast.lane.b32.xlu0 %v2016, %s2057
    %v2059 = vpop.permute.xlu0 %2058
    %s2061 = sor.u32 256, 88
    %2062 = vbcast.lane.b32.xlu0 %v2016, %s2061
    %v2063 = vpop.permute.xlu0 %2062
    %s2065 = sor.u32 256, 96
    %2066 = vbcast.lane.b32.xlu0 %v2016, %s2065
    %v2067 = vpop.permute.xlu0 %2066
    %s2069 = sor.u32 256, 104
    %2070 = vbcast.lane.b32.xlu0 %v2016, %s2069
    %v2071 = vpop.permute.xlu0 %2070
    %s2073 = sor.u32 256, 112
    %2074 = vbcast.lane.b32.xlu0 %v2016, %s2073
    %v2075 = vpop.permute.xlu0 %2074
    %s2077 = sor.u32 256, 120
    %2078 = vbcast.lane.b32.xlu0 %v2016, %s2077
    %v2079 = vpop.permute.xlu0 %2078
    %v2080 = vlaneseq
    %v2081 = vshrl.u32 %v2080, 7
    %v2082 = vsub.s32 2, %v2081
    %v2083 = vrot.slane %v1432, %v2082
    %2085 = vbcast.lane.b32.xlu0 %v2083, 256
    %v2086 = vpop.permute.xlu0 %2085
    %s2088 = sor.u32 256, 8
    %2089 = vbcast.lane.b32.xlu0 %v2083, %s2088
    %v2090 = vpop.permute.xlu0 %2089
    %s2092 = sor.u32 256, 16
    %2093 = vbcast.lane.b32.xlu0 %v2083, %s2092
    %v2094 = vpop.permute.xlu0 %2093
    %s2096 = sor.u32 256, 24
    %2097 = vbcast.lane.b32.xlu0 %v2083, %s2096
    %v2098 = vpop.permute.xlu0 %2097
    %s2100 = sor.u32 256, 32
    %2101 = vbcast.lane.b32.xlu0 %v2083, %s2100
    %v2102 = vpop.permute.xlu0 %2101
    %s2104 = sor.u32 256, 40
    %2105 = vbcast.lane.b32.xlu0 %v2083, %s2104
    %v2106 = vpop.permute.xlu0 %2105
    %s2108 = sor.u32 256, 48
    %2109 = vbcast.lane.b32.xlu0 %v2083, %s2108
    %v2110 = vpop.permute.xlu0 %2109
    %s2112 = sor.u32 256, 56
    %2113 = vbcast.lane.b32.xlu0 %v2083, %s2112
    %v2114 = vpop.permute.xlu0 %2113
    %s2116 = sor.u32 256, 64
    %2117 = vbcast.lane.b32.xlu0 %v2083, %s2116
    %v2118 = vpop.permute.xlu0 %2117
    %s2120 = sor.u32 256, 72
    %2121 = vbcast.lane.b32.xlu0 %v2083, %s2120
    %v2122 = vpop.permute.xlu0 %2121
    %s2124 = sor.u32 256, 80
    %2125 = vbcast.lane.b32.xlu0 %v2083, %s2124
    %v2126 = vpop.permute.xlu0 %2125
    %s2128 = sor.u32 256, 88
    %2129 = vbcast.lane.b32.xlu0 %v2083, %s2128
    %v2130 = vpop.permute.xlu0 %2129
    %s2132 = sor.u32 256, 96
    %2133 = vbcast.lane.b32.xlu0 %v2083, %s2132
    %v2134 = vpop.permute.xlu0 %2133
    %s2136 = sor.u32 256, 104
    %2137 = vbcast.lane.b32.xlu0 %v2083, %s2136
    %v2138 = vpop.permute.xlu0 %2137
    %s2140 = sor.u32 256, 112
    %2141 = vbcast.lane.b32.xlu0 %v2083, %s2140
    %v2142 = vpop.permute.xlu0 %2141
    %s2144 = sor.u32 256, 120
    %2145 = vbcast.lane.b32.xlu0 %v2083, %s2144
    %v2146 = vpop.permute.xlu0 %2145
    %v2147 = vlaneseq
    %v2148 = vshrl.u32 %v2147, 7
    %v2149 = vsub.s32 3, %v2148
    %v2150 = vrot.slane %v1432, %v2149
    %2152 = vbcast.lane.b32.xlu0 %v2150, 256
    %v2153 = vpop.permute.xlu0 %2152
    %s2155 = sor.u32 256, 8
    %2156 = vbcast.lane.b32.xlu0 %v2150, %s2155
    %v2157 = vpop.permute.xlu0 %2156
    %s2159 = sor.u32 256, 16
    %2160 = vbcast.lane.b32.xlu0 %v2150, %s2159
    %v2161 = vpop.permute.xlu0 %2160
    %s2163 = sor.u32 256, 24
    %2164 = vbcast.lane.b32.xlu0 %v2150, %s2163
    %v2165 = vpop.permute.xlu0 %2164
    %s2167 = sor.u32 256, 32
    %2168 = vbcast.lane.b32.xlu0 %v2150, %s2167
    %v2169 = vpop.permute.xlu0 %2168
    %s2171 = sor.u32 256, 40
    %2172 = vbcast.lane.b32.xlu0 %v2150, %s2171
    %v2173 = vpop.permute.xlu0 %2172
    %s2175 = sor.u32 256, 48
    %2176 = vbcast.lane.b32.xlu0 %v2150, %s2175
    %v2177 = vpop.permute.xlu0 %2176
    %s2179 = sor.u32 256, 56
    %2180 = vbcast.lane.b32.xlu0 %v2150, %s2179
    %v2181 = vpop.permute.xlu0 %2180
    %s2183 = sor.u32 256, 64
    %2184 = vbcast.lane.b32.xlu0 %v2150, %s2183
    %v2185 = vpop.permute.xlu0 %2184
    %s2187 = sor.u32 256, 72
    %2188 = vbcast.lane.b32.xlu0 %v2150, %s2187
    %v2189 = vpop.permute.xlu0 %2188
    %s2191 = sor.u32 256, 80
    %2192 = vbcast.lane.b32.xlu0 %v2150, %s2191
    %v2193 = vpop.permute.xlu0 %2192
    %s2195 = sor.u32 256, 88
    %2196 = vbcast.lane.b32.xlu0 %v2150, %s2195
    %v2197 = vpop.permute.xlu0 %2196
    %s2199 = sor.u32 256, 96
    %2200 = vbcast.lane.b32.xlu0 %v2150, %s2199
    %v2201 = vpop.permute.xlu0 %2200
    %s2203 = sor.u32 256, 104
    %2204 = vbcast.lane.b32.xlu0 %v2150, %s2203
    %v2205 = vpop.permute.xlu0 %2204
    %s2207 = sor.u32 256, 112
    %2208 = vbcast.lane.b32.xlu0 %v2150, %s2207
    %v2209 = vpop.permute.xlu0 %2208
    %s2211 = sor.u32 256, 120
    %2212 = vbcast.lane.b32.xlu0 %v2150, %s2211
    %v2213 = vpop.permute.xlu0 %2212
    %v2214 = vlaneseq
    %v2215 = vshrl.u32 %v2214, 7
    %v2216 = vsub.s32 4, %v2215
    %v2217 = vrot.slane %v1432, %v2216
    %2219 = vbcast.lane.b32.xlu0 %v2217, 256
    %v2220 = vpop.permute.xlu0 %2219
    %s2222 = sor.u32 256, 8
    %2223 = vbcast.lane.b32.xlu0 %v2217, %s2222
    %v2224 = vpop.permute.xlu0 %2223
    %s2226 = sor.u32 256, 16
    %2227 = vbcast.lane.b32.xlu0 %v2217, %s2226
    %v2228 = vpop.permute.xlu0 %2227
    %s2230 = sor.u32 256, 24
    %2231 = vbcast.lane.b32.xlu0 %v2217, %s2230
    %v2232 = vpop.permute.xlu0 %2231
    %s2234 = sor.u32 256, 32
    %2235 = vbcast.lane.b32.xlu0 %v2217, %s2234
    %v2236 = vpop.permute.xlu0 %2235
    %s2238 = sor.u32 256, 40
    %2239 = vbcast.lane.b32.xlu0 %v2217, %s2238
    %v2240 = vpop.permute.xlu0 %2239
    %s2242 = sor.u32 256, 48
    %2243 = vbcast.lane.b32.xlu0 %v2217, %s2242
    %v2244 = vpop.permute.xlu0 %2243
    %s2246 = sor.u32 256, 56
    %2247 = vbcast.lane.b32.xlu0 %v2217, %s2246
    %v2248 = vpop.permute.xlu0 %2247
    %s2250 = sor.u32 256, 64
    %2251 = vbcast.lane.b32.xlu0 %v2217, %s2250
    %v2252 = vpop.permute.xlu0 %2251
    %s2254 = sor.u32 256, 72
    %2255 = vbcast.lane.b32.xlu0 %v2217, %s2254
    %v2256 = vpop.permute.xlu0 %2255
    %s2258 = sor.u32 256, 80
    %2259 = vbcast.lane.b32.xlu0 %v2217, %s2258
    %v2260 = vpop.permute.xlu0 %2259
    %s2262 = sor.u32 256, 88
    %2263 = vbcast.lane.b32.xlu0 %v2217, %s2262
    %v2264 = vpop.permute.xlu0 %2263
    %s2266 = sor.u32 256, 96
    %2267 = vbcast.lane.b32.xlu0 %v2217, %s2266
    %v2268 = vpop.permute.xlu0 %2267
    %s2270 = sor.u32 256, 104
    %2271 = vbcast.lane.b32.xlu0 %v2217, %s2270
    %v2272 = vpop.permute.xlu0 %2271
    %s2274 = sor.u32 256, 112
    %2275 = vbcast.lane.b32.xlu0 %v2217, %s2274
    %v2276 = vpop.permute.xlu0 %2275
    %s2278 = sor.u32 256, 120
    %2279 = vbcast.lane.b32.xlu0 %v2217, %s2278
    %v2280 = vpop.permute.xlu0 %2279
    %v2281 = vlaneseq
    %v2282 = vshrl.u32 %v2281, 7
    %v2283 = vsub.s32 5, %v2282
    %v2284 = vrot.slane %v1432, %v2283
    %2286 = vbcast.lane.b32.xlu0 %v2284, 256
    %v2287 = vpop.permute.xlu0 %2286
    %s2289 = sor.u32 256, 8
    %2290 = vbcast.lane.b32.xlu0 %v2284, %s2289
    %v2291 = vpop.permute.xlu0 %2290
    %s2293 = sor.u32 256, 16
    %2294 = vbcast.lane.b32.xlu0 %v2284, %s2293
    %v2295 = vpop.permute.xlu0 %2294
    %s2297 = sor.u32 256, 24
    %2298 = vbcast.lane.b32.xlu0 %v2284, %s2297
    %v2299 = vpop.permute.xlu0 %2298
    %s2301 = sor.u32 256, 32
    %2302 = vbcast.lane.b32.xlu0 %v2284, %s2301
    %v2303 = vpop.permute.xlu0 %2302
    %s2305 = sor.u32 256, 40
    %2306 = vbcast.lane.b32.xlu0 %v2284, %s2305
    %v2307 = vpop.permute.xlu0 %2306
    %s2309 = sor.u32 256, 48
    %2310 = vbcast.lane.b32.xlu0 %v2284, %s2309
    %v2311 = vpop.permute.xlu0 %2310
    %s2313 = sor.u32 256, 56
    %2314 = vbcast.lane.b32.xlu0 %v2284, %s2313
    %v2315 = vpop.permute.xlu0 %2314
    %s2317 = sor.u32 256, 64
    %2318 = vbcast.lane.b32.xlu0 %v2284, %s2317
    %v2319 = vpop.permute.xlu0 %2318
    %s2321 = sor.u32 256, 72
    %2322 = vbcast.lane.b32.xlu0 %v2284, %s2321
    %v2323 = vpop.permute.xlu0 %2322
    %s2325 = sor.u32 256, 80
    %2326 = vbcast.lane.b32.xlu0 %v2284, %s2325
    %v2327 = vpop.permute.xlu0 %2326
    %s2329 = sor.u32 256, 88
    %2330 = vbcast.lane.b32.xlu0 %v2284, %s2329
    %v2331 = vpop.permute.xlu0 %2330
    %s2333 = sor.u32 256, 96
    %2334 = vbcast.lane.b32.xlu0 %v2284, %s2333
    %v2335 = vpop.permute.xlu0 %2334
    %s2337 = sor.u32 256, 104
    %2338 = vbcast.lane.b32.xlu0 %v2284, %s2337
    %v2339 = vpop.permute.xlu0 %2338
    %s2341 = sor.u32 256, 112
    %2342 = vbcast.lane.b32.xlu0 %v2284, %s2341
    %v2343 = vpop.permute.xlu0 %2342
    %s2345 = sor.u32 256, 120
    %2346 = vbcast.lane.b32.xlu0 %v2284, %s2345
    %v2347 = vpop.permute.xlu0 %2346
    %v2348 = vlaneseq
    %v2349 = vshrl.u32 %v2348, 7
    %v2350 = vsub.s32 6, %v2349
    %v2351 = vrot.slane %v1432, %v2350
    %2353 = vbcast.lane.b32.xlu0 %v2351, 256
    %v2354 = vpop.permute.xlu0 %2353
    %s2356 = sor.u32 256, 8
    %2357 = vbcast.lane.b32.xlu0 %v2351, %s2356
    %v2358 = vpop.permute.xlu0 %2357
    %s2360 = sor.u32 256, 16
    %2361 = vbcast.lane.b32.xlu0 %v2351, %s2360
    %v2362 = vpop.permute.xlu0 %2361
    %s2364 = sor.u32 256, 24
    %2365 = vbcast.lane.b32.xlu0 %v2351, %s2364
    %v2366 = vpop.permute.xlu0 %2365
    %s2368 = sor.u32 256, 32
    %2369 = vbcast.lane.b32.xlu0 %v2351, %s2368
    %v2370 = vpop.permute.xlu0 %2369
    %s2372 = sor.u32 256, 40
    %2373 = vbcast.lane.b32.xlu0 %v2351, %s2372
    %v2374 = vpop.permute.xlu0 %2373
    %s2376 = sor.u32 256, 48
    %2377 = vbcast.lane.b32.xlu0 %v2351, %s2376
    %v2378 = vpop.permute.xlu0 %2377
    %s2380 = sor.u32 256, 56
    %2381 = vbcast.lane.b32.xlu0 %v2351, %s2380
    %v2382 = vpop.permute.xlu0 %2381
    %s2384 = sor.u32 256, 64
    %2385 = vbcast.lane.b32.xlu0 %v2351, %s2384
    %v2386 = vpop.permute.xlu0 %2385
    %s2388 = sor.u32 256, 72
    %2389 = vbcast.lane.b32.xlu0 %v2351, %s2388
    %v2390 = vpop.permute.xlu0 %2389
    %s2392 = sor.u32 256, 80
    %2393 = vbcast.lane.b32.xlu0 %v2351, %s2392
    %v2394 = vpop.permute.xlu0 %2393
    %s2396 = sor.u32 256, 88
    %2397 = vbcast.lane.b32.xlu0 %v2351, %s2396
    %v2398 = vpop.permute.xlu0 %2397
    %s2400 = sor.u32 256, 96
    %2401 = vbcast.lane.b32.xlu0 %v2351, %s2400
    %v2402 = vpop.permute.xlu0 %2401
    %s2404 = sor.u32 256, 104
    %2405 = vbcast.lane.b32.xlu0 %v2351, %s2404
    %v2406 = vpop.permute.xlu0 %2405
    %s2408 = sor.u32 256, 112
    %2409 = vbcast.lane.b32.xlu0 %v2351, %s2408
    %v2410 = vpop.permute.xlu0 %2409
    %s2412 = sor.u32 256, 120
    %2413 = vbcast.lane.b32.xlu0 %v2351, %s2412
    %v2414 = vpop.permute.xlu0 %2413
    %v2415 = vlaneseq
    %v2416 = vshrl.u32 %v2415, 7
    %v2417 = vsub.s32 7, %v2416
    %v2418 = vrot.slane %v1432, %v2417
    %2420 = vbcast.lane.b32.xlu0 %v2418, 256
    %v2421 = vpop.permute.xlu0 %2420
    %s2423 = sor.u32 256, 8
    %2424 = vbcast.lane.b32.xlu0 %v2418, %s2423
    %v2425 = vpop.permute.xlu0 %2424
    %s2427 = sor.u32 256, 16
    %2428 = vbcast.lane.b32.xlu0 %v2418, %s2427
    %v2429 = vpop.permute.xlu0 %2428
    %s2431 = sor.u32 256, 24
    %2432 = vbcast.lane.b32.xlu0 %v2418, %s2431
    %v2433 = vpop.permute.xlu0 %2432
    %s2435 = sor.u32 256, 32
    %2436 = vbcast.lane.b32.xlu0 %v2418, %s2435
    %v2437 = vpop.permute.xlu0 %2436
    %s2439 = sor.u32 256, 40
    %2440 = vbcast.lane.b32.xlu0 %v2418, %s2439
    %v2441 = vpop.permute.xlu0 %2440
    %s2443 = sor.u32 256, 48
    %2444 = vbcast.lane.b32.xlu0 %v2418, %s2443
    %v2445 = vpop.permute.xlu0 %2444
    %s2447 = sor.u32 256, 56
    %2448 = vbcast.lane.b32.xlu0 %v2418, %s2447
    %v2449 = vpop.permute.xlu0 %2448
    %s2451 = sor.u32 256, 64
    %2452 = vbcast.lane.b32.xlu0 %v2418, %s2451
    %v2453 = vpop.permute.xlu0 %2452
    %s2455 = sor.u32 256, 72
    %2456 = vbcast.lane.b32.xlu0 %v2418, %s2455
    %v2457 = vpop.permute.xlu0 %2456
    %s2459 = sor.u32 256, 80
    %2460 = vbcast.lane.b32.xlu0 %v2418, %s2459
    %v2461 = vpop.permute.xlu0 %2460
    %s2463 = sor.u32 256, 88
    %2464 = vbcast.lane.b32.xlu0 %v2418, %s2463
    %v2465 = vpop.permute.xlu0 %2464
    %s2467 = sor.u32 256, 96
    %2468 = vbcast.lane.b32.xlu0 %v2418, %s2467
    %v2469 = vpop.permute.xlu0 %2468
    %s2471 = sor.u32 256, 104
    %2472 = vbcast.lane.b32.xlu0 %v2418, %s2471
    %v2473 = vpop.permute.xlu0 %2472
    %s2475 = sor.u32 256, 112
    %2476 = vbcast.lane.b32.xlu0 %v2418, %s2475
    %v2477 = vpop.permute.xlu0 %2476
    %s2479 = sor.u32 256, 120
    %2480 = vbcast.lane.b32.xlu0 %v2418, %s2479
    %v2481 = vpop.permute.xlu0 %2480
    %v2482 = vlaneseq
    %v2483 = vshrl.u32 %v2482, 7
    %v2484 = vsub.s32 0, %v2483
    %v2485 = vrot.slane %v1433, %v2484
    %2487 = vbcast.lane.b32.xlu0 %v2485, 256
    %v2488 = vpop.permute.xlu0 %2487
    %s2490 = sor.u32 256, 8
    %2491 = vbcast.lane.b32.xlu0 %v2485, %s2490
    %v2492 = vpop.permute.xlu0 %2491
    %s2494 = sor.u32 256, 16
    %2495 = vbcast.lane.b32.xlu0 %v2485, %s2494
    %v2496 = vpop.permute.xlu0 %2495
    %s2498 = sor.u32 256, 24
    %2499 = vbcast.lane.b32.xlu0 %v2485, %s2498
    %v2500 = vpop.permute.xlu0 %2499
    %s2502 = sor.u32 256, 32
    %2503 = vbcast.lane.b32.xlu0 %v2485, %s2502
    %v2504 = vpop.permute.xlu0 %2503
    %s2506 = sor.u32 256, 40
    %2507 = vbcast.lane.b32.xlu0 %v2485, %s2506
    %v2508 = vpop.permute.xlu0 %2507
    %s2510 = sor.u32 256, 48
    %2511 = vbcast.lane.b32.xlu0 %v2485, %s2510
    %v2512 = vpop.permute.xlu0 %2511
    %s2514 = sor.u32 256, 56
    %2515 = vbcast.lane.b32.xlu0 %v2485, %s2514
    %v2516 = vpop.permute.xlu0 %2515
    %s2518 = sor.u32 256, 64
    %2519 = vbcast.lane.b32.xlu0 %v2485, %s2518
    %v2520 = vpop.permute.xlu0 %2519
    %s2522 = sor.u32 256, 72
    %2523 = vbcast.lane.b32.xlu0 %v2485, %s2522
    %v2524 = vpop.permute.xlu0 %2523
    %s2526 = sor.u32 256, 80
    %2527 = vbcast.lane.b32.xlu0 %v2485, %s2526
    %v2528 = vpop.permute.xlu0 %2527
    %s2530 = sor.u32 256, 88
    %2531 = vbcast.lane.b32.xlu0 %v2485, %s2530
    %v2532 = vpop.permute.xlu0 %2531
    %s2534 = sor.u32 256, 96
    %2535 = vbcast.lane.b32.xlu0 %v2485, %s2534
    %v2536 = vpop.permute.xlu0 %2535
    %s2538 = sor.u32 256, 104
    %2539 = vbcast.lane.b32.xlu0 %v2485, %s2538
    %v2540 = vpop.permute.xlu0 %2539
    %s2542 = sor.u32 256, 112
    %2543 = vbcast.lane.b32.xlu0 %v2485, %s2542
    %v2544 = vpop.permute.xlu0 %2543
    %s2546 = sor.u32 256, 120
    %2547 = vbcast.lane.b32.xlu0 %v2485, %s2546
    %v2548 = vpop.permute.xlu0 %2547
    %v2549 = vlaneseq
    %v2550 = vshrl.u32 %v2549, 7
    %v2551 = vsub.s32 1, %v2550
    %v2552 = vrot.slane %v1433, %v2551
    %2554 = vbcast.lane.b32.xlu0 %v2552, 256
    %v2555 = vpop.permute.xlu0 %2554
    %s2557 = sor.u32 256, 8
    %2558 = vbcast.lane.b32.xlu0 %v2552, %s2557
    %v2559 = vpop.permute.xlu0 %2558
    %s2561 = sor.u32 256, 16
    %2562 = vbcast.lane.b32.xlu0 %v2552, %s2561
    %v2563 = vpop.permute.xlu0 %2562
    %s2565 = sor.u32 256, 24
    %2566 = vbcast.lane.b32.xlu0 %v2552, %s2565
    %v2567 = vpop.permute.xlu0 %2566
    %s2569 = sor.u32 256, 32
    %2570 = vbcast.lane.b32.xlu0 %v2552, %s2569
    %v2571 = vpop.permute.xlu0 %2570
    %s2573 = sor.u32 256, 40
    %2574 = vbcast.lane.b32.xlu0 %v2552, %s2573
    %v2575 = vpop.permute.xlu0 %2574
    %s2577 = sor.u32 256, 48
    %2578 = vbcast.lane.b32.xlu0 %v2552, %s2577
    %v2579 = vpop.permute.xlu0 %2578
    %s2581 = sor.u32 256, 56
    %2582 = vbcast.lane.b32.xlu0 %v2552, %s2581
    %v2583 = vpop.permute.xlu0 %2582
    %s2585 = sor.u32 256, 64
    %2586 = vbcast.lane.b32.xlu0 %v2552, %s2585
    %v2587 = vpop.permute.xlu0 %2586
    %s2589 = sor.u32 256, 72
    %2590 = vbcast.lane.b32.xlu0 %v2552, %s2589
    %v2591 = vpop.permute.xlu0 %2590
    %s2593 = sor.u32 256, 80
    %2594 = vbcast.lane.b32.xlu0 %v2552, %s2593
    %v2595 = vpop.permute.xlu0 %2594
    %s2597 = sor.u32 256, 88
    %2598 = vbcast.lane.b32.xlu0 %v2552, %s2597
    %v2599 = vpop.permute.xlu0 %2598
    %s2601 = sor.u32 256, 96
    %2602 = vbcast.lane.b32.xlu0 %v2552, %s2601
    %v2603 = vpop.permute.xlu0 %2602
    %s2605 = sor.u32 256, 104
    %2606 = vbcast.lane.b32.xlu0 %v2552, %s2605
    %v2607 = vpop.permute.xlu0 %2606
    %s2609 = sor.u32 256, 112
    %2610 = vbcast.lane.b32.xlu0 %v2552, %s2609
    %v2611 = vpop.permute.xlu0 %2610
    %s2613 = sor.u32 256, 120
    %2614 = vbcast.lane.b32.xlu0 %v2552, %s2613
    %v2615 = vpop.permute.xlu0 %2614
    %v2616 = vlaneseq
    %v2617 = vshrl.u32 %v2616, 7
    %v2618 = vsub.s32 2, %v2617
    %v2619 = vrot.slane %v1433, %v2618
    %2621 = vbcast.lane.b32.xlu0 %v2619, 256
    %v2622 = vpop.permute.xlu0 %2621
    %s2624 = sor.u32 256, 8
    %2625 = vbcast.lane.b32.xlu0 %v2619, %s2624
    %v2626 = vpop.permute.xlu0 %2625
    %s2628 = sor.u32 256, 16
    %2629 = vbcast.lane.b32.xlu0 %v2619, %s2628
    %v2630 = vpop.permute.xlu0 %2629
    %s2632 = sor.u32 256, 24
    %2633 = vbcast.lane.b32.xlu0 %v2619, %s2632
    %v2634 = vpop.permute.xlu0 %2633
    %s2636 = sor.u32 256, 32
    %2637 = vbcast.lane.b32.xlu0 %v2619, %s2636
    %v2638 = vpop.permute.xlu0 %2637
    %s2640 = sor.u32 256, 40
    %2641 = vbcast.lane.b32.xlu0 %v2619, %s2640
    %v2642 = vpop.permute.xlu0 %2641
    %s2644 = sor.u32 256, 48
    %2645 = vbcast.lane.b32.xlu0 %v2619, %s2644
    %v2646 = vpop.permute.xlu0 %2645
    %s2648 = sor.u32 256, 56
    %2649 = vbcast.lane.b32.xlu0 %v2619, %s2648
    %v2650 = vpop.permute.xlu0 %2649
    %s2652 = sor.u32 256, 64
    %2653 = vbcast.lane.b32.xlu0 %v2619, %s2652
    %v2654 = vpop.permute.xlu0 %2653
    %s2656 = sor.u32 256, 72
    %2657 = vbcast.lane.b32.xlu0 %v2619, %s2656
    %v2658 = vpop.permute.xlu0 %2657
    %s2660 = sor.u32 256, 80
    %2661 = vbcast.lane.b32.xlu0 %v2619, %s2660
    %v2662 = vpop.permute.xlu0 %2661
    %s2664 = sor.u32 256, 88
    %2665 = vbcast.lane.b32.xlu0 %v2619, %s2664
    %v2666 = vpop.permute.xlu0 %2665
    %s2668 = sor.u32 256, 96
    %2669 = vbcast.lane.b32.xlu0 %v2619, %s2668
    %v2670 = vpop.permute.xlu0 %2669
    %s2672 = sor.u32 256, 104
    %2673 = vbcast.lane.b32.xlu0 %v2619, %s2672
    %v2674 = vpop.permute.xlu0 %2673
    %s2676 = sor.u32 256, 112
    %2677 = vbcast.lane.b32.xlu0 %v2619, %s2676
    %v2678 = vpop.permute.xlu0 %2677
    %s2680 = sor.u32 256, 120
    %2681 = vbcast.lane.b32.xlu0 %v2619, %s2680
    %v2682 = vpop.permute.xlu0 %2681
    %v2683 = vlaneseq
    %v2684 = vshrl.u32 %v2683, 7
    %v2685 = vsub.s32 3, %v2684
    %v2686 = vrot.slane %v1433, %v2685
    %2688 = vbcast.lane.b32.xlu0 %v2686, 256
    %v2689 = vpop.permute.xlu0 %2688
    %s2691 = sor.u32 256, 8
    %2692 = vbcast.lane.b32.xlu0 %v2686, %s2691
    %v2693 = vpop.permute.xlu0 %2692
    %s2695 = sor.u32 256, 16
    %2696 = vbcast.lane.b32.xlu0 %v2686, %s2695
    %v2697 = vpop.permute.xlu0 %2696
    %s2699 = sor.u32 256, 24
    %2700 = vbcast.lane.b32.xlu0 %v2686, %s2699
    %v2701 = vpop.permute.xlu0 %2700
    %s2703 = sor.u32 256, 32
    %2704 = vbcast.lane.b32.xlu0 %v2686, %s2703
    %v2705 = vpop.permute.xlu0 %2704
    %s2707 = sor.u32 256, 40
    %2708 = vbcast.lane.b32.xlu0 %v2686, %s2707
    %v2709 = vpop.permute.xlu0 %2708
    %s2711 = sor.u32 256, 48
    %2712 = vbcast.lane.b32.xlu0 %v2686, %s2711
    %v2713 = vpop.permute.xlu0 %2712
    %s2715 = sor.u32 256, 56
    %2716 = vbcast.lane.b32.xlu0 %v2686, %s2715
    %v2717 = vpop.permute.xlu0 %2716
    %s2719 = sor.u32 256, 64
    %2720 = vbcast.lane.b32.xlu0 %v2686, %s2719
    %v2721 = vpop.permute.xlu0 %2720
    %s2723 = sor.u32 256, 72
    %2724 = vbcast.lane.b32.xlu0 %v2686, %s2723
    %v2725 = vpop.permute.xlu0 %2724
    %s2727 = sor.u32 256, 80
    %2728 = vbcast.lane.b32.xlu0 %v2686, %s2727
    %v2729 = vpop.permute.xlu0 %2728
    %s2731 = sor.u32 256, 88
    %2732 = vbcast.lane.b32.xlu0 %v2686, %s2731
    %v2733 = vpop.permute.xlu0 %2732
    %s2735 = sor.u32 256, 96
    %2736 = vbcast.lane.b32.xlu0 %v2686, %s2735
    %v2737 = vpop.permute.xlu0 %2736
    %s2739 = sor.u32 256, 104
    %2740 = vbcast.lane.b32.xlu0 %v2686, %s2739
    %v2741 = vpop.permute.xlu0 %2740
    %s2743 = sor.u32 256, 112
    %2744 = vbcast.lane.b32.xlu0 %v2686, %s2743
    %v2745 = vpop.permute.xlu0 %2744
    %s2747 = sor.u32 256, 120
    %2748 = vbcast.lane.b32.xlu0 %v2686, %s2747
    %v2749 = vpop.permute.xlu0 %2748
    %v2750 = vlaneseq
    %v2751 = vshrl.u32 %v2750, 7
    %v2752 = vsub.s32 4, %v2751
    %v2753 = vrot.slane %v1433, %v2752
    %2755 = vbcast.lane.b32.xlu0 %v2753, 256
    %v2756 = vpop.permute.xlu0 %2755
    %s2758 = sor.u32 256, 8
    %2759 = vbcast.lane.b32.xlu0 %v2753, %s2758
    %v2760 = vpop.permute.xlu0 %2759
    %s2762 = sor.u32 256, 16
    %2763 = vbcast.lane.b32.xlu0 %v2753, %s2762
    %v2764 = vpop.permute.xlu0 %2763
    %s2766 = sor.u32 256, 24
    %2767 = vbcast.lane.b32.xlu0 %v2753, %s2766
    %v2768 = vpop.permute.xlu0 %2767
    %s2770 = sor.u32 256, 32
    %2771 = vbcast.lane.b32.xlu0 %v2753, %s2770
    %v2772 = vpop.permute.xlu0 %2771
    %s2774 = sor.u32 256, 40
    %2775 = vbcast.lane.b32.xlu0 %v2753, %s2774
    %v2776 = vpop.permute.xlu0 %2775
    %s2778 = sor.u32 256, 48
    %2779 = vbcast.lane.b32.xlu0 %v2753, %s2778
    %v2780 = vpop.permute.xlu0 %2779
    %s2782 = sor.u32 256, 56
    %2783 = vbcast.lane.b32.xlu0 %v2753, %s2782
    %v2784 = vpop.permute.xlu0 %2783
    %s2786 = sor.u32 256, 64
    %2787 = vbcast.lane.b32.xlu0 %v2753, %s2786
    %v2788 = vpop.permute.xlu0 %2787
    %s2790 = sor.u32 256, 72
    %2791 = vbcast.lane.b32.xlu0 %v2753, %s2790
    %v2792 = vpop.permute.xlu0 %2791
    %s2794 = sor.u32 256, 80
    %2795 = vbcast.lane.b32.xlu0 %v2753, %s2794
    %v2796 = vpop.permute.xlu0 %2795
    %s2798 = sor.u32 256, 88
    %2799 = vbcast.lane.b32.xlu0 %v2753, %s2798
    %v2800 = vpop.permute.xlu0 %2799
    %s2802 = sor.u32 256, 96
    %2803 = vbcast.lane.b32.xlu0 %v2753, %s2802
    %v2804 = vpop.permute.xlu0 %2803
    %s2806 = sor.u32 256, 104
    %2807 = vbcast.lane.b32.xlu0 %v2753, %s2806
    %v2808 = vpop.permute.xlu0 %2807
    %s2810 = sor.u32 256, 112
    %2811 = vbcast.lane.b32.xlu0 %v2753, %s2810
    %v2812 = vpop.permute.xlu0 %2811
    %s2814 = sor.u32 256, 120
    %2815 = vbcast.lane.b32.xlu0 %v2753, %s2814
    %v2816 = vpop.permute.xlu0 %2815
    %v2817 = vlaneseq
    %v2818 = vshrl.u32 %v2817, 7
    %v2819 = vsub.s32 5, %v2818
    %v2820 = vrot.slane %v1433, %v2819
    %2822 = vbcast.lane.b32.xlu0 %v2820, 256
    %v2823 = vpop.permute.xlu0 %2822
    %s2825 = sor.u32 256, 8
    %2826 = vbcast.lane.b32.xlu0 %v2820, %s2825
    %v2827 = vpop.permute.xlu0 %2826
    %s2829 = sor.u32 256, 16
    %2830 = vbcast.lane.b32.xlu0 %v2820, %s2829
    %v2831 = vpop.permute.xlu0 %2830
    %s2833 = sor.u32 256, 24
    %2834 = vbcast.lane.b32.xlu0 %v2820, %s2833
    %v2835 = vpop.permute.xlu0 %2834
    %s2837 = sor.u32 256, 32
    %2838 = vbcast.lane.b32.xlu0 %v2820, %s2837
    %v2839 = vpop.permute.xlu0 %2838
    %s2841 = sor.u32 256, 40
    %2842 = vbcast.lane.b32.xlu0 %v2820, %s2841
    %v2843 = vpop.permute.xlu0 %2842
    %s2845 = sor.u32 256, 48
    %2846 = vbcast.lane.b32.xlu0 %v2820, %s2845
    %v2847 = vpop.permute.xlu0 %2846
    %s2849 = sor.u32 256, 56
    %2850 = vbcast.lane.b32.xlu0 %v2820, %s2849
    %v2851 = vpop.permute.xlu0 %2850
    %s2853 = sor.u32 256, 64
    %2854 = vbcast.lane.b32.xlu0 %v2820, %s2853
    %v2855 = vpop.permute.xlu0 %2854
    %s2857 = sor.u32 256, 72
    %2858 = vbcast.lane.b32.xlu0 %v2820, %s2857
    %v2859 = vpop.permute.xlu0 %2858
    %s2861 = sor.u32 256, 80
    %2862 = vbcast.lane.b32.xlu0 %v2820, %s2861
    %v2863 = vpop.permute.xlu0 %2862
    %s2865 = sor.u32 256, 88
    %2866 = vbcast.lane.b32.xlu0 %v2820, %s2865
    %v2867 = vpop.permute.xlu0 %2866
    %s2869 = sor.u32 256, 96
    %2870 = vbcast.lane.b32.xlu0 %v2820, %s2869
    %v2871 = vpop.permute.xlu0 %2870
    %s2873 = sor.u32 256, 104
    %2874 = vbcast.lane.b32.xlu0 %v2820, %s2873
    %v2875 = vpop.permute.xlu0 %2874
    %s2877 = sor.u32 256, 112
    %2878 = vbcast.lane.b32.xlu0 %v2820, %s2877
    %v2879 = vpop.permute.xlu0 %2878
    %s2881 = sor.u32 256, 120
    %2882 = vbcast.lane.b32.xlu0 %v2820, %s2881
    %v2883 = vpop.permute.xlu0 %2882
    %v2884 = vlaneseq
    %v2885 = vshrl.u32 %v2884, 7
    %v2886 = vsub.s32 6, %v2885
    %v2887 = vrot.slane %v1433, %v2886
    %2889 = vbcast.lane.b32.xlu0 %v2887, 256
    %v2890 = vpop.permute.xlu0 %2889
    %s2892 = sor.u32 256, 8
    %2893 = vbcast.lane.b32.xlu0 %v2887, %s2892
    %v2894 = vpop.permute.xlu0 %2893
    %s2896 = sor.u32 256, 16
    %2897 = vbcast.lane.b32.xlu0 %v2887, %s2896
    %v2898 = vpop.permute.xlu0 %2897
    %s2900 = sor.u32 256, 24
    %2901 = vbcast.lane.b32.xlu0 %v2887, %s2900
    %v2902 = vpop.permute.xlu0 %2901
    %s2904 = sor.u32 256, 32
    %2905 = vbcast.lane.b32.xlu0 %v2887, %s2904
    %v2906 = vpop.permute.xlu0 %2905
    %s2908 = sor.u32 256, 40
    %2909 = vbcast.lane.b32.xlu0 %v2887, %s2908
    %v2910 = vpop.permute.xlu0 %2909
    %s2912 = sor.u32 256, 48
    %2913 = vbcast.lane.b32.xlu0 %v2887, %s2912
    %v2914 = vpop.permute.xlu0 %2913
    %s2916 = sor.u32 256, 56
    %2917 = vbcast.lane.b32.xlu0 %v2887, %s2916
    %v2918 = vpop.permute.xlu0 %2917
    %s2920 = sor.u32 256, 64
    %2921 = vbcast.lane.b32.xlu0 %v2887, %s2920
    %v2922 = vpop.permute.xlu0 %2921
    %s2924 = sor.u32 256, 72
    %2925 = vbcast.lane.b32.xlu0 %v2887, %s2924
    %v2926 = vpop.permute.xlu0 %2925
    %s2928 = sor.u32 256, 80
    %2929 = vbcast.lane.b32.xlu0 %v2887, %s2928
    %v2930 = vpop.permute.xlu0 %2929
    %s2932 = sor.u32 256, 88
    %2933 = vbcast.lane.b32.xlu0 %v2887, %s2932
    %v2934 = vpop.permute.xlu0 %2933
    %s2936 = sor.u32 256, 96
    %2937 = vbcast.lane.b32.xlu0 %v2887, %s2936
    %v2938 = vpop.permute.xlu0 %2937
    %s2940 = sor.u32 256, 104
    %2941 = vbcast.lane.b32.xlu0 %v2887, %s2940
    %v2942 = vpop.permute.xlu0 %2941
    %s2944 = sor.u32 256, 112
    %2945 = vbcast.lane.b32.xlu0 %v2887, %s2944
    %v2946 = vpop.permute.xlu0 %2945
    %s2948 = sor.u32 256, 120
    %2949 = vbcast.lane.b32.xlu0 %v2887, %s2948
    %v2950 = vpop.permute.xlu0 %2949
    %v2951 = vlaneseq
    %v2952 = vshrl.u32 %v2951, 7
    %v2953 = vsub.s32 7, %v2952
    %v2954 = vrot.slane %v1433, %v2953
    %2956 = vbcast.lane.b32.xlu0 %v2954, 256
    %v2957 = vpop.permute.xlu0 %2956
    %s2959 = sor.u32 256, 8
    %2960 = vbcast.lane.b32.xlu0 %v2954, %s2959
    %v2961 = vpop.permute.xlu0 %2960
    %s2963 = sor.u32 256, 16
    %2964 = vbcast.lane.b32.xlu0 %v2954, %s2963
    %v2965 = vpop.permute.xlu0 %2964
    %s2967 = sor.u32 256, 24
    %2968 = vbcast.lane.b32.xlu0 %v2954, %s2967
    %v2969 = vpop.permute.xlu0 %2968
    %s2971 = sor.u32 256, 32
    %2972 = vbcast.lane.b32.xlu0 %v2954, %s2971
    %v2973 = vpop.permute.xlu0 %2972
    %s2975 = sor.u32 256, 40
    %2976 = vbcast.lane.b32.xlu0 %v2954, %s2975
    %v2977 = vpop.permute.xlu0 %2976
    %s2979 = sor.u32 256, 48
    %2980 = vbcast.lane.b32.xlu0 %v2954, %s2979
    %v2981 = vpop.permute.xlu0 %2980
    %s2983 = sor.u32 256, 56
    %2984 = vbcast.lane.b32.xlu0 %v2954, %s2983
    %v2985 = vpop.permute.xlu0 %2984
    %s2987 = sor.u32 256, 64
    %2988 = vbcast.lane.b32.xlu0 %v2954, %s2987
    %v2989 = vpop.permute.xlu0 %2988
    %s2991 = sor.u32 256, 72
    %2992 = vbcast.lane.b32.xlu0 %v2954, %s2991
    %v2993 = vpop.permute.xlu0 %2992
    %s2995 = sor.u32 256, 80
    %2996 = vbcast.lane.b32.xlu0 %v2954, %s2995
    %v2997 = vpop.permute.xlu0 %2996
    %s2999 = sor.u32 256, 88
    %3000 = vbcast.lane.b32.xlu0 %v2954, %s2999
    %v3001 = vpop.permute.xlu0 %3000
    %s3003 = sor.u32 256, 96
    %3004 = vbcast.lane.b32.xlu0 %v2954, %s3003
    %v3005 = vpop.permute.xlu0 %3004
    %s3007 = sor.u32 256, 104
    %3008 = vbcast.lane.b32.xlu0 %v2954, %s3007
    %v3009 = vpop.permute.xlu0 %3008
    %s3011 = sor.u32 256, 112
    %3012 = vbcast.lane.b32.xlu0 %v2954, %s3011
    %v3013 = vpop.permute.xlu0 %3012
    %s3015 = sor.u32 256, 120
    %3016 = vbcast.lane.b32.xlu0 %v2954, %s3015
    %v3017 = vpop.permute.xlu0 %3016
    %v3018 = vmul.f32 %v1690, %v1952
    %v3019 = vmul.f32 %v1691, %v1956
    %v3020 = vmul.f32 %v1692, %v1960
    %v3021 = vmul.f32 %v1693, %v1964
    %v3022 = vmul.f32 %v1694, %v1968
    %v3023 = vmul.f32 %v1695, %v1972
    %v3024 = vmul.f32 %v1696, %v1976
    %v3025 = vmul.f32 %v1697, %v1980
    %v3026 = vmul.f32 %v1698, %v1984
    %v3027 = vmul.f32 %v1699, %v1988
    %v3028 = vmul.f32 %v1700, %v1992
    %v3029 = vmul.f32 %v1701, %v1996
    %v3030 = vmul.f32 %v1702, %v2000
    %v3031 = vmul.f32 %v1703, %v2004
    %v3032 = vmul.f32 %v1704, %v2008
    %v3033 = vmul.f32 %v1705, %v2012
    %v3034 = vmul.f32 %v1706, %v2019
    %v3035 = vmul.f32 %v1707, %v2023
    %v3036 = vmul.f32 %v1708, %v2027
    %v3037 = vmul.f32 %v1709, %v2031
    %v3038 = vmul.f32 %v1710, %v2035
    %v3039 = vmul.f32 %v1711, %v2039
    %v3040 = vmul.f32 %v1712, %v2043
    %v3041 = vmul.f32 %v1713, %v2047
    %v3042 = vmul.f32 %v1714, %v2051
    %v3043 = vmul.f32 %v1715, %v2055
    %v3044 = vmul.f32 %v1716, %v2059
    %v3045 = vmul.f32 %v1717, %v2063
    %v3046 = vmul.f32 %v1718, %v2067
    %v3047 = vmul.f32 %v1719, %v2071
    %v3048 = vmul.f32 %v1720, %v2075
    %v3049 = vmul.f32 %v1721, %v2079
    %v3050 = vmul.f32 %v1722, %v2086
    %v3051 = vmul.f32 %v1723, %v2090
    %v3052 = vmul.f32 %v1724, %v2094
    %v3053 = vmul.f32 %v1725, %v2098
    %v3054 = vmul.f32 %v1726, %v2102
    %v3055 = vmul.f32 %v1727, %v2106
    %v3056 = vmul.f32 %v1728, %v2110
    %v3057 = vmul.f32 %v1729, %v2114
    %v3058 = vmul.f32 %v1730, %v2118
    %v3059 = vmul.f32 %v1731, %v2122
    %v3060 = vmul.f32 %v1732, %v2126
    %v3061 = vmul.f32 %v1733, %v2130
    %v3062 = vmul.f32 %v1734, %v2134
    %v3063 = vmul.f32 %v1735, %v2138
    %v3064 = vmul.f32 %v1736, %v2142
    %v3065 = vmul.f32 %v1737, %v2146
    %v3066 = vmul.f32 %v1738, %v2153
    %v3067 = vmul.f32 %v1739, %v2157
    %v3068 = vmul.f32 %v1740, %v2161
    %v3069 = vmul.f32 %v1741, %v2165
    %v3070 = vmul.f32 %v1742, %v2169
    %v3071 = vmul.f32 %v1743, %v2173
    %v3072 = vmul.f32 %v1744, %v2177
    %v3073 = vmul.f32 %v1745, %v2181
    %v3074 = vmul.f32 %v1746, %v2185
    %v3075 = vmul.f32 %v1747, %v2189
    %v3076 = vmul.f32 %v1748, %v2193
    %v3077 = vmul.f32 %v1749, %v2197
    %v3078 = vmul.f32 %v1750, %v2201
    %v3079 = vmul.f32 %v1751, %v2205
    %v3080 = vmul.f32 %v1752, %v2209
    %v3081 = vmul.f32 %v1753, %v2213
    %v3082 = vmul.f32 %v1754, %v2220
    %v3083 = vmul.f32 %v1755, %v2224
    %v3084 = vmul.f32 %v1756, %v2228
    %v3085 = vmul.f32 %v1757, %v2232
    %v3086 = vmul.f32 %v1758, %v2236
    %v3087 = vmul.f32 %v1759, %v2240
    %v3088 = vmul.f32 %v1760, %v2244
    %v3089 = vmul.f32 %v1761, %v2248
    %v3090 = vmul.f32 %v1762, %v2252
    %v3091 = vmul.f32 %v1763, %v2256
    %v3092 = vmul.f32 %v1764, %v2260
    %v3093 = vmul.f32 %v1765, %v2264
    %v3094 = vmul.f32 %v1766, %v2268
    %v3095 = vmul.f32 %v1767, %v2272
    %v3096 = vmul.f32 %v1768, %v2276
    %v3097 = vmul.f32 %v1769, %v2280
    %v3098 = vmul.f32 %v1770, %v2287
    %v3099 = vmul.f32 %v1771, %v2291
    %v3100 = vmul.f32 %v1772, %v2295
    %v3101 = vmul.f32 %v1773, %v2299
    %v3102 = vmul.f32 %v1774, %v2303
    %v3103 = vmul.f32 %v1775, %v2307
    %v3104 = vmul.f32 %v1776, %v2311
    %v3105 = vmul.f32 %v1777, %v2315
    %v3106 = vmul.f32 %v1778, %v2319
    %v3107 = vmul.f32 %v1779, %v2323
    %v3108 = vmul.f32 %v1780, %v2327
    %v3109 = vmul.f32 %v1781, %v2331
    %v3110 = vmul.f32 %v1782, %v2335
    %v3111 = vmul.f32 %v1783, %v2339
    %v3112 = vmul.f32 %v1784, %v2343
    %v3113 = vmul.f32 %v1785, %v2347
    %v3114 = vmul.f32 %v1786, %v2354
    %v3115 = vmul.f32 %v1787, %v2358
    %v3116 = vmul.f32 %v1788, %v2362
    %v3117 = vmul.f32 %v1789, %v2366
    %v3118 = vmul.f32 %v1790, %v2370
    %v3119 = vmul.f32 %v1791, %v2374
    %v3120 = vmul.f32 %v1792, %v2378
    %v3121 = vmul.f32 %v1793, %v2382
    %v3122 = vmul.f32 %v1794, %v2386
    %v3123 = vmul.f32 %v1795, %v2390
    %v3124 = vmul.f32 %v1796, %v2394
    %v3125 = vmul.f32 %v1797, %v2398
    %v3126 = vmul.f32 %v1798, %v2402
    %v3127 = vmul.f32 %v1799, %v2406
    %v3128 = vmul.f32 %v1800, %v2410
    %v3129 = vmul.f32 %v1801, %v2414
    %v3130 = vmul.f32 %v1802, %v2421
    %v3131 = vmul.f32 %v1803, %v2425
    %v3132 = vmul.f32 %v1804, %v2429
    %v3133 = vmul.f32 %v1805, %v2433
    %v3134 = vmul.f32 %v1806, %v2437
    %v3135 = vmul.f32 %v1807, %v2441
    %v3136 = vmul.f32 %v1808, %v2445
    %v3137 = vmul.f32 %v1809, %v2449
    %v3138 = vmul.f32 %v1810, %v2453
    %v3139 = vmul.f32 %v1811, %v2457
    %v3140 = vmul.f32 %v1812, %v2461
    %v3141 = vmul.f32 %v1813, %v2465
    %v3142 = vmul.f32 %v1814, %v2469
    %v3143 = vmul.f32 %v1815, %v2473
    %v3144 = vmul.f32 %v1816, %v2477
    %v3145 = vmul.f32 %v1817, %v2481
    %v3146 = vmul.f32 %v1818, %v2488
    %v3147 = vmul.f32 %v1819, %v2492
    %v3148 = vmul.f32 %v1820, %v2496
    %v3149 = vmul.f32 %v1821, %v2500
    %v3150 = vmul.f32 %v1822, %v2504
    %v3151 = vmul.f32 %v1823, %v2508
    %v3152 = vmul.f32 %v1824, %v2512
    %v3153 = vmul.f32 %v1825, %v2516
    %v3154 = vmul.f32 %v1826, %v2520
    %v3155 = vmul.f32 %v1827, %v2524
    %v3156 = vmul.f32 %v1828, %v2528
    %v3157 = vmul.f32 %v1829, %v2532
    %v3158 = vmul.f32 %v1830, %v2536
    %v3159 = vmul.f32 %v1831, %v2540
    %v3160 = vmul.f32 %v1832, %v2544
    %v3161 = vmul.f32 %v1833, %v2548
    %v3162 = vmul.f32 %v1834, %v2555
    %v3163 = vmul.f32 %v1835, %v2559
    %v3164 = vmul.f32 %v1836, %v2563
    %v3165 = vmul.f32 %v1837, %v2567
    %v3166 = vmul.f32 %v1838, %v2571
    %v3167 = vmul.f32 %v1839, %v2575
    %v3168 = vmul.f32 %v1840, %v2579
    %v3169 = vmul.f32 %v1841, %v2583
    %v3170 = vmul.f32 %v1842, %v2587
    %v3171 = vmul.f32 %v1843, %v2591
    %v3172 = vmul.f32 %v1844, %v2595
    %v3173 = vmul.f32 %v1845, %v2599
    %v3174 = vmul.f32 %v1846, %v2603
    %v3175 = vmul.f32 %v1847, %v2607
    %v3176 = vmul.f32 %v1848, %v2611
    %v3177 = vmul.f32 %v1849, %v2615
    %v3178 = vmul.f32 %v1850, %v2622
    %v3179 = vmul.f32 %v1851, %v2626
    %v3180 = vmul.f32 %v1852, %v2630
    %v3181 = vmul.f32 %v1853, %v2634
    %v3182 = vmul.f32 %v1854, %v2638
    %v3183 = vmul.f32 %v1855, %v2642
    %v3184 = vmul.f32 %v1856, %v2646
    %v3185 = vmul.f32 %v1857, %v2650
    %v3186 = vmul.f32 %v1858, %v2654
    %v3187 = vmul.f32 %v1859, %v2658
    %v3188 = vmul.f32 %v1860, %v2662
    %v3189 = vmul.f32 %v1861, %v2666
    %v3190 = vmul.f32 %v1862, %v2670
    %v3191 = vmul.f32 %v1863, %v2674
    %v3192 = vmul.f32 %v1864, %v2678
    %v3193 = vmul.f32 %v1865, %v2682
    %v3194 = vmul.f32 %v1866, %v2689
    %v3195 = vmul.f32 %v1867, %v2693
    %v3196 = vmul.f32 %v1868, %v2697
    %v3197 = vmul.f32 %v1869, %v2701
    %v3198 = vmul.f32 %v1870, %v2705
    %v3199 = vmul.f32 %v1871, %v2709
    %v3200 = vmul.f32 %v1872, %v2713
    %v3201 = vmul.f32 %v1873, %v2717
    %v3202 = vmul.f32 %v1874, %v2721
    %v3203 = vmul.f32 %v1875, %v2725
    %v3204 = vmul.f32 %v1876, %v2729
    %v3205 = vmul.f32 %v1877, %v2733
    %v3206 = vmul.f32 %v1878, %v2737
    %v3207 = vmul.f32 %v1879, %v2741
    %v3208 = vmul.f32 %v1880, %v2745
    %v3209 = vmul.f32 %v1881, %v2749
    %v3210 = vmul.f32 %v1882, %v2756
    %v3211 = vmul.f32 %v1883, %v2760
    %v3212 = vmul.f32 %v1884, %v2764
    %v3213 = vmul.f32 %v1885, %v2768
    %v3214 = vmul.f32 %v1886, %v2772
    %v3215 = vmul.f32 %v1887, %v2776
    %v3216 = vmul.f32 %v1888, %v2780
    %v3217 = vmul.f32 %v1889, %v2784
    %v3218 = vmul.f32 %v1890, %v2788
    %v3219 = vmul.f32 %v1891, %v2792
    %v3220 = vmul.f32 %v1892, %v2796
    %v3221 = vmul.f32 %v1893, %v2800
    %v3222 = vmul.f32 %v1894, %v2804
    %v3223 = vmul.f32 %v1895, %v2808
    %v3224 = vmul.f32 %v1896, %v2812
    %v3225 = vmul.f32 %v1897, %v2816
    %v3226 = vmul.f32 %v1898, %v2823
    %v3227 = vmul.f32 %v1899, %v2827
    %v3228 = vmul.f32 %v1900, %v2831
    %v3229 = vmul.f32 %v1901, %v2835
    %v3230 = vmul.f32 %v1902, %v2839
    %v3231 = vmul.f32 %v1903, %v2843
    %v3232 = vmul.f32 %v1904, %v2847
    %v3233 = vmul.f32 %v1905, %v2851
    %v3234 = vmul.f32 %v1906, %v2855
    %v3235 = vmul.f32 %v1907, %v2859
    %v3236 = vmul.f32 %v1908, %v2863
    %v3237 = vmul.f32 %v1909, %v2867
    %v3238 = vmul.f32 %v1910, %v2871
    %v3239 = vmul.f32 %v1911, %v2875
    %v3240 = vmul.f32 %v1912, %v2879
    %v3241 = vmul.f32 %v1913, %v2883
    %v3242 = vmul.f32 %v1914, %v2890
    %v3243 = vmul.f32 %v1915, %v2894
    %v3244 = vmul.f32 %v1916, %v2898
    %v3245 = vmul.f32 %v1917, %v2902
    %v3246 = vmul.f32 %v1918, %v2906
    %v3247 = vmul.f32 %v1919, %v2910
    %v3248 = vmul.f32 %v1920, %v2914
    %v3249 = vmul.f32 %v1921, %v2918
    %v3250 = vmul.f32 %v1922, %v2922
    %v3251 = vmul.f32 %v1923, %v2926
    %v3252 = vmul.f32 %v1924, %v2930
    %v3253 = vmul.f32 %v1925, %v2934
    %v3254 = vmul.f32 %v1926, %v2938
    %v3255 = vmul.f32 %v1927, %v2942
    %v3256 = vmul.f32 %v1928, %v2946
    %v3257 = vmul.f32 %v1929, %v2950
    %v3258 = vmul.f32 %v1930, %v2957
    %v3259 = vmul.f32 %v1931, %v2961
    %v3260 = vmul.f32 %v1932, %v2965
    %v3261 = vmul.f32 %v1933, %v2969
    %v3262 = vmul.f32 %v1934, %v2973
    %v3263 = vmul.f32 %v1935, %v2977
    %v3264 = vmul.f32 %v1936, %v2981
    %v3265 = vmul.f32 %v1937, %v2985
    %v3266 = vmul.f32 %v1938, %v2989
    %v3267 = vmul.f32 %v1939, %v2993
    %v3268 = vmul.f32 %v1940, %v2997
    %v3269 = vmul.f32 %v1941, %v3001
    %v3270 = vmul.f32 %v1942, %v3005
    %v3271 = vmul.f32 %v1943, %v3009
    %v3272 = vmul.f32 %v1944, %v3013
    %v3273 = vmul.f32 %v1945, %v3017
    %v3274 = vadd.f32 %v3018, %v3019
    %v3275 = vadd.f32 %v3274, %v3020
    %v3276 = vadd.f32 %v3275, %v3021
    %v3277 = vadd.f32 %v3276, %v3022
    %v3278 = vadd.f32 %v3277, %v3023
    %v3279 = vadd.f32 %v3278, %v3024
    %v3280 = vadd.f32 %v3279, %v3025
    %v3281 = vadd.f32 %v3280, %v3026
    %v3282 = vadd.f32 %v3281, %v3027
    %v3283 = vadd.f32 %v3282, %v3028
    %v3284 = vadd.f32 %v3283, %v3029
    %v3285 = vadd.f32 %v3284, %v3030
    %v3286 = vadd.f32 %v3285, %v3031
    %v3287 = vadd.f32 %v3286, %v3032
    %v3288 = vadd.f32 %v3287, %v3033
    %v3289 = vrot.slane %v3288, 4
    %v3290 = vadd.f32 %v3288, %v3289
    %v3291 = vrot.slane %v3290, 2
    %v3292 = vadd.f32 %v3290, %v3291
    %v3293 = vrot.slane %v3292, 1
    %v3294 = vadd.f32 %v3292, %v3293
    %v3295 = vadd.f32 %v3034, %v3035
    %v3296 = vadd.f32 %v3295, %v3036
    %v3297 = vadd.f32 %v3296, %v3037
    %v3298 = vadd.f32 %v3297, %v3038
    %v3299 = vadd.f32 %v3298, %v3039
    %v3300 = vadd.f32 %v3299, %v3040
    %v3301 = vadd.f32 %v3300, %v3041
    %v3302 = vadd.f32 %v3301, %v3042
    %v3303 = vadd.f32 %v3302, %v3043
    %v3304 = vadd.f32 %v3303, %v3044
    %v3305 = vadd.f32 %v3304, %v3045
    %v3306 = vadd.f32 %v3305, %v3046
    %v3307 = vadd.f32 %v3306, %v3047
    %v3308 = vadd.f32 %v3307, %v3048
    %v3309 = vadd.f32 %v3308, %v3049
    %v3310 = vrot.slane %v3309, 4
    %v3311 = vadd.f32 %v3309, %v3310
    %v3312 = vrot.slane %v3311, 2
    %v3313 = vadd.f32 %v3311, %v3312
    %v3314 = vrot.slane %v3313, 1
    %v3315 = vadd.f32 %v3313, %v3314
    %v3316 = vadd.f32 %v3050, %v3051
    %v3317 = vadd.f32 %v3316, %v3052
    %v3318 = vadd.f32 %v3317, %v3053
    %v3319 = vadd.f32 %v3318, %v3054
    %v3320 = vadd.f32 %v3319, %v3055
    %v3321 = vadd.f32 %v3320, %v3056
    %v3322 = vadd.f32 %v3321, %v3057
    %v3323 = vadd.f32 %v3322, %v3058
    %v3324 = vadd.f32 %v3323, %v3059
    %v3325 = vadd.f32 %v3324, %v3060
    %v3326 = vadd.f32 %v3325, %v3061
    %v3327 = vadd.f32 %v3326, %v3062
    %v3328 = vadd.f32 %v3327, %v3063
    %v3329 = vadd.f32 %v3328, %v3064
    %v3330 = vadd.f32 %v3329, %v3065
    %v3331 = vrot.slane %v3330, 4
    %v3332 = vadd.f32 %v3330, %v3331
    %v3333 = vrot.slane %v3332, 2
    %v3334 = vadd.f32 %v3332, %v3333
    %v3335 = vrot.slane %v3334, 1
    %v3336 = vadd.f32 %v3334, %v3335
    %v3337 = vadd.f32 %v3066, %v3067
    %v3338 = vadd.f32 %v3337, %v3068
    %v3339 = vadd.f32 %v3338, %v3069
    %v3340 = vadd.f32 %v3339, %v3070
    %v3341 = vadd.f32 %v3340, %v3071
    %v3342 = vadd.f32 %v3341, %v3072
    %v3343 = vadd.f32 %v3342, %v3073
    %v3344 = vadd.f32 %v3343, %v3074
    %v3345 = vadd.f32 %v3344, %v3075
    %v3346 = vadd.f32 %v3345, %v3076
    %v3347 = vadd.f32 %v3346, %v3077
    %v3348 = vadd.f32 %v3347, %v3078
    %v3349 = vadd.f32 %v3348, %v3079
    %v3350 = vadd.f32 %v3349, %v3080
    %v3351 = vadd.f32 %v3350, %v3081
    %v3352 = vrot.slane %v3351, 4
    %v3353 = vadd.f32 %v3351, %v3352
    %v3354 = vrot.slane %v3353, 2
    %v3355 = vadd.f32 %v3353, %v3354
    %v3356 = vrot.slane %v3355, 1
    %v3357 = vadd.f32 %v3355, %v3356
    %v3358 = vadd.f32 %v3082, %v3083
    %v3359 = vadd.f32 %v3358, %v3084
    %v3360 = vadd.f32 %v3359, %v3085
    %v3361 = vadd.f32 %v3360, %v3086
    %v3362 = vadd.f32 %v3361, %v3087
    %v3363 = vadd.f32 %v3362, %v3088
    %v3364 = vadd.f32 %v3363, %v3089
    %v3365 = vadd.f32 %v3364, %v3090
    %v3366 = vadd.f32 %v3365, %v3091
    %v3367 = vadd.f32 %v3366, %v3092
    %v3368 = vadd.f32 %v3367, %v3093
    %v3369 = vadd.f32 %v3368, %v3094
    %v3370 = vadd.f32 %v3369, %v3095
    %v3371 = vadd.f32 %v3370, %v3096
    %v3372 = vadd.f32 %v3371, %v3097
    %v3373 = vrot.slane %v3372, 4
    %v3374 = vadd.f32 %v3372, %v3373
    %v3375 = vrot.slane %v3374, 2
    %v3376 = vadd.f32 %v3374, %v3375
    %v3377 = vrot.slane %v3376, 1
    %v3378 = vadd.f32 %v3376, %v3377
    %v3379 = vadd.f32 %v3098, %v3099
    %v3380 = vadd.f32 %v3379, %v3100
    %v3381 = vadd.f32 %v3380, %v3101
    %v3382 = vadd.f32 %v3381, %v3102
    %v3383 = vadd.f32 %v3382, %v3103
    %v3384 = vadd.f32 %v3383, %v3104
    %v3385 = vadd.f32 %v3384, %v3105
    %v3386 = vadd.f32 %v3385, %v3106
    %v3387 = vadd.f32 %v3386, %v3107
    %v3388 = vadd.f32 %v3387, %v3108
    %v3389 = vadd.f32 %v3388, %v3109
    %v3390 = vadd.f32 %v3389, %v3110
    %v3391 = vadd.f32 %v3390, %v3111
    %v3392 = vadd.f32 %v3391, %v3112
    %v3393 = vadd.f32 %v3392, %v3113
    %v3394 = vrot.slane %v3393, 4
    %v3395 = vadd.f32 %v3393, %v3394
    %v3396 = vrot.slane %v3395, 2
    %v3397 = vadd.f32 %v3395, %v3396
    %v3398 = vrot.slane %v3397, 1
    %v3399 = vadd.f32 %v3397, %v3398
    %v3400 = vadd.f32 %v3114, %v3115
    %v3401 = vadd.f32 %v3400, %v3116
    %v3402 = vadd.f32 %v3401, %v3117
    %v3403 = vadd.f32 %v3402, %v3118
    %v3404 = vadd.f32 %v3403, %v3119
    %v3405 = vadd.f32 %v3404, %v3120
    %v3406 = vadd.f32 %v3405, %v3121
    %v3407 = vadd.f32 %v3406, %v3122
    %v3408 = vadd.f32 %v3407, %v3123
    %v3409 = vadd.f32 %v3408, %v3124
    %v3410 = vadd.f32 %v3409, %v3125
    %v3411 = vadd.f32 %v3410, %v3126
    %v3412 = vadd.f32 %v3411, %v3127
    %v3413 = vadd.f32 %v3412, %v3128
    %v3414 = vadd.f32 %v3413, %v3129
    %v3415 = vrot.slane %v3414, 4
    %v3416 = vadd.f32 %v3414, %v3415
    %v3417 = vrot.slane %v3416, 2
    %v3418 = vadd.f32 %v3416, %v3417
    %v3419 = vrot.slane %v3418, 1
    %v3420 = vadd.f32 %v3418, %v3419
    %v3421 = vadd.f32 %v3130, %v3131
    %v3422 = vadd.f32 %v3421, %v3132
    %v3423 = vadd.f32 %v3422, %v3133
    %v3424 = vadd.f32 %v3423, %v3134
    %v3425 = vadd.f32 %v3424, %v3135
    %v3426 = vadd.f32 %v3425, %v3136
    %v3427 = vadd.f32 %v3426, %v3137
    %v3428 = vadd.f32 %v3427, %v3138
    %v3429 = vadd.f32 %v3428, %v3139
    %v3430 = vadd.f32 %v3429, %v3140
    %v3431 = vadd.f32 %v3430, %v3141
    %v3432 = vadd.f32 %v3431, %v3142
    %v3433 = vadd.f32 %v3432, %v3143
    %v3434 = vadd.f32 %v3433, %v3144
    %v3435 = vadd.f32 %v3434, %v3145
    %v3436 = vrot.slane %v3435, 4
    %v3437 = vadd.f32 %v3435, %v3436
    %v3438 = vrot.slane %v3437, 2
    %v3439 = vadd.f32 %v3437, %v3438
    %v3440 = vrot.slane %v3439, 1
    %v3441 = vadd.f32 %v3439, %v3440
    %v3442 = vadd.f32 %v3146, %v3147
    %v3443 = vadd.f32 %v3442, %v3148
    %v3444 = vadd.f32 %v3443, %v3149
    %v3445 = vadd.f32 %v3444, %v3150
    %v3446 = vadd.f32 %v3445, %v3151
    %v3447 = vadd.f32 %v3446, %v3152
    %v3448 = vadd.f32 %v3447, %v3153
    %v3449 = vadd.f32 %v3448, %v3154
    %v3450 = vadd.f32 %v3449, %v3155
    %v3451 = vadd.f32 %v3450, %v3156
    %v3452 = vadd.f32 %v3451, %v3157
    %v3453 = vadd.f32 %v3452, %v3158
    %v3454 = vadd.f32 %v3453, %v3159
    %v3455 = vadd.f32 %v3454, %v3160
    %v3456 = vadd.f32 %v3455, %v3161
    %v3457 = vrot.slane %v3456, 4
    %v3458 = vadd.f32 %v3456, %v3457
    %v3459 = vrot.slane %v3458, 2
    %v3460 = vadd.f32 %v3458, %v3459
    %v3461 = vrot.slane %v3460, 1
    %v3462 = vadd.f32 %v3460, %v3461
    %v3463 = vadd.f32 %v3162, %v3163
    %v3464 = vadd.f32 %v3463, %v3164
    %v3465 = vadd.f32 %v3464, %v3165
    %v3466 = vadd.f32 %v3465, %v3166
    %v3467 = vadd.f32 %v3466, %v3167
    %v3468 = vadd.f32 %v3467, %v3168
    %v3469 = vadd.f32 %v3468, %v3169
    %v3470 = vadd.f32 %v3469, %v3170
    %v3471 = vadd.f32 %v3470, %v3171
    %v3472 = vadd.f32 %v3471, %v3172
    %v3473 = vadd.f32 %v3472, %v3173
    %v3474 = vadd.f32 %v3473, %v3174
    %v3475 = vadd.f32 %v3474, %v3175
    %v3476 = vadd.f32 %v3475, %v3176
    %v3477 = vadd.f32 %v3476, %v3177
    %v3478 = vrot.slane %v3477, 4
    %v3479 = vadd.f32 %v3477, %v3478
    %v3480 = vrot.slane %v3479, 2
    %v3481 = vadd.f32 %v3479, %v3480
    %v3482 = vrot.slane %v3481, 1
    %v3483 = vadd.f32 %v3481, %v3482
    %v3484 = vadd.f32 %v3178, %v3179
    %v3485 = vadd.f32 %v3484, %v3180
    %v3486 = vadd.f32 %v3485, %v3181
    %v3487 = vadd.f32 %v3486, %v3182
    %v3488 = vadd.f32 %v3487, %v3183
    %v3489 = vadd.f32 %v3488, %v3184
    %v3490 = vadd.f32 %v3489, %v3185
    %v3491 = vadd.f32 %v3490, %v3186
    %v3492 = vadd.f32 %v3491, %v3187
    %v3493 = vadd.f32 %v3492, %v3188
    %v3494 = vadd.f32 %v3493, %v3189
    %v3495 = vadd.f32 %v3494, %v3190
    %v3496 = vadd.f32 %v3495, %v3191
    %v3497 = vadd.f32 %v3496, %v3192
    %v3498 = vadd.f32 %v3497, %v3193
    %v3499 = vrot.slane %v3498, 4
    %v3500 = vadd.f32 %v3498, %v3499
    %v3501 = vrot.slane %v3500, 2
    %v3502 = vadd.f32 %v3500, %v3501
    %v3503 = vrot.slane %v3502, 1
    %v3504 = vadd.f32 %v3502, %v3503
    %v3505 = vadd.f32 %v3194, %v3195
    %v3506 = vadd.f32 %v3505, %v3196
    %v3507 = vadd.f32 %v3506, %v3197
    %v3508 = vadd.f32 %v3507, %v3198
    %v3509 = vadd.f32 %v3508, %v3199
    %v3510 = vadd.f32 %v3509, %v3200
    %v3511 = vadd.f32 %v3510, %v3201
    %v3512 = vadd.f32 %v3511, %v3202
    %v3513 = vadd.f32 %v3512, %v3203
    %v3514 = vadd.f32 %v3513, %v3204
    %v3515 = vadd.f32 %v3514, %v3205
    %v3516 = vadd.f32 %v3515, %v3206
    %v3517 = vadd.f32 %v3516, %v3207
    %v3518 = vadd.f32 %v3517, %v3208
    %v3519 = vadd.f32 %v3518, %v3209
    %v3520 = vrot.slane %v3519, 4
    %v3521 = vadd.f32 %v3519, %v3520
    %v3522 = vrot.slane %v3521, 2
    %v3523 = vadd.f32 %v3521, %v3522
    %v3524 = vrot.slane %v3523, 1
    %v3525 = vadd.f32 %v3523, %v3524
    %v3526 = vadd.f32 %v3210, %v3211
    %v3527 = vadd.f32 %v3526, %v3212
    %v3528 = vadd.f32 %v3527, %v3213
    %v3529 = vadd.f32 %v3528, %v3214
    %v3530 = vadd.f32 %v3529, %v3215
    %v3531 = vadd.f32 %v3530, %v3216
    %v3532 = vadd.f32 %v3531, %v3217
    %v3533 = vadd.f32 %v3532, %v3218
    %v3534 = vadd.f32 %v3533, %v3219
    %v3535 = vadd.f32 %v3534, %v3220
    %v3536 = vadd.f32 %v3535, %v3221
    %v3537 = vadd.f32 %v3536, %v3222
    %v3538 = vadd.f32 %v3537, %v3223
    %v3539 = vadd.f32 %v3538, %v3224
    %v3540 = vadd.f32 %v3539, %v3225
    %v3541 = vrot.slane %v3540, 4
    %v3542 = vadd.f32 %v3540, %v3541
    %v3543 = vrot.slane %v3542, 2
    %v3544 = vadd.f32 %v3542, %v3543
    %v3545 = vrot.slane %v3544, 1
    %v3546 = vadd.f32 %v3544, %v3545
    %v3547 = vadd.f32 %v3226, %v3227
    %v3548 = vadd.f32 %v3547, %v3228
    %v3549 = vadd.f32 %v3548, %v3229
    %v3550 = vadd.f32 %v3549, %v3230
    %v3551 = vadd.f32 %v3550, %v3231
    %v3552 = vadd.f32 %v3551, %v3232
    %v3553 = vadd.f32 %v3552, %v3233
    %v3554 = vadd.f32 %v3553, %v3234
    %v3555 = vadd.f32 %v3554, %v3235
    %v3556 = vadd.f32 %v3555, %v3236
    %v3557 = vadd.f32 %v3556, %v3237
    %v3558 = vadd.f32 %v3557, %v3238
    %v3559 = vadd.f32 %v3558, %v3239
    %v3560 = vadd.f32 %v3559, %v3240
    %v3561 = vadd.f32 %v3560, %v3241
    %v3562 = vrot.slane %v3561, 4
    %v3563 = vadd.f32 %v3561, %v3562
    %v3564 = vrot.slane %v3563, 2
    %v3565 = vadd.f32 %v3563, %v3564
    %v3566 = vrot.slane %v3565, 1
    %v3567 = vadd.f32 %v3565, %v3566
    %v3568 = vadd.f32 %v3242, %v3243
    %v3569 = vadd.f32 %v3568, %v3244
    %v3570 = vadd.f32 %v3569, %v3245
    %v3571 = vadd.f32 %v3570, %v3246
    %v3572 = vadd.f32 %v3571, %v3247
    %v3573 = vadd.f32 %v3572, %v3248
    %v3574 = vadd.f32 %v3573, %v3249
    %v3575 = vadd.f32 %v3574, %v3250
    %v3576 = vadd.f32 %v3575, %v3251
    %v3577 = vadd.f32 %v3576, %v3252
    %v3578 = vadd.f32 %v3577, %v3253
    %v3579 = vadd.f32 %v3578, %v3254
    %v3580 = vadd.f32 %v3579, %v3255
    %v3581 = vadd.f32 %v3580, %v3256
    %v3582 = vadd.f32 %v3581, %v3257
    %v3583 = vrot.slane %v3582, 4
    %v3584 = vadd.f32 %v3582, %v3583
    %v3585 = vrot.slane %v3584, 2
    %v3586 = vadd.f32 %v3584, %v3585
    %v3587 = vrot.slane %v3586, 1
    %v3588 = vadd.f32 %v3586, %v3587
    %v3589 = vadd.f32 %v3258, %v3259
    %v3590 = vadd.f32 %v3589, %v3260
    %v3591 = vadd.f32 %v3590, %v3261
    %v3592 = vadd.f32 %v3591, %v3262
    %v3593 = vadd.f32 %v3592, %v3263
    %v3594 = vadd.f32 %v3593, %v3264
    %v3595 = vadd.f32 %v3594, %v3265
    %v3596 = vadd.f32 %v3595, %v3266
    %v3597 = vadd.f32 %v3596, %v3267
    %v3598 = vadd.f32 %v3597, %v3268
    %v3599 = vadd.f32 %v3598, %v3269
    %v3600 = vadd.f32 %v3599, %v3270
    %v3601 = vadd.f32 %v3600, %v3271
    %v3602 = vadd.f32 %v3601, %v3272
    %v3603 = vadd.f32 %v3602, %v3273
    %v3604 = vrot.slane %v3603, 4
    %v3605 = vadd.f32 %v3603, %v3604
    %v3606 = vrot.slane %v3605, 2
    %v3607 = vadd.f32 %v3605, %v3606
    %v3608 = vrot.slane %v3607, 1
    %v3609 = vadd.f32 %v3607, %v3608
    %v3610 = vld [vmem:[%s3] sm:$0xf]
    %v3611 = vld [vmem:[%s3 + $0x4] sm:$0xf]
    %v3612 = vld [vmem:[%s3 + $0x8] sm:$0xf]
    %v3613 = vld [vmem:[%s3 + $0xc] sm:$0xf]
    %v3614 = vld [vmem:[%s3 + $0x10] sm:$0xf]
    %v3615 = vld [vmem:[%s3 + $0x14] sm:$0xf]
    %v3616 = vld [vmem:[%s3 + $0x18] sm:$0xf]
    %v3617 = vld [vmem:[%s3 + $0x1c] sm:$0xf]
    %v3618 = vld [vmem:[%s3 + $0x20] sm:$0xf]
    %v3619 = vld [vmem:[%s3 + $0x24] sm:$0xf]
    %v3620 = vld [vmem:[%s3 + $0x28] sm:$0xf]
    %v3621 = vld [vmem:[%s3 + $0x2c] sm:$0xf]
    %v3622 = vld [vmem:[%s3 + $0x30] sm:$0xf]
    %v3623 = vld [vmem:[%s3 + $0x34] sm:$0xf]
    %v3624 = vld [vmem:[%s3 + $0x38] sm:$0xf]
    %v3625 = vld [vmem:[%s3 + $0x3c] sm:$0xf]
    %v3626 = vlaneseq
    %v3627 = vshrl.u32 %v3626, 7
    %v3628 = vadd.s32 %v3627, 1
    %vm3629 = vcmp.lt.s32.totalorder %v3628, 3
    %v3630 = vsel %vm3629, %v3628, 3
    %vm3631 = vcmp.eq.s32.totalorder %v122, %v3630
    %v3632 = vsel %vm3631, 1, 0
    %v3633 = vcvt.s32.f32 %v3632
    %vm3634 = vcmp.eq.s32.totalorder %v122, 0
    %v3635 = vsel %vm3634, 1, 0
    %v3636 = vcvt.s32.f32 %v3635
    %3638 = vbcast.lane.b32.xlu0 %v3636, 256
    %v3639 = vpop.permute.xlu0 %3638
    %v3640 = vmul.f32 %v3639, %v3633
    %vm3641 = vcmask 27648
    %v3642 = vsel %vm3641, %v3640, 0.0
    %v3643 = vrot.slane %v3642, 4
    %v3644 = vadd.f32 %v3642, %v3643
    %v3645 = vrot.slane %v3644, 2
    %v3646 = vadd.f32 %v3644, %v3645
    %v3647 = vrot.slane %v3646, 1
    %v3648 = vadd.f32 %v3646, %v3647
    %v3649 = vsub.f32 1.0, %v3648
    %v3650 = vmul.f32 %v3649, 0.0
    %v3651 = vadd.f32 %v3648, %v3650
    %v3652 = vmul.f32 %v3636, 0.0
    %vm3653 = vcmask 31744
    %v3654 = vsel %vm3653, %v3652, 0.0
    %3655 = vadd.xlane.f32.xlu0 %v3654
    %v3656 = vpop.xlane.xlu0 %3655
    %v3657 = vmul.f32 %v3651, %v3648
    %v3659 = vsel %vm656, %v3657, %v3657
    %v3660 = vsel %vm658, %v3657, %v3659
    %v3661 = vsel %vm660, %v3657, %v3660
    %v3662 = vsel %vm662, %v3657, %v3661
    %v3663 = vsel %vm664, %v3657, %v3662
    %v3664 = vsel %vm666, %v3657, %v3663
    %v3666 = vsel %vm3653, %v3664, 0.0
    %3667 = vadd.xlane.f32.xlu0 %v3666
    %v3668 = vpop.xlane.xlu0 %3667
    %v3669 = vmul.f32 %v3668, %v694
    %v3670 = vmul.f32 %v3668, %v696
    %3671 = vst [vmem:[#allocation8] sm:$0xff] %v3669
    %3672 = vst [vmem:[#allocation8 + $0x8] sm:$0xff] %v3670
    %v3673 = vmul.f32 %v3656, %v694
    %v3674 = vmul.f32 %v3656, %v696
    %s3675 = scalar_lea.vmem [#allocation8], 16
    %3676 = vst [vmem:[%s3675] sm:$0xff] %v3673
    %3677 = vst [vmem:[%s3675 + $0x8] sm:$0xff] %v3674
    %3679 = vset.pattern.permute.xlu0 0
    %3680 = vperm.xlu0 %3679, %v3610
    %v3681 = vpop.permute.xlu0 %3680
    %3684 = vset.pattern.permute.xlu0 0
    %3685 = vperm.xlu0 %3684, %v3611
    %v3686 = vpop.permute.xlu0 %3685
    %3689 = vset.pattern.permute.xlu0 0
    %3690 = vperm.xlu0 %3689, %v3612
    %v3691 = vpop.permute.xlu0 %3690
    %3694 = vset.pattern.permute.xlu0 0
    %3695 = vperm.xlu0 %3694, %v3613
    %v3696 = vpop.permute.xlu0 %3695
    %3699 = vset.pattern.permute.xlu0 0
    %3700 = vperm.xlu0 %3699, %v3614
    %v3701 = vpop.permute.xlu0 %3700
    %3704 = vset.pattern.permute.xlu0 0
    %3705 = vperm.xlu0 %3704, %v3615
    %v3706 = vpop.permute.xlu0 %3705
    %3709 = vset.pattern.permute.xlu0 0
    %3710 = vperm.xlu0 %3709, %v3616
    %v3711 = vpop.permute.xlu0 %3710
    %3714 = vset.pattern.permute.xlu0 0
    %3715 = vperm.xlu0 %3714, %v3617
    %v3716 = vpop.permute.xlu0 %3715
    %3719 = vset.pattern.permute.xlu0 0
    %3720 = vperm.xlu0 %3719, %v3618
    %v3721 = vpop.permute.xlu0 %3720
    %3724 = vset.pattern.permute.xlu0 0
    %3725 = vperm.xlu0 %3724, %v3619
    %v3726 = vpop.permute.xlu0 %3725
    %3729 = vset.pattern.permute.xlu0 0
    %3730 = vperm.xlu0 %3729, %v3620
    %v3731 = vpop.permute.xlu0 %3730
    %3734 = vset.pattern.permute.xlu0 0
    %3735 = vperm.xlu0 %3734, %v3621
    %v3736 = vpop.permute.xlu0 %3735
    %3739 = vset.pattern.permute.xlu0 0
    %3740 = vperm.xlu0 %3739, %v3622
    %v3741 = vpop.permute.xlu0 %3740
    %3744 = vset.pattern.permute.xlu0 0
    %3745 = vperm.xlu0 %3744, %v3623
    %v3746 = vpop.permute.xlu0 %3745
    %3749 = vset.pattern.permute.xlu0 0
    %3750 = vperm.xlu0 %3749, %v3624
    %v3751 = vpop.permute.xlu0 %3750
    %3754 = vset.pattern.permute.xlu0 0
    %3755 = vperm.xlu0 %3754, %v3625
    %v3756 = vpop.permute.xlu0 %3755
    %v3758 = vmul.f32 %v3681, %v3651
    %v3759 = vmul.f32 %v3686, %v3651
    %v3760 = vmul.f32 %v3691, %v3651
    %v3761 = vmul.f32 %v3696, %v3651
    %v3762 = vmul.f32 %v3701, %v3651
    %v3763 = vmul.f32 %v3706, %v3651
    %v3764 = vmul.f32 %v3711, %v3651
    %v3765 = vmul.f32 %v3716, %v3651
    %v3766 = vmul.f32 %v3721, %v3651
    %v3767 = vmul.f32 %v3726, %v3651
    %v3768 = vmul.f32 %v3731, %v3651
    %v3769 = vmul.f32 %v3736, %v3651
    %v3770 = vmul.f32 %v3741, %v3651
    %v3771 = vmul.f32 %v3746, %v3651
    %v3772 = vmul.f32 %v3751, %v3651
    %v3773 = vmul.f32 %v3756, %v3651
    %3774 = vset.pattern.permute.xlu0 1
    %3775 = vperm.xlu0 %3774, %v3610
    %v3776 = vpop.permute.xlu0 %3775
    %3778 = vset.pattern.permute.xlu0 1
    %3779 = vperm.xlu0 %3778, %v3611
    %v3780 = vpop.permute.xlu0 %3779
    %3782 = vset.pattern.permute.xlu0 1
    %3783 = vperm.xlu0 %3782, %v3612
    %v3784 = vpop.permute.xlu0 %3783
    %3786 = vset.pattern.permute.xlu0 1
    %3787 = vperm.xlu0 %3786, %v3613
    %v3788 = vpop.permute.xlu0 %3787
    %3790 = vset.pattern.permute.xlu0 1
    %3791 = vperm.xlu0 %3790, %v3614
    %v3792 = vpop.permute.xlu0 %3791
    %3794 = vset.pattern.permute.xlu0 1
    %3795 = vperm.xlu0 %3794, %v3615
    %v3796 = vpop.permute.xlu0 %3795
    %3798 = vset.pattern.permute.xlu0 1
    %3799 = vperm.xlu0 %3798, %v3616
    %v3800 = vpop.permute.xlu0 %3799
    %3802 = vset.pattern.permute.xlu0 1
    %3803 = vperm.xlu0 %3802, %v3617
    %v3804 = vpop.permute.xlu0 %3803
    %3806 = vset.pattern.permute.xlu0 1
    %3807 = vperm.xlu0 %3806, %v3618
    %v3808 = vpop.permute.xlu0 %3807
    %3810 = vset.pattern.permute.xlu0 1
    %3811 = vperm.xlu0 %3810, %v3619
    %v3812 = vpop.permute.xlu0 %3811
    %3814 = vset.pattern.permute.xlu0 1
    %3815 = vperm.xlu0 %3814, %v3620
    %v3816 = vpop.permute.xlu0 %3815
    %3818 = vset.pattern.permute.xlu0 1
    %3819 = vperm.xlu0 %3818, %v3621
    %v3820 = vpop.permute.xlu0 %3819
    %3822 = vset.pattern.permute.xlu0 1
    %3823 = vperm.xlu0 %3822, %v3622
    %v3824 = vpop.permute.xlu0 %3823
    %3826 = vset.pattern.permute.xlu0 1
    %3827 = vperm.xlu0 %3826, %v3623
    %v3828 = vpop.permute.xlu0 %3827
    %3830 = vset.pattern.permute.xlu0 1
    %3831 = vperm.xlu0 %3830, %v3624
    %v3832 = vpop.permute.xlu0 %3831
    %3834 = vset.pattern.permute.xlu0 1
    %3835 = vperm.xlu0 %3834, %v3625
    %v3836 = vpop.permute.xlu0 %3835
    %v3838 = vmul.f32 %v3776, 0.0
    %v3839 = vmul.f32 %v3780, 0.0
    %v3840 = vmul.f32 %v3784, 0.0
    %v3841 = vmul.f32 %v3788, 0.0
    %v3842 = vmul.f32 %v3792, 0.0
    %v3843 = vmul.f32 %v3796, 0.0
    %v3844 = vmul.f32 %v3800, 0.0
    %v3845 = vmul.f32 %v3804, 0.0
    %v3846 = vmul.f32 %v3808, 0.0
    %v3847 = vmul.f32 %v3812, 0.0
    %v3848 = vmul.f32 %v3816, 0.0
    %v3849 = vmul.f32 %v3820, 0.0
    %v3850 = vmul.f32 %v3824, 0.0
    %v3851 = vmul.f32 %v3828, 0.0
    %v3852 = vmul.f32 %v3832, 0.0
    %v3853 = vmul.f32 %v3836, 0.0
    %v3854 = vadd.f32 %v3758, %v3838
    %v3855 = vadd.f32 %v3759, %v3839
    %v3856 = vadd.f32 %v3760, %v3840
    %v3857 = vadd.f32 %v3761, %v3841
    %v3858 = vadd.f32 %v3762, %v3842
    %v3859 = vadd.f32 %v3763, %v3843
    %v3860 = vadd.f32 %v3764, %v3844
    %v3861 = vadd.f32 %v3765, %v3845
    %v3862 = vadd.f32 %v3766, %v3846
    %v3863 = vadd.f32 %v3767, %v3847
    %v3864 = vadd.f32 %v3768, %v3848
    %v3865 = vadd.f32 %v3769, %v3849
    %v3866 = vadd.f32 %v3770, %v3850
    %v3867 = vadd.f32 %v3771, %v3851
    %v3868 = vadd.f32 %v3772, %v3852
    %v3869 = vadd.f32 %v3773, %v3853
    %v3870 = vmul.f32 %v3610, 0.0
    %v3871 = vmul.f32 %v3611, 0.0
    %v3872 = vmul.f32 %v3612, 0.0
    %v3873 = vmul.f32 %v3613, 0.0
    %v3874 = vmul.f32 %v3614, 0.0
    %v3875 = vmul.f32 %v3615, 0.0
    %v3876 = vmul.f32 %v3616, 0.0
    %v3877 = vmul.f32 %v3617, 0.0
    %v3878 = vmul.f32 %v3618, 0.0
    %v3879 = vmul.f32 %v3619, 0.0
    %v3880 = vmul.f32 %v3620, 0.0
    %v3881 = vmul.f32 %v3621, 0.0
    %v3882 = vmul.f32 %v3622, 0.0
    %v3883 = vmul.f32 %v3623, 0.0
    %v3884 = vmul.f32 %v3624, 0.0
    %v3885 = vmul.f32 %v3625, 0.0
    %v3886 = vmul.f32 %v3610, %v3656
    %v3887 = vmul.f32 %v3611, %v3656
    %v3888 = vmul.f32 %v3612, %v3656
    %v3889 = vmul.f32 %v3613, %v3656
    %v3890 = vmul.f32 %v3614, %v3656
    %v3891 = vmul.f32 %v3615, %v3656
    %v3892 = vmul.f32 %v3616, %v3656
    %v3893 = vmul.f32 %v3617, %v3656
    %v3894 = vmul.f32 %v3618, %v3656
    %v3895 = vmul.f32 %v3619, %v3656
    %v3896 = vmul.f32 %v3620, %v3656
    %v3897 = vmul.f32 %v3621, %v3656
    %v3898 = vmul.f32 %v3622, %v3656
    %v3899 = vmul.f32 %v3623, %v3656
    %v3900 = vmul.f32 %v3624, %v3656
    %v3901 = vmul.f32 %v3625, %v3656
    %3918 = vrot.lane.b32.xlu0 %v3886, 127
    %v3919 = vpop.permute.xlu0 %3918
    %3920 = vrot.lane.b32.xlu0 %v3887, 127
    %v3921 = vpop.permute.xlu0 %3920
    %3922 = vrot.lane.b32.xlu0 %v3888, 127
    %v3923 = vpop.permute.xlu0 %3922
    %3924 = vrot.lane.b32.xlu0 %v3889, 127
    %v3925 = vpop.permute.xlu0 %3924
    %3926 = vrot.lane.b32.xlu0 %v3890, 127
    %v3927 = vpop.permute.xlu0 %3926
    %3928 = vrot.lane.b32.xlu0 %v3891, 127
    %v3929 = vpop.permute.xlu0 %3928
    %3930 = vrot.lane.b32.xlu0 %v3892, 127
    %v3931 = vpop.permute.xlu0 %3930
    %3932 = vrot.lane.b32.xlu0 %v3893, 127
    %v3933 = vpop.permute.xlu0 %3932
    %3934 = vrot.lane.b32.xlu0 %v3894, 127
    %v3935 = vpop.permute.xlu0 %3934
    %3936 = vrot.lane.b32.xlu0 %v3895, 127
    %v3937 = vpop.permute.xlu0 %3936
    %3938 = vrot.lane.b32.xlu0 %v3896, 127
    %v3939 = vpop.permute.xlu0 %3938
    %3940 = vrot.lane.b32.xlu0 %v3897, 127
    %v3941 = vpop.permute.xlu0 %3940
    %3942 = vrot.lane.b32.xlu0 %v3898, 127
    %v3943 = vpop.permute.xlu0 %3942
    %3944 = vrot.lane.b32.xlu0 %v3899, 127
    %v3945 = vpop.permute.xlu0 %3944
    %3946 = vrot.lane.b32.xlu0 %v3900, 127
    %v3947 = vpop.permute.xlu0 %3946
    %3948 = vrot.lane.b32.xlu0 %v3901, 127
    %v3949 = vpop.permute.xlu0 %3948
    %v3966 = vadd.f32 %v3870, %v3919
    %v3967 = vadd.f32 %v3871, %v3921
    %v3968 = vadd.f32 %v3872, %v3923
    %v3969 = vadd.f32 %v3873, %v3925
    %v3970 = vadd.f32 %v3874, %v3927
    %v3971 = vadd.f32 %v3875, %v3929
    %v3972 = vadd.f32 %v3876, %v3931
    %v3973 = vadd.f32 %v3877, %v3933
    %v3974 = vadd.f32 %v3878, %v3935
    %v3975 = vadd.f32 %v3879, %v3937
    %v3976 = vadd.f32 %v3880, %v3939
    %v3977 = vadd.f32 %v3881, %v3941
    %v3978 = vadd.f32 %v3882, %v3943
    %v3979 = vadd.f32 %v3883, %v3945
    %v3980 = vadd.f32 %v3884, %v3947
    %v3981 = vadd.f32 %v3885, %v3949
    %v3982 = vmul.f32 %v3681, %v3648
    %v3983 = vmul.f32 %v3686, %v3648
    %v3984 = vmul.f32 %v3691, %v3648
    %v3985 = vmul.f32 %v3696, %v3648
    %v3986 = vmul.f32 %v3701, %v3648
    %v3987 = vmul.f32 %v3706, %v3648
    %v3988 = vmul.f32 %v3711, %v3648
    %v3989 = vmul.f32 %v3716, %v3648
    %v3990 = vmul.f32 %v3721, %v3648
    %v3991 = vmul.f32 %v3726, %v3648
    %v3992 = vmul.f32 %v3731, %v3648
    %v3993 = vmul.f32 %v3736, %v3648
    %v3994 = vmul.f32 %v3741, %v3648
    %v3995 = vmul.f32 %v3746, %v3648
    %v3996 = vmul.f32 %v3751, %v3648
    %v3997 = vmul.f32 %v3756, %v3648
    %v3998 = vmul.f32 %v3776, %v3636
    %v3999 = vmul.f32 %v3780, %v3636
    %v4000 = vmul.f32 %v3784, %v3636
    %v4001 = vmul.f32 %v3788, %v3636
    %v4002 = vmul.f32 %v3792, %v3636
    %v4003 = vmul.f32 %v3796, %v3636
    %v4004 = vmul.f32 %v3800, %v3636
    %v4005 = vmul.f32 %v3804, %v3636
    %v4006 = vmul.f32 %v3808, %v3636
    %v4007 = vmul.f32 %v3812, %v3636
    %v4008 = vmul.f32 %v3816, %v3636
    %v4009 = vmul.f32 %v3820, %v3636
    %v4010 = vmul.f32 %v3824, %v3636
    %v4011 = vmul.f32 %v3828, %v3636
    %v4012 = vmul.f32 %v3832, %v3636
    %v4013 = vmul.f32 %v3836, %v3636
    %v4014 = vadd.f32 %v3982, %v3998
    %v4015 = vadd.f32 %v3983, %v3999
    %v4016 = vadd.f32 %v3984, %v4000
    %v4017 = vadd.f32 %v3985, %v4001
    %v4018 = vadd.f32 %v3986, %v4002
    %v4019 = vadd.f32 %v3987, %v4003
    %v4020 = vadd.f32 %v3988, %v4004
    %v4021 = vadd.f32 %v3989, %v4005
    %v4022 = vadd.f32 %v3990, %v4006
    %v4023 = vadd.f32 %v3991, %v4007
    %v4024 = vadd.f32 %v3992, %v4008
    %v4025 = vadd.f32 %v3993, %v4009
    %v4026 = vadd.f32 %v3994, %v4010
    %v4027 = vadd.f32 %v3995, %v4011
    %v4028 = vadd.f32 %v3996, %v4012
    %v4029 = vadd.f32 %v3997, %v4013
    %v4030 = vmul.f32 %v4014, 10.0
    %v4031 = vmul.f32 %v4015, 10.0
    %v4032 = vmul.f32 %v4016, 10.0
    %v4033 = vmul.f32 %v4017, 10.0
    %v4034 = vmul.f32 %v4018, 10.0
    %v4035 = vmul.f32 %v4019, 10.0
    %v4036 = vmul.f32 %v4020, 10.0
    %v4037 = vmul.f32 %v4021, 10.0
    %v4038 = vmul.f32 %v4022, 10.0
    %v4039 = vmul.f32 %v4023, 10.0
    %v4040 = vmul.f32 %v4024, 10.0
    %v4041 = vmul.f32 %v4025, 10.0
    %v4042 = vmul.f32 %v4026, 10.0
    %v4043 = vmul.f32 %v4027, 10.0
    %v4044 = vmul.f32 %v4028, 10.0
    %v4045 = vmul.f32 %v4029, 10.0
    %v4062 = vrot.slane %v4031, 7
    %v4063 = vsel %vm654, %v4062, %v4030
    %v4064 = vrot.slane %v4032, 6
    %v4065 = vsel %vm656, %v4064, %v4063
    %v4066 = vrot.slane %v4033, 5
    %v4067 = vsel %vm658, %v4066, %v4065
    %v4068 = vrot.slane %v4034, 4
    %v4069 = vsel %vm660, %v4068, %v4067
    %v4070 = vrot.slane %v4035, 3
    %v4071 = vsel %vm662, %v4070, %v4069
    %v4072 = vrot.slane %v4036, 2
    %v4073 = vsel %vm664, %v4072, %v4071
    %v4074 = vrot.slane %v4037, 1
    %v4075 = vsel %vm666, %v4074, %v4073
    %v4076 = vrot.slane %v4039, 7
    %v4077 = vsel %vm654, %v4076, %v4038
    %v4078 = vrot.slane %v4040, 6
    %v4079 = vsel %vm656, %v4078, %v4077
    %v4080 = vrot.slane %v4041, 5
    %v4081 = vsel %vm658, %v4080, %v4079
    %v4082 = vrot.slane %v4042, 4
    %v4083 = vsel %vm660, %v4082, %v4081
    %v4084 = vrot.slane %v4043, 3
    %v4085 = vsel %vm662, %v4084, %v4083
    %v4086 = vrot.slane %v4044, 2
    %v4087 = vsel %vm664, %v4086, %v4085
    %v4088 = vrot.slane %v4045, 1
    %v4089 = vsel %vm666, %v4088, %v4087
    %v4092 = vsel %vm3653, %v4075, -inf
    %4093 = vmax.xlane.f32.xlu0 %v4092
    %v4094 = vpop.xlane.xlu0 %4093
    %v4095 = vsel %vm3653, %v4089, -inf
    %4096 = vmax.xlane.f32.xlu0 %v4095
    %v4097 = vpop.xlane.xlu0 %4096
    %v4100 = vrot.slane %v4094, 1
    %v4101 = vrot.slane %v4094, 2
    %v4102 = vrot.slane %v4094, 3
    %v4103 = vrot.slane %v4094, 4
    %v4104 = vrot.slane %v4094, 5
    %v4105 = vrot.slane %v4094, 6
    %v4106 = vrot.slane %v4094, 7
    %v4107 = vrot.slane %v4097, 1
    %v4108 = vrot.slane %v4097, 2
    %v4109 = vrot.slane %v4097, 3
    %v4110 = vrot.slane %v4097, 4
    %v4111 = vrot.slane %v4097, 5
    %v4112 = vrot.slane %v4097, 6
    %v4113 = vrot.slane %v4097, 7
    %v4130 = vsub.f32 %v4030, %v4094
    %v4131 = vsub.f32 %v4031, %v4100
    %v4132 = vsub.f32 %v4032, %v4101
    %v4133 = vsub.f32 %v4033, %v4102
    %v4134 = vsub.f32 %v4034, %v4103
    %v4135 = vsub.f32 %v4035, %v4104
    %v4136 = vsub.f32 %v4036, %v4105
    %v4137 = vsub.f32 %v4037, %v4106
    %v4138 = vsub.f32 %v4038, %v4097
    %v4139 = vsub.f32 %v4039, %v4107
    %v4140 = vsub.f32 %v4040, %v4108
    %v4141 = vsub.f32 %v4041, %v4109
    %v4142 = vsub.f32 %v4042, %v4110
    %v4143 = vsub.f32 %v4043, %v4111
    %v4144 = vsub.f32 %v4044, %v4112
    %v4145 = vsub.f32 %v4045, %v4113
    %v4146 = vmul.f32 %v4130, 1.442695
    %v4147 = vpow.pop %v4146
    %v4148 = vmul.f32 %v4131, 1.442695
    %v4149 = vpow.pop %v4148
    %v4150 = vmul.f32 %v4132, 1.442695
    %v4151 = vpow.pop %v4150
    %v4152 = vmul.f32 %v4133, 1.442695
    %v4153 = vpow.pop %v4152
    %v4154 = vmul.f32 %v4134, 1.442695
    %v4155 = vpow.pop %v4154
    %v4156 = vmul.f32 %v4135, 1.442695
    %v4157 = vpow.pop %v4156
    %v4158 = vmul.f32 %v4136, 1.442695
    %v4159 = vpow.pop %v4158
    %v4160 = vmul.f32 %v4137, 1.442695
    %v4161 = vpow.pop %v4160
    %v4162 = vmul.f32 %v4138, 1.442695
    %v4163 = vpow.pop %v4162
    %v4164 = vmul.f32 %v4139, 1.442695
    %v4165 = vpow.pop %v4164
    %v4166 = vmul.f32 %v4140, 1.442695
    %v4167 = vpow.pop %v4166
    %v4168 = vmul.f32 %v4141, 1.442695
    %v4169 = vpow.pop %v4168
    %v4170 = vmul.f32 %v4142, 1.442695
    %v4171 = vpow.pop %v4170
    %v4172 = vmul.f32 %v4143, 1.442695
    %v4173 = vpow.pop %v4172
    %v4174 = vmul.f32 %v4144, 1.442695
    %v4175 = vpow.pop %v4174
    %v4176 = vmul.f32 %v4145, 1.442695
    %v4177 = vpow.pop %v4176
    %v4194 = vrot.slane %v4149, 7
    %v4195 = vsel %vm654, %v4194, %v4147
    %v4196 = vrot.slane %v4151, 6
    %v4197 = vsel %vm656, %v4196, %v4195
    %v4198 = vrot.slane %v4153, 5
    %v4199 = vsel %vm658, %v4198, %v4197
    %v4200 = vrot.slane %v4155, 4
    %v4201 = vsel %vm660, %v4200, %v4199
    %v4202 = vrot.slane %v4157, 3
    %v4203 = vsel %vm662, %v4202, %v4201
    %v4204 = vrot.slane %v4159, 2
    %v4205 = vsel %vm664, %v4204, %v4203
    %v4206 = vrot.slane %v4161, 1
    %v4207 = vsel %vm666, %v4206, %v4205
    %v4208 = vrot.slane %v4165, 7
    %v4209 = vsel %vm654, %v4208, %v4163
    %v4210 = vrot.slane %v4167, 6
    %v4211 = vsel %vm656, %v4210, %v4209
    %v4212 = vrot.slane %v4169, 5
    %v4213 = vsel %vm658, %v4212, %v4211
    %v4214 = vrot.slane %v4171, 4
    %v4215 = vsel %vm660, %v4214, %v4213
    %v4216 = vrot.slane %v4173, 3
    %v4217 = vsel %vm662, %v4216, %v4215
    %v4218 = vrot.slane %v4175, 2
    %v4219 = vsel %vm664, %v4218, %v4217
    %v4220 = vrot.slane %v4177, 1
    %v4221 = vsel %vm666, %v4220, %v4219
    %v4224 = vsel %vm3653, %v4207, 0.0
    %4225 = vadd.xlane.f32.xlu0 %v4224
    %v4226 = vpop.xlane.xlu0 %4225
    %v4227 = vsel %vm3653, %v4221, 0.0
    %4228 = vadd.xlane.f32.xlu0 %v4227
    %v4229 = vpop.xlane.xlu0 %4228
    %v4232 = vrot.slane %v4226, 1
    %v4233 = vrot.slane %v4226, 2
    %v4234 = vrot.slane %v4226, 3
    %v4235 = vrot.slane %v4226, 4
    %v4236 = vrot.slane %v4226, 5
    %v4237 = vrot.slane %v4226, 6
    %v4238 = vrot.slane %v4226, 7
    %v4239 = vrot.slane %v4229, 1
    %v4240 = vrot.slane %v4229, 2
    %v4241 = vrot.slane %v4229, 3
    %v4242 = vrot.slane %v4229, 4
    %v4243 = vrot.slane %v4229, 5
    %v4244 = vrot.slane %v4229, 6
    %v4245 = vrot.slane %v4229, 7
    %v4262 = vrcp.pop %v4226
    %v4263 = vmul.f32 %v4147, %v4262
    %v4264 = vrcp.pop %v4232
    %v4265 = vmul.f32 %v4149, %v4264
    %v4266 = vrcp.pop %v4233
    %v4267 = vmul.f32 %v4151, %v4266
    %v4268 = vrcp.pop %v4234
    %v4269 = vmul.f32 %v4153, %v4268
    %v4270 = vrcp.pop %v4235
    %v4271 = vmul.f32 %v4155, %v4270
    %v4272 = vrcp.pop %v4236
    %v4273 = vmul.f32 %v4157, %v4272
    %v4274 = vrcp.pop %v4237
    %v4275 = vmul.f32 %v4159, %v4274
    %v4276 = vrcp.pop %v4238
    %v4277 = vmul.f32 %v4161, %v4276
    %v4278 = vrcp.pop %v4229
    %v4279 = vmul.f32 %v4163, %v4278
    %v4280 = vrcp.pop %v4239
    %v4281 = vmul.f32 %v4165, %v4280
    %v4282 = vrcp.pop %v4240
    %v4283 = vmul.f32 %v4167, %v4282
    %v4284 = vrcp.pop %v4241
    %v4285 = vmul.f32 %v4169, %v4284
    %v4286 = vrcp.pop %v4242
    %v4287 = vmul.f32 %v4171, %v4286
    %v4288 = vrcp.pop %v4243
    %v4289 = vmul.f32 %v4173, %v4288
    %v4290 = vrcp.pop %v4244
    %v4291 = vmul.f32 %v4175, %v4290
    %v4292 = vrcp.pop %v4245
    %v4293 = vmul.f32 %v4177, %v4292
    %v4294 = vlaneseq
    %v4295 = vshrl.u32 %v4294, 7
    %v4296 = vsub.s32 0, %v4295
    %v4297 = vrot.slane %v4263, %v4296
    %4299 = vbcast.lane.b32.xlu0 %v4297, 256
    %v4300 = vpop.permute.xlu0 %4299
    %v4301 = vlaneseq
    %v4302 = vshrl.u32 %v4301, 7
    %v4303 = vsub.s32 0, %v4302
    %v4304 = vrot.slane %v4265, %v4303
    %4306 = vbcast.lane.b32.xlu0 %v4304, 256
    %v4307 = vpop.permute.xlu0 %4306
    %v4308 = vlaneseq
    %v4309 = vshrl.u32 %v4308, 7
    %v4310 = vsub.s32 0, %v4309
    %v4311 = vrot.slane %v4267, %v4310
    %4313 = vbcast.lane.b32.xlu0 %v4311, 256
    %v4314 = vpop.permute.xlu0 %4313
    %v4315 = vlaneseq
    %v4316 = vshrl.u32 %v4315, 7
    %v4317 = vsub.s32 0, %v4316
    %v4318 = vrot.slane %v4269, %v4317
    %4320 = vbcast.lane.b32.xlu0 %v4318, 256
    %v4321 = vpop.permute.xlu0 %4320
    %v4322 = vlaneseq
    %v4323 = vshrl.u32 %v4322, 7
    %v4324 = vsub.s32 0, %v4323
    %v4325 = vrot.slane %v4271, %v4324
    %4327 = vbcast.lane.b32.xlu0 %v4325, 256
    %v4328 = vpop.permute.xlu0 %4327
    %v4329 = vlaneseq
    %v4330 = vshrl.u32 %v4329, 7
    %v4331 = vsub.s32 0, %v4330
    %v4332 = vrot.slane %v4273, %v4331
    %4334 = vbcast.lane.b32.xlu0 %v4332, 256
    %v4335 = vpop.permute.xlu0 %4334
    %v4336 = vlaneseq
    %v4337 = vshrl.u32 %v4336, 7
    %v4338 = vsub.s32 0, %v4337
    %v4339 = vrot.slane %v4275, %v4338
    %4341 = vbcast.lane.b32.xlu0 %v4339, 256
    %v4342 = vpop.permute.xlu0 %4341
    %v4343 = vlaneseq
    %v4344 = vshrl.u32 %v4343, 7
    %v4345 = vsub.s32 0, %v4344
    %v4346 = vrot.slane %v4277, %v4345
    %4348 = vbcast.lane.b32.xlu0 %v4346, 256
    %v4349 = vpop.permute.xlu0 %4348
    %v4350 = vlaneseq
    %v4351 = vshrl.u32 %v4350, 7
    %v4352 = vsub.s32 0, %v4351
    %v4353 = vrot.slane %v4279, %v4352
    %4355 = vbcast.lane.b32.xlu0 %v4353, 256
    %v4356 = vpop.permute.xlu0 %4355
    %v4357 = vlaneseq
    %v4358 = vshrl.u32 %v4357, 7
    %v4359 = vsub.s32 0, %v4358
    %v4360 = vrot.slane %v4281, %v4359
    %4362 = vbcast.lane.b32.xlu0 %v4360, 256
    %v4363 = vpop.permute.xlu0 %4362
    %v4364 = vlaneseq
    %v4365 = vshrl.u32 %v4364, 7
    %v4366 = vsub.s32 0, %v4365
    %v4367 = vrot.slane %v4283, %v4366
    %4369 = vbcast.lane.b32.xlu0 %v4367, 256
    %v4370 = vpop.permute.xlu0 %4369
    %v4371 = vlaneseq
    %v4372 = vshrl.u32 %v4371, 7
    %v4373 = vsub.s32 0, %v4372
    %v4374 = vrot.slane %v4285, %v4373
    %4376 = vbcast.lane.b32.xlu0 %v4374, 256
    %v4377 = vpop.permute.xlu0 %4376
    %v4378 = vlaneseq
    %v4379 = vshrl.u32 %v4378, 7
    %v4380 = vsub.s32 0, %v4379
    %v4381 = vrot.slane %v4287, %v4380
    %4383 = vbcast.lane.b32.xlu0 %v4381, 256
    %v4384 = vpop.permute.xlu0 %4383
    %v4385 = vlaneseq
    %v4386 = vshrl.u32 %v4385, 7
    %v4387 = vsub.s32 0, %v4386
    %v4388 = vrot.slane %v4289, %v4387
    %4390 = vbcast.lane.b32.xlu0 %v4388, 256
    %v4391 = vpop.permute.xlu0 %4390
    %v4392 = vlaneseq
    %v4393 = vshrl.u32 %v4392, 7
    %v4394 = vsub.s32 0, %v4393
    %v4395 = vrot.slane %v4291, %v4394
    %4397 = vbcast.lane.b32.xlu0 %v4395, 256
    %v4398 = vpop.permute.xlu0 %4397
    %v4399 = vlaneseq
    %v4400 = vshrl.u32 %v4399, 7
    %v4401 = vsub.s32 0, %v4400
    %v4402 = vrot.slane %v4293, %v4401
    %4404 = vbcast.lane.b32.xlu0 %v4402, 256
    %v4405 = vpop.permute.xlu0 %4404
    %v4406 = vmul.f32 %v4300, %v3633
    %v4407 = vmul.f32 %v4307, %v3633
    %v4408 = vmul.f32 %v4314, %v3633
    %v4409 = vmul.f32 %v4321, %v3633
    %v4410 = vmul.f32 %v4328, %v3633
    %v4411 = vmul.f32 %v4335, %v3633
    %v4412 = vmul.f32 %v4342, %v3633
    %v4413 = vmul.f32 %v4349, %v3633
    %v4414 = vmul.f32 %v4356, %v3633
    %v4415 = vmul.f32 %v4363, %v3633
    %v4416 = vmul.f32 %v4370, %v3633
    %v4417 = vmul.f32 %v4377, %v3633
    %v4418 = vmul.f32 %v4384, %v3633
    %v4419 = vmul.f32 %v4391, %v3633
    %v4420 = vmul.f32 %v4398, %v3633
    %v4421 = vmul.f32 %v4405, %v3633
    %v4422 = vsel %vm3641, %v4406, 0.0
    %v4423 = vrot.slane %v4422, 4
    %v4424 = vadd.f32 %v4422, %v4423
    %v4425 = vrot.slane %v4424, 2
    %v4426 = vadd.f32 %v4424, %v4425
    %v4427 = vrot.slane %v4426, 1
    %v4428 = vadd.f32 %v4426, %v4427
    %v4429 = vsel %vm3641, %v4407, 0.0
    %v4430 = vrot.slane %v4429, 4
    %v4431 = vadd.f32 %v4429, %v4430
    %v4432 = vrot.slane %v4431, 2
    %v4433 = vadd.f32 %v4431, %v4432
    %v4434 = vrot.slane %v4433, 1
    %v4435 = vadd.f32 %v4433, %v4434
    %v4436 = vsel %vm3641, %v4408, 0.0
    %v4437 = vrot.slane %v4436, 4
    %v4438 = vadd.f32 %v4436, %v4437
    %v4439 = vrot.slane %v4438, 2
    %v4440 = vadd.f32 %v4438, %v4439
    %v4441 = vrot.slane %v4440, 1
    %v4442 = vadd.f32 %v4440, %v4441
    %v4443 = vsel %vm3641, %v4409, 0.0
    %v4444 = vrot.slane %v4443, 4
    %v4445 = vadd.f32 %v4443, %v4444
    %v4446 = vrot.slane %v4445, 2
    %v4447 = vadd.f32 %v4445, %v4446
    %v4448 = vrot.slane %v4447, 1
    %v4449 = vadd.f32 %v4447, %v4448
    %v4450 = vsel %vm3641, %v4410, 0.0
    %v4451 = vrot.slane %v4450, 4
    %v4452 = vadd.f32 %v4450, %v4451
    %v4453 = vrot.slane %v4452, 2
    %v4454 = vadd.f32 %v4452, %v4453
    %v4455 = vrot.slane %v4454, 1
    %v4456 = vadd.f32 %v4454, %v4455
    %v4457 = vsel %vm3641, %v4411, 0.0
    %v4458 = vrot.slane %v4457, 4
    %v4459 = vadd.f32 %v4457, %v4458
    %v4460 = vrot.slane %v4459, 2
    %v4461 = vadd.f32 %v4459, %v4460
    %v4462 = vrot.slane %v4461, 1
    %v4463 = vadd.f32 %v4461, %v4462
    %v4464 = vsel %vm3641, %v4412, 0.0
    %v4465 = vrot.slane %v4464, 4
    %v4466 = vadd.f32 %v4464, %v4465
    %v4467 = vrot.slane %v4466, 2
    %v4468 = vadd.f32 %v4466, %v4467
    %v4469 = vrot.slane %v4468, 1
    %v4470 = vadd.f32 %v4468, %v4469
    %v4471 = vsel %vm3641, %v4413, 0.0
    %v4472 = vrot.slane %v4471, 4
    %v4473 = vadd.f32 %v4471, %v4472
    %v4474 = vrot.slane %v4473, 2
    %v4475 = vadd.f32 %v4473, %v4474
    %v4476 = vrot.slane %v4475, 1
    %v4477 = vadd.f32 %v4475, %v4476
    %v4478 = vsel %vm3641, %v4414, 0.0
    %v4479 = vrot.slane %v4478, 4
    %v4480 = vadd.f32 %v4478, %v4479
    %v4481 = vrot.slane %v4480, 2
    %v4482 = vadd.f32 %v4480, %v4481
    %v4483 = vrot.slane %v4482, 1
    %v4484 = vadd.f32 %v4482, %v4483
    %v4485 = vsel %vm3641, %v4415, 0.0
    %v4486 = vrot.slane %v4485, 4
    %v4487 = vadd.f32 %v4485, %v4486
    %v4488 = vrot.slane %v4487, 2
    %v4489 = vadd.f32 %v4487, %v4488
    %v4490 = vrot.slane %v4489, 1
    %v4491 = vadd.f32 %v4489, %v4490
    %v4492 = vsel %vm3641, %v4416, 0.0
    %v4493 = vrot.slane %v4492, 4
    %v4494 = vadd.f32 %v4492, %v4493
    %v4495 = vrot.slane %v4494, 2
    %v4496 = vadd.f32 %v4494, %v4495
    %v4497 = vrot.slane %v4496, 1
    %v4498 = vadd.f32 %v4496, %v4497
    %v4499 = vsel %vm3641, %v4417, 0.0
    %v4500 = vrot.slane %v4499, 4
    %v4501 = vadd.f32 %v4499, %v4500
    %v4502 = vrot.slane %v4501, 2
    %v4503 = vadd.f32 %v4501, %v4502
    %v4504 = vrot.slane %v4503, 1
    %v4505 = vadd.f32 %v4503, %v4504
    %v4506 = vsel %vm3641, %v4418, 0.0
    %v4507 = vrot.slane %v4506, 4
    %v4508 = vadd.f32 %v4506, %v4507
    %v4509 = vrot.slane %v4508, 2
    %v4510 = vadd.f32 %v4508, %v4509
    %v4511 = vrot.slane %v4510, 1
    %v4512 = vadd.f32 %v4510, %v4511
    %v4513 = vsel %vm3641, %v4419, 0.0
    %v4514 = vrot.slane %v4513, 4
    %v4515 = vadd.f32 %v4513, %v4514
    %v4516 = vrot.slane %v4515, 2
    %v4517 = vadd.f32 %v4515, %v4516
    %v4518 = vrot.slane %v4517, 1
    %v4519 = vadd.f32 %v4517, %v4518
    %v4520 = vsel %vm3641, %v4420, 0.0
    %v4521 = vrot.slane %v4520, 4
    %v4522 = vadd.f32 %v4520, %v4521
    %v4523 = vrot.slane %v4522, 2
    %v4524 = vadd.f32 %v4522, %v4523
    %v4525 = vrot.slane %v4524, 1
    %v4526 = vadd.f32 %v4524, %v4525
    %v4527 = vsel %vm3641, %v4421, 0.0
    %v4528 = vrot.slane %v4527, 4
    %v4529 = vadd.f32 %v4527, %v4528
    %v4530 = vrot.slane %v4529, 2
    %v4531 = vadd.f32 %v4529, %v4530
    %v4532 = vrot.slane %v4531, 1
    %v4533 = vadd.f32 %v4531, %v4532
    %v4534 = vsub.f32 1.0, %v4428
    %v4535 = vsub.f32 1.0, %v4435
    %v4536 = vsub.f32 1.0, %v4442
    %v4537 = vsub.f32 1.0, %v4449
    %v4538 = vsub.f32 1.0, %v4456
    %v4539 = vsub.f32 1.0, %v4463
    %v4540 = vsub.f32 1.0, %v4470
    %v4541 = vsub.f32 1.0, %v4477
    %v4542 = vsub.f32 1.0, %v4484
    %v4543 = vsub.f32 1.0, %v4491
    %v4544 = vsub.f32 1.0, %v4498
    %v4545 = vsub.f32 1.0, %v4505
    %v4546 = vsub.f32 1.0, %v4512
    %v4547 = vsub.f32 1.0, %v4519
    %v4548 = vsub.f32 1.0, %v4526
    %v4549 = vsub.f32 1.0, %v4533
    %v4550 = vmul.f32 %v3854, %v4534
    %v4551 = vmul.f32 %v3855, %v4535
    %v4552 = vmul.f32 %v3856, %v4536
    %v4553 = vmul.f32 %v3857, %v4537
    %v4554 = vmul.f32 %v3858, %v4538
    %v4555 = vmul.f32 %v3859, %v4539
    %v4556 = vmul.f32 %v3860, %v4540
    %v4557 = vmul.f32 %v3861, %v4541
    %v4558 = vmul.f32 %v3862, %v4542
    %v4559 = vmul.f32 %v3863, %v4543
    %v4560 = vmul.f32 %v3864, %v4544
    %v4561 = vmul.f32 %v3865, %v4545
    %v4562 = vmul.f32 %v3866, %v4546
    %v4563 = vmul.f32 %v3867, %v4547
    %v4564 = vmul.f32 %v3868, %v4548
    %v4565 = vmul.f32 %v3869, %v4549
    %v4566 = vadd.f32 %v4428, %v4550
    %v4567 = vadd.f32 %v4435, %v4551
    %v4568 = vadd.f32 %v4442, %v4552
    %v4569 = vadd.f32 %v4449, %v4553
    %v4570 = vadd.f32 %v4456, %v4554
    %v4571 = vadd.f32 %v4463, %v4555
    %v4572 = vadd.f32 %v4470, %v4556
    %v4573 = vadd.f32 %v4477, %v4557
    %v4574 = vadd.f32 %v4484, %v4558
    %v4575 = vadd.f32 %v4491, %v4559
    %v4576 = vadd.f32 %v4498, %v4560
    %v4577 = vadd.f32 %v4505, %v4561
    %v4578 = vadd.f32 %v4512, %v4562
    %v4579 = vadd.f32 %v4519, %v4563
    %v4580 = vadd.f32 %v4526, %v4564
    %v4581 = vadd.f32 %v4533, %v4565
    %v4582 = vmul.f32 %v3854, %v4263
    %v4583 = vmul.f32 %v3855, %v4265
    %v4584 = vmul.f32 %v3856, %v4267
    %v4585 = vmul.f32 %v3857, %v4269
    %v4586 = vmul.f32 %v3858, %v4271
    %v4587 = vmul.f32 %v3859, %v4273
    %v4588 = vmul.f32 %v3860, %v4275
    %v4589 = vmul.f32 %v3861, %v4277
    %v4590 = vmul.f32 %v3862, %v4279
    %v4591 = vmul.f32 %v3863, %v4281
    %v4592 = vmul.f32 %v3864, %v4283
    %v4593 = vmul.f32 %v3865, %v4285
    %v4594 = vmul.f32 %v3866, %v4287
    %v4595 = vmul.f32 %v3867, %v4289
    %v4596 = vmul.f32 %v3868, %v4291
    %v4597 = vmul.f32 %v3869, %v4293
    %v4614 = vrot.slane %v4583, 7
    %v4615 = vsel %vm654, %v4614, %v4582
    %v4616 = vrot.slane %v4584, 6
    %v4617 = vsel %vm656, %v4616, %v4615
    %v4618 = vrot.slane %v4585, 5
    %v4619 = vsel %vm658, %v4618, %v4617
    %v4620 = vrot.slane %v4586, 4
    %v4621 = vsel %vm660, %v4620, %v4619
    %v4622 = vrot.slane %v4587, 3
    %v4623 = vsel %vm662, %v4622, %v4621
    %v4624 = vrot.slane %v4588, 2
    %v4625 = vsel %vm664, %v4624, %v4623
    %v4626 = vrot.slane %v4589, 1
    %v4627 = vsel %vm666, %v4626, %v4625
    %v4628 = vrot.slane %v4591, 7
    %v4629 = vsel %vm654, %v4628, %v4590
    %v4630 = vrot.slane %v4592, 6
    %v4631 = vsel %vm656, %v4630, %v4629
    %v4632 = vrot.slane %v4593, 5
    %v4633 = vsel %vm658, %v4632, %v4631
    %v4634 = vrot.slane %v4594, 4
    %v4635 = vsel %vm660, %v4634, %v4633
    %v4636 = vrot.slane %v4595, 3
    %v4637 = vsel %vm662, %v4636, %v4635
    %v4638 = vrot.slane %v4596, 2
    %v4639 = vsel %vm664, %v4638, %v4637
    %v4640 = vrot.slane %v4597, 1
    %v4641 = vsel %vm666, %v4640, %v4639
    %v4644 = vsel %vm3653, %v4627, 0.0
    %4645 = vadd.xlane.f32.xlu0 %v4644
    %v4646 = vpop.xlane.xlu0 %4645
    %v4647 = vsel %vm3653, %v4641, 0.0
    %4648 = vadd.xlane.f32.xlu0 %v4647
    %v4649 = vpop.xlane.xlu0 %4648
    %v4650 = vmul.f32 %v4566, %v4428
    %v4651 = vmul.f32 %v4567, %v4435
    %v4652 = vmul.f32 %v4568, %v4442
    %v4653 = vmul.f32 %v4569, %v4449
    %v4654 = vmul.f32 %v4570, %v4456
    %v4655 = vmul.f32 %v4571, %v4463
    %v4656 = vmul.f32 %v4572, %v4470
    %v4657 = vmul.f32 %v4573, %v4477
    %v4658 = vmul.f32 %v4574, %v4484
    %v4659 = vmul.f32 %v4575, %v4491
    %v4660 = vmul.f32 %v4576, %v4498
    %v4661 = vmul.f32 %v4577, %v4505
    %v4662 = vmul.f32 %v4578, %v4512
    %v4663 = vmul.f32 %v4579, %v4519
    %v4664 = vmul.f32 %v4580, %v4526
    %v4665 = vmul.f32 %v4581, %v4533
    %v4682 = vrot.slane %v4651, 7
    %v4683 = vsel %vm654, %v4682, %v4650
    %v4684 = vrot.slane %v4652, 6
    %v4685 = vsel %vm656, %v4684, %v4683
    %v4686 = vrot.slane %v4653, 5
    %v4687 = vsel %vm658, %v4686, %v4685
    %v4688 = vrot.slane %v4654, 4
    %v4689 = vsel %vm660, %v4688, %v4687
    %v4690 = vrot.slane %v4655, 3
    %v4691 = vsel %vm662, %v4690, %v4689
    %v4692 = vrot.slane %v4656, 2
    %v4693 = vsel %vm664, %v4692, %v4691
    %v4694 = vrot.slane %v4657, 1
    %v4695 = vsel %vm666, %v4694, %v4693
    %v4696 = vrot.slane %v4659, 7
    %v4697 = vsel %vm654, %v4696, %v4658
    %v4698 = vrot.slane %v4660, 6
    %v4699 = vsel %vm656, %v4698, %v4697
    %v4700 = vrot.slane %v4661, 5
    %v4701 = vsel %vm658, %v4700, %v4699
    %v4702 = vrot.slane %v4662, 4
    %v4703 = vsel %vm660, %v4702, %v4701
    %v4704 = vrot.slane %v4663, 3
    %v4705 = vsel %vm662, %v4704, %v4703
    %v4706 = vrot.slane %v4664, 2
    %v4707 = vsel %vm664, %v4706, %v4705
    %v4708 = vrot.slane %v4665, 1
    %v4709 = vsel %vm666, %v4708, %v4707
    %v4712 = vsel %vm3653, %v4695, 0.0
    %4713 = vadd.xlane.f32.xlu0 %v4712
    %v4714 = vpop.xlane.xlu0 %4713
    %v4715 = vsel %vm3653, %v4709, 0.0
    %4716 = vadd.xlane.f32.xlu0 %v4715
    %v4717 = vpop.xlane.xlu0 %4716
    %v4718 = vmul.f32 %v4714, %v694
    %v4719 = vmul.f32 %v4717, %v696
    %s4720 = scalar_lea.vmem [#allocation8], 32
    %4721 = vst [vmem:[%s4720] sm:$0xff] %v4718
    %4722 = vst [vmem:[%s4720 + $0x8] sm:$0xff] %v4719
    %v4723 = vmul.f32 %v4646, %v694
    %v4724 = vmul.f32 %v4649, %v696
    %s4725 = scalar_lea.vmem [#allocation8], 48
    %4726 = vst [vmem:[%s4725] sm:$0xff] %v4723
    %4727 = vst [vmem:[%s4725 + $0x8] sm:$0xff] %v4724
    %v4744 = vrot.slane %v4566, 7
    %v4745 = vrot.slane %v4567, 7
    %v4746 = vrot.slane %v4568, 7
    %v4747 = vrot.slane %v4569, 7
    %v4748 = vrot.slane %v4570, 7
    %v4749 = vrot.slane %v4571, 7
    %v4750 = vrot.slane %v4572, 7
    %v4751 = vrot.slane %v4573, 7
    %v4752 = vrot.slane %v4574, 7
    %v4753 = vrot.slane %v4575, 7
    %v4754 = vrot.slane %v4576, 7
    %v4755 = vrot.slane %v4577, 7
    %v4756 = vrot.slane %v4578, 7
    %v4757 = vrot.slane %v4579, 7
    %v4758 = vrot.slane %v4580, 7
    %v4759 = vrot.slane %v4581, 7
    %v4776 = vmul.f32 %v3681, %v4744
    %v4777 = vmul.f32 %v3686, %v4745
    %v4778 = vmul.f32 %v3691, %v4746
    %v4779 = vmul.f32 %v3696, %v4747
    %v4780 = vmul.f32 %v3701, %v4748
    %v4781 = vmul.f32 %v3706, %v4749
    %v4782 = vmul.f32 %v3711, %v4750
    %v4783 = vmul.f32 %v3716, %v4751
    %v4784 = vmul.f32 %v3721, %v4752
    %v4785 = vmul.f32 %v3726, %v4753
    %v4786 = vmul.f32 %v3731, %v4754
    %v4787 = vmul.f32 %v3736, %v4755
    %v4788 = vmul.f32 %v3741, %v4756
    %v4789 = vmul.f32 %v3746, %v4757
    %v4790 = vmul.f32 %v3751, %v4758
    %v4791 = vmul.f32 %v3756, %v4759
    %v4808 = vrot.slane %v3854, 7
    %v4809 = vrot.slane %v3855, 7
    %v4810 = vrot.slane %v3856, 7
    %v4811 = vrot.slane %v3857, 7
    %v4812 = vrot.slane %v3858, 7
    %v4813 = vrot.slane %v3859, 7
    %v4814 = vrot.slane %v3860, 7
    %v4815 = vrot.slane %v3861, 7
    %v4816 = vrot.slane %v3862, 7
    %v4817 = vrot.slane %v3863, 7
    %v4818 = vrot.slane %v3864, 7
    %v4819 = vrot.slane %v3865, 7
    %v4820 = vrot.slane %v3866, 7
    %v4821 = vrot.slane %v3867, 7
    %v4822 = vrot.slane %v3868, 7
    %v4823 = vrot.slane %v3869, 7
    %v4840 = vmul.f32 %v3776, %v4808
    %v4841 = vmul.f32 %v3780, %v4809
    %v4842 = vmul.f32 %v3784, %v4810
    %v4843 = vmul.f32 %v3788, %v4811
    %v4844 = vmul.f32 %v3792, %v4812
    %v4845 = vmul.f32 %v3796, %v4813
    %v4846 = vmul.f32 %v3800, %v4814
    %v4847 = vmul.f32 %v3804, %v4815
    %v4848 = vmul.f32 %v3808, %v4816
    %v4849 = vmul.f32 %v3812, %v4817
    %v4850 = vmul.f32 %v3816, %v4818
    %v4851 = vmul.f32 %v3820, %v4819
    %v4852 = vmul.f32 %v3824, %v4820
    %v4853 = vmul.f32 %v3828, %v4821
    %v4854 = vmul.f32 %v3832, %v4822
    %v4855 = vmul.f32 %v3836, %v4823
    %v4856 = vadd.f32 %v4776, %v4840
    %v4857 = vadd.f32 %v4777, %v4841
    %v4858 = vadd.f32 %v4778, %v4842
    %v4859 = vadd.f32 %v4779, %v4843
    %v4860 = vadd.f32 %v4780, %v4844
    %v4861 = vadd.f32 %v4781, %v4845
    %v4862 = vadd.f32 %v4782, %v4846
    %v4863 = vadd.f32 %v4783, %v4847
    %v4864 = vadd.f32 %v4784, %v4848
    %v4865 = vadd.f32 %v4785, %v4849
    %v4866 = vadd.f32 %v4786, %v4850
    %v4867 = vadd.f32 %v4787, %v4851
    %v4868 = vadd.f32 %v4788, %v4852
    %v4869 = vadd.f32 %v4789, %v4853
    %v4870 = vadd.f32 %v4790, %v4854
    %v4871 = vadd.f32 %v4791, %v4855
    %v4888 = vrot.slane %v3966, 7
    %v4889 = vrot.slane %v3967, 7
    %v4890 = vrot.slane %v3968, 7
    %v4891 = vrot.slane %v3969, 7
    %v4892 = vrot.slane %v3970, 7
    %v4893 = vrot.slane %v3971, 7
    %v4894 = vrot.slane %v3972, 7
    %v4895 = vrot.slane %v3973, 7
    %v4896 = vrot.slane %v3974, 7
    %v4897 = vrot.slane %v3975, 7
    %v4898 = vrot.slane %v3976, 7
    %v4899 = vrot.slane %v3977, 7
    %v4900 = vrot.slane %v3978, 7
    %v4901 = vrot.slane %v3979, 7
    %v4902 = vrot.slane %v3980, 7
    %v4903 = vrot.slane %v3981, 7
    %v4920 = vmul.f32 %v3610, %v4888
    %v4921 = vmul.f32 %v3611, %v4889
    %v4922 = vmul.f32 %v3612, %v4890
    %v4923 = vmul.f32 %v3613, %v4891
    %v4924 = vmul.f32 %v3614, %v4892
    %v4925 = vmul.f32 %v3615, %v4893
    %v4926 = vmul.f32 %v3616, %v4894
    %v4927 = vmul.f32 %v3617, %v4895
    %v4928 = vmul.f32 %v3618, %v4896
    %v4929 = vmul.f32 %v3619, %v4897
    %v4930 = vmul.f32 %v3620, %v4898
    %v4931 = vmul.f32 %v3621, %v4899
    %v4932 = vmul.f32 %v3622, %v4900
    %v4933 = vmul.f32 %v3623, %v4901
    %v4934 = vmul.f32 %v3624, %v4902
    %v4935 = vmul.f32 %v3625, %v4903
    %v4938 = vrot.slane %v4646, 7
    %v4939 = vrot.slane %v4646, 1
    %v4940 = vrot.slane %v4646, 2
    %v4941 = vrot.slane %v4646, 3
    %v4942 = vrot.slane %v4646, 4
    %v4943 = vrot.slane %v4646, 5
    %v4944 = vrot.slane %v4646, 6
    %v4945 = vrot.slane %v4649, 7
    %v4946 = vrot.slane %v4649, 1
    %v4947 = vrot.slane %v4649, 2
    %v4948 = vrot.slane %v4649, 3
    %v4949 = vrot.slane %v4649, 4
    %v4950 = vrot.slane %v4649, 5
    %v4951 = vrot.slane %v4649, 6
    %v4968 = vmul.f32 %v3610, %v4938
    %v4969 = vmul.f32 %v3611, %v4646
    %v4970 = vmul.f32 %v3612, %v4939
    %v4971 = vmul.f32 %v3613, %v4940
    %v4972 = vmul.f32 %v3614, %v4941
    %v4973 = vmul.f32 %v3615, %v4942
    %v4974 = vmul.f32 %v3616, %v4943
    %v4975 = vmul.f32 %v3617, %v4944
    %v4976 = vmul.f32 %v3618, %v4945
    %v4977 = vmul.f32 %v3619, %v4649
    %v4978 = vmul.f32 %v3620, %v4946
    %v4979 = vmul.f32 %v3621, %v4947
    %v4980 = vmul.f32 %v3622, %v4948
    %v4981 = vmul.f32 %v3623, %v4949
    %v4982 = vmul.f32 %v3624, %v4950
    %v4983 = vmul.f32 %v3625, %v4951
    %5000 = vrot.lane.b32.xlu0 %v4968, 127
    %v5001 = vpop.permute.xlu0 %5000
    %5002 = vrot.lane.b32.xlu0 %v4969, 127
    %v5003 = vpop.permute.xlu0 %5002
    %5004 = vrot.lane.b32.xlu0 %v4970, 127
    %v5005 = vpop.permute.xlu0 %5004
    %5006 = vrot.lane.b32.xlu0 %v4971, 127
    %v5007 = vpop.permute.xlu0 %5006
    %5008 = vrot.lane.b32.xlu0 %v4972, 127
    %v5009 = vpop.permute.xlu0 %5008
    %5010 = vrot.lane.b32.xlu0 %v4973, 127
    %v5011 = vpop.permute.xlu0 %5010
    %5012 = vrot.lane.b32.xlu0 %v4974, 127
    %v5013 = vpop.permute.xlu0 %5012
    %5014 = vrot.lane.b32.xlu0 %v4975, 127
    %v5015 = vpop.permute.xlu0 %5014
    %5016 = vrot.lane.b32.xlu0 %v4976, 127
    %v5017 = vpop.permute.xlu0 %5016
    %5018 = vrot.lane.b32.xlu0 %v4977, 127
    %v5019 = vpop.permute.xlu0 %5018
    %5020 = vrot.lane.b32.xlu0 %v4978, 127
    %v5021 = vpop.permute.xlu0 %5020
    %5022 = vrot.lane.b32.xlu0 %v4979, 127
    %v5023 = vpop.permute.xlu0 %5022
    %5024 = vrot.lane.b32.xlu0 %v4980, 127
    %v5025 = vpop.permute.xlu0 %5024
    %5026 = vrot.lane.b32.xlu0 %v4981, 127
    %v5027 = vpop.permute.xlu0 %5026
    %5028 = vrot.lane.b32.xlu0 %v4982, 127
    %v5029 = vpop.permute.xlu0 %5028
    %5030 = vrot.lane.b32.xlu0 %v4983, 127
    %v5031 = vpop.permute.xlu0 %5030
    %v5048 = vadd.f32 %v4920, %v5001
    %v5049 = vadd.f32 %v4921, %v5003
    %v5050 = vadd.f32 %v4922, %v5005
    %v5051 = vadd.f32 %v4923, %v5007
    %v5052 = vadd.f32 %v4924, %v5009
    %v5053 = vadd.f32 %v4925, %v5011
    %v5054 = vadd.f32 %v4926, %v5013
    %v5055 = vadd.f32 %v4927, %v5015
    %v5056 = vadd.f32 %v4928, %v5017
    %v5057 = vadd.f32 %v4929, %v5019
    %v5058 = vadd.f32 %v4930, %v5021
    %v5059 = vadd.f32 %v4931, %v5023
    %v5060 = vadd.f32 %v4932, %v5025
    %v5061 = vadd.f32 %v4933, %v5027
    %v5062 = vadd.f32 %v4934, %v5029
    %v5063 = vadd.f32 %v4935, %v5031
    %v5064 = vmul.f32 %v3681, %v4428
    %v5065 = vmul.f32 %v3686, %v4435
    %v5066 = vmul.f32 %v3691, %v4442
    %v5067 = vmul.f32 %v3696, %v4449
    %v5068 = vmul.f32 %v3701, %v4456
    %v5069 = vmul.f32 %v3706, %v4463
    %v5070 = vmul.f32 %v3711, %v4470
    %v5071 = vmul.f32 %v3716, %v4477
    %v5072 = vmul.f32 %v3721, %v4484
    %v5073 = vmul.f32 %v3726, %v4491
    %v5074 = vmul.f32 %v3731, %v4498
    %v5075 = vmul.f32 %v3736, %v4505
    %v5076 = vmul.f32 %v3741, %v4512
    %v5077 = vmul.f32 %v3746, %v4519
    %v5078 = vmul.f32 %v3751, %v4526
    %v5079 = vmul.f32 %v3756, %v4533
    %v5096 = vrot.slane %v4263, 7
    %v5097 = vrot.slane %v4265, 7
    %v5098 = vrot.slane %v4267, 7
    %v5099 = vrot.slane %v4269, 7
    %v5100 = vrot.slane %v4271, 7
    %v5101 = vrot.slane %v4273, 7
    %v5102 = vrot.slane %v4275, 7
    %v5103 = vrot.slane %v4277, 7
    %v5104 = vrot.slane %v4279, 7
    %v5105 = vrot.slane %v4281, 7
    %v5106 = vrot.slane %v4283, 7
    %v5107 = vrot.slane %v4285, 7
    %v5108 = vrot.slane %v4287, 7
    %v5109 = vrot.slane %v4289, 7
    %v5110 = vrot.slane %v4291, 7
    %v5111 = vrot.slane %v4293, 7
    %v5128 = vmul.f32 %v3776, %v5096
    %v5129 = vmul.f32 %v3780, %v5097
    %v5130 = vmul.f32 %v3784, %v5098
    %v5131 = vmul.f32 %v3788, %v5099
    %v5132 = vmul.f32 %v3792, %v5100
    %v5133 = vmul.f32 %v3796, %v5101
    %v5134 = vmul.f32 %v3800, %v5102
    %v5135 = vmul.f32 %v3804, %v5103
    %v5136 = vmul.f32 %v3808, %v5104
    %v5137 = vmul.f32 %v3812, %v5105
    %v5138 = vmul.f32 %v3816, %v5106
    %v5139 = vmul.f32 %v3820, %v5107
    %v5140 = vmul.f32 %v3824, %v5108
    %v5141 = vmul.f32 %v3828, %v5109
    %v5142 = vmul.f32 %v3832, %v5110
    %v5143 = vmul.f32 %v3836, %v5111
    %v5144 = vadd.f32 %v5064, %v5128
    %v5145 = vadd.f32 %v5065, %v5129
    %v5146 = vadd.f32 %v5066, %v5130
    %v5147 = vadd.f32 %v5067, %v5131
    %v5148 = vadd.f32 %v5068, %v5132
    %v5149 = vadd.f32 %v5069, %v5133
    %v5150 = vadd.f32 %v5070, %v5134
    %v5151 = vadd.f32 %v5071, %v5135
    %v5152 = vadd.f32 %v5072, %v5136
    %v5153 = vadd.f32 %v5073, %v5137
    %v5154 = vadd.f32 %v5074, %v5138
    %v5155 = vadd.f32 %v5075, %v5139
    %v5156 = vadd.f32 %v5076, %v5140
    %v5157 = vadd.f32 %v5077, %v5141
    %v5158 = vadd.f32 %v5078, %v5142
    %v5159 = vadd.f32 %v5079, %v5143
    %v5160 = vmul.f32 %v5144, 10.0
    %v5161 = vmul.f32 %v5145, 10.0
    %v5162 = vmul.f32 %v5146, 10.0
    %v5163 = vmul.f32 %v5147, 10.0
    %v5164 = vmul.f32 %v5148, 10.0
    %v5165 = vmul.f32 %v5149, 10.0
    %v5166 = vmul.f32 %v5150, 10.0
    %v5167 = vmul.f32 %v5151, 10.0
    %v5168 = vmul.f32 %v5152, 10.0
    %v5169 = vmul.f32 %v5153, 10.0
    %v5170 = vmul.f32 %v5154, 10.0
    %v5171 = vmul.f32 %v5155, 10.0
    %v5172 = vmul.f32 %v5156, 10.0
    %v5173 = vmul.f32 %v5157, 10.0
    %v5174 = vmul.f32 %v5158, 10.0
    %v5175 = vmul.f32 %v5159, 10.0
    %v5192 = vrot.slane %v5161, 7
    %v5193 = vsel %vm656, %v5192, %v5160
    %v5194 = vrot.slane %v5162, 6
    %v5195 = vsel %vm658, %v5194, %v5193
    %v5196 = vrot.slane %v5163, 5
    %v5197 = vsel %vm660, %v5196, %v5195
    %v5198 = vrot.slane %v5164, 4
    %v5199 = vsel %vm662, %v5198, %v5197
    %v5200 = vrot.slane %v5165, 3
    %v5201 = vsel %vm664, %v5200, %v5199
    %v5202 = vrot.slane %v5166, 2
    %v5203 = vsel %vm666, %v5202, %v5201
    %v5204 = vrot.slane %v5167, 1
    %v5205 = vsel %vm654, %v5168, %v5204
    %v5206 = vrot.slane %v5169, 7
    %v5207 = vsel %vm656, %v5206, %v5205
    %v5208 = vrot.slane %v5170, 6
    %v5209 = vsel %vm658, %v5208, %v5207
    %v5210 = vrot.slane %v5171, 5
    %v5211 = vsel %vm660, %v5210, %v5209
    %v5212 = vrot.slane %v5172, 4
    %v5213 = vsel %vm662, %v5212, %v5211
    %v5214 = vrot.slane %v5173, 3
    %v5215 = vsel %vm664, %v5214, %v5213
    %v5216 = vrot.slane %v5174, 2
    %v5217 = vsel %vm666, %v5216, %v5215
    %v5218 = vrot.slane %v5175, 1
    %vm5222 = vcmask 31745
    %v5223 = vsel %vm5222, %v5203, -inf
    %5224 = vmax.xlane.f32.xlu0 %v5223
    %v5225 = vpop.xlane.xlu0 %5224
    %v5226 = vsel %vm3653, %v5217, -inf
    %5227 = vmax.xlane.f32.xlu0 %v5226
    %v5228 = vpop.xlane.xlu0 %5227
    %vm5229 = vcmask 24576
    %v5230 = vsel %vm5229, %v5218, -inf
    %5231 = vmax.xlane.f32.xlu0 %v5230
    %v5232 = vpop.xlane.xlu0 %5231
    %v5236 = vrot.slane %v5225, 1
    %v5237 = vrot.slane %v5225, 2
    %v5238 = vrot.slane %v5225, 3
    %v5239 = vrot.slane %v5225, 4
    %v5240 = vrot.slane %v5225, 5
    %v5241 = vrot.slane %v5225, 6
    %v5242 = vrot.slane %v5228, 7
    %v5243 = vrot.slane %v5228, 1
    %v5244 = vrot.slane %v5228, 2
    %v5245 = vrot.slane %v5228, 3
    %v5246 = vrot.slane %v5228, 4
    %v5247 = vrot.slane %v5228, 5
    %v5248 = vrot.slane %v5228, 6
    %v5249 = vrot.slane %v5232, 7
    %v5266 = vsub.f32 %v5160, %v5225
    %v5267 = vsub.f32 %v5161, %v5236
    %v5268 = vsub.f32 %v5162, %v5237
    %v5269 = vsub.f32 %v5163, %v5238
    %v5270 = vsub.f32 %v5164, %v5239
    %v5271 = vsub.f32 %v5165, %v5240
    %v5272 = vsub.f32 %v5166, %v5241
    %v5273 = vsub.f32 %v5167, %v5242
    %v5274 = vsub.f32 %v5168, %v5228
    %v5275 = vsub.f32 %v5169, %v5243
    %v5276 = vsub.f32 %v5170, %v5244
    %v5277 = vsub.f32 %v5171, %v5245
    %v5278 = vsub.f32 %v5172, %v5246
    %v5279 = vsub.f32 %v5173, %v5247
    %v5280 = vsub.f32 %v5174, %v5248
    %v5281 = vsub.f32 %v5175, %v5249
    %v5282 = vmul.f32 %v5266, 1.442695
    %v5283 = vpow.pop %v5282
    %v5284 = vmul.f32 %v5267, 1.442695
    %v5285 = vpow.pop %v5284
    %v5286 = vmul.f32 %v5268, 1.442695
    %v5287 = vpow.pop %v5286
    %v5288 = vmul.f32 %v5269, 1.442695
    %v5289 = vpow.pop %v5288
    %v5290 = vmul.f32 %v5270, 1.442695
    %v5291 = vpow.pop %v5290
    %v5292 = vmul.f32 %v5271, 1.442695
    %v5293 = vpow.pop %v5292
    %v5294 = vmul.f32 %v5272, 1.442695
    %v5295 = vpow.pop %v5294
    %v5296 = vmul.f32 %v5273, 1.442695
    %v5297 = vpow.pop %v5296
    %v5298 = vmul.f32 %v5274, 1.442695
    %v5299 = vpow.pop %v5298
    %v5300 = vmul.f32 %v5275, 1.442695
    %v5301 = vpow.pop %v5300
    %v5302 = vmul.f32 %v5276, 1.442695
    %v5303 = vpow.pop %v5302
    %v5304 = vmul.f32 %v5277, 1.442695
    %v5305 = vpow.pop %v5304
    %v5306 = vmul.f32 %v5278, 1.442695
    %v5307 = vpow.pop %v5306
    %v5308 = vmul.f32 %v5279, 1.442695
    %v5309 = vpow.pop %v5308
    %v5310 = vmul.f32 %v5280, 1.442695
    %v5311 = vpow.pop %v5310
    %v5312 = vmul.f32 %v5281, 1.442695
    %v5313 = vpow.pop %v5312
    %v5330 = vrot.slane %v5285, 7
    %v5331 = vsel %vm656, %v5330, %v5283
    %v5332 = vrot.slane %v5287, 6
    %v5333 = vsel %vm658, %v5332, %v5331
    %v5334 = vrot.slane %v5289, 5
    %v5335 = vsel %vm660, %v5334, %v5333
    %v5336 = vrot.slane %v5291, 4
    %v5337 = vsel %vm662, %v5336, %v5335
    %v5338 = vrot.slane %v5293, 3
    %v5339 = vsel %vm664, %v5338, %v5337
    %v5340 = vrot.slane %v5295, 2
    %v5341 = vsel %vm666, %v5340, %v5339
    %v5342 = vrot.slane %v5297, 1
    %v5343 = vsel %vm654, %v5299, %v5342
    %v5344 = vrot.slane %v5301, 7
    %v5345 = vsel %vm656, %v5344, %v5343
    %v5346 = vrot.slane %v5303, 6
    %v5347 = vsel %vm658, %v5346, %v5345
    %v5348 = vrot.slane %v5305, 5
    %v5349 = vsel %vm660, %v5348, %v5347
    %v5350 = vrot.slane %v5307, 4
    %v5351 = vsel %vm662, %v5350, %v5349
    %v5352 = vrot.slane %v5309, 3
    %v5353 = vsel %vm664, %v5352, %v5351
    %v5354 = vrot.slane %v5311, 2
    %v5355 = vsel %vm666, %v5354, %v5353
    %v5356 = vrot.slane %v5313, 1
    %v5360 = vsel %vm5222, %v5341, 0.0
    %5361 = vadd.xlane.f32.xlu0 %v5360
    %v5362 = vpop.xlane.xlu0 %5361
    %v5363 = vsel %vm3653, %v5355, 0.0
    %5364 = vadd.xlane.f32.xlu0 %v5363
    %v5365 = vpop.xlane.xlu0 %5364
    %v5366 = vsel %vm5229, %v5356, 0.0
    %5367 = vadd.xlane.f32.xlu0 %v5366
    %v5368 = vpop.xlane.xlu0 %5367
    %v5372 = vrot.slane %v5362, 1
    %v5373 = vrot.slane %v5362, 2
    %v5374 = vrot.slane %v5362, 3
    %v5375 = vrot.slane %v5362, 4
    %v5376 = vrot.slane %v5362, 5
    %v5377 = vrot.slane %v5362, 6
    %v5378 = vrot.slane %v5365, 7
    %v5379 = vrot.slane %v5365, 1
    %v5380 = vrot.slane %v5365, 2
    %v5381 = vrot.slane %v5365, 3
    %v5382 = vrot.slane %v5365, 4
    %v5383 = vrot.slane %v5365, 5
    %v5384 = vrot.slane %v5365, 6
    %v5385 = vrot.slane %v5368, 7
    %v5402 = vrcp.pop %v5362
    %v5403 = vmul.f32 %v5283, %v5402
    %v5404 = vrcp.pop %v5372
    %v5405 = vmul.f32 %v5285, %v5404
    %v5406 = vrcp.pop %v5373
    %v5407 = vmul.f32 %v5287, %v5406
    %v5408 = vrcp.pop %v5374
    %v5409 = vmul.f32 %v5289, %v5408
    %v5410 = vrcp.pop %v5375
    %v5411 = vmul.f32 %v5291, %v5410
    %v5412 = vrcp.pop %v5376
    %v5413 = vmul.f32 %v5293, %v5412
    %v5414 = vrcp.pop %v5377
    %v5415 = vmul.f32 %v5295, %v5414
    %v5416 = vrcp.pop %v5378
    %v5417 = vmul.f32 %v5297, %v5416
    %v5418 = vrcp.pop %v5365
    %v5419 = vmul.f32 %v5299, %v5418
    %v5420 = vrcp.pop %v5379
    %v5421 = vmul.f32 %v5301, %v5420
    %v5422 = vrcp.pop %v5380
    %v5423 = vmul.f32 %v5303, %v5422
    %v5424 = vrcp.pop %v5381
    %v5425 = vmul.f32 %v5305, %v5424
    %v5426 = vrcp.pop %v5382
    %v5427 = vmul.f32 %v5307, %v5426
    %v5428 = vrcp.pop %v5383
    %v5429 = vmul.f32 %v5309, %v5428
    %v5430 = vrcp.pop %v5384
    %v5431 = vmul.f32 %v5311, %v5430
    %v5432 = vrcp.pop %v5385
    %v5433 = vmul.f32 %v5313, %v5432
    %v5434 = vlaneseq
    %v5435 = vshrl.u32 %v5434, 7
    %v5436 = vsub.s32 1, %v5435
    %v5437 = vrot.slane %v5403, %v5436
    %5439 = vbcast.lane.b32.xlu0 %v5437, 256
    %v5440 = vpop.permute.xlu0 %5439
    %v5441 = vlaneseq
    %v5442 = vshrl.u32 %v5441, 7
    %v5443 = vsub.s32 1, %v5442
    %v5444 = vrot.slane %v5405, %v5443
    %5446 = vbcast.lane.b32.xlu0 %v5444, 256
    %v5447 = vpop.permute.xlu0 %5446
    %v5448 = vlaneseq
    %v5449 = vshrl.u32 %v5448, 7
    %v5450 = vsub.s32 1, %v5449
    %v5451 = vrot.slane %v5407, %v5450
    %5453 = vbcast.lane.b32.xlu0 %v5451, 256
    %v5454 = vpop.permute.xlu0 %5453
    %v5455 = vlaneseq
    %v5456 = vshrl.u32 %v5455, 7
    %v5457 = vsub.s32 1, %v5456
    %v5458 = vrot.slane %v5409, %v5457
    %5460 = vbcast.lane.b32.xlu0 %v5458, 256
    %v5461 = vpop.permute.xlu0 %5460
    %v5462 = vlaneseq
    %v5463 = vshrl.u32 %v5462, 7
    %v5464 = vsub.s32 1, %v5463
    %v5465 = vrot.slane %v5411, %v5464
    %5467 = vbcast.lane.b32.xlu0 %v5465, 256
    %v5468 = vpop.permute.xlu0 %5467
    %v5469 = vlaneseq
    %v5470 = vshrl.u32 %v5469, 7
    %v5471 = vsub.s32 1, %v5470
    %v5472 = vrot.slane %v5413, %v5471
    %5474 = vbcast.lane.b32.xlu0 %v5472, 256
    %v5475 = vpop.permute.xlu0 %5474
    %v5476 = vlaneseq
    %v5477 = vshrl.u32 %v5476, 7
    %v5478 = vsub.s32 1, %v5477
    %v5479 = vrot.slane %v5415, %v5478
    %5481 = vbcast.lane.b32.xlu0 %v5479, 256
    %v5482 = vpop.permute.xlu0 %5481
    %v5483 = vlaneseq
    %v5484 = vshrl.u32 %v5483, 7
    %v5485 = vsub.s32 1, %v5484
    %v5486 = vrot.slane %v5417, %v5485
    %5488 = vbcast.lane.b32.xlu0 %v5486, 256
    %v5489 = vpop.permute.xlu0 %5488
    %v5490 = vlaneseq
    %v5491 = vshrl.u32 %v5490, 7
    %v5492 = vsub.s32 1, %v5491
    %v5493 = vrot.slane %v5419, %v5492
    %5495 = vbcast.lane.b32.xlu0 %v5493, 256
    %v5496 = vpop.permute.xlu0 %5495
    %v5497 = vlaneseq
    %v5498 = vshrl.u32 %v5497, 7
    %v5499 = vsub.s32 1, %v5498
    %v5500 = vrot.slane %v5421, %v5499
    %5502 = vbcast.lane.b32.xlu0 %v5500, 256
    %v5503 = vpop.permute.xlu0 %5502
    %v5504 = vlaneseq
    %v5505 = vshrl.u32 %v5504, 7
    %v5506 = vsub.s32 1, %v5505
    %v5507 = vrot.slane %v5423, %v5506
    %5509 = vbcast.lane.b32.xlu0 %v5507, 256
    %v5510 = vpop.permute.xlu0 %5509
    %v5511 = vlaneseq
    %v5512 = vshrl.u32 %v5511, 7
    %v5513 = vsub.s32 1, %v5512
    %v5514 = vrot.slane %v5425, %v5513
    %5516 = vbcast.lane.b32.xlu0 %v5514, 256
    %v5517 = vpop.permute.xlu0 %5516
    %v5518 = vlaneseq
    %v5519 = vshrl.u32 %v5518, 7
    %v5520 = vsub.s32 1, %v5519
    %v5521 = vrot.slane %v5427, %v5520
    %5523 = vbcast.lane.b32.xlu0 %v5521, 256
    %v5524 = vpop.permute.xlu0 %5523
    %v5525 = vlaneseq
    %v5526 = vshrl.u32 %v5525, 7
    %v5527 = vsub.s32 1, %v5526
    %v5528 = vrot.slane %v5429, %v5527
    %5530 = vbcast.lane.b32.xlu0 %v5528, 256
    %v5531 = vpop.permute.xlu0 %5530
    %v5532 = vlaneseq
    %v5533 = vshrl.u32 %v5532, 7
    %v5534 = vsub.s32 1, %v5533
    %v5535 = vrot.slane %v5431, %v5534
    %5537 = vbcast.lane.b32.xlu0 %v5535, 256
    %v5538 = vpop.permute.xlu0 %5537
    %v5539 = vlaneseq
    %v5540 = vshrl.u32 %v5539, 7
    %v5541 = vsub.s32 1, %v5540
    %v5542 = vrot.slane %v5433, %v5541
    %5544 = vbcast.lane.b32.xlu0 %v5542, 256
    %v5545 = vpop.permute.xlu0 %5544
    %v5546 = vmul.f32 %v5440, %v3633
    %v5547 = vmul.f32 %v5447, %v3633
    %v5548 = vmul.f32 %v5454, %v3633
    %v5549 = vmul.f32 %v5461, %v3633
    %v5550 = vmul.f32 %v5468, %v3633
    %v5551 = vmul.f32 %v5475, %v3633
    %v5552 = vmul.f32 %v5482, %v3633
    %v5553 = vmul.f32 %v5489, %v3633
    %v5554 = vmul.f32 %v5496, %v3633
    %v5555 = vmul.f32 %v5503, %v3633
    %v5556 = vmul.f32 %v5510, %v3633
    %v5557 = vmul.f32 %v5517, %v3633
    %v5558 = vmul.f32 %v5524, %v3633
    %v5559 = vmul.f32 %v5531, %v3633
    %v5560 = vmul.f32 %v5538, %v3633
    %v5561 = vmul.f32 %v5545, %v3633
    %v5562 = vsel %vm3641, %v5546, 0.0
    %v5563 = vrot.slane %v5562, 4
    %v5564 = vadd.f32 %v5562, %v5563
    %v5565 = vrot.slane %v5564, 2
    %v5566 = vadd.f32 %v5564, %v5565
    %v5567 = vrot.slane %v5566, 1
    %v5568 = vadd.f32 %v5566, %v5567
    %v5569 = vsel %vm3641, %v5547, 0.0
    %v5570 = vrot.slane %v5569, 4
    %v5571 = vadd.f32 %v5569, %v5570
    %v5572 = vrot.slane %v5571, 2
    %v5573 = vadd.f32 %v5571, %v5572
    %v5574 = vrot.slane %v5573, 1
    %v5575 = vadd.f32 %v5573, %v5574
    %v5576 = vsel %vm3641, %v5548, 0.0
    %v5577 = vrot.slane %v5576, 4
    %v5578 = vadd.f32 %v5576, %v5577
    %v5579 = vrot.slane %v5578, 2
    %v5580 = vadd.f32 %v5578, %v5579
    %v5581 = vrot.slane %v5580, 1
    %v5582 = vadd.f32 %v5580, %v5581
    %v5583 = vsel %vm3641, %v5549, 0.0
    %v5584 = vrot.slane %v5583, 4
    %v5585 = vadd.f32 %v5583, %v5584
    %v5586 = vrot.slane %v5585, 2
    %v5587 = vadd.f32 %v5585, %v5586
    %v5588 = vrot.slane %v5587, 1
    %v5589 = vadd.f32 %v5587, %v5588
    %v5590 = vsel %vm3641, %v5550, 0.0
    %v5591 = vrot.slane %v5590, 4
    %v5592 = vadd.f32 %v5590, %v5591
    %v5593 = vrot.slane %v5592, 2
    %v5594 = vadd.f32 %v5592, %v5593
    %v5595 = vrot.slane %v5594, 1
    %v5596 = vadd.f32 %v5594, %v5595
    %v5597 = vsel %vm3641, %v5551, 0.0
    %v5598 = vrot.slane %v5597, 4
    %v5599 = vadd.f32 %v5597, %v5598
    %v5600 = vrot.slane %v5599, 2
    %v5601 = vadd.f32 %v5599, %v5600
    %v5602 = vrot.slane %v5601, 1
    %v5603 = vadd.f32 %v5601, %v5602
    %v5604 = vsel %vm3641, %v5552, 0.0
    %v5605 = vrot.slane %v5604, 4
    %v5606 = vadd.f32 %v5604, %v5605
    %v5607 = vrot.slane %v5606, 2
    %v5608 = vadd.f32 %v5606, %v5607
    %v5609 = vrot.slane %v5608, 1
    %v5610 = vadd.f32 %v5608, %v5609
    %v5611 = vsel %vm3641, %v5553, 0.0
    %v5612 = vrot.slane %v5611, 4
    %v5613 = vadd.f32 %v5611, %v5612
    %v5614 = vrot.slane %v5613, 2
    %v5615 = vadd.f32 %v5613, %v5614
    %v5616 = vrot.slane %v5615, 1
    %v5617 = vadd.f32 %v5615, %v5616
    %v5618 = vsel %vm3641, %v5554, 0.0
    %v5619 = vrot.slane %v5618, 4
    %v5620 = vadd.f32 %v5618, %v5619
    %v5621 = vrot.slane %v5620, 2
    %v5622 = vadd.f32 %v5620, %v5621
    %v5623 = vrot.slane %v5622, 1
    %v5624 = vadd.f32 %v5622, %v5623
    %v5625 = vsel %vm3641, %v5555, 0.0
    %v5626 = vrot.slane %v5625, 4
    %v5627 = vadd.f32 %v5625, %v5626
    %v5628 = vrot.slane %v5627, 2
    %v5629 = vadd.f32 %v5627, %v5628
    %v5630 = vrot.slane %v5629, 1
    %v5631 = vadd.f32 %v5629, %v5630
    %v5632 = vsel %vm3641, %v5556, 0.0
    %v5633 = vrot.slane %v5632, 4
    %v5634 = vadd.f32 %v5632, %v5633
    %v5635 = vrot.slane %v5634, 2
    %v5636 = vadd.f32 %v5634, %v5635
    %v5637 = vrot.slane %v5636, 1
    %v5638 = vadd.f32 %v5636, %v5637
    %v5639 = vsel %vm3641, %v5557, 0.0
    %v5640 = vrot.slane %v5639, 4
    %v5641 = vadd.f32 %v5639, %v5640
    %v5642 = vrot.slane %v5641, 2
    %v5643 = vadd.f32 %v5641, %v5642
    %v5644 = vrot.slane %v5643, 1
    %v5645 = vadd.f32 %v5643, %v5644
    %v5646 = vsel %vm3641, %v5558, 0.0
    %v5647 = vrot.slane %v5646, 4
    %v5648 = vadd.f32 %v5646, %v5647
    %v5649 = vrot.slane %v5648, 2
    %v5650 = vadd.f32 %v5648, %v5649
    %v5651 = vrot.slane %v5650, 1
    %v5652 = vadd.f32 %v5650, %v5651
    %v5653 = vsel %vm3641, %v5559, 0.0
    %v5654 = vrot.slane %v5653, 4
    %v5655 = vadd.f32 %v5653, %v5654
    %v5656 = vrot.slane %v5655, 2
    %v5657 = vadd.f32 %v5655, %v5656
    %v5658 = vrot.slane %v5657, 1
    %v5659 = vadd.f32 %v5657, %v5658
    %v5660 = vsel %vm3641, %v5560, 0.0
    %v5661 = vrot.slane %v5660, 4
    %v5662 = vadd.f32 %v5660, %v5661
    %v5663 = vrot.slane %v5662, 2
    %v5664 = vadd.f32 %v5662, %v5663
    %v5665 = vrot.slane %v5664, 1
    %v5666 = vadd.f32 %v5664, %v5665
    %v5667 = vsel %vm3641, %v5561, 0.0
    %v5668 = vrot.slane %v5667, 4
    %v5669 = vadd.f32 %v5667, %v5668
    %v5670 = vrot.slane %v5669, 2
    %v5671 = vadd.f32 %v5669, %v5670
    %v5672 = vrot.slane %v5671, 1
    %v5673 = vadd.f32 %v5671, %v5672
    %v5674 = vsub.f32 1.0, %v5568
    %v5675 = vsub.f32 1.0, %v5575
    %v5676 = vsub.f32 1.0, %v5582
    %v5677 = vsub.f32 1.0, %v5589
    %v5678 = vsub.f32 1.0, %v5596
    %v5679 = vsub.f32 1.0, %v5603
    %v5680 = vsub.f32 1.0, %v5610
    %v5681 = vsub.f32 1.0, %v5617
    %v5682 = vsub.f32 1.0, %v5624
    %v5683 = vsub.f32 1.0, %v5631
    %v5684 = vsub.f32 1.0, %v5638
    %v5685 = vsub.f32 1.0, %v5645
    %v5686 = vsub.f32 1.0, %v5652
    %v5687 = vsub.f32 1.0, %v5659
    %v5688 = vsub.f32 1.0, %v5666
    %v5689 = vsub.f32 1.0, %v5673
    %v5690 = vmul.f32 %v4856, %v5674
    %v5691 = vmul.f32 %v4857, %v5675
    %v5692 = vmul.f32 %v4858, %v5676
    %v5693 = vmul.f32 %v4859, %v5677
    %v5694 = vmul.f32 %v4860, %v5678
    %v5695 = vmul.f32 %v4861, %v5679
    %v5696 = vmul.f32 %v4862, %v5680
    %v5697 = vmul.f32 %v4863, %v5681
    %v5698 = vmul.f32 %v4864, %v5682
    %v5699 = vmul.f32 %v4865, %v5683
    %v5700 = vmul.f32 %v4866, %v5684
    %v5701 = vmul.f32 %v4867, %v5685
    %v5702 = vmul.f32 %v4868, %v5686
    %v5703 = vmul.f32 %v4869, %v5687
    %v5704 = vmul.f32 %v4870, %v5688
    %v5705 = vmul.f32 %v4871, %v5689
    %v5706 = vadd.f32 %v5568, %v5690
    %v5707 = vadd.f32 %v5575, %v5691
    %v5708 = vadd.f32 %v5582, %v5692
    %v5709 = vadd.f32 %v5589, %v5693
    %v5710 = vadd.f32 %v5596, %v5694
    %v5711 = vadd.f32 %v5603, %v5695
    %v5712 = vadd.f32 %v5610, %v5696
    %v5713 = vadd.f32 %v5617, %v5697
    %v5714 = vadd.f32 %v5624, %v5698
    %v5715 = vadd.f32 %v5631, %v5699
    %v5716 = vadd.f32 %v5638, %v5700
    %v5717 = vadd.f32 %v5645, %v5701
    %v5718 = vadd.f32 %v5652, %v5702
    %v5719 = vadd.f32 %v5659, %v5703
    %v5720 = vadd.f32 %v5666, %v5704
    %v5721 = vadd.f32 %v5673, %v5705
    %v5722 = vmul.f32 %v4856, %v5403
    %v5723 = vmul.f32 %v4857, %v5405
    %v5724 = vmul.f32 %v4858, %v5407
    %v5725 = vmul.f32 %v4859, %v5409
    %v5726 = vmul.f32 %v4860, %v5411
    %v5727 = vmul.f32 %v4861, %v5413
    %v5728 = vmul.f32 %v4862, %v5415
    %v5729 = vmul.f32 %v4863, %v5417
    %v5730 = vmul.f32 %v4864, %v5419
    %v5731 = vmul.f32 %v4865, %v5421
    %v5732 = vmul.f32 %v4866, %v5423
    %v5733 = vmul.f32 %v4867, %v5425
    %v5734 = vmul.f32 %v4868, %v5427
    %v5735 = vmul.f32 %v4869, %v5429
    %v5736 = vmul.f32 %v4870, %v5431
    %v5737 = vmul.f32 %v4871, %v5433
    %v5754 = vrot.slane %v5723, 7
    %v5755 = vsel %vm656, %v5754, %v5722
    %v5756 = vrot.slane %v5724, 6
    %v5757 = vsel %vm658, %v5756, %v5755
    %v5758 = vrot.slane %v5725, 5
    %v5759 = vsel %vm660, %v5758, %v5757
    %v5760 = vrot.slane %v5726, 4
    %v5761 = vsel %vm662, %v5760, %v5759
    %v5762 = vrot.slane %v5727, 3
    %v5763 = vsel %vm664, %v5762, %v5761
    %v5764 = vrot.slane %v5728, 2
    %v5765 = vsel %vm666, %v5764, %v5763
    %v5766 = vrot.slane %v5729, 1
    %v5767 = vsel %vm654, %v5730, %v5766
    %v5768 = vrot.slane %v5731, 7
    %v5769 = vsel %vm656, %v5768, %v5767
    %v5770 = vrot.slane %v5732, 6
    %v5771 = vsel %vm658, %v5770, %v5769
    %v5772 = vrot.slane %v5733, 5
    %v5773 = vsel %vm660, %v5772, %v5771
    %v5774 = vrot.slane %v5734, 4
    %v5775 = vsel %vm662, %v5774, %v5773
    %v5776 = vrot.slane %v5735, 3
    %v5777 = vsel %vm664, %v5776, %v5775
    %v5778 = vrot.slane %v5736, 2
    %v5779 = vsel %vm666, %v5778, %v5777
    %v5780 = vrot.slane %v5737, 1
    %v5784 = vsel %vm5222, %v5765, 0.0
    %5785 = vadd.xlane.f32.xlu0 %v5784
    %v5786 = vpop.xlane.xlu0 %5785
    %v5787 = vsel %vm3653, %v5779, 0.0
    %5788 = vadd.xlane.f32.xlu0 %v5787
    %v5789 = vpop.xlane.xlu0 %5788
    %v5790 = vsel %vm5229, %v5780, 0.0
    %5791 = vadd.xlane.f32.xlu0 %v5790
    %v5792 = vpop.xlane.xlu0 %5791
    %v5793 = vmul.f32 %v5706, %v5568
    %v5794 = vmul.f32 %v5707, %v5575
    %v5795 = vmul.f32 %v5708, %v5582
    %v5796 = vmul.f32 %v5709, %v5589
    %v5797 = vmul.f32 %v5710, %v5596
    %v5798 = vmul.f32 %v5711, %v5603
    %v5799 = vmul.f32 %v5712, %v5610
    %v5800 = vmul.f32 %v5713, %v5617
    %v5801 = vmul.f32 %v5714, %v5624
    %v5802 = vmul.f32 %v5715, %v5631
    %v5803 = vmul.f32 %v5716, %v5638
    %v5804 = vmul.f32 %v5717, %v5645
    %v5805 = vmul.f32 %v5718, %v5652
    %v5806 = vmul.f32 %v5719, %v5659
    %v5807 = vmul.f32 %v5720, %v5666
    %v5808 = vmul.f32 %v5721, %v5673
    %v5825 = vrot.slane %v5794, 7
    %v5826 = vsel %vm656, %v5825, %v5793
    %v5827 = vrot.slane %v5795, 6
    %v5828 = vsel %vm658, %v5827, %v5826
    %v5829 = vrot.slane %v5796, 5
    %v5830 = vsel %vm660, %v5829, %v5828
    %v5831 = vrot.slane %v5797, 4
    %v5832 = vsel %vm662, %v5831, %v5830
    %v5833 = vrot.slane %v5798, 3
    %v5834 = vsel %vm664, %v5833, %v5832
    %v5835 = vrot.slane %v5799, 2
    %v5836 = vsel %vm666, %v5835, %v5834
    %v5837 = vrot.slane %v5800, 1
    %v5838 = vsel %vm654, %v5801, %v5837
    %v5839 = vrot.slane %v5802, 7
    %v5840 = vsel %vm656, %v5839, %v5838
    %v5841 = vrot.slane %v5803, 6
    %v5842 = vsel %vm658, %v5841, %v5840
    %v5843 = vrot.slane %v5804, 5
    %v5844 = vsel %vm660, %v5843, %v5842
    %v5845 = vrot.slane %v5805, 4
    %v5846 = vsel %vm662, %v5845, %v5844
    %v5847 = vrot.slane %v5806, 3
    %v5848 = vsel %vm664, %v5847, %v5846
    %v5849 = vrot.slane %v5807, 2
    %v5850 = vsel %vm666, %v5849, %v5848
    %v5851 = vrot.slane %v5808, 1
    %v5855 = vsel %vm5222, %v5836, 0.0
    %5856 = vadd.xlane.f32.xlu0 %v5855
    %v5857 = vpop.xlane.xlu0 %5856
    %v5858 = vsel %vm3653, %v5850, 0.0
    %5859 = vadd.xlane.f32.xlu0 %v5858
    %v5860 = vpop.xlane.xlu0 %5859
    %v5861 = vsel %vm5229, %v5851, 0.0
    %5862 = vadd.xlane.f32.xlu0 %v5861
    %v5863 = vpop.xlane.xlu0 %5862
    %vm5866 = vcmask 1040384
    %v5867 = vrot.slane %v694, 7
    %v5868 = vrot.slane %v696, 7
    %v5869 = vsel %vm5866, %v5867, %v5868
    %v5873 = vmul.f32 %v5857, %v5867
    %v5874 = vmul.f32 %v5860, %v5869
    %v5875 = vmul.f32 %v5863, %v5868
    %s5876 = scalar_lea.vmem [#allocation8], 64
    %5877 = vst [vmem:[%s5876 - $0x1] sm:$0xfe] %v5873
    %5878 = vst [vmem:[%s5876 + $0x7] sm:$0xff] %v5874
    %5879 = vst [vmem:[%s5876 + $0xf] sm:$0x1] %v5875
    %v5880 = vmul.f32 %v5786, %v5867
    %v5881 = vmul.f32 %v5789, %v5869
    %v5882 = vmul.f32 %v5792, %v5868
    %s5883 = scalar_lea.vmem [#allocation8], 80
    %5884 = vst [vmem:[%s5883 - $0x1] sm:$0xfe] %v5880
    %5885 = vst [vmem:[%s5883 + $0x7] sm:$0xff] %v5881
    %5886 = vst [vmem:[%s5883 + $0xf] sm:$0x1] %v5882
    %v5903 = vrot.slane %v5706, 7
    %v5904 = vrot.slane %v5707, 7
    %v5905 = vrot.slane %v5708, 7
    %v5906 = vrot.slane %v5709, 7
    %v5907 = vrot.slane %v5710, 7
    %v5908 = vrot.slane %v5711, 7
    %v5909 = vrot.slane %v5712, 7
    %v5910 = vrot.slane %v5713, 7
    %v5911 = vrot.slane %v5714, 7
    %v5912 = vrot.slane %v5715, 7
    %v5913 = vrot.slane %v5716, 7
    %v5914 = vrot.slane %v5717, 7
    %v5915 = vrot.slane %v5718, 7
    %v5916 = vrot.slane %v5719, 7
    %v5917 = vrot.slane %v5720, 7
    %v5918 = vrot.slane %v5721, 7
    %v5935 = vmul.f32 %v3681, %v5903
    %v5936 = vmul.f32 %v3686, %v5904
    %v5937 = vmul.f32 %v3691, %v5905
    %v5938 = vmul.f32 %v3696, %v5906
    %v5939 = vmul.f32 %v3701, %v5907
    %v5940 = vmul.f32 %v3706, %v5908
    %v5941 = vmul.f32 %v3711, %v5909
    %v5942 = vmul.f32 %v3716, %v5910
    %v5943 = vmul.f32 %v3721, %v5911
    %v5944 = vmul.f32 %v3726, %v5912
    %v5945 = vmul.f32 %v3731, %v5913
    %v5946 = vmul.f32 %v3736, %v5914
    %v5947 = vmul.f32 %v3741, %v5915
    %v5948 = vmul.f32 %v3746, %v5916
    %v5949 = vmul.f32 %v3751, %v5917
    %v5950 = vmul.f32 %v3756, %v5918
    %v5967 = vrot.slane %v4856, 7
    %v5968 = vrot.slane %v4857, 7
    %v5969 = vrot.slane %v4858, 7
    %v5970 = vrot.slane %v4859, 7
    %v5971 = vrot.slane %v4860, 7
    %v5972 = vrot.slane %v4861, 7
    %v5973 = vrot.slane %v4862, 7
    %v5974 = vrot.slane %v4863, 7
    %v5975 = vrot.slane %v4864, 7
    %v5976 = vrot.slane %v4865, 7
    %v5977 = vrot.slane %v4866, 7
    %v5978 = vrot.slane %v4867, 7
    %v5979 = vrot.slane %v4868, 7
    %v5980 = vrot.slane %v4869, 7
    %v5981 = vrot.slane %v4870, 7
    %v5982 = vrot.slane %v4871, 7
    %v5999 = vmul.f32 %v3776, %v5967
    %v6000 = vmul.f32 %v3780, %v5968
    %v6001 = vmul.f32 %v3784, %v5969
    %v6002 = vmul.f32 %v3788, %v5970
    %v6003 = vmul.f32 %v3792, %v5971
    %v6004 = vmul.f32 %v3796, %v5972
    %v6005 = vmul.f32 %v3800, %v5973
    %v6006 = vmul.f32 %v3804, %v5974
    %v6007 = vmul.f32 %v3808, %v5975
    %v6008 = vmul.f32 %v3812, %v5976
    %v6009 = vmul.f32 %v3816, %v5977
    %v6010 = vmul.f32 %v3820, %v5978
    %v6011 = vmul.f32 %v3824, %v5979
    %v6012 = vmul.f32 %v3828, %v5980
    %v6013 = vmul.f32 %v3832, %v5981
    %v6014 = vmul.f32 %v3836, %v5982
    %v6015 = vadd.f32 %v5935, %v5999
    %v6016 = vadd.f32 %v5936, %v6000
    %v6017 = vadd.f32 %v5937, %v6001
    %v6018 = vadd.f32 %v5938, %v6002
    %v6019 = vadd.f32 %v5939, %v6003
    %v6020 = vadd.f32 %v5940, %v6004
    %v6021 = vadd.f32 %v5941, %v6005
    %v6022 = vadd.f32 %v5942, %v6006
    %v6023 = vadd.f32 %v5943, %v6007
    %v6024 = vadd.f32 %v5944, %v6008
    %v6025 = vadd.f32 %v5945, %v6009
    %v6026 = vadd.f32 %v5946, %v6010
    %v6027 = vadd.f32 %v5947, %v6011
    %v6028 = vadd.f32 %v5948, %v6012
    %v6029 = vadd.f32 %v5949, %v6013
    %v6030 = vadd.f32 %v5950, %v6014
    %v6047 = vrot.slane %v5048, 7
    %v6048 = vrot.slane %v5049, 7
    %v6049 = vrot.slane %v5050, 7
    %v6050 = vrot.slane %v5051, 7
    %v6051 = vrot.slane %v5052, 7
    %v6052 = vrot.slane %v5053, 7
    %v6053 = vrot.slane %v5054, 7
    %v6054 = vrot.slane %v5055, 7
    %v6055 = vrot.slane %v5056, 7
    %v6056 = vrot.slane %v5057, 7
    %v6057 = vrot.slane %v5058, 7
    %v6058 = vrot.slane %v5059, 7
    %v6059 = vrot.slane %v5060, 7
    %v6060 = vrot.slane %v5061, 7
    %v6061 = vrot.slane %v5062, 7
    %v6062 = vrot.slane %v5063, 7
    %v6079 = vmul.f32 %v3610, %v6047
    %v6080 = vmul.f32 %v3611, %v6048
    %v6081 = vmul.f32 %v3612, %v6049
    %v6082 = vmul.f32 %v3613, %v6050
    %v6083 = vmul.f32 %v3614, %v6051
    %v6084 = vmul.f32 %v3615, %v6052
    %v6085 = vmul.f32 %v3616, %v6053
    %v6086 = vmul.f32 %v3617, %v6054
    %v6087 = vmul.f32 %v3618, %v6055
    %v6088 = vmul.f32 %v3619, %v6056
    %v6089 = vmul.f32 %v3620, %v6057
    %v6090 = vmul.f32 %v3621, %v6058
    %v6091 = vmul.f32 %v3622, %v6059
    %v6092 = vmul.f32 %v3623, %v6060
    %v6093 = vmul.f32 %v3624, %v6061
    %v6094 = vmul.f32 %v3625, %v6062
    %v6098 = vrot.slane %v5786, 7
    %v6099 = vrot.slane %v5786, 1
    %v6100 = vrot.slane %v5786, 2
    %v6101 = vrot.slane %v5786, 3
    %v6102 = vrot.slane %v5786, 4
    %v6103 = vrot.slane %v5786, 5
    %v6104 = vrot.slane %v5789, 6
    %v6105 = vrot.slane %v5789, 7
    %v6106 = vrot.slane %v5789, 1
    %v6107 = vrot.slane %v5789, 2
    %v6108 = vrot.slane %v5789, 3
    %v6109 = vrot.slane %v5789, 4
    %v6110 = vrot.slane %v5789, 5
    %v6111 = vrot.slane %v5792, 6
    %v6128 = vmul.f32 %v3610, %v6098
    %v6129 = vmul.f32 %v3611, %v5786
    %v6130 = vmul.f32 %v3612, %v6099
    %v6131 = vmul.f32 %v3613, %v6100
    %v6132 = vmul.f32 %v3614, %v6101
    %v6133 = vmul.f32 %v3615, %v6102
    %v6134 = vmul.f32 %v3616, %v6103
    %v6135 = vmul.f32 %v3617, %v6104
    %v6136 = vmul.f32 %v3618, %v6105
    %v6137 = vmul.f32 %v3619, %v5789
    %v6138 = vmul.f32 %v3620, %v6106
    %v6139 = vmul.f32 %v3621, %v6107
    %v6140 = vmul.f32 %v3622, %v6108
    %v6141 = vmul.f32 %v3623, %v6109
    %v6142 = vmul.f32 %v3624, %v6110
    %v6143 = vmul.f32 %v3625, %v6111
    %6160 = vrot.lane.b32.xlu0 %v6128, 127
    %v6161 = vpop.permute.xlu0 %6160
    %6162 = vrot.lane.b32.xlu0 %v6129, 127
    %v6163 = vpop.permute.xlu0 %6162
    %6164 = vrot.lane.b32.xlu0 %v6130, 127
    %v6165 = vpop.permute.xlu0 %6164
    %6166 = vrot.lane.b32.xlu0 %v6131, 127
    %v6167 = vpop.permute.xlu0 %6166
    %6168 = vrot.lane.b32.xlu0 %v6132, 127
    %v6169 = vpop.permute.xlu0 %6168
    %6170 = vrot.lane.b32.xlu0 %v6133, 127
    %v6171 = vpop.permute.xlu0 %6170
    %6172 = vrot.lane.b32.xlu0 %v6134, 127
    %v6173 = vpop.permute.xlu0 %6172
    %6174 = vrot.lane.b32.xlu0 %v6135, 127
    %v6175 = vpop.permute.xlu0 %6174
    %6176 = vrot.lane.b32.xlu0 %v6136, 127
    %v6177 = vpop.permute.xlu0 %6176
    %6178 = vrot.lane.b32.xlu0 %v6137, 127
    %v6179 = vpop.permute.xlu0 %6178
    %6180 = vrot.lane.b32.xlu0 %v6138, 127
    %v6181 = vpop.permute.xlu0 %6180
    %6182 = vrot.lane.b32.xlu0 %v6139, 127
    %v6183 = vpop.permute.xlu0 %6182
    %6184 = vrot.lane.b32.xlu0 %v6140, 127
    %v6185 = vpop.permute.xlu0 %6184
    %6186 = vrot.lane.b32.xlu0 %v6141, 127
    %v6187 = vpop.permute.xlu0 %6186
    %6188 = vrot.lane.b32.xlu0 %v6142, 127
    %v6189 = vpop.permute.xlu0 %6188
    %6190 = vrot.lane.b32.xlu0 %v6143, 127
    %v6191 = vpop.permute.xlu0 %6190
    %v6208 = vadd.f32 %v6079, %v6161
    %v6209 = vadd.f32 %v6080, %v6163
    %v6210 = vadd.f32 %v6081, %v6165
    %v6211 = vadd.f32 %v6082, %v6167
    %v6212 = vadd.f32 %v6083, %v6169
    %v6213 = vadd.f32 %v6084, %v6171
    %v6214 = vadd.f32 %v6085, %v6173
    %v6215 = vadd.f32 %v6086, %v6175
    %v6216 = vadd.f32 %v6087, %v6177
    %v6217 = vadd.f32 %v6088, %v6179
    %v6218 = vadd.f32 %v6089, %v6181
    %v6219 = vadd.f32 %v6090, %v6183
    %v6220 = vadd.f32 %v6091, %v6185
    %v6221 = vadd.f32 %v6092, %v6187
    %v6222 = vadd.f32 %v6093, %v6189
    %v6223 = vadd.f32 %v6094, %v6191
    %v6224 = vmul.f32 %v3681, %v5568
    %v6225 = vmul.f32 %v3686, %v5575
    %v6226 = vmul.f32 %v3691, %v5582
    %v6227 = vmul.f32 %v3696, %v5589
    %v6228 = vmul.f32 %v3701, %v5596
    %v6229 = vmul.f32 %v3706, %v5603
    %v6230 = vmul.f32 %v3711, %v5610
    %v6231 = vmul.f32 %v3716, %v5617
    %v6232 = vmul.f32 %v3721, %v5624
    %v6233 = vmul.f32 %v3726, %v5631
    %v6234 = vmul.f32 %v3731, %v5638
    %v6235 = vmul.f32 %v3736, %v5645
    %v6236 = vmul.f32 %v3741, %v5652
    %v6237 = vmul.f32 %v3746, %v5659
    %v6238 = vmul.f32 %v3751, %v5666
    %v6239 = vmul.f32 %v3756, %v5673
    %v6256 = vrot.slane %v5403, 7
    %v6257 = vrot.slane %v5405, 7
    %v6258 = vrot.slane %v5407, 7
    %v6259 = vrot.slane %v5409, 7
    %v6260 = vrot.slane %v5411, 7
    %v6261 = vrot.slane %v5413, 7
    %v6262 = vrot.slane %v5415, 7
    %v6263 = vrot.slane %v5417, 7
    %v6264 = vrot.slane %v5419, 7
    %v6265 = vrot.slane %v5421, 7
    %v6266 = vrot.slane %v5423, 7
    %v6267 = vrot.slane %v5425, 7
    %v6268 = vrot.slane %v5427, 7
    %v6269 = vrot.slane %v5429, 7
    %v6270 = vrot.slane %v5431, 7
    %v6271 = vrot.slane %v5433, 7
    %v6288 = vmul.f32 %v3776, %v6256
    %v6289 = vmul.f32 %v3780, %v6257
    %v6290 = vmul.f32 %v3784, %v6258
    %v6291 = vmul.f32 %v3788, %v6259
    %v6292 = vmul.f32 %v3792, %v6260
    %v6293 = vmul.f32 %v3796, %v6261
    %v6294 = vmul.f32 %v3800, %v6262
    %v6295 = vmul.f32 %v3804, %v6263
    %v6296 = vmul.f32 %v3808, %v6264
    %v6297 = vmul.f32 %v3812, %v6265
    %v6298 = vmul.f32 %v3816, %v6266
    %v6299 = vmul.f32 %v3820, %v6267
    %v6300 = vmul.f32 %v3824, %v6268
    %v6301 = vmul.f32 %v3828, %v6269
    %v6302 = vmul.f32 %v3832, %v6270
    %v6303 = vmul.f32 %v3836, %v6271
    %v6304 = vadd.f32 %v6224, %v6288
    %v6305 = vadd.f32 %v6225, %v6289
    %v6306 = vadd.f32 %v6226, %v6290
    %v6307 = vadd.f32 %v6227, %v6291
    %v6308 = vadd.f32 %v6228, %v6292
    %v6309 = vadd.f32 %v6229, %v6293
    %v6310 = vadd.f32 %v6230, %v6294
    %v6311 = vadd.f32 %v6231, %v6295
    %v6312 = vadd.f32 %v6232, %v6296
    %v6313 = vadd.f32 %v6233, %v6297
    %v6314 = vadd.f32 %v6234, %v6298
    %v6315 = vadd.f32 %v6235, %v6299
    %v6316 = vadd.f32 %v6236, %v6300
    %v6317 = vadd.f32 %v6237, %v6301
    %v6318 = vadd.f32 %v6238, %v6302
    %v6319 = vadd.f32 %v6239, %v6303
    %v6320 = vmul.f32 %v6304, 10.0
    %v6321 = vmul.f32 %v6305, 10.0
    %v6322 = vmul.f32 %v6306, 10.0
    %v6323 = vmul.f32 %v6307, 10.0
    %v6324 = vmul.f32 %v6308, 10.0
    %v6325 = vmul.f32 %v6309, 10.0
    %v6326 = vmul.f32 %v6310, 10.0
    %v6327 = vmul.f32 %v6311, 10.0
    %v6328 = vmul.f32 %v6312, 10.0
    %v6329 = vmul.f32 %v6313, 10.0
    %v6330 = vmul.f32 %v6314, 10.0
    %v6331 = vmul.f32 %v6315, 10.0
    %v6332 = vmul.f32 %v6316, 10.0
    %v6333 = vmul.f32 %v6317, 10.0
    %v6334 = vmul.f32 %v6318, 10.0
    %v6335 = vmul.f32 %v6319, 10.0
    %v6352 = vrot.slane %v6321, 7
    %v6353 = vsel %vm658, %v6352, %v6320
    %v6354 = vrot.slane %v6322, 6
    %v6355 = vsel %vm660, %v6354, %v6353
    %v6356 = vrot.slane %v6323, 5
    %v6357 = vsel %vm662, %v6356, %v6355
    %v6358 = vrot.slane %v6324, 4
    %v6359 = vsel %vm664, %v6358, %v6357
    %v6360 = vrot.slane %v6325, 3
    %v6361 = vsel %vm666, %v6360, %v6359
    %v6362 = vrot.slane %v6326, 2
    %v6363 = vrot.slane %v6327, 1
    %v6364 = vsel %vm654, %v6363, %v6362
    %v6365 = vsel %vm656, %v6328, %v6364
    %v6366 = vrot.slane %v6329, 7
    %v6367 = vsel %vm658, %v6366, %v6365
    %v6368 = vrot.slane %v6330, 6
    %v6369 = vsel %vm660, %v6368, %v6367
    %v6370 = vrot.slane %v6331, 5
    %v6371 = vsel %vm662, %v6370, %v6369
    %v6372 = vrot.slane %v6332, 4
    %v6373 = vsel %vm664, %v6372, %v6371
    %v6374 = vrot.slane %v6333, 3
    %v6375 = vsel %vm666, %v6374, %v6373
    %v6376 = vrot.slane %v6334, 2
    %v6377 = vrot.slane %v6335, 1
    %v6378 = vsel %vm654, %v6377, %v6376
    %vm6382 = vcmask 31746
    %v6383 = vsel %vm6382, %v6361, -inf
    %6384 = vmax.xlane.f32.xlu0 %v6383
    %v6385 = vpop.xlane.xlu0 %6384
    %v6386 = vsel %vm3653, %v6375, -inf
    %6387 = vmax.xlane.f32.xlu0 %v6386
    %v6388 = vpop.xlane.xlu0 %6387
    %vm6389 = vcmask 25600
    %v6390 = vsel %vm6389, %v6378, -inf
    %6391 = vmax.xlane.f32.xlu0 %v6390
    %v6392 = vpop.xlane.xlu0 %6391
    %v6396 = vrot.slane %v6385, 1
    %v6397 = vrot.slane %v6385, 2
    %v6398 = vrot.slane %v6385, 3
    %v6399 = vrot.slane %v6385, 4
    %v6400 = vrot.slane %v6385, 5
    %v6401 = vrot.slane %v6388, 6
    %v6402 = vrot.slane %v6388, 7
    %v6403 = vrot.slane %v6388, 1
    %v6404 = vrot.slane %v6388, 2
    %v6405 = vrot.slane %v6388, 3
    %v6406 = vrot.slane %v6388, 4
    %v6407 = vrot.slane %v6388, 5
    %v6408 = vrot.slane %v6392, 6
    %v6409 = vrot.slane %v6392, 7
    %v6426 = vsub.f32 %v6320, %v6385
    %v6427 = vsub.f32 %v6321, %v6396
    %v6428 = vsub.f32 %v6322, %v6397
    %v6429 = vsub.f32 %v6323, %v6398
    %v6430 = vsub.f32 %v6324, %v6399
    %v6431 = vsub.f32 %v6325, %v6400
    %v6432 = vsub.f32 %v6326, %v6401
    %v6433 = vsub.f32 %v6327, %v6402
    %v6434 = vsub.f32 %v6328, %v6388
    %v6435 = vsub.f32 %v6329, %v6403
    %v6436 = vsub.f32 %v6330, %v6404
    %v6437 = vsub.f32 %v6331, %v6405
    %v6438 = vsub.f32 %v6332, %v6406
    %v6439 = vsub.f32 %v6333, %v6407
    %v6440 = vsub.f32 %v6334, %v6408
    %v6441 = vsub.f32 %v6335, %v6409
    %v6442 = vmul.f32 %v6426, 1.442695
    %v6443 = vpow.pop %v6442
    %v6444 = vmul.f32 %v6427, 1.442695
    %v6445 = vpow.pop %v6444
    %v6446 = vmul.f32 %v6428, 1.442695
    %v6447 = vpow.pop %v6446
    %v6448 = vmul.f32 %v6429, 1.442695
    %v6449 = vpow.pop %v6448
    %v6450 = vmul.f32 %v6430, 1.442695
    %v6451 = vpow.pop %v6450
    %v6452 = vmul.f32 %v6431, 1.442695
    %v6453 = vpow.pop %v6452
    %v6454 = vmul.f32 %v6432, 1.442695
    %v6455 = vpow.pop %v6454
    %v6456 = vmul.f32 %v6433, 1.442695
    %v6457 = vpow.pop %v6456
    %v6458 = vmul.f32 %v6434, 1.442695
    %v6459 = vpow.pop %v6458
    %v6460 = vmul.f32 %v6435, 1.442695
    %v6461 = vpow.pop %v6460
    %v6462 = vmul.f32 %v6436, 1.442695
    %v6463 = vpow.pop %v6462
    %v6464 = vmul.f32 %v6437, 1.442695
    %v6465 = vpow.pop %v6464
    %v6466 = vmul.f32 %v6438, 1.442695
    %v6467 = vpow.pop %v6466
    %v6468 = vmul.f32 %v6439, 1.442695
    %v6469 = vpow.pop %v6468
    %v6470 = vmul.f32 %v6440, 1.442695
    %v6471 = vpow.pop %v6470
    %v6472 = vmul.f32 %v6441, 1.442695
    %v6473 = vpow.pop %v6472
    %v6490 = vrot.slane %v6445, 7
    %v6491 = vsel %vm658, %v6490, %v6443
    %v6492 = vrot.slane %v6447, 6
    %v6493 = vsel %vm660, %v6492, %v6491
    %v6494 = vrot.slane %v6449, 5
    %v6495 = vsel %vm662, %v6494, %v6493
    %v6496 = vrot.slane %v6451, 4
    %v6497 = vsel %vm664, %v6496, %v6495
    %v6498 = vrot.slane %v6453, 3
    %v6499 = vsel %vm666, %v6498, %v6497
    %v6500 = vrot.slane %v6455, 2
    %v6501 = vrot.slane %v6457, 1
    %v6502 = vsel %vm654, %v6501, %v6500
    %v6503 = vsel %vm656, %v6459, %v6502
    %v6504 = vrot.slane %v6461, 7
    %v6505 = vsel %vm658, %v6504, %v6503
    %v6506 = vrot.slane %v6463, 6
    %v6507 = vsel %vm660, %v6506, %v6505
    %v6508 = vrot.slane %v6465, 5
    %v6509 = vsel %vm662, %v6508, %v6507
    %v6510 = vrot.slane %v6467, 4
    %v6511 = vsel %vm664, %v6510, %v6509
    %v6512 = vrot.slane %v6469, 3
    %v6513 = vsel %vm666, %v6512, %v6511
    %v6514 = vrot.slane %v6471, 2
    %v6515 = vrot.slane %v6473, 1
    %v6516 = vsel %vm654, %v6515, %v6514
    %v6520 = vsel %vm6382, %v6499, 0.0
    %6521 = vadd.xlane.f32.xlu0 %v6520
    %v6522 = vpop.xlane.xlu0 %6521
    %v6523 = vsel %vm3653, %v6513, 0.0
    %6524 = vadd.xlane.f32.xlu0 %v6523
    %v6525 = vpop.xlane.xlu0 %6524
    %v6526 = vsel %vm6389, %v6516, 0.0
    %6527 = vadd.xlane.f32.xlu0 %v6526
    %v6528 = vpop.xlane.xlu0 %6527
    %v6532 = vrot.slane %v6522, 1
    %v6533 = vrot.slane %v6522, 2
    %v6534 = vrot.slane %v6522, 3
    %v6535 = vrot.slane %v6522, 4
    %v6536 = vrot.slane %v6522, 5
    %v6537 = vrot.slane %v6525, 6
    %v6538 = vrot.slane %v6525, 7
    %v6539 = vrot.slane %v6525, 1
    %v6540 = vrot.slane %v6525, 2
    %v6541 = vrot.slane %v6525, 3
    %v6542 = vrot.slane %v6525, 4
    %v6543 = vrot.slane %v6525, 5
    %v6544 = vrot.slane %v6528, 6
    %v6545 = vrot.slane %v6528, 7
    %v6562 = vrcp.pop %v6522
    %v6563 = vmul.f32 %v6443, %v6562
    %v6564 = vrcp.pop %v6532
    %v6565 = vmul.f32 %v6445, %v6564
    %v6566 = vrcp.pop %v6533
    %v6567 = vmul.f32 %v6447, %v6566
    %v6568 = vrcp.pop %v6534
    %v6569 = vmul.f32 %v6449, %v6568
    %v6570 = vrcp.pop %v6535
    %v6571 = vmul.f32 %v6451, %v6570
    %v6572 = vrcp.pop %v6536
    %v6573 = vmul.f32 %v6453, %v6572
    %v6574 = vrcp.pop %v6537
    %v6575 = vmul.f32 %v6455, %v6574
    %v6576 = vrcp.pop %v6538
    %v6577 = vmul.f32 %v6457, %v6576
    %v6578 = vrcp.pop %v6525
    %v6579 = vmul.f32 %v6459, %v6578
    %v6580 = vrcp.pop %v6539
    %v6581 = vmul.f32 %v6461, %v6580
    %v6582 = vrcp.pop %v6540
    %v6583 = vmul.f32 %v6463, %v6582
    %v6584 = vrcp.pop %v6541
    %v6585 = vmul.f32 %v6465, %v6584
    %v6586 = vrcp.pop %v6542
    %v6587 = vmul.f32 %v6467, %v6586
    %v6588 = vrcp.pop %v6543
    %v6589 = vmul.f32 %v6469, %v6588
    %v6590 = vrcp.pop %v6544
    %v6591 = vmul.f32 %v6471, %v6590
    %v6592 = vrcp.pop %v6545
    %v6593 = vmul.f32 %v6473, %v6592
    %v6594 = vlaneseq
    %v6595 = vshrl.u32 %v6594, 7
    %v6596 = vsub.s32 2, %v6595
    %v6597 = vrot.slane %v6563, %v6596
    %6599 = vbcast.lane.b32.xlu0 %v6597, 256
    %v6600 = vpop.permute.xlu0 %6599
    %v6601 = vlaneseq
    %v6602 = vshrl.u32 %v6601, 7
    %v6603 = vsub.s32 2, %v6602
    %v6604 = vrot.slane %v6565, %v6603
    %6606 = vbcast.lane.b32.xlu0 %v6604, 256
    %v6607 = vpop.permute.xlu0 %6606
    %v6608 = vlaneseq
    %v6609 = vshrl.u32 %v6608, 7
    %v6610 = vsub.s32 2, %v6609
    %v6611 = vrot.slane %v6567, %v6610
    %6613 = vbcast.lane.b32.xlu0 %v6611, 256
    %v6614 = vpop.permute.xlu0 %6613
    %v6615 = vlaneseq
    %v6616 = vshrl.u32 %v6615, 7
    %v6617 = vsub.s32 2, %v6616
    %v6618 = vrot.slane %v6569, %v6617
    %6620 = vbcast.lane.b32.xlu0 %v6618, 256
    %v6621 = vpop.permute.xlu0 %6620
    %v6622 = vlaneseq
    %v6623 = vshrl.u32 %v6622, 7
    %v6624 = vsub.s32 2, %v6623
    %v6625 = vrot.slane %v6571, %v6624
    %6627 = vbcast.lane.b32.xlu0 %v6625, 256
    %v6628 = vpop.permute.xlu0 %6627
    %v6629 = vlaneseq
    %v6630 = vshrl.u32 %v6629, 7
    %v6631 = vsub.s32 2, %v6630
    %v6632 = vrot.slane %v6573, %v6631
    %6634 = vbcast.lane.b32.xlu0 %v6632, 256
    %v6635 = vpop.permute.xlu0 %6634
    %v6636 = vlaneseq
    %v6637 = vshrl.u32 %v6636, 7
    %v6638 = vsub.s32 2, %v6637
    %v6639 = vrot.slane %v6575, %v6638
    %6641 = vbcast.lane.b32.xlu0 %v6639, 256
    %v6642 = vpop.permute.xlu0 %6641
    %v6643 = vlaneseq
    %v6644 = vshrl.u32 %v6643, 7
    %v6645 = vsub.s32 2, %v6644
    %v6646 = vrot.slane %v6577, %v6645
    %6648 = vbcast.lane.b32.xlu0 %v6646, 256
    %v6649 = vpop.permute.xlu0 %6648
    %v6650 = vlaneseq
    %v6651 = vshrl.u32 %v6650, 7
    %v6652 = vsub.s32 2, %v6651
    %v6653 = vrot.slane %v6579, %v6652
    %6655 = vbcast.lane.b32.xlu0 %v6653, 256
    %v6656 = vpop.permute.xlu0 %6655
    %v6657 = vlaneseq
    %v6658 = vshrl.u32 %v6657, 7
    %v6659 = vsub.s32 2, %v6658
    %v6660 = vrot.slane %v6581, %v6659
    %6662 = vbcast.lane.b32.xlu0 %v6660, 256
    %v6663 = vpop.permute.xlu0 %6662
    %v6664 = vlaneseq
    %v6665 = vshrl.u32 %v6664, 7
    %v6666 = vsub.s32 2, %v6665
    %v6667 = vrot.slane %v6583, %v6666
    %6669 = vbcast.lane.b32.xlu0 %v6667, 256
    %v6670 = vpop.permute.xlu0 %6669
    %v6671 = vlaneseq
    %v6672 = vshrl.u32 %v6671, 7
    %v6673 = vsub.s32 2, %v6672
    %v6674 = vrot.slane %v6585, %v6673
    %6676 = vbcast.lane.b32.xlu0 %v6674, 256
    %v6677 = vpop.permute.xlu0 %6676
    %v6678 = vlaneseq
    %v6679 = vshrl.u32 %v6678, 7
    %v6680 = vsub.s32 2, %v6679
    %v6681 = vrot.slane %v6587, %v6680
    %6683 = vbcast.lane.b32.xlu0 %v6681, 256
    %v6684 = vpop.permute.xlu0 %6683
    %v6685 = vlaneseq
    %v6686 = vshrl.u32 %v6685, 7
    %v6687 = vsub.s32 2, %v6686
    %v6688 = vrot.slane %v6589, %v6687
    %6690 = vbcast.lane.b32.xlu0 %v6688, 256
    %v6691 = vpop.permute.xlu0 %6690
    %v6692 = vlaneseq
    %v6693 = vshrl.u32 %v6692, 7
    %v6694 = vsub.s32 2, %v6693
    %v6695 = vrot.slane %v6591, %v6694
    %6697 = vbcast.lane.b32.xlu0 %v6695, 256
    %v6698 = vpop.permute.xlu0 %6697
    %v6699 = vlaneseq
    %v6700 = vshrl.u32 %v6699, 7
    %v6701 = vsub.s32 2, %v6700
    %v6702 = vrot.slane %v6593, %v6701
    %6704 = vbcast.lane.b32.xlu0 %v6702, 256
    %v6705 = vpop.permute.xlu0 %6704
    %v6706 = vmul.f32 %v6600, %v3633
    %v6707 = vmul.f32 %v6607, %v3633
    %v6708 = vmul.f32 %v6614, %v3633
    %v6709 = vmul.f32 %v6621, %v3633
    %v6710 = vmul.f32 %v6628, %v3633
    %v6711 = vmul.f32 %v6635, %v3633
    %v6712 = vmul.f32 %v6642, %v3633
    %v6713 = vmul.f32 %v6649, %v3633
    %v6714 = vmul.f32 %v6656, %v3633
    %v6715 = vmul.f32 %v6663, %v3633
    %v6716 = vmul.f32 %v6670, %v3633
    %v6717 = vmul.f32 %v6677, %v3633
    %v6718 = vmul.f32 %v6684, %v3633
    %v6719 = vmul.f32 %v6691, %v3633
    %v6720 = vmul.f32 %v6698, %v3633
    %v6721 = vmul.f32 %v6705, %v3633
    %v6722 = vsel %vm3641, %v6706, 0.0
    %v6723 = vrot.slane %v6722, 4
    %v6724 = vadd.f32 %v6722, %v6723
    %v6725 = vrot.slane %v6724, 2
    %v6726 = vadd.f32 %v6724, %v6725
    %v6727 = vrot.slane %v6726, 1
    %v6728 = vadd.f32 %v6726, %v6727
    %v6729 = vsel %vm3641, %v6707, 0.0
    %v6730 = vrot.slane %v6729, 4
    %v6731 = vadd.f32 %v6729, %v6730
    %v6732 = vrot.slane %v6731, 2
    %v6733 = vadd.f32 %v6731, %v6732
    %v6734 = vrot.slane %v6733, 1
    %v6735 = vadd.f32 %v6733, %v6734
    %v6736 = vsel %vm3641, %v6708, 0.0
    %v6737 = vrot.slane %v6736, 4
    %v6738 = vadd.f32 %v6736, %v6737
    %v6739 = vrot.slane %v6738, 2
    %v6740 = vadd.f32 %v6738, %v6739
    %v6741 = vrot.slane %v6740, 1
    %v6742 = vadd.f32 %v6740, %v6741
    %v6743 = vsel %vm3641, %v6709, 0.0
    %v6744 = vrot.slane %v6743, 4
    %v6745 = vadd.f32 %v6743, %v6744
    %v6746 = vrot.slane %v6745, 2
    %v6747 = vadd.f32 %v6745, %v6746
    %v6748 = vrot.slane %v6747, 1
    %v6749 = vadd.f32 %v6747, %v6748
    %v6750 = vsel %vm3641, %v6710, 0.0
    %v6751 = vrot.slane %v6750, 4
    %v6752 = vadd.f32 %v6750, %v6751
    %v6753 = vrot.slane %v6752, 2
    %v6754 = vadd.f32 %v6752, %v6753
    %v6755 = vrot.slane %v6754, 1
    %v6756 = vadd.f32 %v6754, %v6755
    %v6757 = vsel %vm3641, %v6711, 0.0
    %v6758 = vrot.slane %v6757, 4
    %v6759 = vadd.f32 %v6757, %v6758
    %v6760 = vrot.slane %v6759, 2
    %v6761 = vadd.f32 %v6759, %v6760
    %v6762 = vrot.slane %v6761, 1
    %v6763 = vadd.f32 %v6761, %v6762
    %v6764 = vsel %vm3641, %v6712, 0.0
    %v6765 = vrot.slane %v6764, 4
    %v6766 = vadd.f32 %v6764, %v6765
    %v6767 = vrot.slane %v6766, 2
    %v6768 = vadd.f32 %v6766, %v6767
    %v6769 = vrot.slane %v6768, 1
    %v6770 = vadd.f32 %v6768, %v6769
    %v6771 = vsel %vm3641, %v6713, 0.0
    %v6772 = vrot.slane %v6771, 4
    %v6773 = vadd.f32 %v6771, %v6772
    %v6774 = vrot.slane %v6773, 2
    %v6775 = vadd.f32 %v6773, %v6774
    %v6776 = vrot.slane %v6775, 1
    %v6777 = vadd.f32 %v6775, %v6776
    %v6778 = vsel %vm3641, %v6714, 0.0
    %v6779 = vrot.slane %v6778, 4
    %v6780 = vadd.f32 %v6778, %v6779
    %v6781 = vrot.slane %v6780, 2
    %v6782 = vadd.f32 %v6780, %v6781
    %v6783 = vrot.slane %v6782, 1
    %v6784 = vadd.f32 %v6782, %v6783
    %v6785 = vsel %vm3641, %v6715, 0.0
    %v6786 = vrot.slane %v6785, 4
    %v6787 = vadd.f32 %v6785, %v6786
    %v6788 = vrot.slane %v6787, 2
    %v6789 = vadd.f32 %v6787, %v6788
    %v6790 = vrot.slane %v6789, 1
    %v6791 = vadd.f32 %v6789, %v6790
    %v6792 = vsel %vm3641, %v6716, 0.0
    %v6793 = vrot.slane %v6792, 4
    %v6794 = vadd.f32 %v6792, %v6793
    %v6795 = vrot.slane %v6794, 2
    %v6796 = vadd.f32 %v6794, %v6795
    %v6797 = vrot.slane %v6796, 1
    %v6798 = vadd.f32 %v6796, %v6797
    %v6799 = vsel %vm3641, %v6717, 0.0
    %v6800 = vrot.slane %v6799, 4
    %v6801 = vadd.f32 %v6799, %v6800
    %v6802 = vrot.slane %v6801, 2
    %v6803 = vadd.f32 %v6801, %v6802
    %v6804 = vrot.slane %v6803, 1
    %v6805 = vadd.f32 %v6803, %v6804
    %v6806 = vsel %vm3641, %v6718, 0.0
    %v6807 = vrot.slane %v6806, 4
    %v6808 = vadd.f32 %v6806, %v6807
    %v6809 = vrot.slane %v6808, 2
    %v6810 = vadd.f32 %v6808, %v6809
    %v6811 = vrot.slane %v6810, 1
    %v6812 = vadd.f32 %v6810, %v6811
    %v6813 = vsel %vm3641, %v6719, 0.0
    %v6814 = vrot.slane %v6813, 4
    %v6815 = vadd.f32 %v6813, %v6814
    %v6816 = vrot.slane %v6815, 2
    %v6817 = vadd.f32 %v6815, %v6816
    %v6818 = vrot.slane %v6817, 1
    %v6819 = vadd.f32 %v6817, %v6818
    %v6820 = vsel %vm3641, %v6720, 0.0
    %v6821 = vrot.slane %v6820, 4
    %v6822 = vadd.f32 %v6820, %v6821
    %v6823 = vrot.slane %v6822, 2
    %v6824 = vadd.f32 %v6822, %v6823
    %v6825 = vrot.slane %v6824, 1
    %v6826 = vadd.f32 %v6824, %v6825
    %v6827 = vsel %vm3641, %v6721, 0.0
    %v6828 = vrot.slane %v6827, 4
    %v6829 = vadd.f32 %v6827, %v6828
    %v6830 = vrot.slane %v6829, 2
    %v6831 = vadd.f32 %v6829, %v6830
    %v6832 = vrot.slane %v6831, 1
    %v6833 = vadd.f32 %v6831, %v6832
    %v6834 = vsub.f32 1.0, %v6728
    %v6835 = vsub.f32 1.0, %v6735
    %v6836 = vsub.f32 1.0, %v6742
    %v6837 = vsub.f32 1.0, %v6749
    %v6838 = vsub.f32 1.0, %v6756
    %v6839 = vsub.f32 1.0, %v6763
    %v6840 = vsub.f32 1.0, %v6770
    %v6841 = vsub.f32 1.0, %v6777
    %v6842 = vsub.f32 1.0, %v6784
    %v6843 = vsub.f32 1.0, %v6791
    %v6844 = vsub.f32 1.0, %v6798
    %v6845 = vsub.f32 1.0, %v6805
    %v6846 = vsub.f32 1.0, %v6812
    %v6847 = vsub.f32 1.0, %v6819
    %v6848 = vsub.f32 1.0, %v6826
    %v6849 = vsub.f32 1.0, %v6833
    %v6850 = vmul.f32 %v6015, %v6834
    %v6851 = vmul.f32 %v6016, %v6835
    %v6852 = vmul.f32 %v6017, %v6836
    %v6853 = vmul.f32 %v6018, %v6837
    %v6854 = vmul.f32 %v6019, %v6838
    %v6855 = vmul.f32 %v6020, %v6839
    %v6856 = vmul.f32 %v6021, %v6840
    %v6857 = vmul.f32 %v6022, %v6841
    %v6858 = vmul.f32 %v6023, %v6842
    %v6859 = vmul.f32 %v6024, %v6843
    %v6860 = vmul.f32 %v6025, %v6844
    %v6861 = vmul.f32 %v6026, %v6845
    %v6862 = vmul.f32 %v6027, %v6846
    %v6863 = vmul.f32 %v6028, %v6847
    %v6864 = vmul.f32 %v6029, %v6848
    %v6865 = vmul.f32 %v6030, %v6849
    %v6866 = vadd.f32 %v6728, %v6850
    %v6867 = vadd.f32 %v6735, %v6851
    %v6868 = vadd.f32 %v6742, %v6852
    %v6869 = vadd.f32 %v6749, %v6853
    %v6870 = vadd.f32 %v6756, %v6854
    %v6871 = vadd.f32 %v6763, %v6855
    %v6872 = vadd.f32 %v6770, %v6856
    %v6873 = vadd.f32 %v6777, %v6857
    %v6874 = vadd.f32 %v6784, %v6858
    %v6875 = vadd.f32 %v6791, %v6859
    %v6876 = vadd.f32 %v6798, %v6860
    %v6877 = vadd.f32 %v6805, %v6861
    %v6878 = vadd.f32 %v6812, %v6862
    %v6879 = vadd.f32 %v6819, %v6863
    %v6880 = vadd.f32 %v6826, %v6864
    %v6881 = vadd.f32 %v6833, %v6865
    %v6882 = vmul.f32 %v6015, %v6563
    %v6883 = vmul.f32 %v6016, %v6565
    %v6884 = vmul.f32 %v6017, %v6567
    %v6885 = vmul.f32 %v6018, %v6569
    %v6886 = vmul.f32 %v6019, %v6571
    %v6887 = vmul.f32 %v6020, %v6573
    %v6888 = vmul.f32 %v6021, %v6575
    %v6889 = vmul.f32 %v6022, %v6577
    %v6890 = vmul.f32 %v6023, %v6579
    %v6891 = vmul.f32 %v6024, %v6581
    %v6892 = vmul.f32 %v6025, %v6583
    %v6893 = vmul.f32 %v6026, %v6585
    %v6894 = vmul.f32 %v6027, %v6587
    %v6895 = vmul.f32 %v6028, %v6589
    %v6896 = vmul.f32 %v6029, %v6591
    %v6897 = vmul.f32 %v6030, %v6593
    %v6914 = vrot.slane %v6883, 7
    %v6915 = vsel %vm658, %v6914, %v6882
    %v6916 = vrot.slane %v6884, 6
    %v6917 = vsel %vm660, %v6916, %v6915
    %v6918 = vrot.slane %v6885, 5
    %v6919 = vsel %vm662, %v6918, %v6917
    %v6920 = vrot.slane %v6886, 4
    %v6921 = vsel %vm664, %v6920, %v6919
    %v6922 = vrot.slane %v6887, 3
    %v6923 = vsel %vm666, %v6922, %v6921
    %v6924 = vrot.slane %v6888, 2
    %v6925 = vrot.slane %v6889, 1
    %v6926 = vsel %vm654, %v6925, %v6924
    %v6927 = vsel %vm656, %v6890, %v6926
    %v6928 = vrot.slane %v6891, 7
    %v6929 = vsel %vm658, %v6928, %v6927
    %v6930 = vrot.slane %v6892, 6
    %v6931 = vsel %vm660, %v6930, %v6929
    %v6932 = vrot.slane %v6893, 5
    %v6933 = vsel %vm662, %v6932, %v6931
    %v6934 = vrot.slane %v6894, 4
    %v6935 = vsel %vm664, %v6934, %v6933
    %v6936 = vrot.slane %v6895, 3
    %v6937 = vsel %vm666, %v6936, %v6935
    %v6938 = vrot.slane %v6896, 2
    %v6939 = vrot.slane %v6897, 1
    %v6940 = vsel %vm654, %v6939, %v6938
    %v6944 = vsel %vm6382, %v6923, 0.0
    %6945 = vadd.xlane.f32.xlu0 %v6944
    %v6946 = vpop.xlane.xlu0 %6945
    %v6947 = vsel %vm3653, %v6937, 0.0
    %6948 = vadd.xlane.f32.xlu0 %v6947
    %v6949 = vpop.xlane.xlu0 %6948
    %v6950 = vsel %vm6389, %v6940, 0.0
    %6951 = vadd.xlane.f32.xlu0 %v6950
    %v6952 = vpop.xlane.xlu0 %6951
    %v6953 = vmul.f32 %v6866, %v6728
    %v6954 = vmul.f32 %v6867, %v6735
    %v6955 = vmul.f32 %v6868, %v6742
    %v6956 = vmul.f32 %v6869, %v6749
    %v6957 = vmul.f32 %v6870, %v6756
    %v6958 = vmul.f32 %v6871, %v6763
    %v6959 = vmul.f32 %v6872, %v6770
    %v6960 = vmul.f32 %v6873, %v6777
    %v6961 = vmul.f32 %v6874, %v6784
    %v6962 = vmul.f32 %v6875, %v6791
    %v6963 = vmul.f32 %v6876, %v6798
    %v6964 = vmul.f32 %v6877, %v6805
    %v6965 = vmul.f32 %v6878, %v6812
    %v6966 = vmul.f32 %v6879, %v6819
    %v6967 = vmul.f32 %v6880, %v6826
    %v6968 = vmul.f32 %v6881, %v6833
    %v6985 = vrot.slane %v6954, 7
    %v6986 = vsel %vm658, %v6985, %v6953
    %v6987 = vrot.slane %v6955, 6
    %v6988 = vsel %vm660, %v6987, %v6986
    %v6989 = vrot.slane %v6956, 5
    %v6990 = vsel %vm662, %v6989, %v6988
    %v6991 = vrot.slane %v6957, 4
    %v6992 = vsel %vm664, %v6991, %v6990
    %v6993 = vrot.slane %v6958, 3
    %v6994 = vsel %vm666, %v6993, %v6992
    %v6995 = vrot.slane %v6959, 2
    %v6996 = vrot.slane %v6960, 1
    %v6997 = vsel %vm654, %v6996, %v6995
    %v6998 = vsel %vm656, %v6961, %v6997
    %v6999 = vrot.slane %v6962, 7
    %v7000 = vsel %vm658, %v6999, %v6998
    %v7001 = vrot.slane %v6963, 6
    %v7002 = vsel %vm660, %v7001, %v7000
    %v7003 = vrot.slane %v6964, 5
    %v7004 = vsel %vm662, %v7003, %v7002
    %v7005 = vrot.slane %v6965, 4
    %v7006 = vsel %vm664, %v7005, %v7004
    %v7007 = vrot.slane %v6966, 3
    %v7008 = vsel %vm666, %v7007, %v7006
    %v7009 = vrot.slane %v6967, 2
    %v7010 = vrot.slane %v6968, 1
    %v7011 = vsel %vm654, %v7010, %v7009
    %v7015 = vsel %vm6382, %v6994, 0.0
    %7016 = vadd.xlane.f32.xlu0 %v7015
    %v7017 = vpop.xlane.xlu0 %7016
    %v7018 = vsel %vm3653, %v7008, 0.0
    %7019 = vadd.xlane.f32.xlu0 %v7018
    %v7020 = vpop.xlane.xlu0 %7019
    %v7021 = vsel %vm6389, %v7011, 0.0
    %7022 = vadd.xlane.f32.xlu0 %v7021
    %v7023 = vpop.xlane.xlu0 %7022
    %vm7024 = vcmask 1041408
    %v7025 = vrot.slane %v694, 6
    %v7026 = vrot.slane %v696, 6
    %v7027 = vsel %vm7024, %v7025, %v7026
    %v7031 = vmul.f32 %v7017, %v7025
    %v7032 = vmul.f32 %v7020, %v7027
    %v7033 = vmul.f32 %v7023, %v7026
    %s7034 = scalar_lea.vmem [#allocation8], 96
    %7035 = vst [vmem:[%s7034 - $0x2] sm:$0xfc] %v7031
    %7036 = vst [vmem:[%s7034 + $0x6] sm:$0xff] %v7032
    %7037 = vst [vmem:[%s7034 + $0xe] sm:$0x3] %v7033
    %v7038 = vmul.f32 %v6946, %v7025
    %v7039 = vmul.f32 %v6949, %v7027
    %v7040 = vmul.f32 %v6952, %v7026
    %s7041 = scalar_lea.vmem [#allocation8], 112
    %7042 = vst [vmem:[%s7041 - $0x2] sm:$0xfc] %v7038
    %7043 = vst [vmem:[%s7041 + $0x6] sm:$0xff] %v7039
    %7044 = vst [vmem:[%s7041 + $0xe] sm:$0x3] %v7040
    %v7061 = vrot.slane %v6208, 7
    %v7062 = vrot.slane %v6209, 7
    %v7063 = vrot.slane %v6210, 7
    %v7064 = vrot.slane %v6211, 7
    %v7065 = vrot.slane %v6212, 7
    %v7066 = vrot.slane %v6213, 7
    %v7067 = vrot.slane %v6214, 7
    %v7068 = vrot.slane %v6215, 7
    %v7069 = vrot.slane %v6216, 7
    %v7070 = vrot.slane %v6217, 7
    %v7071 = vrot.slane %v6218, 7
    %v7072 = vrot.slane %v6219, 7
    %v7073 = vrot.slane %v6220, 7
    %v7074 = vrot.slane %v6221, 7
    %v7075 = vrot.slane %v6222, 7
    %v7076 = vrot.slane %v6223, 7
    %v7093 = vmul.f32 %v3610, %v7061
    %v7094 = vmul.f32 %v3611, %v7062
    %v7095 = vmul.f32 %v3612, %v7063
    %v7096 = vmul.f32 %v3613, %v7064
    %v7097 = vmul.f32 %v3614, %v7065
    %v7098 = vmul.f32 %v3615, %v7066
    %v7099 = vmul.f32 %v3616, %v7067
    %v7100 = vmul.f32 %v3617, %v7068
    %v7101 = vmul.f32 %v3618, %v7069
    %v7102 = vmul.f32 %v3619, %v7070
    %v7103 = vmul.f32 %v3620, %v7071
    %v7104 = vmul.f32 %v3621, %v7072
    %v7105 = vmul.f32 %v3622, %v7073
    %v7106 = vmul.f32 %v3623, %v7074
    %v7107 = vmul.f32 %v3624, %v7075
    %v7108 = vmul.f32 %v3625, %v7076
    %v7112 = vrot.slane %v6946, 7
    %v7113 = vrot.slane %v6946, 1
    %v7114 = vrot.slane %v6946, 2
    %v7115 = vrot.slane %v6946, 3
    %v7116 = vrot.slane %v6946, 4
    %v7117 = vrot.slane %v6949, 5
    %v7118 = vrot.slane %v6949, 6
    %v7119 = vrot.slane %v6949, 7
    %v7120 = vrot.slane %v6949, 1
    %v7121 = vrot.slane %v6949, 2
    %v7122 = vrot.slane %v6949, 3
    %v7123 = vrot.slane %v6949, 4
    %v7124 = vrot.slane %v6952, 5
    %v7125 = vrot.slane %v6952, 6
    %v7142 = vmul.f32 %v3610, %v7112
    %v7143 = vmul.f32 %v3611, %v6946
    %v7144 = vmul.f32 %v3612, %v7113
    %v7145 = vmul.f32 %v3613, %v7114
    %v7146 = vmul.f32 %v3614, %v7115
    %v7147 = vmul.f32 %v3615, %v7116
    %v7148 = vmul.f32 %v3616, %v7117
    %v7149 = vmul.f32 %v3617, %v7118
    %v7150 = vmul.f32 %v3618, %v7119
    %v7151 = vmul.f32 %v3619, %v6949
    %v7152 = vmul.f32 %v3620, %v7120
    %v7153 = vmul.f32 %v3621, %v7121
    %v7154 = vmul.f32 %v3622, %v7122
    %v7155 = vmul.f32 %v3623, %v7123
    %v7156 = vmul.f32 %v3624, %v7124
    %v7157 = vmul.f32 %v3625, %v7125
    %7174 = vrot.lane.b32.xlu0 %v7142, 127
    %v7175 = vpop.permute.xlu0 %7174
    %7176 = vrot.lane.b32.xlu0 %v7143, 127
    %v7177 = vpop.permute.xlu0 %7176
    %7178 = vrot.lane.b32.xlu0 %v7144, 127
    %v7179 = vpop.permute.xlu0 %7178
    %7180 = vrot.lane.b32.xlu0 %v7145, 127
    %v7181 = vpop.permute.xlu0 %7180
    %7182 = vrot.lane.b32.xlu0 %v7146, 127
    %v7183 = vpop.permute.xlu0 %7182
    %7184 = vrot.lane.b32.xlu0 %v7147, 127
    %v7185 = vpop.permute.xlu0 %7184
    %7186 = vrot.lane.b32.xlu0 %v7148, 127
    %v7187 = vpop.permute.xlu0 %7186
    %7188 = vrot.lane.b32.xlu0 %v7149, 127
    %v7189 = vpop.permute.xlu0 %7188
    %7190 = vrot.lane.b32.xlu0 %v7150, 127
    %v7191 = vpop.permute.xlu0 %7190
    %7192 = vrot.lane.b32.xlu0 %v7151, 127
    %v7193 = vpop.permute.xlu0 %7192
    %7194 = vrot.lane.b32.xlu0 %v7152, 127
    %v7195 = vpop.permute.xlu0 %7194
    %7196 = vrot.lane.b32.xlu0 %v7153, 127
    %v7197 = vpop.permute.xlu0 %7196
    %7198 = vrot.lane.b32.xlu0 %v7154, 127
    %v7199 = vpop.permute.xlu0 %7198
    %7200 = vrot.lane.b32.xlu0 %v7155, 127
    %v7201 = vpop.permute.xlu0 %7200
    %7202 = vrot.lane.b32.xlu0 %v7156, 127
    %v7203 = vpop.permute.xlu0 %7202
    %7204 = vrot.lane.b32.xlu0 %v7157, 127
    %v7205 = vpop.permute.xlu0 %7204
    %v7222 = vadd.f32 %v7093, %v7175
    %v7223 = vadd.f32 %v7094, %v7177
    %v7224 = vadd.f32 %v7095, %v7179
    %v7225 = vadd.f32 %v7096, %v7181
    %v7226 = vadd.f32 %v7097, %v7183
    %v7227 = vadd.f32 %v7098, %v7185
    %v7228 = vadd.f32 %v7099, %v7187
    %v7229 = vadd.f32 %v7100, %v7189
    %v7230 = vadd.f32 %v7101, %v7191
    %v7231 = vadd.f32 %v7102, %v7193
    %v7232 = vadd.f32 %v7103, %v7195
    %v7233 = vadd.f32 %v7104, %v7197
    %v7234 = vadd.f32 %v7105, %v7199
    %v7235 = vadd.f32 %v7106, %v7201
    %v7236 = vadd.f32 %v7107, %v7203
    %v7237 = vadd.f32 %v7108, %v7205
    %7239 = vset.pattern.permute.xlu0 0
    %7240 = vperm.xlu0 %7239, %v7222
    %v7241 = vpop.permute.xlu0 %7240
    %7244 = vset.pattern.permute.xlu0 0
    %7245 = vperm.xlu0 %7244, %v7223
    %v7246 = vpop.permute.xlu0 %7245
    %7249 = vset.pattern.permute.xlu0 0
    %7250 = vperm.xlu0 %7249, %v7224
    %v7251 = vpop.permute.xlu0 %7250
    %7254 = vset.pattern.permute.xlu0 0
    %7255 = vperm.xlu0 %7254, %v7225
    %v7256 = vpop.permute.xlu0 %7255
    %7259 = vset.pattern.permute.xlu0 0
    %7260 = vperm.xlu0 %7259, %v7226
    %v7261 = vpop.permute.xlu0 %7260
    %7264 = vset.pattern.permute.xlu0 0
    %7265 = vperm.xlu0 %7264, %v7227
    %v7266 = vpop.permute.xlu0 %7265
    %7269 = vset.pattern.permute.xlu0 0
    %7270 = vperm.xlu0 %7269, %v7228
    %v7271 = vpop.permute.xlu0 %7270
    %7274 = vset.pattern.permute.xlu0 0
    %7275 = vperm.xlu0 %7274, %v7229
    %v7276 = vpop.permute.xlu0 %7275
    %7279 = vset.pattern.permute.xlu0 0
    %7280 = vperm.xlu0 %7279, %v7230
    %v7281 = vpop.permute.xlu0 %7280
    %7284 = vset.pattern.permute.xlu0 0
    %7285 = vperm.xlu0 %7284, %v7231
    %v7286 = vpop.permute.xlu0 %7285
    %7289 = vset.pattern.permute.xlu0 0
    %7290 = vperm.xlu0 %7289, %v7232
    %v7291 = vpop.permute.xlu0 %7290
    %7294 = vset.pattern.permute.xlu0 0
    %7295 = vperm.xlu0 %7294, %v7233
    %v7296 = vpop.permute.xlu0 %7295
    %7299 = vset.pattern.permute.xlu0 0
    %7300 = vperm.xlu0 %7299, %v7234
    %v7301 = vpop.permute.xlu0 %7300
    %7304 = vset.pattern.permute.xlu0 0
    %7305 = vperm.xlu0 %7304, %v7235
    %v7306 = vpop.permute.xlu0 %7305
    %7309 = vset.pattern.permute.xlu0 0
    %7310 = vperm.xlu0 %7309, %v7236
    %v7311 = vpop.permute.xlu0 %7310
    %7314 = vset.pattern.permute.xlu0 0
    %7315 = vperm.xlu0 %7314, %v7237
    %v7316 = vpop.permute.xlu0 %7315
    %v7318 = vmul.f32 %v7241, %v3294
    %v7319 = vmul.f32 %v7246, %v3315
    %v7320 = vmul.f32 %v7251, %v3336
    %v7321 = vmul.f32 %v7256, %v3357
    %v7322 = vmul.f32 %v7261, %v3378
    %v7323 = vmul.f32 %v7266, %v3399
    %v7324 = vmul.f32 %v7271, %v3420
    %v7325 = vmul.f32 %v7276, %v3441
    %v7326 = vmul.f32 %v7281, %v3462
    %v7327 = vmul.f32 %v7286, %v3483
    %v7328 = vmul.f32 %v7291, %v3504
    %v7329 = vmul.f32 %v7296, %v3525
    %v7330 = vmul.f32 %v7301, %v3546
    %v7331 = vmul.f32 %v7306, %v3567
    %v7332 = vmul.f32 %v7311, %v3588
    %v7333 = vmul.f32 %v7316, %v3609
    %v7334 = vxor.u32 %v7318, 2147483648
    %v7335 = vxor.u32 %v7319, 2147483648
    %v7336 = vxor.u32 %v7320, 2147483648
    %v7337 = vxor.u32 %v7321, 2147483648
    %v7338 = vxor.u32 %v7322, 2147483648
    %v7339 = vxor.u32 %v7323, 2147483648
    %v7340 = vxor.u32 %v7324, 2147483648
    %v7341 = vxor.u32 %v7325, 2147483648
    %v7342 = vxor.u32 %v7326, 2147483648
    %v7343 = vxor.u32 %v7327, 2147483648
    %v7344 = vxor.u32 %v7328, 2147483648
    %v7345 = vxor.u32 %v7329, 2147483648
    %v7346 = vxor.u32 %v7330, 2147483648
    %v7347 = vxor.u32 %v7331, 2147483648
    %v7348 = vxor.u32 %v7332, 2147483648
    %v7349 = vxor.u32 %v7333, 2147483648
    %v7350 = vmul.f32 %v7334, 1.442695
    %v7351 = vpow.pop %v7350
    %v7352 = vmul.f32 %v7335, 1.442695
    %v7353 = vpow.pop %v7352
    %v7354 = vmul.f32 %v7336, 1.442695
    %v7355 = vpow.pop %v7354
    %v7356 = vmul.f32 %v7337, 1.442695
    %v7357 = vpow.pop %v7356
    %v7358 = vmul.f32 %v7338, 1.442695
    %v7359 = vpow.pop %v7358
    %v7360 = vmul.f32 %v7339, 1.442695
    %v7361 = vpow.pop %v7360
    %v7362 = vmul.f32 %v7340, 1.442695
    %v7363 = vpow.pop %v7362
    %v7364 = vmul.f32 %v7341, 1.442695
    %v7365 = vpow.pop %v7364
    %v7366 = vmul.f32 %v7342, 1.442695
    %v7367 = vpow.pop %v7366
    %v7368 = vmul.f32 %v7343, 1.442695
    %v7369 = vpow.pop %v7368
    %v7370 = vmul.f32 %v7344, 1.442695
    %v7371 = vpow.pop %v7370
    %v7372 = vmul.f32 %v7345, 1.442695
    %v7373 = vpow.pop %v7372
    %v7374 = vmul.f32 %v7346, 1.442695
    %v7375 = vpow.pop %v7374
    %v7376 = vmul.f32 %v7347, 1.442695
    %v7377 = vpow.pop %v7376
    %v7378 = vmul.f32 %v7348, 1.442695
    %v7379 = vpow.pop %v7378
    %v7380 = vmul.f32 %v7349, 1.442695
    %v7381 = vpow.pop %v7380
    %v7382 = vadd.f32 %v7351, 1.0
    %v7383 = vadd.f32 %v7353, 1.0
    %v7384 = vadd.f32 %v7355, 1.0
    %v7385 = vadd.f32 %v7357, 1.0
    %v7386 = vadd.f32 %v7359, 1.0
    %v7387 = vadd.f32 %v7361, 1.0
    %v7388 = vadd.f32 %v7363, 1.0
    %v7389 = vadd.f32 %v7365, 1.0
    %v7390 = vadd.f32 %v7367, 1.0
    %v7391 = vadd.f32 %v7369, 1.0
    %v7392 = vadd.f32 %v7371, 1.0
    %v7393 = vadd.f32 %v7373, 1.0
    %v7394 = vadd.f32 %v7375, 1.0
    %v7395 = vadd.f32 %v7377, 1.0
    %v7396 = vadd.f32 %v7379, 1.0
    %v7397 = vadd.f32 %v7381, 1.0
    %v7398 = vrcp.pop %v7382
    %v7399 = vmul.f32 1.0, %v7398
    %v7400 = vrcp.pop %v7383
    %v7401 = vmul.f32 1.0, %v7400
    %v7402 = vrcp.pop %v7384
    %v7403 = vmul.f32 1.0, %v7402
    %v7404 = vrcp.pop %v7385
    %v7405 = vmul.f32 1.0, %v7404
    %v7406 = vrcp.pop %v7386
    %v7407 = vmul.f32 1.0, %v7406
    %v7408 = vrcp.pop %v7387
    %v7409 = vmul.f32 1.0, %v7408
    %v7410 = vrcp.pop %v7388
    %v7411 = vmul.f32 1.0, %v7410
    %v7412 = vrcp.pop %v7389
    %v7413 = vmul.f32 1.0, %v7412
    %v7414 = vrcp.pop %v7390
    %v7415 = vmul.f32 1.0, %v7414
    %v7416 = vrcp.pop %v7391
    %v7417 = vmul.f32 1.0, %v7416
    %v7418 = vrcp.pop %v7392
    %v7419 = vmul.f32 1.0, %v7418
    %v7420 = vrcp.pop %v7393
    %v7421 = vmul.f32 1.0, %v7420
    %v7422 = vrcp.pop %v7394
    %v7423 = vmul.f32 1.0, %v7422
    %v7424 = vrcp.pop %v7395
    %v7425 = vmul.f32 1.0, %v7424
    %v7426 = vrcp.pop %v7396
    %v7427 = vmul.f32 1.0, %v7426
    %v7428 = vrcp.pop %v7397
    %v7429 = vmul.f32 1.0, %v7428
    %v7446 = vrot.slane %v7401, 7
    %v7447 = vsel %vm660, %v7446, %v7399
    %v7448 = vrot.slane %v7403, 6
    %v7449 = vsel %vm662, %v7448, %v7447
    %v7450 = vrot.slane %v7405, 5
    %v7451 = vsel %vm664, %v7450, %v7449
    %v7452 = vrot.slane %v7407, 4
    %v7453 = vsel %vm666, %v7452, %v7451
    %v7454 = vrot.slane %v7409, 3
    %v7455 = vrot.slane %v7411, 2
    %v7456 = vsel %vm654, %v7455, %v7454
    %v7457 = vrot.slane %v7413, 1
    %v7458 = vsel %vm656, %v7457, %v7456
    %v7459 = vsel %vm658, %v7415, %v7458
    %v7460 = vrot.slane %v7417, 7
    %v7461 = vsel %vm660, %v7460, %v7459
    %v7462 = vrot.slane %v7419, 6
    %v7463 = vsel %vm662, %v7462, %v7461
    %v7464 = vrot.slane %v7421, 5
    %v7465 = vsel %vm664, %v7464, %v7463
    %v7466 = vrot.slane %v7423, 4
    %v7467 = vsel %vm666, %v7466, %v7465
    %v7468 = vrot.slane %v7425, 3
    %v7469 = vrot.slane %v7427, 2
    %v7470 = vsel %vm654, %v7469, %v7468
    %v7471 = vrot.slane %v7429, 1
    %v7472 = vsel %vm656, %v7471, %v7470
    %7476 = vst [vmem:[#allocation7 - $0x3] sm:$0xf8] %v7453
    %7477 = vst [vmem:[#allocation7 + $0x5] sm:$0xff] %v7467
    %7478 = vst [vmem:[#allocation7 + $0xd] sm:$0x7] %v7472
    // Predicated region
    $region34: #{tpu_custom_call.1} parent=1 // pred_check
      _
    $region35: #{tpu_custom_call.1} parent=1 // pred_check_branch
      %7480 = sbr.rel (0) target = $region37
    $region36: #{tpu_custom_call.1} parent=1 // pred_region
      %s7482 = ssub.s32 256, 256
      %7483 = vsyncadd [#allocation4], %s7482
      %s7484 = sshll.u32 [#allocation7], 4
      %s7485 = int_to_ptr.vmem [resolvable:$true] %s7484
      %7490 = dma.vmem_to_hbm [thread:$0]  %s7485, 256, %s6, [#allocation4], 128, 128, 8
    $region37: #{tpu_custom_call.1} parent=1 // pred_fallthru
      _
    // Predicated region
    $region38: #{tpu_custom_call.1} parent=1 // pred_check
      _
    $region39: #{tpu_custom_call.1} parent=1 // pred_check_branch
      %7492 = sbr.rel (0) target = $region41
    $region40: #{tpu_custom_call.1} parent=1 // pred_region
      %s7494 = ssub.s32 2048, 2048
      %7495 = vsyncadd [#allocation9], %s7494
      %s7496 = sshll.u32 [#allocation8], 4
      %s7497 = int_to_ptr.vmem [resolvable:$true] %s7496
      %7502 = dma.vmem_to_hbm [thread:$0]  %s7497, 2048, %s7, [#allocation9], 128, 128, 8
    $region41: #{tpu_custom_call.1} parent=1 // pred_fallthru
      _
    // Predicated region
    $region42: #{tpu_custom_call.1} parent=1 // pred_check
      _
    $region43: #{tpu_custom_call.1} parent=1 // pred_check_branch
      %7504 = sbr.rel (0) target = $region45
    $region44: #{tpu_custom_call.1} parent=1 // pred_region
      %7505 = dma.done [#allocation4], 256
    $region45: #{tpu_custom_call.1} parent=1 // pred_fallthru
      _
    // Predicated region
    $region46: #{tpu_custom_call.1} parent=1 // pred_check
      _
    $region47: #{tpu_custom_call.1} parent=1 // pred_check_branch
      %7507 = sbr.rel (0) target = $region49
    $region48: #{tpu_custom_call.1} parent=1 // pred_region
      %7508 = dma.done [#allocation9], 2048
    $region49: #{tpu_custom_call.1} parent=1 // pred_fallthru
      _
    %7509 = vsyncpa [#allocation3], 1
    %7510 = vsyncpa [#allocation6], 1
    %7511 = vsyncpa [#allocation4], 1
    %7512 = vsyncpa [#allocation9], 1

</llo_original>
